<compile_context>
chip_gen: v5e
topology: v5e:2x2
jax: 0.10.0
libtpu: 0.0.40
codegen_flags: <defaults>
</compile_context>

<pallas_src>
import jax
import jax.numpy as jnp
from jax.experimental import pallas as pl
from jax.experimental.pallas import tpu as pltpu


_NODE_PAD = 512   # nodes padded to a multiple of this -> tiles always (8,128)-aligned
_NC_PAD = 128     # num_prop (6) + cat_prop (11) padded into one 128-lane input


def _vmem_limit():
    """Generation-aware VMEM limit: ~3/4 of physical, capped at 112 MiB."""
    try:
        cap = int(pltpu.get_tpu_info().vmem_capacity_bytes)
    except Exception:
        cap = 64 * 1024 * 1024  # assume the smallest (v7x) if the query fails
    return int(min(cap * 3 // 4, 112 * 1024 * 1024))


_VMEM_LIMIT = _vmem_limit()


def _round_up(x, m):
    return (x + m - 1) // m * m


def _leaky(x):
    # torch.nn.LeakyReLU default negative_slope = 0.01
    return jnp.where(x >= 0, x, 0.01 * x)


def _node_tile(n_pad, pref):
    """Largest (8,128)-aligned tile <= pref that divides n_pad."""
    for t in (pref, 512, 256, 128):
        if t <= n_pad and n_pad % t == 0:
            return t
    return n_pad


def _rep_spec(shape, grid_rank):
    """Weight/bias spec: full block, resident across the whole grid."""
    zeros = (0,) * len(shape)
    if grid_rank == 1:
        return pl.BlockSpec(shape, lambda i: zeros)
    return pl.BlockSpec(shape, lambda i, k: zeros)


# ----------------------------------------------------------------------------
# Kernel 1: input feature fusion
#   LeakyReLU(des@Wd+bd) | LeakyReLU(tweet@Wt+bt) | LeakyReLU([num|cat]@Wnc+bnc)
#   lane-concatenated in-register, then linear_relu_input as one K=128 matmul.
# ----------------------------------------------------------------------------
def input_fusion_kernel(des_ref, tweet_ref, nc_ref,
                        wd_ref, bd_ref, wt_ref, bt_ref, wnc_ref, bnc_ref,
                        w1_ref, b1_ref, out_ref):
    hd = _leaky(jnp.dot(des_ref[...], wd_ref[...],
                        preferred_element_type=jnp.float32) + bd_ref[...])
    ht = _leaky(jnp.dot(tweet_ref[...], wt_ref[...],
                        preferred_element_type=jnp.float32) + bt_ref[...])
    hnc = _leaky(jnp.dot(nc_ref[...], wnc_ref[...],
                         preferred_element_type=jnp.float32) + bnc_ref[...])
    # lane-concat; order matches torch.cat((d, t, n, c), dim=1): num|cat are
    # already in that order inside hnc via the block-diagonal weight.
    h = jnp.concatenate([hd, ht, hnc], axis=1).astype(w1_ref.dtype)   # (tm, 128)
    pre = jnp.dot(h, w1_ref[...], preferred_element_type=jnp.float32) + b1_ref[...]
    out_ref[...] = _leaky(pre).astype(out_ref.dtype)


def input_fusion(des, tweet, numcat, p):
    n = des.shape[0]
    lc = p["w1"].shape[1]
    tm = _node_tile(n, 512)
    grid = (n // tm,)

    weights = (p["w_des"], p["b_des"], p["w_tweet"], p["b_tweet"],
               p["w_nc"], p["b_nc"], p["w1"], p["b1"])
    in_specs = [pl.BlockSpec((tm, des.shape[1]), lambda i: (i, 0)),
                pl.BlockSpec((tm, tweet.shape[1]), lambda i: (i, 0)),
                pl.BlockSpec((tm, numcat.shape[1]), lambda i: (i, 0))]
    in_specs += [_rep_spec(w.shape, 1) for w in weights]

    return pl.pallas_call(
        input_fusion_kernel,
        grid=grid,
        in_specs=in_specs,
        out_specs=pl.BlockSpec((tm, lc), lambda i: (i, 0)),
        out_shape=jax.ShapeDtypeStruct((n, lc), jnp.bfloat16),
        compiler_params=pltpu.CompilerParams(
            dimension_semantics=("parallel",),
            vmem_limit_bytes=_VMEM_LIMIT),
    )(des, tweet, numcat, *weights)


# ----------------------------------------------------------------------------
# Kernel 2: one RGCNConv application (2 relations, mean aggregation, root + bias)
#   grid = (dst_tiles, src_tiles); src axis is a reduction held in f32 VMEM
#   accumulators. Both relation adjacencies arrive in a single stacked block.
#   Finalize is ONE fused K=384 matmul: [x_dst | agg0 | agg1] @ [Wroot;W0;W1].
# ----------------------------------------------------------------------------
def rgcn_kernel(x_dst_ref, x_src_ref, adj_ref, invd0_ref, invd1_ref,
                w_ref, b_ref, out_ref, acc0_ref, acc1_ref):
    k = pl.program_id(1)

    @pl.when(k == 0)
    def _():
        acc0_ref[...] = jnp.zeros_like(acc0_ref)
        acc1_ref[...] = jnp.zeros_like(acc1_ref)

    xs = x_src_ref[...]
    acc0_ref[...] += jnp.dot(adj_ref[0], xs, preferred_element_type=jnp.float32)
    acc1_ref[...] += jnp.dot(adj_ref[1], xs, preferred_element_type=jnp.float32)

    @pl.when(k == pl.num_programs(1) - 1)
    def _():
        # mean aggregation: divide by per-relation in-degree (0 if no edges)
        agg0 = (acc0_ref[...] * invd0_ref[...]).astype(x_dst_ref.dtype)
        agg1 = (acc1_ref[...] * invd1_ref[...]).astype(x_dst_ref.dtype)
        xcat = jnp.concatenate([x_dst_ref[...], agg0, agg1], axis=1)   # (tm, 3*d)
        out = (jnp.dot(xcat, w_ref[...], preferred_element_type=jnp.float32)
               + b_ref[...])
        out_ref[...] = out.astype(out_ref.dtype)


def rgcn_layer(x, adj, invd0, invd1, p):
    n, d = x.shape
    tm = _node_tile(n, 1024)
    tk = _node_tile(n, 512)
    grid = (n // tm, n // tk)

    in_specs = [
        pl.BlockSpec((tm, d), lambda i, k: (i, 0)),           # x_dst
        pl.BlockSpec((tk, d), lambda i, k: (k, 0)),           # x_src
        pl.BlockSpec((2, tm, tk), lambda i, k: (0, i, k)),    # stacked adjacency
        pl.BlockSpec((tm, 1), lambda i, k: (i, 0)),           # 1/deg relation 0
        pl.BlockSpec((tm, 1), lambda i, k: (i, 0)),           # 1/deg relation 1
        _rep_spec(p["w_cat"].shape, 2),
        _rep_spec(p["b"].shape, 2),
    ]

    return pl.pallas_call(
        rgcn_kernel,
        grid=grid,
        in_specs=in_specs,
        out_specs=pl.BlockSpec((tm, d), lambda i, k: (i, 0)),
        out_shape=jax.ShapeDtypeStruct((n, d), jnp.bfloat16),
        scratch_shapes=[pltpu.VMEM((tm, d), jnp.float32),
                        pltpu.VMEM((tm, d), jnp.float32)],
        compiler_params=pltpu.CompilerParams(
            dimension_semantics=("parallel", "arbitrary"),
            vmem_limit_bytes=_VMEM_LIMIT),
    )(x, x, adj, invd0, invd1, p["w_cat"], p["b"])


# ----------------------------------------------------------------------------
# Kernel 3: fused classification head: out1 + LeakyReLU, out2.
#   Output block is (tm, 2) (2 == full last dim), so there is no f32 write
#   amplification for padded lanes.
# ----------------------------------------------------------------------------
def head_kernel(x_ref, w1_ref, b1_ref, w2_ref, b2_ref, out_ref):
    h = _leaky(jnp.dot(x_ref[...], w1_ref[...],
                       preferred_element_type=jnp.float32) + b1_ref[...])
    out = (jnp.dot(h.astype(w2_ref.dtype), w2_ref[...],
                   preferred_element_type=jnp.float32) + b2_ref[...])
    out_ref[...] = out


def head(x, p):
    n, d = x.shape
    tm = _node_tile(n, 512)
    grid = (n // tm,)
    n_out = p["w_out2"].shape[1]

    weights = (p["w_out1"], p["b_out1"], p["w_out2"], p["b_out2"])
    in_specs = [pl.BlockSpec((tm, d), lambda i: (i, 0))]
    in_specs += [_rep_spec(w.shape, 1) for w in weights]

    return pl.pallas_call(
        head_kernel,
        grid=grid,
        in_specs=in_specs,
        out_specs=pl.BlockSpec((tm, n_out), lambda i: (i, 0)),
        out_shape=jax.ShapeDtypeStruct((n, n_out), jnp.float32),
        compiler_params=pltpu.CompilerParams(
            dimension_semantics=("parallel",),
            vmem_limit_bytes=_VMEM_LIMIT),
    )(x, *weights)


# ----------------------------------------------------------------------------
# parameters (deterministic synthetic init; weights stored [in, out], i.e. W^T
# of torch's [out, in] convention). Big weights in bf16, biases in f32.
# ----------------------------------------------------------------------------
def _w(key, shape, scale=0.05):
    return jax.random.normal(key, shape, jnp.float32) * scale


def init_params(key, des_size=768, tweet_size=768, num_prop_size=6,
                cat_prop_size=11, emb=128):
    c4 = emb // 4
    ks = jax.random.split(key, 18)
    bf = jnp.bfloat16

    # block-diagonal merged num/cat weight: one 128-lane input, one matmul
    w_num = _w(ks[4], (num_prop_size, c4))
    w_cat = _w(ks[6], (cat_prop_size, c4))
    w_nc = jnp.zeros((_NC_PAD, 2 * c4), jnp.float32)
    w_nc = w_nc.at[:num_prop_size, :c4].set(w_num)
    w_nc = w_nc.at[num_prop_size:num_prop_size + cat_prop_size, c4:].set(w_cat)
    b_nc = jnp.concatenate([_w(ks[5], (1, c4), 0.01),
                            _w(ks[7], (1, c4), 0.01)], axis=1)

    p = dict(
        w_des=_w(ks[0], (des_size, c4)).astype(bf),     b_des=_w(ks[1], (1, c4), 0.01),
        w_tweet=_w(ks[2], (tweet_size, c4)).astype(bf), b_tweet=_w(ks[3], (1, c4), 0.01),
        w_nc=w_nc.astype(bf),                           b_nc=b_nc,
        w1=_w(ks[8], (emb, emb)).astype(bf),            b1=_w(ks[9], (1, emb), 0.01),
        w_out1=_w(ks[10], (emb, emb)).astype(bf),       b_out1=_w(ks[11], (1, emb), 0.01),
        w_out2=_w(ks[12], (emb, 2)).astype(bf),         b_out2=_w(ks[13], (1, 2), 0.01),
    )

    # one RGCNConv module applied twice (shared weights).  Finalize matmul is
    # fused: [x_dst | agg0 | agg1] @ [W_root; W_rel0; W_rel1]  (K = 384).
    w_root = _w(ks[14], (emb, emb))
    w_rel0 = _w(ks[15], (emb, emb))
    w_rel1 = _w(ks[16], (emb, emb))
    p["rgcn"] = dict(
        w_cat=jnp.concatenate([w_root, w_rel0, w_rel1], axis=0).astype(bf),
        b=_w(ks[17], (1, emb), 0.01),
    )
    return p


# ----------------------------------------------------------------------------
# forward (glue in plain JAX: node padding, edge-list -> stacked per-relation
#          dense adjacency + inverse in-degree, then the Pallas kernels)
# ----------------------------------------------------------------------------
def dense_adj(edge_index, edge_type, n_pad):
    src, dst = edge_index[0], edge_index[1]

    def one(rel):
        w = (edge_type == rel).astype(jnp.float32)
        # adj[dst, src] counts edge multiplicities (matches PyG scatter-mean)
        adj = jnp.zeros((n_pad, n_pad), jnp.float32).at[dst, src].add(w)
        deg = jnp.sum(adj, axis=1, keepdims=True)
        inv = jnp.where(deg > 0, 1.0 / deg, 0.0)
        return adj, inv

    a0, inv0 = one(0)
    a1, inv1 = one(1)
    # NOTE: bf16 represents integer edge multiplicities exactly only up to 256.
    adj = jnp.stack([a0, a1], axis=0).astype(jnp.bfloat16)   # (2, n_pad, n_pad)
    return adj, inv0, inv1


def botrgcn_forward(params, des, tweet, num_prop, cat_prop, edge_index, edge_type):
    n = des.shape[0]
    n_pad = _round_up(n, _NODE_PAD)
    pad = n_pad - n

    des_p = jnp.pad(des, ((0, pad), (0, 0))).astype(jnp.bfloat16)
    tweet_p = jnp.pad(tweet, ((0, pad), (0, 0))).astype(jnp.bfloat16)
    numcat = jnp.concatenate([num_prop, cat_prop], axis=1)
    numcat_p = jnp.pad(numcat, ((0, pad), (0, _NC_PAD - numcat.shape[1]))
                       ).astype(jnp.bfloat16)

    # TODO(synk): dense O(N^2) per-relation adjacency; at real Twibot-20 scale
    # this must become block-sparse with scalar-prefetch tile skipping.
    adj, invd0, invd1 = dense_adj(edge_index, edge_type, n_pad)

    x = input_fusion(des_p, tweet_p, numcat_p, params)        # [n_pad, 128] bf16
    x = rgcn_layer(x, adj, invd0, invd1, params["rgcn"])
    # TODO(synk): F.dropout(p=0.3) is stochastic; eval-mode identity here.
    x = rgcn_layer(x, adj, invd0, invd1, params["rgcn"])
    logits = head(x, params)                                   # [n_pad, 2] f32
    return logits[:n]


# ----------------------------------------------------------------------------
if __name__ == "__main__":
    N, E = 256, 1024
    key = jax.random.PRNGKey(0)
    k_des, k_tw, k_np, k_cp, k_src, k_dst, k_et, k_par = jax.random.split(key, 8)

    des_features = jax.random.normal(k_des, (N, 768), jnp.float32)
    tweet_features = jax.random.normal(k_tw, (N, 768), jnp.float32)
    num_prop_features = jax.random.normal(k_np, (N, 6), jnp.float32)
    cat_prop_features = jax.random.normal(k_cp, (N, 11), jnp.float32)
    src = jax.random.randint(k_src, (E,), 0, N)
    dst = jax.random.randint(k_dst, (E,), 0, N)
    edge_index = jnp.stack([src, dst], axis=0)            # [2, E]
    edge_type = jax.random.randint(k_et, (E,), 0, 2)      # 2 relations

    params = init_params(k_par)

    logits = botrgcn_forward(params, des_features, tweet_features,
                             num_prop_features, cat_prop_features,
                             edge_index, edge_type)
    logits = jax.block_until_ready(logits)
    assert logits.shape == (N, 2)
    assert bool(jnp.all(jnp.isfinite(logits)))
    print("KERNEL_OK")
</pallas_src>

<mosaic_0001>
module attributes {stable_mosaic.version = 11 : i64} {
  func.func @input_fusion_kernel(%arg0: i32, %arg1: memref<512x768xbf16, #tpu.memory_space<vmem>>, %arg2: memref<512x768xbf16, #tpu.memory_space<vmem>>, %arg3: memref<512x128xbf16, #tpu.memory_space<vmem>>, %arg4: memref<768x32xbf16, #tpu.memory_space<vmem>>, %arg5: memref<1x32xf32, #tpu.memory_space<vmem>>, %arg6: memref<768x32xbf16, #tpu.memory_space<vmem>>, %arg7: memref<1x32xf32, #tpu.memory_space<vmem>>, %arg8: memref<128x64xbf16, #tpu.memory_space<vmem>>, %arg9: memref<1x64xf32, #tpu.memory_space<vmem>>, %arg10: memref<128x128xbf16, #tpu.memory_space<vmem>>, %arg11: memref<1x128xf32, #tpu.memory_space<vmem>>, %arg12: memref<512x128xbf16, #tpu.memory_space<vmem>>) attributes {dimension_semantics = [#tpu.dimension_semantics<parallel>], iteration_bounds = array<i64: 1>, scalar_prefetch = 0 : i64, scratch_operands = 0 : i64, tpu.core_type = #tpu.core_type<tc>, window_params = [{transform_indices = @transform_0, window_bounds = array<i64: 512, 768>}, {transform_indices = @transform_1, window_bounds = array<i64: 512, 768>}, {transform_indices = @transform_2, window_bounds = array<i64: 512, 128>}, {pipeline_mode = #tpu.pipeline_mode<synchronous>, transform_indices = @transform_3, window_bounds = array<i64: 768, 32>}, {pipeline_mode = #tpu.pipeline_mode<synchronous>, transform_indices = @transform_4, window_bounds = array<i64: 1, 32>}, {pipeline_mode = #tpu.pipeline_mode<synchronous>, transform_indices = @transform_5, window_bounds = array<i64: 768, 32>}, {pipeline_mode = #tpu.pipeline_mode<synchronous>, transform_indices = @transform_6, window_bounds = array<i64: 1, 32>}, {pipeline_mode = #tpu.pipeline_mode<synchronous>, transform_indices = @transform_7, window_bounds = array<i64: 128, 64>}, {pipeline_mode = #tpu.pipeline_mode<synchronous>, transform_indices = @transform_8, window_bounds = array<i64: 1, 64>}, {pipeline_mode = #tpu.pipeline_mode<synchronous>, transform_indices = @transform_9, window_bounds = array<i64: 128, 128>}, {pipeline_mode = #tpu.pipeline_mode<synchronous>, transform_indices = @transform_10, window_bounds = array<i64: 1, 128>}, {transform_indices = @transform_11, window_bounds = array<i64: 512, 128>}]} {
    %c0 = arith.constant 0 : index
    %c0_0 = arith.constant 0 : index
    %0 = vector.load %arg1[%c0, %c0_0] : memref<512x768xbf16, #tpu.memory_space<vmem>>, vector<512x768xbf16>
    %c0_1 = arith.constant 0 : index
    %c0_2 = arith.constant 0 : index
    %1 = vector.load %arg4[%c0_1, %c0_2] : memref<768x32xbf16, #tpu.memory_space<vmem>>, vector<768x32xbf16>
    %cst = arith.constant dense<0.000000e+00> : vector<512x32xf32>
    %2 = tpu.matmul %0, %1, %cst {dimension_numbers = #tpu.dot_dimension_numbers<[1], [0], [0], [1], [0, 0, 1, 1], [], []>} : vector<512x768xbf16>, vector<768x32xbf16>, vector<512x32xf32> -> vector<512x32xf32>
    %c0_3 = arith.constant 0 : index
    %c0_4 = arith.constant 0 : index
    %3 = vector.load %arg5[%c0_3, %c0_4] : memref<1x32xf32, #tpu.memory_space<vmem>>, vector<1x32xf32>
    %4 = vector.broadcast %3 : vector<1x32xf32> to vector<512x32xf32>
    %5 = arith.addf %2, %4 : vector<512x32xf32>
    %cst_5 = arith.constant 0.000000e+00 : f32
    %6 = vector.broadcast %cst_5 : f32 to vector<512x32xf32>
    %7 = arith.cmpf oge, %5, %6 : vector<512x32xf32>
    %cst_6 = arith.constant 0.00999999977 : f32
    %8 = vector.broadcast %cst_6 : f32 to vector<512x32xf32>
    %9 = arith.mulf %8, %5 : vector<512x32xf32>
    %10 = arith.select %7, %5, %9 : vector<512x32xi1>, vector<512x32xf32>
    %c0_7 = arith.constant 0 : index
    %c0_8 = arith.constant 0 : index
    %11 = vector.load %arg2[%c0_7, %c0_8] : memref<512x768xbf16, #tpu.memory_space<vmem>>, vector<512x768xbf16>
    %c0_9 = arith.constant 0 : index
    %c0_10 = arith.constant 0 : index
    %12 = vector.load %arg6[%c0_9, %c0_10] : memref<768x32xbf16, #tpu.memory_space<vmem>>, vector<768x32xbf16>
    %cst_11 = arith.constant dense<0.000000e+00> : vector<512x32xf32>
    %13 = tpu.matmul %11, %12, %cst_11 {dimension_numbers = #tpu.dot_dimension_numbers<[1], [0], [0], [1], [0, 0, 1, 1], [], []>} : vector<512x768xbf16>, vector<768x32xbf16>, vector<512x32xf32> -> vector<512x32xf32>
    %c0_12 = arith.constant 0 : index
    %c0_13 = arith.constant 0 : index
    %14 = vector.load %arg7[%c0_12, %c0_13] : memref<1x32xf32, #tpu.memory_space<vmem>>, vector<1x32xf32>
    %15 = vector.broadcast %14 : vector<1x32xf32> to vector<512x32xf32>
    %16 = arith.addf %13, %15 : vector<512x32xf32>
    %cst_14 = arith.constant 0.000000e+00 : f32
    %17 = vector.broadcast %cst_14 : f32 to vector<512x32xf32>
    %18 = arith.cmpf oge, %16, %17 : vector<512x32xf32>
    %cst_15 = arith.constant 0.00999999977 : f32
    %19 = vector.broadcast %cst_15 : f32 to vector<512x32xf32>
    %20 = arith.mulf %19, %16 : vector<512x32xf32>
    %21 = arith.select %18, %16, %20 : vector<512x32xi1>, vector<512x32xf32>
    %c0_16 = arith.constant 0 : index
    %c0_17 = arith.constant 0 : index
    %22 = vector.load %arg3[%c0_16, %c0_17] : memref<512x128xbf16, #tpu.memory_space<vmem>>, vector<512x128xbf16>
    %c0_18 = arith.constant 0 : index
    %c0_19 = arith.constant 0 : index
    %23 = vector.load %arg8[%c0_18, %c0_19] : memref<128x64xbf16, #tpu.memory_space<vmem>>, vector<128x64xbf16>
    %cst_20 = arith.constant dense<0.000000e+00> : vector<512x64xf32>
    %24 = tpu.matmul %22, %23, %cst_20 {dimension_numbers = #tpu.dot_dimension_numbers<[1], [0], [0], [1], [0, 0, 1, 1], [], []>} : vector<512x128xbf16>, vector<128x64xbf16>, vector<512x64xf32> -> vector<512x64xf32>
    %c0_21 = arith.constant 0 : index
    %c0_22 = arith.constant 0 : index
    %25 = vector.load %arg9[%c0_21, %c0_22] : memref<1x64xf32, #tpu.memory_space<vmem>>, vector<1x64xf32>
    %26 = vector.broadcast %25 : vector<1x64xf32> to vector<512x64xf32>
    %27 = arith.addf %24, %26 : vector<512x64xf32>
    %cst_23 = arith.constant 0.000000e+00 : f32
    %28 = vector.broadcast %cst_23 : f32 to vector<512x64xf32>
    %29 = arith.cmpf oge, %27, %28 : vector<512x64xf32>
    %cst_24 = arith.constant 0.00999999977 : f32
    %30 = vector.broadcast %cst_24 : f32 to vector<512x64xf32>
    %31 = arith.mulf %30, %27 : vector<512x64xf32>
    %32 = arith.select %29, %27, %31 : vector<512x64xi1>, vector<512x64xf32>
    %33 = tpu.concatenate %10, %21, %32 in 1 : vector<512x32xf32>, vector<512x32xf32>, vector<512x64xf32> -> vector<512x128xf32>
    %34 = arith.truncf %33 : vector<512x128xf32> to vector<512x128xbf16>
    %c0_25 = arith.constant 0 : index
    %c0_26 = arith.constant 0 : index
    %35 = vector.load %arg10[%c0_25, %c0_26] : memref<128x128xbf16, #tpu.memory_space<vmem>>, vector<128x128xbf16>
    %cst_27 = arith.constant dense<0.000000e+00> : vector<512x128xf32>
    %36 = tpu.matmul %34, %35, %cst_27 {dimension_numbers = #tpu.dot_dimension_numbers<[1], [0], [0], [1], [0, 0, 1, 1], [], []>} : vector<512x128xbf16>, vector<128x128xbf16>, vector<512x128xf32> -> vector<512x128xf32>
    %c0_28 = arith.constant 0 : index
    %c0_29 = arith.constant 0 : index
    %37 = vector.load %arg11[%c0_28, %c0_29] : memref<1x128xf32, #tpu.memory_space<vmem>>, vector<1x128xf32>
    %38 = vector.broadcast %37 : vector<1x128xf32> to vector<512x128xf32>
    %39 = arith.addf %36, %38 : vector<512x128xf32>
    %cst_30 = arith.constant 0.000000e+00 : f32
    %40 = vector.broadcast %cst_30 : f32 to vector<512x128xf32>
    %41 = arith.cmpf oge, %39, %40 : vector<512x128xf32>
    %cst_31 = arith.constant 0.00999999977 : f32
    %42 = vector.broadcast %cst_31 : f32 to vector<512x128xf32>
    %43 = arith.mulf %42, %39 : vector<512x128xf32>
    %44 = arith.select %41, %39, %43 : vector<512x128xi1>, vector<512x128xf32>
    %45 = arith.truncf %44 : vector<512x128xf32> to vector<512x128xbf16>
    %c0_32 = arith.constant 0 : index
    %c0_33 = arith.constant 0 : index
    %46 = vector.load %arg12[%c0_32, %c0_33] : memref<512x128xbf16, #tpu.memory_space<vmem>>, vector<512x128xbf16>
    tpu.vector_store %arg12[%c0_32, %c0_33], %45 {strides = array<i32>} : memref<512x128xbf16, #tpu.memory_space<vmem>>, vector<512x128xbf16>,
    return
  }
  func.func @transform_0(%arg0: i32) -> (i32, i32) {
    %c0_i32 = arith.constant 0 : i32
    %c0_i32_0 = arith.constant 0 : i32
    return %arg0, %c0_i32 : i32, i32
  }
  func.func @transform_1(%arg0: i32) -> (i32, i32) {
    %c0_i32 = arith.constant 0 : i32
    %c0_i32_0 = arith.constant 0 : i32
    return %arg0, %c0_i32 : i32, i32
  }
  func.func @transform_2(%arg0: i32) -> (i32, i32) {
    %c0_i32 = arith.constant 0 : i32
    %c0_i32_0 = arith.constant 0 : i32
    return %arg0, %c0_i32 : i32, i32
  }
  func.func @transform_3(%arg0: i32) -> (i32, i32) {
    %c0_i32 = arith.constant 0 : i32
    %c0_i32_0 = arith.constant 0 : i32
    %c0_i32_1 = arith.constant 0 : i32
    return %c0_i32, %c0_i32_0 : i32, i32
  }
  func.func @transform_4(%arg0: i32) -> (i32, i32) {
    %c0_i32 = arith.constant 0 : i32
    %c0_i32_0 = arith.constant 0 : i32
    %c0_i32_1 = arith.constant 0 : i32
    return %c0_i32, %c0_i32_0 : i32, i32
  }
  func.func @transform_5(%arg0: i32) -> (i32, i32) {
    %c0_i32 = arith.constant 0 : i32
    %c0_i32_0 = arith.constant 0 : i32
    %c0_i32_1 = arith.constant 0 : i32
    return %c0_i32, %c0_i32_0 : i32, i32
  }
  func.func @transform_6(%arg0: i32) -> (i32, i32) {
    %c0_i32 = arith.constant 0 : i32
    %c0_i32_0 = arith.constant 0 : i32
    %c0_i32_1 = arith.constant 0 : i32
    return %c0_i32, %c0_i32_0 : i32, i32
  }
  func.func @transform_7(%arg0: i32) -> (i32, i32) {
    %c0_i32 = arith.constant 0 : i32
    %c0_i32_0 = arith.constant 0 : i32
    %c0_i32_1 = arith.constant 0 : i32
    return %c0_i32, %c0_i32_0 : i32, i32
  }
  func.func @transform_8(%arg0: i32) -> (i32, i32) {
    %c0_i32 = arith.constant 0 : i32
    %c0_i32_0 = arith.constant 0 : i32
    %c0_i32_1 = arith.constant 0 : i32
    return %c0_i32, %c0_i32_0 : i32, i32
  }
  func.func @transform_9(%arg0: i32) -> (i32, i32) {
    %c0_i32 = arith.constant 0 : i32
    %c0_i32_0 = arith.constant 0 : i32
    %c0_i32_1 = arith.constant 0 : i32
    return %c0_i32, %c0_i32_0 : i32, i32
  }
  func.func @transform_10(%arg0: i32) -> (i32, i32) {
    %c0_i32 = arith.constant 0 : i32
    %c0_i32_0 = arith.constant 0 : i32
    %c0_i32_1 = arith.constant 0 : i32
    return %c0_i32, %c0_i32_0 : i32, i32
  }
  func.func @transform_11(%arg0: i32) -> (i32, i32) {
    %c0_i32 = arith.constant 0 : i32
    %c0_i32_0 = arith.constant 0 : i32
    return %arg0, %c0_i32 : i32, i32
  }
}

</mosaic_0001>

<llo_original>
// kernel: tpu_custom_call.1
$region0: #{tpu_custom_call.1}
  #allocation0 [shape = 'u32[]', space=smem, size = 0x4, offset = 0x4, fixed_abs, tag = 'smem constant byte address 0x4 - core index']
  #allocation1 [shape = 'u32[72,128]{1,0:T(1,128)}', space=vmem, size = 0x9000, scoped, tag = 'internal scratch']
  %s0 = inlined_call_operand.hbm [shape: bf16[512,768], index: 0, kind: input, shape index: {}]
  %s1 = inlined_call_operand.hbm [shape: bf16[512,768], index: 1, kind: input, shape index: {}]
  %s2 = inlined_call_operand.vmem [shape: bf16[512,128], index: 2, kind: input, shape index: {}]
  %s3 = inlined_call_operand.vmem [shape: bf16[768,32], index: 3, kind: input, shape index: {}]
  %s4 = inlined_call_operand.vmem [shape: f32[1,32], index: 4, kind: input, shape index: {}]
  %s5 = inlined_call_operand.vmem [shape: bf16[768,32], index: 5, kind: input, shape index: {}]
  %s6 = inlined_call_operand.vmem [shape: f32[1,32], index: 6, kind: input, shape index: {}]
  %s7 = inlined_call_operand.vmem [shape: bf16[128,64], index: 7, kind: input, shape index: {}]
  %s8 = inlined_call_operand.vmem [shape: f32[1,64], index: 8, kind: input, shape index: {}]
  %s9 = inlined_call_operand.vmem [shape: bf16[128,128], index: 9, kind: input, shape index: {}]
  %s10 = inlined_call_operand.vmem [shape: f32[1,128], index: 10, kind: input, shape index: {}]
  %s11 = inlined_call_operand.hbm [shape: bf16[512,128], index: 11, kind: output, shape index: {}]
  %s12 = sld [smem:[#allocation0]]
  $region62: #{tpu_custom_call.1} parent=0
    _
  %s14 = ssub.s32 1, %s12
  %s15 = scalar_select 0, %s14, %s12
  $region1: #{tpu_custom_call.1} parent=0
    #allocation2 [shape = 'u8[786432]{0}', space=vmem, size = 0xc0000, scoped, tag = 'input window, operand 0, single buffered']
    #allocation3 [shape = 's32[1]{0}', space=sflag, size = 0x4, scoped, tag = 'scoped memory for tpu_custom_call.1']
    #allocation4 [shape = 's32[1]{0}', space=sflag, size = 0x4, scoped, tag = 'scoped memory for tpu_custom_call.1']
    #allocation5 [shape = 'u8[786432]{0}', space=vmem, size = 0xc0000, scoped, tag = 'input window, operand 1, single buffered']
    #allocation6 [shape = 's32[1]{0}', space=sflag, size = 0x4, scoped, tag = 'scoped memory for tpu_custom_call.1']
    #allocation7 [shape = 'u8[131072]{0}', space=vmem, size = 0x20000, scoped, tag = 'output window, operand 0, single buffered']
    %16 = vsyncpa [#allocation3], 0
    %17 = vsyncpa [#allocation6], 0
    %18 = vsyncpa [#allocation4], 0
    // Predicated region
    $region2: #{tpu_custom_call.1} parent=1 // pred_check
      _
    $region3: #{tpu_custom_call.1} parent=1 // pred_check_branch
      %20 = sbr.rel (0) target = $region5
    $region4: #{tpu_custom_call.1} parent=1 // pred_region
      %22 = vsyncadd [#allocation3], 0
      %s23 = sshll.u32 %s0, 4
      %s24 = int_to_ptr.hbm [resolvable:$true] %s23
      %s25 = sshll.u32 [#allocation2], 4
      %s26 = int_to_ptr.vmem [resolvable:$true] %s25
      %31 = dma.hbm_to_vmem [thread:$0]  %s24, 24576, %s26, [#allocation3], 384, 384, 24
    $region5: #{tpu_custom_call.1} parent=1 // pred_fallthru
      _
    // Predicated region
    $region6: #{tpu_custom_call.1} parent=1 // pred_check
      _
    $region7: #{tpu_custom_call.1} parent=1 // pred_check_branch
      %33 = sbr.rel (0) target = $region9
    $region8: #{tpu_custom_call.1} parent=1 // pred_region
      %35 = vsyncadd [#allocation6], 0
      %s36 = sshll.u32 %s1, 4
      %s37 = int_to_ptr.hbm [resolvable:$true] %s36
      %s38 = sshll.u32 [#allocation5], 4
      %s39 = int_to_ptr.vmem [resolvable:$true] %s38
      %44 = dma.hbm_to_vmem [thread:$0]  %s37, 24576, %s39, [#allocation6], 384, 384, 24
    $region9: #{tpu_custom_call.1} parent=1 // pred_fallthru
      _
    // Predicated region
    $region10: #{tpu_custom_call.1} parent=1 // pred_check
      _
    $region11: #{tpu_custom_call.1} parent=1 // pred_check_branch
      %46 = sbr.rel (0) target = $region13
    $region12: #{tpu_custom_call.1} parent=1 // pred_region
      _
    $region13: #{tpu_custom_call.1} parent=1 // pred_fallthru
      _
    // Predicated region
    $region14: #{tpu_custom_call.1} parent=1 // pred_check
      _
    $region15: #{tpu_custom_call.1} parent=1 // pred_check_branch
      %48 = sbr.rel (0) target = $region17
    $region16: #{tpu_custom_call.1} parent=1 // pred_region
      _
    $region17: #{tpu_custom_call.1} parent=1 // pred_fallthru
      _
    // Predicated region
    $region18: #{tpu_custom_call.1} parent=1 // pred_check
      _
    $region19: #{tpu_custom_call.1} parent=1 // pred_check_branch
      %50 = sbr.rel (0) target = $region21
    $region20: #{tpu_custom_call.1} parent=1 // pred_region
      _
    $region21: #{tpu_custom_call.1} parent=1 // pred_fallthru
      _
    // Predicated region
    $region22: #{tpu_custom_call.1} parent=1 // pred_check
      _
    $region23: #{tpu_custom_call.1} parent=1 // pred_check_branch
      %52 = sbr.rel (0) target = $region25
    $region24: #{tpu_custom_call.1} parent=1 // pred_region
      _
    $region25: #{tpu_custom_call.1} parent=1 // pred_fallthru
      _
    // Predicated region
    $region26: #{tpu_custom_call.1} parent=1 // pred_check
      _
    $region27: #{tpu_custom_call.1} parent=1 // pred_check_branch
      %54 = sbr.rel (0) target = $region29
    $region28: #{tpu_custom_call.1} parent=1 // pred_region
      _
    $region29: #{tpu_custom_call.1} parent=1 // pred_fallthru
      _
    // Predicated region
    $region30: #{tpu_custom_call.1} parent=1 // pred_check
      _
    $region31: #{tpu_custom_call.1} parent=1 // pred_check_branch
      %56 = sbr.rel (0) target = $region33
    $region32: #{tpu_custom_call.1} parent=1 // pred_region
      _
    $region33: #{tpu_custom_call.1} parent=1 // pred_fallthru
      _
    // Predicated region
    $region34: #{tpu_custom_call.1} parent=1 // pred_check
      _
    $region35: #{tpu_custom_call.1} parent=1 // pred_check_branch
      %58 = sbr.rel (0) target = $region37
    $region36: #{tpu_custom_call.1} parent=1 // pred_region
      _
    $region37: #{tpu_custom_call.1} parent=1 // pred_fallthru
      _
    // Predicated region
    $region38: #{tpu_custom_call.1} parent=1 // pred_check
      _
    $region39: #{tpu_custom_call.1} parent=1 // pred_check_branch
      %60 = sbr.rel (0) target = $region41
    $region40: #{tpu_custom_call.1} parent=1 // pred_region
      _
    $region41: #{tpu_custom_call.1} parent=1 // pred_fallthru
      _
    // Predicated region
    $region42: #{tpu_custom_call.1} parent=1 // pred_check
      _
    $region43: #{tpu_custom_call.1} parent=1 // pred_check_branch
      %62 = sbr.rel (0) target = $region45
    $region44: #{tpu_custom_call.1} parent=1 // pred_region
      _
    $region45: #{tpu_custom_call.1} parent=1 // pred_fallthru
      _
    // Predicated region
    $region46: #{tpu_custom_call.1} parent=1 // pred_check
      _
    $region47: #{tpu_custom_call.1} parent=1 // pred_check_branch
      %64 = sbr.rel (0) target = $region49
    $region48: #{tpu_custom_call.1} parent=1 // pred_region
      %66 = dma.done [#allocation3], 24576
    $region49: #{tpu_custom_call.1} parent=1 // pred_fallthru
      _
    // Predicated region
    $region50: #{tpu_custom_call.1} parent=1 // pred_check
      _
    $region51: #{tpu_custom_call.1} parent=1 // pred_check_branch
      %68 = sbr.rel (0) target = $region53
    $region52: #{tpu_custom_call.1} parent=1 // pred_region
      %70 = dma.done [#allocation6], 24576
    $region53: #{tpu_custom_call.1} parent=1 // pred_fallthru
      _
    %v71 = vld [vmem:[#allocation2] sm:$0xff]
    %v72 = vld [vmem:[#allocation2 + $0x8] sm:$0xff]
    %v73 = vld [vmem:[#allocation2 + $0x10] sm:$0xff]
    %v74 = vld [vmem:[#allocation2 + $0x18] sm:$0xff]
    %v75 = vld [vmem:[#allocation2 + $0x20] sm:$0xff]
    %v76 = vld [vmem:[#allocation2 + $0x28] sm:$0xff]
    %v77 = vld [vmem:[#allocation2 + $0x30] sm:$0xff]
    %v78 = vld [vmem:[#allocation2 + $0x38] sm:$0xff]
    %v79 = vld [vmem:[#allocation2 + $0x40] sm:$0xff]
    %v80 = vld [vmem:[#allocation2 + $0x48] sm:$0xff]
    %v81 = vld [vmem:[#allocation2 + $0x50] sm:$0xff]
    %v82 = vld [vmem:[#allocation2 + $0x58] sm:$0xff]
    %v83 = vld [vmem:[#allocation2 + $0x60] sm:$0xff]
    %v84 = vld [vmem:[#allocation2 + $0x68] sm:$0xff]
    %v85 = vld [vmem:[#allocation2 + $0x70] sm:$0xff]
    %v86 = vld [vmem:[#allocation2 + $0x78] sm:$0xff]
    %v87 = vld [vmem:[#allocation2 + $0x80] sm:$0xff]
    %v88 = vld [vmem:[#allocation2 + $0x88] sm:$0xff]
    %v89 = vld [vmem:[#allocation2 + $0x90] sm:$0xff]
    %v90 = vld [vmem:[#allocation2 + $0x98] sm:$0xff]
    %v91 = vld [vmem:[#allocation2 + $0xa0] sm:$0xff]
    %v92 = vld [vmem:[#allocation2 + $0xa8] sm:$0xff]
    %v93 = vld [vmem:[#allocation2 + $0xb0] sm:$0xff]
    %v94 = vld [vmem:[#allocation2 + $0xb8] sm:$0xff]
    %v95 = vld [vmem:[#allocation2 + $0xc0] sm:$0xff]
    %v96 = vld [vmem:[#allocation2 + $0xc8] sm:$0xff]
    %v97 = vld [vmem:[#allocation2 + $0xd0] sm:$0xff]
    %v98 = vld [vmem:[#allocation2 + $0xd8] sm:$0xff]
    %v99 = vld [vmem:[#allocation2 + $0xe0] sm:$0xff]
    %v100 = vld [vmem:[#allocation2 + $0xe8] sm:$0xff]
    %v101 = vld [vmem:[#allocation2 + $0xf0] sm:$0xff]
    %v102 = vld [vmem:[#allocation2 + $0xf8] sm:$0xff]
    %v103 = vld [vmem:[#allocation2 + $0x100] sm:$0xff]
    %v104 = vld [vmem:[#allocation2 + $0x108] sm:$0xff]
    %v105 = vld [vmem:[#allocation2 + $0x110] sm:$0xff]
    %v106 = vld [vmem:[#allocation2 + $0x118] sm:$0xff]
    %v107 = vld [vmem:[#allocation2 + $0x120] sm:$0xff]
    %v108 = vld [vmem:[#allocation2 + $0x128] sm:$0xff]
    %v109 = vld [vmem:[#allocation2 + $0x130] sm:$0xff]
    %v110 = vld [vmem:[#allocation2 + $0x138] sm:$0xff]
    %v111 = vld [vmem:[#allocation2 + $0x140] sm:$0xff]
    %v112 = vld [vmem:[#allocation2 + $0x148] sm:$0xff]
    %v113 = vld [vmem:[#allocation2 + $0x150] sm:$0xff]
    %v114 = vld [vmem:[#allocation2 + $0x158] sm:$0xff]
    %v115 = vld [vmem:[#allocation2 + $0x160] sm:$0xff]
    %v116 = vld [vmem:[#allocation2 + $0x168] sm:$0xff]
    %v117 = vld [vmem:[#allocation2 + $0x170] sm:$0xff]
    %v118 = vld [vmem:[#allocation2 + $0x178] sm:$0xff]
    %v119 = vld [vmem:[#allocation2 + $0x180] sm:$0xff]
    %v120 = vld [vmem:[#allocation2 + $0x188] sm:$0xff]
    %v121 = vld [vmem:[#allocation2 + $0x190] sm:$0xff]
    %v122 = vld [vmem:[#allocation2 + $0x198] sm:$0xff]
    %v123 = vld [vmem:[#allocation2 + $0x1a0] sm:$0xff]
    %v124 = vld [vmem:[#allocation2 + $0x1a8] sm:$0xff]
    %v125 = vld [vmem:[#allocation2 + $0x1b0] sm:$0xff]
    %v126 = vld [vmem:[#allocation2 + $0x1b8] sm:$0xff]
    %v127 = vld [vmem:[#allocation2 + $0x1c0] sm:$0xff]
    %v128 = vld [vmem:[#allocation2 + $0x1c8] sm:$0xff]
    %v129 = vld [vmem:[#allocation2 + $0x1d0] sm:$0xff]
    %v130 = vld [vmem:[#allocation2 + $0x1d8] sm:$0xff]
    %v131 = vld [vmem:[#allocation2 + $0x1e0] sm:$0xff]
    %v132 = vld [vmem:[#allocation2 + $0x1e8] sm:$0xff]
    %v133 = vld [vmem:[#allocation2 + $0x1f0] sm:$0xff]
    %v134 = vld [vmem:[#allocation2 + $0x1f8] sm:$0xff]
    %v135 = vld [vmem:[#allocation2 + $0x200] sm:$0xff]
    %v136 = vld [vmem:[#allocation2 + $0x208] sm:$0xff]
    %v137 = vld [vmem:[#allocation2 + $0x210] sm:$0xff]
    %v138 = vld [vmem:[#allocation2 + $0x218] sm:$0xff]
    %v139 = vld [vmem:[#allocation2 + $0x220] sm:$0xff]
    %v140 = vld [vmem:[#allocation2 + $0x228] sm:$0xff]
    %v141 = vld [vmem:[#allocation2 + $0x230] sm:$0xff]
    %v142 = vld [vmem:[#allocation2 + $0x238] sm:$0xff]
    %v143 = vld [vmem:[#allocation2 + $0x240] sm:$0xff]
    %v144 = vld [vmem:[#allocation2 + $0x248] sm:$0xff]
    %v145 = vld [vmem:[#allocation2 + $0x250] sm:$0xff]
    %v146 = vld [vmem:[#allocation2 + $0x258] sm:$0xff]
    %v147 = vld [vmem:[#allocation2 + $0x260] sm:$0xff]
    %v148 = vld [vmem:[#allocation2 + $0x268] sm:$0xff]
    %v149 = vld [vmem:[#allocation2 + $0x270] sm:$0xff]
    %v150 = vld [vmem:[#allocation2 + $0x278] sm:$0xff]
    %v151 = vld [vmem:[#allocation2 + $0x280] sm:$0xff]
    %v152 = vld [vmem:[#allocation2 + $0x288] sm:$0xff]
    %v153 = vld [vmem:[#allocation2 + $0x290] sm:$0xff]
    %v154 = vld [vmem:[#allocation2 + $0x298] sm:$0xff]
    %v155 = vld [vmem:[#allocation2 + $0x2a0] sm:$0xff]
    %v156 = vld [vmem:[#allocation2 + $0x2a8] sm:$0xff]
    %v157 = vld [vmem:[#allocation2 + $0x2b0] sm:$0xff]
    %v158 = vld [vmem:[#allocation2 + $0x2b8] sm:$0xff]
    %v159 = vld [vmem:[#allocation2 + $0x2c0] sm:$0xff]
    %v160 = vld [vmem:[#allocation2 + $0x2c8] sm:$0xff]
    %v161 = vld [vmem:[#allocation2 + $0x2d0] sm:$0xff]
    %v162 = vld [vmem:[#allocation2 + $0x2d8] sm:$0xff]
    %v163 = vld [vmem:[#allocation2 + $0x2e0] sm:$0xff]
    %v164 = vld [vmem:[#allocation2 + $0x2e8] sm:$0xff]
    %v165 = vld [vmem:[#allocation2 + $0x2f0] sm:$0xff]
    %v166 = vld [vmem:[#allocation2 + $0x2f8] sm:$0xff]
    %v167 = vld [vmem:[#allocation2 + $0x300] sm:$0xff]
    %v168 = vld [vmem:[#allocation2 + $0x308] sm:$0xff]
    %v169 = vld [vmem:[#allocation2 + $0x310] sm:$0xff]
    %v170 = vld [vmem:[#allocation2 + $0x318] sm:$0xff]
    %v171 = vld [vmem:[#allocation2 + $0x320] sm:$0xff]
    %v172 = vld [vmem:[#allocation2 + $0x328] sm:$0xff]
    %v173 = vld [vmem:[#allocation2 + $0x330] sm:$0xff]
    %v174 = vld [vmem:[#allocation2 + $0x338] sm:$0xff]
    %v175 = vld [vmem:[#allocation2 + $0x340] sm:$0xff]
    %v176 = vld [vmem:[#allocation2 + $0x348] sm:$0xff]
    %v177 = vld [vmem:[#allocation2 + $0x350] sm:$0xff]
    %v178 = vld [vmem:[#allocation2 + $0x358] sm:$0xff]
    %v179 = vld [vmem:[#allocation2 + $0x360] sm:$0xff]
    %v180 = vld [vmem:[#allocation2 + $0x368] sm:$0xff]
    %v181 = vld [vmem:[#allocation2 + $0x370] sm:$0xff]
    %v182 = vld [vmem:[#allocation2 + $0x378] sm:$0xff]
    %v183 = vld [vmem:[#allocation2 + $0x380] sm:$0xff]
    %v184 = vld [vmem:[#allocation2 + $0x388] sm:$0xff]
    %v185 = vld [vmem:[#allocation2 + $0x390] sm:$0xff]
    %v186 = vld [vmem:[#allocation2 + $0x398] sm:$0xff]
    %v187 = vld [vmem:[#allocation2 + $0x3a0] sm:$0xff]
    %v188 = vld [vmem:[#allocation2 + $0x3a8] sm:$0xff]
    %v189 = vld [vmem:[#allocation2 + $0x3b0] sm:$0xff]
    %v190 = vld [vmem:[#allocation2 + $0x3b8] sm:$0xff]
    %v191 = vld [vmem:[#allocation2 + $0x3c0] sm:$0xff]
    %v192 = vld [vmem:[#allocation2 + $0x3c8] sm:$0xff]
    %v193 = vld [vmem:[#allocation2 + $0x3d0] sm:$0xff]
    %v194 = vld [vmem:[#allocation2 + $0x3d8] sm:$0xff]
    %v195 = vld [vmem:[#allocation2 + $0x3e0] sm:$0xff]
    %v196 = vld [vmem:[#allocation2 + $0x3e8] sm:$0xff]
    %v197 = vld [vmem:[#allocation2 + $0x3f0] sm:$0xff]
    %v198 = vld [vmem:[#allocation2 + $0x3f8] sm:$0xff]
    %v199 = vld [vmem:[#allocation2 + $0x400] sm:$0xff]
    %v200 = vld [vmem:[#allocation2 + $0x408] sm:$0xff]
    %v201 = vld [vmem:[#allocation2 + $0x410] sm:$0xff]
    %v202 = vld [vmem:[#allocation2 + $0x418] sm:$0xff]
    %v203 = vld [vmem:[#allocation2 + $0x420] sm:$0xff]
    %v204 = vld [vmem:[#allocation2 + $0x428] sm:$0xff]
    %v205 = vld [vmem:[#allocation2 + $0x430] sm:$0xff]
    %v206 = vld [vmem:[#allocation2 + $0x438] sm:$0xff]
    %v207 = vld [vmem:[#allocation2 + $0x440] sm:$0xff]
    %v208 = vld [vmem:[#allocation2 + $0x448] sm:$0xff]
    %v209 = vld [vmem:[#allocation2 + $0x450] sm:$0xff]
    %v210 = vld [vmem:[#allocation2 + $0x458] sm:$0xff]
    %v211 = vld [vmem:[#allocation2 + $0x460] sm:$0xff]
    %v212 = vld [vmem:[#allocation2 + $0x468] sm:$0xff]
    %v213 = vld [vmem:[#allocation2 + $0x470] sm:$0xff]
    %v214 = vld [vmem:[#allocation2 + $0x478] sm:$0xff]
    %v215 = vld [vmem:[#allocation2 + $0x480] sm:$0xff]
    %v216 = vld [vmem:[#allocation2 + $0x488] sm:$0xff]
    %v217 = vld [vmem:[#allocation2 + $0x490] sm:$0xff]
    %v218 = vld [vmem:[#allocation2 + $0x498] sm:$0xff]
    %v219 = vld [vmem:[#allocation2 + $0x4a0] sm:$0xff]
    %v220 = vld [vmem:[#allocation2 + $0x4a8] sm:$0xff]
    %v221 = vld [vmem:[#allocation2 + $0x4b0] sm:$0xff]
    %v222 = vld [vmem:[#allocation2 + $0x4b8] sm:$0xff]
    %v223 = vld [vmem:[#allocation2 + $0x4c0] sm:$0xff]
    %v224 = vld [vmem:[#allocation2 + $0x4c8] sm:$0xff]
    %v225 = vld [vmem:[#allocation2 + $0x4d0] sm:$0xff]
    %v226 = vld [vmem:[#allocation2 + $0x4d8] sm:$0xff]
    %v227 = vld [vmem:[#allocation2 + $0x4e0] sm:$0xff]
    %v228 = vld [vmem:[#allocation2 + $0x4e8] sm:$0xff]
    %v229 = vld [vmem:[#allocation2 + $0x4f0] sm:$0xff]
    %v230 = vld [vmem:[#allocation2 + $0x4f8] sm:$0xff]
    %v231 = vld [vmem:[#allocation2 + $0x500] sm:$0xff]
    %v232 = vld [vmem:[#allocation2 + $0x508] sm:$0xff]
    %v233 = vld [vmem:[#allocation2 + $0x510] sm:$0xff]
    %v234 = vld [vmem:[#allocation2 + $0x518] sm:$0xff]
    %v235 = vld [vmem:[#allocation2 + $0x520] sm:$0xff]
    %v236 = vld [vmem:[#allocation2 + $0x528] sm:$0xff]
    %v237 = vld [vmem:[#allocation2 + $0x530] sm:$0xff]
    %v238 = vld [vmem:[#allocation2 + $0x538] sm:$0xff]
    %v239 = vld [vmem:[#allocation2 + $0x540] sm:$0xff]
    %v240 = vld [vmem:[#allocation2 + $0x548] sm:$0xff]
    %v241 = vld [vmem:[#allocation2 + $0x550] sm:$0xff]
    %v242 = vld [vmem:[#allocation2 + $0x558] sm:$0xff]
    %v243 = vld [vmem:[#allocation2 + $0x560] sm:$0xff]
    %v244 = vld [vmem:[#allocation2 + $0x568] sm:$0xff]
    %v245 = vld [vmem:[#allocation2 + $0x570] sm:$0xff]
    %v246 = vld [vmem:[#allocation2 + $0x578] sm:$0xff]
    %v247 = vld [vmem:[#allocation2 + $0x580] sm:$0xff]
    %v248 = vld [vmem:[#allocation2 + $0x588] sm:$0xff]
    %v249 = vld [vmem:[#allocation2 + $0x590] sm:$0xff]
    %v250 = vld [vmem:[#allocation2 + $0x598] sm:$0xff]
    %v251 = vld [vmem:[#allocation2 + $0x5a0] sm:$0xff]
    %v252 = vld [vmem:[#allocation2 + $0x5a8] sm:$0xff]
    %v253 = vld [vmem:[#allocation2 + $0x5b0] sm:$0xff]
    %v254 = vld [vmem:[#allocation2 + $0x5b8] sm:$0xff]
    %v255 = vld [vmem:[#allocation2 + $0x5c0] sm:$0xff]
    %v256 = vld [vmem:[#allocation2 + $0x5c8] sm:$0xff]
    %v257 = vld [vmem:[#allocation2 + $0x5d0] sm:$0xff]
    %v258 = vld [vmem:[#allocation2 + $0x5d8] sm:$0xff]
    %v259 = vld [vmem:[#allocation2 + $0x5e0] sm:$0xff]
    %v260 = vld [vmem:[#allocation2 + $0x5e8] sm:$0xff]
    %v261 = vld [vmem:[#allocation2 + $0x5f0] sm:$0xff]
    %v262 = vld [vmem:[#allocation2 + $0x5f8] sm:$0xff]
    %v263 = vld [vmem:[%s3] sm:$0xf]
    %v264 = vld [vmem:[%s3 + $0x4] sm:$0xf]
    %v265 = vld [vmem:[%s3 + $0x8] sm:$0xf]
    %v266 = vld [vmem:[%s3 + $0xc] sm:$0xf]
    %v267 = vld [vmem:[%s3 + $0x10] sm:$0xf]
    %v268 = vld [vmem:[%s3 + $0x14] sm:$0xf]
    %v269 = vld [vmem:[%s3 + $0x18] sm:$0xf]
    %v270 = vld [vmem:[%s3 + $0x1c] sm:$0xf]
    %v271 = vld [vmem:[%s3 + $0x20] sm:$0xf]
    %v272 = vld [vmem:[%s3 + $0x24] sm:$0xf]
    %v273 = vld [vmem:[%s3 + $0x28] sm:$0xf]
    %v274 = vld [vmem:[%s3 + $0x2c] sm:$0xf]
    %v275 = vld [vmem:[%s3 + $0x30] sm:$0xf]
    %v276 = vld [vmem:[%s3 + $0x34] sm:$0xf]
    %v277 = vld [vmem:[%s3 + $0x38] sm:$0xf]
    %v278 = vld [vmem:[%s3 + $0x3c] sm:$0xf]
    %v279 = vld [vmem:[%s3 + $0x40] sm:$0xf]
    %v280 = vld [vmem:[%s3 + $0x44] sm:$0xf]
    %v281 = vld [vmem:[%s3 + $0x48] sm:$0xf]
    %v282 = vld [vmem:[%s3 + $0x4c] sm:$0xf]
    %v283 = vld [vmem:[%s3 + $0x50] sm:$0xf]
    %v284 = vld [vmem:[%s3 + $0x54] sm:$0xf]
    %v285 = vld [vmem:[%s3 + $0x58] sm:$0xf]
    %v286 = vld [vmem:[%s3 + $0x5c] sm:$0xf]
    %v287 = vld [vmem:[%s3 + $0x60] sm:$0xf]
    %v288 = vld [vmem:[%s3 + $0x64] sm:$0xf]
    %v289 = vld [vmem:[%s3 + $0x68] sm:$0xf]
    %v290 = vld [vmem:[%s3 + $0x6c] sm:$0xf]
    %v291 = vld [vmem:[%s3 + $0x70] sm:$0xf]
    %v292 = vld [vmem:[%s3 + $0x74] sm:$0xf]
    %v293 = vld [vmem:[%s3 + $0x78] sm:$0xf]
    %v294 = vld [vmem:[%s3 + $0x7c] sm:$0xf]
    %v295 = vld [vmem:[%s3 + $0x80] sm:$0xf]
    %v296 = vld [vmem:[%s3 + $0x84] sm:$0xf]
    %v297 = vld [vmem:[%s3 + $0x88] sm:$0xf]
    %v298 = vld [vmem:[%s3 + $0x8c] sm:$0xf]
    %v299 = vld [vmem:[%s3 + $0x90] sm:$0xf]
    %v300 = vld [vmem:[%s3 + $0x94] sm:$0xf]
    %v301 = vld [vmem:[%s3 + $0x98] sm:$0xf]
    %v302 = vld [vmem:[%s3 + $0x9c] sm:$0xf]
    %v303 = vld [vmem:[%s3 + $0xa0] sm:$0xf]
    %v304 = vld [vmem:[%s3 + $0xa4] sm:$0xf]
    %v305 = vld [vmem:[%s3 + $0xa8] sm:$0xf]
    %v306 = vld [vmem:[%s3 + $0xac] sm:$0xf]
    %v307 = vld [vmem:[%s3 + $0xb0] sm:$0xf]
    %v308 = vld [vmem:[%s3 + $0xb4] sm:$0xf]
    %v309 = vld [vmem:[%s3 + $0xb8] sm:$0xf]
    %v310 = vld [vmem:[%s3 + $0xbc] sm:$0xf]
    %v311 = vld [vmem:[%s3 + $0xc0] sm:$0xf]
    %v312 = vld [vmem:[%s3 + $0xc4] sm:$0xf]
    %v313 = vld [vmem:[%s3 + $0xc8] sm:$0xf]
    %v314 = vld [vmem:[%s3 + $0xcc] sm:$0xf]
    %v315 = vld [vmem:[%s3 + $0xd0] sm:$0xf]
    %v316 = vld [vmem:[%s3 + $0xd4] sm:$0xf]
    %v317 = vld [vmem:[%s3 + $0xd8] sm:$0xf]
    %v318 = vld [vmem:[%s3 + $0xdc] sm:$0xf]
    %v319 = vld [vmem:[%s3 + $0xe0] sm:$0xf]
    %v320 = vld [vmem:[%s3 + $0xe4] sm:$0xf]
    %v321 = vld [vmem:[%s3 + $0xe8] sm:$0xf]
    %v322 = vld [vmem:[%s3 + $0xec] sm:$0xf]
    %v323 = vld [vmem:[%s3 + $0xf0] sm:$0xf]
    %v324 = vld [vmem:[%s3 + $0xf4] sm:$0xf]
    %v325 = vld [vmem:[%s3 + $0xf8] sm:$0xf]
    %v326 = vld [vmem:[%s3 + $0xfc] sm:$0xf]
    %v327 = vld [vmem:[%s3 + $0x100] sm:$0xf]
    %v328 = vld [vmem:[%s3 + $0x104] sm:$0xf]
    %v329 = vld [vmem:[%s3 + $0x108] sm:$0xf]
    %v330 = vld [vmem:[%s3 + $0x10c] sm:$0xf]
    %v331 = vld [vmem:[%s3 + $0x110] sm:$0xf]
    %v332 = vld [vmem:[%s3 + $0x114] sm:$0xf]
    %v333 = vld [vmem:[%s3 + $0x118] sm:$0xf]
    %v334 = vld [vmem:[%s3 + $0x11c] sm:$0xf]
    %v335 = vld [vmem:[%s3 + $0x120] sm:$0xf]
    %v336 = vld [vmem:[%s3 + $0x124] sm:$0xf]
    %v337 = vld [vmem:[%s3 + $0x128] sm:$0xf]
    %v338 = vld [vmem:[%s3 + $0x12c] sm:$0xf]
    %v339 = vld [vmem:[%s3 + $0x130] sm:$0xf]
    %v340 = vld [vmem:[%s3 + $0x134] sm:$0xf]
    %v341 = vld [vmem:[%s3 + $0x138] sm:$0xf]
    %v342 = vld [vmem:[%s3 + $0x13c] sm:$0xf]
    %v343 = vld [vmem:[%s3 + $0x140] sm:$0xf]
    %v344 = vld [vmem:[%s3 + $0x144] sm:$0xf]
    %v345 = vld [vmem:[%s3 + $0x148] sm:$0xf]
    %v346 = vld [vmem:[%s3 + $0x14c] sm:$0xf]
    %v347 = vld [vmem:[%s3 + $0x150] sm:$0xf]
    %v348 = vld [vmem:[%s3 + $0x154] sm:$0xf]
    %v349 = vld [vmem:[%s3 + $0x158] sm:$0xf]
    %v350 = vld [vmem:[%s3 + $0x15c] sm:$0xf]
    %v351 = vld [vmem:[%s3 + $0x160] sm:$0xf]
    %v352 = vld [vmem:[%s3 + $0x164] sm:$0xf]
    %v353 = vld [vmem:[%s3 + $0x168] sm:$0xf]
    %v354 = vld [vmem:[%s3 + $0x16c] sm:$0xf]
    %v355 = vld [vmem:[%s3 + $0x170] sm:$0xf]
    %v356 = vld [vmem:[%s3 + $0x174] sm:$0xf]
    %v357 = vld [vmem:[%s3 + $0x178] sm:$0xf]
    %v358 = vld [vmem:[%s3 + $0x17c] sm:$0xf]
    %v359 = vld [vmem:[%s4] sm:$0x1]
    %v361 = vperm.slane %v359, 0
    %v555 = vunpack.c.l.b16 %v71
    %v556 = vunpack.c.h.b16 %v71
    %v557 = vunpack.c.l.b16 %v72
    %v558 = vunpack.c.h.b16 %v72
    %v559 = vunpack.c.l.b16 %v73
    %v560 = vunpack.c.h.b16 %v73
    %v561 = vunpack.c.l.b16 %v74
    %v562 = vunpack.c.h.b16 %v74
    %v563 = vunpack.c.l.b16 %v75
    %v564 = vunpack.c.h.b16 %v75
    %v565 = vunpack.c.l.b16 %v76
    %v566 = vunpack.c.h.b16 %v76
    %v567 = vunpack.c.l.b16 %v77
    %v568 = vunpack.c.h.b16 %v77
    %v569 = vunpack.c.l.b16 %v78
    %v570 = vunpack.c.h.b16 %v78
    %v571 = vunpack.c.l.b16 %v79
    %v572 = vunpack.c.h.b16 %v79
    %v573 = vunpack.c.l.b16 %v80
    %v574 = vunpack.c.h.b16 %v80
    %v575 = vunpack.c.l.b16 %v81
    %v576 = vunpack.c.h.b16 %v81
    %v577 = vunpack.c.l.b16 %v82
    %v578 = vunpack.c.h.b16 %v82
    %v579 = vunpack.c.l.b16 %v83
    %v580 = vunpack.c.h.b16 %v83
    %v581 = vunpack.c.l.b16 %v84
    %v582 = vunpack.c.h.b16 %v84
    %v583 = vunpack.c.l.b16 %v85
    %v584 = vunpack.c.h.b16 %v85
    %v585 = vunpack.c.l.b16 %v86
    %v586 = vunpack.c.h.b16 %v86
    %v587 = vunpack.c.l.b16 %v87
    %v588 = vunpack.c.h.b16 %v87
    %v589 = vunpack.c.l.b16 %v88
    %v590 = vunpack.c.h.b16 %v88
    %v591 = vunpack.c.l.b16 %v89
    %v592 = vunpack.c.h.b16 %v89
    %v593 = vunpack.c.l.b16 %v90
    %v594 = vunpack.c.h.b16 %v90
    %v595 = vunpack.c.l.b16 %v91
    %v596 = vunpack.c.h.b16 %v91
    %v597 = vunpack.c.l.b16 %v92
    %v598 = vunpack.c.h.b16 %v92
    %v599 = vunpack.c.l.b16 %v93
    %v600 = vunpack.c.h.b16 %v93
    %v601 = vunpack.c.l.b16 %v94
    %v602 = vunpack.c.h.b16 %v94
    %v603 = vunpack.c.l.b16 %v95
    %v604 = vunpack.c.h.b16 %v95
    %v605 = vunpack.c.l.b16 %v96
    %v606 = vunpack.c.h.b16 %v96
    %v607 = vunpack.c.l.b16 %v97
    %v608 = vunpack.c.h.b16 %v97
    %v609 = vunpack.c.l.b16 %v98
    %v610 = vunpack.c.h.b16 %v98
    %v611 = vunpack.c.l.b16 %v99
    %v612 = vunpack.c.h.b16 %v99
    %v613 = vunpack.c.l.b16 %v100
    %v614 = vunpack.c.h.b16 %v100
    %v615 = vunpack.c.l.b16 %v101
    %v616 = vunpack.c.h.b16 %v101
    %v617 = vunpack.c.l.b16 %v102
    %v618 = vunpack.c.h.b16 %v102
    %v619 = vunpack.c.l.b16 %v103
    %v620 = vunpack.c.h.b16 %v103
    %v621 = vunpack.c.l.b16 %v104
    %v622 = vunpack.c.h.b16 %v104
    %v623 = vunpack.c.l.b16 %v105
    %v624 = vunpack.c.h.b16 %v105
    %v625 = vunpack.c.l.b16 %v106
    %v626 = vunpack.c.h.b16 %v106
    %v627 = vunpack.c.l.b16 %v107
    %v628 = vunpack.c.h.b16 %v107
    %v629 = vunpack.c.l.b16 %v108
    %v630 = vunpack.c.h.b16 %v108
    %v631 = vunpack.c.l.b16 %v109
    %v632 = vunpack.c.h.b16 %v109
    %v633 = vunpack.c.l.b16 %v110
    %v634 = vunpack.c.h.b16 %v110
    %v635 = vunpack.c.l.b16 %v111
    %v636 = vunpack.c.h.b16 %v111
    %v637 = vunpack.c.l.b16 %v112
    %v638 = vunpack.c.h.b16 %v112
    %v639 = vunpack.c.l.b16 %v113
    %v640 = vunpack.c.h.b16 %v113
    %v641 = vunpack.c.l.b16 %v114
    %v642 = vunpack.c.h.b16 %v114
    %v643 = vunpack.c.l.b16 %v115
    %v644 = vunpack.c.h.b16 %v115
    %v645 = vunpack.c.l.b16 %v116
    %v646 = vunpack.c.h.b16 %v116
    %v647 = vunpack.c.l.b16 %v117
    %v648 = vunpack.c.h.b16 %v117
    %v649 = vunpack.c.l.b16 %v118
    %v650 = vunpack.c.h.b16 %v118
    %v651 = vunpack.c.l.b16 %v119
    %v652 = vunpack.c.h.b16 %v119
    %v653 = vunpack.c.l.b16 %v120
    %v654 = vunpack.c.h.b16 %v120
    %v655 = vunpack.c.l.b16 %v121
    %v656 = vunpack.c.h.b16 %v121
    %v657 = vunpack.c.l.b16 %v122
    %v658 = vunpack.c.h.b16 %v122
    %v659 = vunpack.c.l.b16 %v123
    %v660 = vunpack.c.h.b16 %v123
    %v661 = vunpack.c.l.b16 %v124
    %v662 = vunpack.c.h.b16 %v124
    %v663 = vunpack.c.l.b16 %v125
    %v664 = vunpack.c.h.b16 %v125
    %v665 = vunpack.c.l.b16 %v126
    %v666 = vunpack.c.h.b16 %v126
    %v667 = vunpack.c.l.b16 %v127
    %v668 = vunpack.c.h.b16 %v127
    %v669 = vunpack.c.l.b16 %v128
    %v670 = vunpack.c.h.b16 %v128
    %v671 = vunpack.c.l.b16 %v129
    %v672 = vunpack.c.h.b16 %v129
    %v673 = vunpack.c.l.b16 %v130
    %v674 = vunpack.c.h.b16 %v130
    %v675 = vunpack.c.l.b16 %v131
    %v676 = vunpack.c.h.b16 %v131
    %v677 = vunpack.c.l.b16 %v132
    %v678 = vunpack.c.h.b16 %v132
    %v679 = vunpack.c.l.b16 %v133
    %v680 = vunpack.c.h.b16 %v133
    %v681 = vunpack.c.l.b16 %v134
    %v682 = vunpack.c.h.b16 %v134
    %v683 = vunpack.c.l.b16 %v135
    %v684 = vunpack.c.h.b16 %v135
    %v685 = vunpack.c.l.b16 %v136
    %v686 = vunpack.c.h.b16 %v136
    %v687 = vunpack.c.l.b16 %v137
    %v688 = vunpack.c.h.b16 %v137
    %v689 = vunpack.c.l.b16 %v138
    %v690 = vunpack.c.h.b16 %v138
    %v691 = vunpack.c.l.b16 %v139
    %v692 = vunpack.c.h.b16 %v139
    %v693 = vunpack.c.l.b16 %v140
    %v694 = vunpack.c.h.b16 %v140
    %v695 = vunpack.c.l.b16 %v141
    %v696 = vunpack.c.h.b16 %v141
    %v697 = vunpack.c.l.b16 %v142
    %v698 = vunpack.c.h.b16 %v142
    %v699 = vunpack.c.l.b16 %v143
    %v700 = vunpack.c.h.b16 %v143
    %v701 = vunpack.c.l.b16 %v144
    %v702 = vunpack.c.h.b16 %v144
    %v703 = vunpack.c.l.b16 %v145
    %v704 = vunpack.c.h.b16 %v145
    %v705 = vunpack.c.l.b16 %v146
    %v706 = vunpack.c.h.b16 %v146
    %v707 = vunpack.c.l.b16 %v147
    %v708 = vunpack.c.h.b16 %v147
    %v709 = vunpack.c.l.b16 %v148
    %v710 = vunpack.c.h.b16 %v148
    %v711 = vunpack.c.l.b16 %v149
    %v712 = vunpack.c.h.b16 %v149
    %v713 = vunpack.c.l.b16 %v150
    %v714 = vunpack.c.h.b16 %v150
    %v715 = vunpack.c.l.b16 %v151
    %v716 = vunpack.c.h.b16 %v151
    %v717 = vunpack.c.l.b16 %v152
    %v718 = vunpack.c.h.b16 %v152
    %v719 = vunpack.c.l.b16 %v153
    %v720 = vunpack.c.h.b16 %v153
    %v721 = vunpack.c.l.b16 %v154
    %v722 = vunpack.c.h.b16 %v154
    %v723 = vunpack.c.l.b16 %v155
    %v724 = vunpack.c.h.b16 %v155
    %v725 = vunpack.c.l.b16 %v156
    %v726 = vunpack.c.h.b16 %v156
    %v727 = vunpack.c.l.b16 %v157
    %v728 = vunpack.c.h.b16 %v157
    %v729 = vunpack.c.l.b16 %v158
    %v730 = vunpack.c.h.b16 %v158
    %v731 = vunpack.c.l.b16 %v159
    %v732 = vunpack.c.h.b16 %v159
    %v733 = vunpack.c.l.b16 %v160
    %v734 = vunpack.c.h.b16 %v160
    %v735 = vunpack.c.l.b16 %v161
    %v736 = vunpack.c.h.b16 %v161
    %v737 = vunpack.c.l.b16 %v162
    %v738 = vunpack.c.h.b16 %v162
    %v739 = vunpack.c.l.b16 %v163
    %v740 = vunpack.c.h.b16 %v163
    %v741 = vunpack.c.l.b16 %v164
    %v742 = vunpack.c.h.b16 %v164
    %v743 = vunpack.c.l.b16 %v165
    %v744 = vunpack.c.h.b16 %v165
    %v745 = vunpack.c.l.b16 %v166
    %v746 = vunpack.c.h.b16 %v166
    %v747 = vunpack.c.l.b16 %v167
    %v748 = vunpack.c.h.b16 %v167
    %v749 = vunpack.c.l.b16 %v168
    %v750 = vunpack.c.h.b16 %v168
    %v751 = vunpack.c.l.b16 %v169
    %v752 = vunpack.c.h.b16 %v169
    %v753 = vunpack.c.l.b16 %v170
    %v754 = vunpack.c.h.b16 %v170
    %v755 = vunpack.c.l.b16 %v171
    %v756 = vunpack.c.h.b16 %v171
    %v757 = vunpack.c.l.b16 %v172
    %v758 = vunpack.c.h.b16 %v172
    %v759 = vunpack.c.l.b16 %v173
    %v760 = vunpack.c.h.b16 %v173
    %v761 = vunpack.c.l.b16 %v174
    %v762 = vunpack.c.h.b16 %v174
    %v763 = vunpack.c.l.b16 %v175
    %v764 = vunpack.c.h.b16 %v175
    %v765 = vunpack.c.l.b16 %v176
    %v766 = vunpack.c.h.b16 %v176
    %v767 = vunpack.c.l.b16 %v177
    %v768 = vunpack.c.h.b16 %v177
    %v769 = vunpack.c.l.b16 %v178
    %v770 = vunpack.c.h.b16 %v178
    %v771 = vunpack.c.l.b16 %v179
    %v772 = vunpack.c.h.b16 %v179
    %v773 = vunpack.c.l.b16 %v180
    %v774 = vunpack.c.h.b16 %v180
    %v775 = vunpack.c.l.b16 %v181
    %v776 = vunpack.c.h.b16 %v181
    %v777 = vunpack.c.l.b16 %v182
    %v778 = vunpack.c.h.b16 %v182
    %v779 = vunpack.c.l.b16 %v183
    %v780 = vunpack.c.h.b16 %v183
    %v781 = vunpack.c.l.b16 %v184
    %v782 = vunpack.c.h.b16 %v184
    %v783 = vunpack.c.l.b16 %v185
    %v784 = vunpack.c.h.b16 %v185
    %v785 = vunpack.c.l.b16 %v186
    %v786 = vunpack.c.h.b16 %v186
    %v787 = vunpack.c.l.b16 %v187
    %v788 = vunpack.c.h.b16 %v187
    %v789 = vunpack.c.l.b16 %v188
    %v790 = vunpack.c.h.b16 %v188
    %v791 = vunpack.c.l.b16 %v189
    %v792 = vunpack.c.h.b16 %v189
    %v793 = vunpack.c.l.b16 %v190
    %v794 = vunpack.c.h.b16 %v190
    %v795 = vunpack.c.l.b16 %v191
    %v796 = vunpack.c.h.b16 %v191
    %v797 = vunpack.c.l.b16 %v192
    %v798 = vunpack.c.h.b16 %v192
    %v799 = vunpack.c.l.b16 %v193
    %v800 = vunpack.c.h.b16 %v193
    %v801 = vunpack.c.l.b16 %v194
    %v802 = vunpack.c.h.b16 %v194
    %v803 = vunpack.c.l.b16 %v195
    %v804 = vunpack.c.h.b16 %v195
    %v805 = vunpack.c.l.b16 %v196
    %v806 = vunpack.c.h.b16 %v196
    %v807 = vunpack.c.l.b16 %v197
    %v808 = vunpack.c.h.b16 %v197
    %v809 = vunpack.c.l.b16 %v198
    %v810 = vunpack.c.h.b16 %v198
    %v811 = vunpack.c.l.b16 %v199
    %v812 = vunpack.c.h.b16 %v199
    %v813 = vunpack.c.l.b16 %v200
    %v814 = vunpack.c.h.b16 %v200
    %v815 = vunpack.c.l.b16 %v201
    %v816 = vunpack.c.h.b16 %v201
    %v817 = vunpack.c.l.b16 %v202
    %v818 = vunpack.c.h.b16 %v202
    %v819 = vunpack.c.l.b16 %v203
    %v820 = vunpack.c.h.b16 %v203
    %v821 = vunpack.c.l.b16 %v204
    %v822 = vunpack.c.h.b16 %v204
    %v823 = vunpack.c.l.b16 %v205
    %v824 = vunpack.c.h.b16 %v205
    %v825 = vunpack.c.l.b16 %v206
    %v826 = vunpack.c.h.b16 %v206
    %v827 = vunpack.c.l.b16 %v207
    %v828 = vunpack.c.h.b16 %v207
    %v829 = vunpack.c.l.b16 %v208
    %v830 = vunpack.c.h.b16 %v208
    %v831 = vunpack.c.l.b16 %v209
    %v832 = vunpack.c.h.b16 %v209
    %v833 = vunpack.c.l.b16 %v210
    %v834 = vunpack.c.h.b16 %v210
    %v835 = vunpack.c.l.b16 %v211
    %v836 = vunpack.c.h.b16 %v211
    %v837 = vunpack.c.l.b16 %v212
    %v838 = vunpack.c.h.b16 %v212
    %v839 = vunpack.c.l.b16 %v213
    %v840 = vunpack.c.h.b16 %v213
    %v841 = vunpack.c.l.b16 %v214
    %v842 = vunpack.c.h.b16 %v214
    %v843 = vunpack.c.l.b16 %v215
    %v844 = vunpack.c.h.b16 %v215
    %v845 = vunpack.c.l.b16 %v216
    %v846 = vunpack.c.h.b16 %v216
    %v847 = vunpack.c.l.b16 %v217
    %v848 = vunpack.c.h.b16 %v217
    %v849 = vunpack.c.l.b16 %v218
    %v850 = vunpack.c.h.b16 %v218
    %v851 = vunpack.c.l.b16 %v219
    %v852 = vunpack.c.h.b16 %v219
    %v853 = vunpack.c.l.b16 %v220
    %v854 = vunpack.c.h.b16 %v220
    %v855 = vunpack.c.l.b16 %v221
    %v856 = vunpack.c.h.b16 %v221
    %v857 = vunpack.c.l.b16 %v222
    %v858 = vunpack.c.h.b16 %v222
    %v859 = vunpack.c.l.b16 %v223
    %v860 = vunpack.c.h.b16 %v223
    %v861 = vunpack.c.l.b16 %v224
    %v862 = vunpack.c.h.b16 %v224
    %v863 = vunpack.c.l.b16 %v225
    %v864 = vunpack.c.h.b16 %v225
    %v865 = vunpack.c.l.b16 %v226
    %v866 = vunpack.c.h.b16 %v226
    %v867 = vunpack.c.l.b16 %v227
    %v868 = vunpack.c.h.b16 %v227
    %v869 = vunpack.c.l.b16 %v228
    %v870 = vunpack.c.h.b16 %v228
    %v871 = vunpack.c.l.b16 %v229
    %v872 = vunpack.c.h.b16 %v229
    %v873 = vunpack.c.l.b16 %v230
    %v874 = vunpack.c.h.b16 %v230
    %v875 = vunpack.c.l.b16 %v231
    %v876 = vunpack.c.h.b16 %v231
    %v877 = vunpack.c.l.b16 %v232
    %v878 = vunpack.c.h.b16 %v232
    %v879 = vunpack.c.l.b16 %v233
    %v880 = vunpack.c.h.b16 %v233
    %v881 = vunpack.c.l.b16 %v234
    %v882 = vunpack.c.h.b16 %v234
    %v883 = vunpack.c.l.b16 %v235
    %v884 = vunpack.c.h.b16 %v235
    %v885 = vunpack.c.l.b16 %v236
    %v886 = vunpack.c.h.b16 %v236
    %v887 = vunpack.c.l.b16 %v237
    %v888 = vunpack.c.h.b16 %v237
    %v889 = vunpack.c.l.b16 %v238
    %v890 = vunpack.c.h.b16 %v238
    %v891 = vunpack.c.l.b16 %v239
    %v892 = vunpack.c.h.b16 %v239
    %v893 = vunpack.c.l.b16 %v240
    %v894 = vunpack.c.h.b16 %v240
    %v895 = vunpack.c.l.b16 %v241
    %v896 = vunpack.c.h.b16 %v241
    %v897 = vunpack.c.l.b16 %v242
    %v898 = vunpack.c.h.b16 %v242
    %v899 = vunpack.c.l.b16 %v243
    %v900 = vunpack.c.h.b16 %v243
    %v901 = vunpack.c.l.b16 %v244
    %v902 = vunpack.c.h.b16 %v244
    %v903 = vunpack.c.l.b16 %v245
    %v904 = vunpack.c.h.b16 %v245
    %v905 = vunpack.c.l.b16 %v246
    %v906 = vunpack.c.h.b16 %v246
    %v907 = vunpack.c.l.b16 %v247
    %v908 = vunpack.c.h.b16 %v247
    %v909 = vunpack.c.l.b16 %v248
    %v910 = vunpack.c.h.b16 %v248
    %v911 = vunpack.c.l.b16 %v249
    %v912 = vunpack.c.h.b16 %v249
    %v913 = vunpack.c.l.b16 %v250
    %v914 = vunpack.c.h.b16 %v250
    %v915 = vunpack.c.l.b16 %v251
    %v916 = vunpack.c.h.b16 %v251
    %v917 = vunpack.c.l.b16 %v252
    %v918 = vunpack.c.h.b16 %v252
    %v919 = vunpack.c.l.b16 %v253
    %v920 = vunpack.c.h.b16 %v253
    %v921 = vunpack.c.l.b16 %v254
    %v922 = vunpack.c.h.b16 %v254
    %v923 = vunpack.c.l.b16 %v255
    %v924 = vunpack.c.h.b16 %v255
    %v925 = vunpack.c.l.b16 %v256
    %v926 = vunpack.c.h.b16 %v256
    %v927 = vunpack.c.l.b16 %v257
    %v928 = vunpack.c.h.b16 %v257
    %v929 = vunpack.c.l.b16 %v258
    %v930 = vunpack.c.h.b16 %v258
    %v931 = vunpack.c.l.b16 %v259
    %v932 = vunpack.c.h.b16 %v259
    %v933 = vunpack.c.l.b16 %v260
    %v934 = vunpack.c.h.b16 %v260
    %v935 = vunpack.c.l.b16 %v261
    %v936 = vunpack.c.h.b16 %v261
    %v937 = vunpack.c.l.b16 %v262
    %v938 = vunpack.c.h.b16 %v262
    %v939 = vpack.c.b16 %v561, %v555
    %v940 = vpack.c.b16 %v562, %v556
    %v941 = vpack.c.b16 %v563, %v557
    %v942 = vpack.c.b16 %v564, %v558
    %v943 = vpack.c.b16 %v565, %v559
    %v944 = vpack.c.b16 %v566, %v560
    %v945 = vpack.c.b16 %v573, %v567
    %v946 = vpack.c.b16 %v574, %v568
    %v947 = vpack.c.b16 %v575, %v569
    %v948 = vpack.c.b16 %v576, %v570
    %v949 = vpack.c.b16 %v577, %v571
    %v950 = vpack.c.b16 %v578, %v572
    %v951 = vpack.c.b16 %v585, %v579
    %v952 = vpack.c.b16 %v586, %v580
    %v953 = vpack.c.b16 %v587, %v581
    %v954 = vpack.c.b16 %v588, %v582
    %v955 = vpack.c.b16 %v589, %v583
    %v956 = vpack.c.b16 %v590, %v584
    %v957 = vpack.c.b16 %v597, %v591
    %v958 = vpack.c.b16 %v598, %v592
    %v959 = vpack.c.b16 %v599, %v593
    %v960 = vpack.c.b16 %v600, %v594
    %v961 = vpack.c.b16 %v601, %v595
    %v962 = vpack.c.b16 %v602, %v596
    %v963 = vpack.c.b16 %v609, %v603
    %v964 = vpack.c.b16 %v610, %v604
    %v965 = vpack.c.b16 %v611, %v605
    %v966 = vpack.c.b16 %v612, %v606
    %v967 = vpack.c.b16 %v613, %v607
    %v968 = vpack.c.b16 %v614, %v608
    %v969 = vpack.c.b16 %v621, %v615
    %v970 = vpack.c.b16 %v622, %v616
    %v971 = vpack.c.b16 %v623, %v617
    %v972 = vpack.c.b16 %v624, %v618
    %v973 = vpack.c.b16 %v625, %v619
    %v974 = vpack.c.b16 %v626, %v620
    %v975 = vpack.c.b16 %v633, %v627
    %v976 = vpack.c.b16 %v634, %v628
    %v977 = vpack.c.b16 %v635, %v629
    %v978 = vpack.c.b16 %v636, %v630
    %v979 = vpack.c.b16 %v637, %v631
    %v980 = vpack.c.b16 %v638, %v632
    %v981 = vpack.c.b16 %v645, %v639
    %v982 = vpack.c.b16 %v646, %v640
    %v983 = vpack.c.b16 %v647, %v641
    %v984 = vpack.c.b16 %v648, %v642
    %v985 = vpack.c.b16 %v649, %v643
    %v986 = vpack.c.b16 %v650, %v644
    %v987 = vpack.c.b16 %v657, %v651
    %v988 = vpack.c.b16 %v658, %v652
    %v989 = vpack.c.b16 %v659, %v653
    %v990 = vpack.c.b16 %v660, %v654
    %v991 = vpack.c.b16 %v661, %v655
    %v992 = vpack.c.b16 %v662, %v656
    %v993 = vpack.c.b16 %v669, %v663
    %v994 = vpack.c.b16 %v670, %v664
    %v995 = vpack.c.b16 %v671, %v665
    %v996 = vpack.c.b16 %v672, %v666
    %v997 = vpack.c.b16 %v673, %v667
    %v998 = vpack.c.b16 %v674, %v668
    %v999 = vpack.c.b16 %v681, %v675
    %v1000 = vpack.c.b16 %v682, %v676
    %v1001 = vpack.c.b16 %v683, %v677
    %v1002 = vpack.c.b16 %v684, %v678
    %v1003 = vpack.c.b16 %v685, %v679
    %v1004 = vpack.c.b16 %v686, %v680
    %v1005 = vpack.c.b16 %v693, %v687
    %v1006 = vpack.c.b16 %v694, %v688
    %v1007 = vpack.c.b16 %v695, %v689
    %v1008 = vpack.c.b16 %v696, %v690
    %v1009 = vpack.c.b16 %v697, %v691
    %v1010 = vpack.c.b16 %v698, %v692
    %v1011 = vpack.c.b16 %v705, %v699
    %v1012 = vpack.c.b16 %v706, %v700
    %v1013 = vpack.c.b16 %v707, %v701
    %v1014 = vpack.c.b16 %v708, %v702
    %v1015 = vpack.c.b16 %v709, %v703
    %v1016 = vpack.c.b16 %v710, %v704
    %v1017 = vpack.c.b16 %v717, %v711
    %v1018 = vpack.c.b16 %v718, %v712
    %v1019 = vpack.c.b16 %v719, %v713
    %v1020 = vpack.c.b16 %v720, %v714
    %v1021 = vpack.c.b16 %v721, %v715
    %v1022 = vpack.c.b16 %v722, %v716
    %v1023 = vpack.c.b16 %v729, %v723
    %v1024 = vpack.c.b16 %v730, %v724
    %v1025 = vpack.c.b16 %v731, %v725
    %v1026 = vpack.c.b16 %v732, %v726
    %v1027 = vpack.c.b16 %v733, %v727
    %v1028 = vpack.c.b16 %v734, %v728
    %v1029 = vpack.c.b16 %v741, %v735
    %v1030 = vpack.c.b16 %v742, %v736
    %v1031 = vpack.c.b16 %v743, %v737
    %v1032 = vpack.c.b16 %v744, %v738
    %v1033 = vpack.c.b16 %v745, %v739
    %v1034 = vpack.c.b16 %v746, %v740
    %v1035 = vpack.c.b16 %v753, %v747
    %v1036 = vpack.c.b16 %v754, %v748
    %v1037 = vpack.c.b16 %v755, %v749
    %v1038 = vpack.c.b16 %v756, %v750
    %v1039 = vpack.c.b16 %v757, %v751
    %v1040 = vpack.c.b16 %v758, %v752
    %v1041 = vpack.c.b16 %v765, %v759
    %v1042 = vpack.c.b16 %v766, %v760
    %v1043 = vpack.c.b16 %v767, %v761
    %v1044 = vpack.c.b16 %v768, %v762
    %v1045 = vpack.c.b16 %v769, %v763
    %v1046 = vpack.c.b16 %v770, %v764
    %v1047 = vpack.c.b16 %v777, %v771
    %v1048 = vpack.c.b16 %v778, %v772
    %v1049 = vpack.c.b16 %v779, %v773
    %v1050 = vpack.c.b16 %v780, %v774
    %v1051 = vpack.c.b16 %v781, %v775
    %v1052 = vpack.c.b16 %v782, %v776
    %v1053 = vpack.c.b16 %v789, %v783
    %v1054 = vpack.c.b16 %v790, %v784
    %v1055 = vpack.c.b16 %v791, %v785
    %v1056 = vpack.c.b16 %v792, %v786
    %v1057 = vpack.c.b16 %v793, %v787
    %v1058 = vpack.c.b16 %v794, %v788
    %v1059 = vpack.c.b16 %v801, %v795
    %v1060 = vpack.c.b16 %v802, %v796
    %v1061 = vpack.c.b16 %v803, %v797
    %v1062 = vpack.c.b16 %v804, %v798
    %v1063 = vpack.c.b16 %v805, %v799
    %v1064 = vpack.c.b16 %v806, %v800
    %v1065 = vpack.c.b16 %v813, %v807
    %v1066 = vpack.c.b16 %v814, %v808
    %v1067 = vpack.c.b16 %v815, %v809
    %v1068 = vpack.c.b16 %v816, %v810
    %v1069 = vpack.c.b16 %v817, %v811
    %v1070 = vpack.c.b16 %v818, %v812
    %v1071 = vpack.c.b16 %v825, %v819
    %v1072 = vpack.c.b16 %v826, %v820
    %v1073 = vpack.c.b16 %v827, %v821
    %v1074 = vpack.c.b16 %v828, %v822
    %v1075 = vpack.c.b16 %v829, %v823
    %v1076 = vpack.c.b16 %v830, %v824
    %v1077 = vpack.c.b16 %v837, %v831
    %v1078 = vpack.c.b16 %v838, %v832
    %v1079 = vpack.c.b16 %v839, %v833
    %v1080 = vpack.c.b16 %v840, %v834
    %v1081 = vpack.c.b16 %v841, %v835
    %v1082 = vpack.c.b16 %v842, %v836
    %v1083 = vpack.c.b16 %v849, %v843
    %v1084 = vpack.c.b16 %v850, %v844
    %v1085 = vpack.c.b16 %v851, %v845
    %v1086 = vpack.c.b16 %v852, %v846
    %v1087 = vpack.c.b16 %v853, %v847
    %v1088 = vpack.c.b16 %v854, %v848
    %v1089 = vpack.c.b16 %v861, %v855
    %v1090 = vpack.c.b16 %v862, %v856
    %v1091 = vpack.c.b16 %v863, %v857
    %v1092 = vpack.c.b16 %v864, %v858
    %v1093 = vpack.c.b16 %v865, %v859
    %v1094 = vpack.c.b16 %v866, %v860
    %v1095 = vpack.c.b16 %v873, %v867
    %v1096 = vpack.c.b16 %v874, %v868
    %v1097 = vpack.c.b16 %v875, %v869
    %v1098 = vpack.c.b16 %v876, %v870
    %v1099 = vpack.c.b16 %v877, %v871
    %v1100 = vpack.c.b16 %v878, %v872
    %v1101 = vpack.c.b16 %v885, %v879
    %v1102 = vpack.c.b16 %v886, %v880
    %v1103 = vpack.c.b16 %v887, %v881
    %v1104 = vpack.c.b16 %v888, %v882
    %v1105 = vpack.c.b16 %v889, %v883
    %v1106 = vpack.c.b16 %v890, %v884
    %v1107 = vpack.c.b16 %v897, %v891
    %v1108 = vpack.c.b16 %v898, %v892
    %v1109 = vpack.c.b16 %v899, %v893
    %v1110 = vpack.c.b16 %v900, %v894
    %v1111 = vpack.c.b16 %v901, %v895
    %v1112 = vpack.c.b16 %v902, %v896
    %v1113 = vpack.c.b16 %v909, %v903
    %v1114 = vpack.c.b16 %v910, %v904
    %v1115 = vpack.c.b16 %v911, %v905
    %v1116 = vpack.c.b16 %v912, %v906
    %v1117 = vpack.c.b16 %v913, %v907
    %v1118 = vpack.c.b16 %v914, %v908
    %v1119 = vpack.c.b16 %v921, %v915
    %v1120 = vpack.c.b16 %v922, %v916
    %v1121 = vpack.c.b16 %v923, %v917
    %v1122 = vpack.c.b16 %v924, %v918
    %v1123 = vpack.c.b16 %v925, %v919
    %v1124 = vpack.c.b16 %v926, %v920
    %v1125 = vpack.c.b16 %v933, %v927
    %v1126 = vpack.c.b16 %v934, %v928
    %v1127 = vpack.c.b16 %v935, %v929
    %v1128 = vpack.c.b16 %v936, %v930
    %v1129 = vpack.c.b16 %v937, %v931
    %v1130 = vpack.c.b16 %v938, %v932
    %v1419 = vunpack.c.l.b16 %v263
    %v1420 = vunpack.c.l.b16 %v264
    %v1421 = vunpack.c.l.b16 %v265
    %v1422 = vunpack.c.l.b16 %v266
    %v1423 = vunpack.c.l.b16 %v267
    %v1424 = vunpack.c.l.b16 %v268
    %v1425 = vunpack.c.l.b16 %v269
    %v1426 = vunpack.c.l.b16 %v270
    %v1427 = vunpack.c.l.b16 %v271
    %v1428 = vunpack.c.l.b16 %v272
    %v1429 = vunpack.c.l.b16 %v273
    %v1430 = vunpack.c.l.b16 %v274
    %v1431 = vunpack.c.l.b16 %v275
    %v1432 = vunpack.c.l.b16 %v276
    %v1433 = vunpack.c.l.b16 %v277
    %v1434 = vunpack.c.l.b16 %v278
    %v1435 = vunpack.c.l.b16 %v279
    %v1436 = vunpack.c.l.b16 %v280
    %v1437 = vunpack.c.l.b16 %v281
    %v1438 = vunpack.c.l.b16 %v282
    %v1439 = vunpack.c.l.b16 %v283
    %v1440 = vunpack.c.l.b16 %v284
    %v1441 = vunpack.c.l.b16 %v285
    %v1442 = vunpack.c.l.b16 %v286
    %v1443 = vunpack.c.l.b16 %v287
    %v1444 = vunpack.c.l.b16 %v288
    %v1445 = vunpack.c.l.b16 %v289
    %v1446 = vunpack.c.l.b16 %v290
    %v1447 = vunpack.c.l.b16 %v291
    %v1448 = vunpack.c.l.b16 %v292
    %v1449 = vunpack.c.l.b16 %v293
    %v1450 = vunpack.c.l.b16 %v294
    %v1451 = vunpack.c.l.b16 %v295
    %v1452 = vunpack.c.l.b16 %v296
    %v1453 = vunpack.c.l.b16 %v297
    %v1454 = vunpack.c.l.b16 %v298
    %v1455 = vunpack.c.l.b16 %v299
    %v1456 = vunpack.c.l.b16 %v300
    %v1457 = vunpack.c.l.b16 %v301
    %v1458 = vunpack.c.l.b16 %v302
    %v1459 = vunpack.c.l.b16 %v303
    %v1460 = vunpack.c.l.b16 %v304
    %v1461 = vunpack.c.l.b16 %v305
    %v1462 = vunpack.c.l.b16 %v306
    %v1463 = vunpack.c.l.b16 %v307
    %v1464 = vunpack.c.l.b16 %v308
    %v1465 = vunpack.c.l.b16 %v309
    %v1466 = vunpack.c.l.b16 %v310
    %v1467 = vunpack.c.l.b16 %v311
    %v1468 = vunpack.c.l.b16 %v312
    %v1469 = vunpack.c.l.b16 %v313
    %v1470 = vunpack.c.l.b16 %v314
    %v1471 = vunpack.c.l.b16 %v315
    %v1472 = vunpack.c.l.b16 %v316
    %v1473 = vunpack.c.l.b16 %v317
    %v1474 = vunpack.c.l.b16 %v318
    %v1475 = vunpack.c.l.b16 %v319
    %v1476 = vunpack.c.l.b16 %v320
    %v1477 = vunpack.c.l.b16 %v321
    %v1478 = vunpack.c.l.b16 %v322
    %v1479 = vunpack.c.l.b16 %v323
    %v1480 = vunpack.c.l.b16 %v324
    %v1481 = vunpack.c.l.b16 %v325
    %v1482 = vunpack.c.l.b16 %v326
    %v1483 = vunpack.c.l.b16 %v327
    %v1484 = vunpack.c.l.b16 %v328
    %v1485 = vunpack.c.l.b16 %v329
    %v1486 = vunpack.c.l.b16 %v330
    %v1487 = vunpack.c.l.b16 %v331
    %v1488 = vunpack.c.l.b16 %v332
    %v1489 = vunpack.c.l.b16 %v333
    %v1490 = vunpack.c.l.b16 %v334
    %v1491 = vunpack.c.l.b16 %v335
    %v1492 = vunpack.c.l.b16 %v336
    %v1493 = vunpack.c.l.b16 %v337
    %v1494 = vunpack.c.l.b16 %v338
    %v1495 = vunpack.c.l.b16 %v339
    %v1496 = vunpack.c.l.b16 %v340
    %v1497 = vunpack.c.l.b16 %v341
    %v1498 = vunpack.c.l.b16 %v342
    %v1499 = vunpack.c.l.b16 %v343
    %v1500 = vunpack.c.l.b16 %v344
    %v1501 = vunpack.c.l.b16 %v345
    %v1502 = vunpack.c.l.b16 %v346
    %v1503 = vunpack.c.l.b16 %v347
    %v1504 = vunpack.c.l.b16 %v348
    %v1505 = vunpack.c.l.b16 %v349
    %v1506 = vunpack.c.l.b16 %v350
    %v1507 = vunpack.c.l.b16 %v351
    %v1508 = vunpack.c.l.b16 %v352
    %v1509 = vunpack.c.l.b16 %v353
    %v1510 = vunpack.c.l.b16 %v354
    %v1511 = vunpack.c.l.b16 %v355
    %v1512 = vunpack.c.l.b16 %v356
    %v1513 = vunpack.c.l.b16 %v357
    %v1514 = vunpack.c.l.b16 %v358
    %v1515 = vpack.c.b16 %v1420, %v1419
    %v1516 = vpack.c.b16 %v1422, %v1421
    %v1517 = vpack.c.b16 %v1424, %v1423
    %v1518 = vpack.c.b16 %v1426, %v1425
    %v1519 = vpack.c.b16 %v1428, %v1427
    %v1520 = vpack.c.b16 %v1430, %v1429
    %v1521 = vpack.c.b16 %v1432, %v1431
    %v1522 = vpack.c.b16 %v1434, %v1433
    %v1523 = vpack.c.b16 %v1436, %v1435
    %v1524 = vpack.c.b16 %v1438, %v1437
    %v1525 = vpack.c.b16 %v1440, %v1439
    %v1526 = vpack.c.b16 %v1442, %v1441
    %v1527 = vpack.c.b16 %v1444, %v1443
    %v1528 = vpack.c.b16 %v1446, %v1445
    %v1529 = vpack.c.b16 %v1448, %v1447
    %v1530 = vpack.c.b16 %v1450, %v1449
    %v1531 = vpack.c.b16 %v1452, %v1451
    %v1532 = vpack.c.b16 %v1454, %v1453
    %v1533 = vpack.c.b16 %v1456, %v1455
    %v1534 = vpack.c.b16 %v1458, %v1457
    %v1535 = vpack.c.b16 %v1460, %v1459
    %v1536 = vpack.c.b16 %v1462, %v1461
    %v1537 = vpack.c.b16 %v1464, %v1463
    %v1538 = vpack.c.b16 %v1466, %v1465
    %v1539 = vpack.c.b16 %v1468, %v1467
    %v1540 = vpack.c.b16 %v1470, %v1469
    %v1541 = vpack.c.b16 %v1472, %v1471
    %v1542 = vpack.c.b16 %v1474, %v1473
    %v1543 = vpack.c.b16 %v1476, %v1475
    %v1544 = vpack.c.b16 %v1478, %v1477
    %v1545 = vpack.c.b16 %v1480, %v1479
    %v1546 = vpack.c.b16 %v1482, %v1481
    %v1547 = vpack.c.b16 %v1484, %v1483
    %v1548 = vpack.c.b16 %v1486, %v1485
    %v1549 = vpack.c.b16 %v1488, %v1487
    %v1550 = vpack.c.b16 %v1490, %v1489
    %v1551 = vpack.c.b16 %v1492, %v1491
    %v1552 = vpack.c.b16 %v1494, %v1493
    %v1553 = vpack.c.b16 %v1496, %v1495
    %v1554 = vpack.c.b16 %v1498, %v1497
    %v1555 = vpack.c.b16 %v1500, %v1499
    %v1556 = vpack.c.b16 %v1502, %v1501
    %v1557 = vpack.c.b16 %v1504, %v1503
    %v1558 = vpack.c.b16 %v1506, %v1505
    %v1559 = vpack.c.b16 %v1508, %v1507
    %v1560 = vpack.c.b16 %v1510, %v1509
    %v1561 = vpack.c.b16 %v1512, %v1511
    %v1562 = vpack.c.b16 %v1514, %v1513
    %1611 = vmatpush.bf16.msra.mxu0 %v1522
    %1612 = vmatpush.bf16.msra.mxu0 %v1521
    %1613 = vmatpush.bf16.msra.mxu0 %v1520
    %1614 = vmatpush.bf16.msra.mxu0 %v1519
    %1615 = vmatpush.bf16.msra.mxu0 %v1518
    %1616 = vmatpush.bf16.msra.mxu0 %v1517
    %1617 = vmatpush.bf16.msra.mxu0 %v1516
    %1618 = vmatpush.bf16.msra.mxu0 %v1515
    %1619 = vmatmul.bf16.gmra.mxu0 %v939
    %v1620 = vpop.f32.mrf.mxu0
    %v1621 = vadd.f32 %v361, %v1620
    %v1622 = vpop.f32.mrf.mxu0
    %v1623 = vadd.f32 %v361, %v1622
    %1624 = vmatmul.bf16.gmra.mxu0 %v945
    %v1625 = vpop.f32.mrf.mxu0
    %v1626 = vadd.f32 %v361, %v1625
    %v1627 = vpop.f32.mrf.mxu0
    %v1628 = vadd.f32 %v361, %v1627
    %1629 = vmatmul.bf16.gmra.mxu0 %v951
    %v1630 = vpop.f32.mrf.mxu0
    %v1631 = vadd.f32 %v361, %v1630
    %v1632 = vpop.f32.mrf.mxu0
    %v1633 = vadd.f32 %v361, %v1632
    %1634 = vmatmul.bf16.gmra.mxu0 %v957
    %v1635 = vpop.f32.mrf.mxu0
    %v1636 = vadd.f32 %v361, %v1635
    %v1637 = vpop.f32.mrf.mxu0
    %v1638 = vadd.f32 %v361, %v1637
    %1639 = vmatmul.bf16.gmra.mxu0 %v963
    %v1640 = vpop.f32.mrf.mxu0
    %v1641 = vadd.f32 %v361, %v1640
    %v1642 = vpop.f32.mrf.mxu0
    %v1643 = vadd.f32 %v361, %v1642
    %1644 = vmatmul.bf16.gmra.mxu0 %v969
    %v1645 = vpop.f32.mrf.mxu0
    %v1646 = vadd.f32 %v361, %v1645
    %v1647 = vpop.f32.mrf.mxu0
    %v1648 = vadd.f32 %v361, %v1647
    %1649 = vmatmul.bf16.gmra.mxu0 %v975
    %v1650 = vpop.f32.mrf.mxu0
    %v1651 = vadd.f32 %v361, %v1650
    %v1652 = vpop.f32.mrf.mxu0
    %v1653 = vadd.f32 %v361, %v1652
    %1654 = vmatmul.bf16.gmra.mxu0 %v981
    %v1655 = vpop.f32.mrf.mxu0
    %v1656 = vadd.f32 %v361, %v1655
    %v1657 = vpop.f32.mrf.mxu0
    %v1658 = vadd.f32 %v361, %v1657
    %1659 = vmatmul.bf16.gmra.mxu0 %v987
    %v1660 = vpop.f32.mrf.mxu0
    %v1661 = vadd.f32 %v361, %v1660
    %v1662 = vpop.f32.mrf.mxu0
    %v1663 = vadd.f32 %v361, %v1662
    %1664 = vmatmul.bf16.gmra.mxu0 %v993
    %v1665 = vpop.f32.mrf.mxu0
    %v1666 = vadd.f32 %v361, %v1665
    %v1667 = vpop.f32.mrf.mxu0
    %v1668 = vadd.f32 %v361, %v1667
    %1669 = vmatmul.bf16.gmra.mxu0 %v999
    %v1670 = vpop.f32.mrf.mxu0
    %v1671 = vadd.f32 %v361, %v1670
    %v1672 = vpop.f32.mrf.mxu0
    %v1673 = vadd.f32 %v361, %v1672
    %1674 = vmatmul.bf16.gmra.mxu0 %v1005
    %v1675 = vpop.f32.mrf.mxu0
    %v1676 = vadd.f32 %v361, %v1675
    %v1677 = vpop.f32.mrf.mxu0
    %v1678 = vadd.f32 %v361, %v1677
    %1679 = vmatmul.bf16.gmra.mxu0 %v1011
    %v1680 = vpop.f32.mrf.mxu0
    %v1681 = vadd.f32 %v361, %v1680
    %v1682 = vpop.f32.mrf.mxu0
    %v1683 = vadd.f32 %v361, %v1682
    %1684 = vmatmul.bf16.gmra.mxu0 %v1017
    %v1685 = vpop.f32.mrf.mxu0
    %v1686 = vadd.f32 %v361, %v1685
    %v1687 = vpop.f32.mrf.mxu0
    %v1688 = vadd.f32 %v361, %v1687
    %1689 = vmatmul.bf16.gmra.mxu0 %v1023
    %v1690 = vpop.f32.mrf.mxu0
    %v1691 = vadd.f32 %v361, %v1690
    %v1692 = vpop.f32.mrf.mxu0
    %v1693 = vadd.f32 %v361, %v1692
    %1694 = vmatmul.bf16.gmra.mxu0 %v1029
    %v1695 = vpop.f32.mrf.mxu0
    %v1696 = vadd.f32 %v361, %v1695
    %v1697 = vpop.f32.mrf.mxu0
    %v1698 = vadd.f32 %v361, %v1697
    %1699 = vmatmul.bf16.gmra.mxu0 %v1035
    %v1700 = vpop.f32.mrf.mxu0
    %v1701 = vadd.f32 %v361, %v1700
    %v1702 = vpop.f32.mrf.mxu0
    %v1703 = vadd.f32 %v361, %v1702
    %1704 = vmatmul.bf16.gmra.mxu0 %v1041
    %v1705 = vpop.f32.mrf.mxu0
    %v1706 = vadd.f32 %v361, %v1705
    %v1707 = vpop.f32.mrf.mxu0
    %v1708 = vadd.f32 %v361, %v1707
    %1709 = vmatmul.bf16.gmra.mxu0 %v1047
    %v1710 = vpop.f32.mrf.mxu0
    %v1711 = vadd.f32 %v361, %v1710
    %v1712 = vpop.f32.mrf.mxu0
    %v1713 = vadd.f32 %v361, %v1712
    %1714 = vmatmul.bf16.gmra.mxu0 %v1053
    %v1715 = vpop.f32.mrf.mxu0
    %v1716 = vadd.f32 %v361, %v1715
    %v1717 = vpop.f32.mrf.mxu0
    %v1718 = vadd.f32 %v361, %v1717
    %1719 = vmatmul.bf16.gmra.mxu0 %v1059
    %v1720 = vpop.f32.mrf.mxu0
    %v1721 = vadd.f32 %v361, %v1720
    %v1722 = vpop.f32.mrf.mxu0
    %v1723 = vadd.f32 %v361, %v1722
    %1724 = vmatmul.bf16.gmra.mxu0 %v1065
    %v1725 = vpop.f32.mrf.mxu0
    %v1726 = vadd.f32 %v361, %v1725
    %v1727 = vpop.f32.mrf.mxu0
    %v1728 = vadd.f32 %v361, %v1727
    %1729 = vmatmul.bf16.gmra.mxu0 %v1071
    %v1730 = vpop.f32.mrf.mxu0
    %v1731 = vadd.f32 %v361, %v1730
    %v1732 = vpop.f32.mrf.mxu0
    %v1733 = vadd.f32 %v361, %v1732
    %1734 = vmatmul.bf16.gmra.mxu0 %v1077
    %v1735 = vpop.f32.mrf.mxu0
    %v1736 = vadd.f32 %v361, %v1735
    %v1737 = vpop.f32.mrf.mxu0
    %v1738 = vadd.f32 %v361, %v1737
    %1739 = vmatmul.bf16.gmra.mxu0 %v1083
    %v1740 = vpop.f32.mrf.mxu0
    %v1741 = vadd.f32 %v361, %v1740
    %v1742 = vpop.f32.mrf.mxu0
    %v1743 = vadd.f32 %v361, %v1742
    %1744 = vmatmul.bf16.gmra.mxu0 %v1089
    %v1745 = vpop.f32.mrf.mxu0
    %v1746 = vadd.f32 %v361, %v1745
    %v1747 = vpop.f32.mrf.mxu0
    %v1748 = vadd.f32 %v361, %v1747
    %1749 = vmatmul.bf16.gmra.mxu0 %v1095
    %v1750 = vpop.f32.mrf.mxu0
    %v1751 = vadd.f32 %v361, %v1750
    %v1752 = vpop.f32.mrf.mxu0
    %v1753 = vadd.f32 %v361, %v1752
    %1754 = vmatmul.bf16.gmra.mxu0 %v1101
    %v1755 = vpop.f32.mrf.mxu0
    %v1756 = vadd.f32 %v361, %v1755
    %v1757 = vpop.f32.mrf.mxu0
    %v1758 = vadd.f32 %v361, %v1757
    %1759 = vmatmul.bf16.gmra.mxu0 %v1107
    %v1760 = vpop.f32.mrf.mxu0
    %v1761 = vadd.f32 %v361, %v1760
    %v1762 = vpop.f32.mrf.mxu0
    %v1763 = vadd.f32 %v361, %v1762
    %1764 = vmatmul.bf16.gmra.mxu0 %v1113
    %v1765 = vpop.f32.mrf.mxu0
    %v1766 = vadd.f32 %v361, %v1765
    %v1767 = vpop.f32.mrf.mxu0
    %v1768 = vadd.f32 %v361, %v1767
    %1769 = vmatmul.bf16.gmra.mxu0 %v1119
    %v1770 = vpop.f32.mrf.mxu0
    %v1771 = vadd.f32 %v361, %v1770
    %v1772 = vpop.f32.mrf.mxu0
    %v1773 = vadd.f32 %v361, %v1772
    %1774 = vmatmul.bf16.gmra.mxu0 %v1125
    %v1775 = vpop.f32.mrf.mxu0
    %v1776 = vadd.f32 %v361, %v1775
    %v1777 = vpop.f32.mrf.mxu0
    %v1778 = vadd.f32 %v361, %v1777
    %1779 = vdwg.mxu0
    %1780 = vmatpush.bf16.msra.mxu0 %v1530
    %1781 = vmatpush.bf16.msra.mxu0 %v1529
    %1782 = vmatpush.bf16.msra.mxu0 %v1528
    %1783 = vmatpush.bf16.msra.mxu0 %v1527
    %1784 = vmatpush.bf16.msra.mxu0 %v1526
    %1785 = vmatpush.bf16.msra.mxu0 %v1525
    %1786 = vmatpush.bf16.msra.mxu0 %v1524
    %1787 = vmatpush.bf16.msra.mxu0 %v1523
    %1788 = vmatmul.bf16.gmra.mxu0 %v940
    %v1789 = vpop.f32.mrf.mxu0
    %v1790 = vadd.f32 %v1621, %v1789
    %v1791 = vpop.f32.mrf.mxu0
    %v1792 = vadd.f32 %v1623, %v1791
    %1793 = vmatmul.bf16.gmra.mxu0 %v946
    %v1794 = vpop.f32.mrf.mxu0
    %v1795 = vadd.f32 %v1626, %v1794
    %v1796 = vpop.f32.mrf.mxu0
    %v1797 = vadd.f32 %v1628, %v1796
    %1798 = vmatmul.bf16.gmra.mxu0 %v952
    %v1799 = vpop.f32.mrf.mxu0
    %v1800 = vadd.f32 %v1631, %v1799
    %v1801 = vpop.f32.mrf.mxu0
    %v1802 = vadd.f32 %v1633, %v1801
    %1803 = vmatmul.bf16.gmra.mxu0 %v958
    %v1804 = vpop.f32.mrf.mxu0
    %v1805 = vadd.f32 %v1636, %v1804
    %v1806 = vpop.f32.mrf.mxu0
    %v1807 = vadd.f32 %v1638, %v1806
    %1808 = vmatmul.bf16.gmra.mxu0 %v964
    %v1809 = vpop.f32.mrf.mxu0
    %v1810 = vadd.f32 %v1641, %v1809
    %v1811 = vpop.f32.mrf.mxu0
    %v1812 = vadd.f32 %v1643, %v1811
    %1813 = vmatmul.bf16.gmra.mxu0 %v970
    %v1814 = vpop.f32.mrf.mxu0
    %v1815 = vadd.f32 %v1646, %v1814
    %v1816 = vpop.f32.mrf.mxu0
    %v1817 = vadd.f32 %v1648, %v1816
    %1818 = vmatmul.bf16.gmra.mxu0 %v976
    %v1819 = vpop.f32.mrf.mxu0
    %v1820 = vadd.f32 %v1651, %v1819
    %v1821 = vpop.f32.mrf.mxu0
    %v1822 = vadd.f32 %v1653, %v1821
    %1823 = vmatmul.bf16.gmra.mxu0 %v982
    %v1824 = vpop.f32.mrf.mxu0
    %v1825 = vadd.f32 %v1656, %v1824
    %v1826 = vpop.f32.mrf.mxu0
    %v1827 = vadd.f32 %v1658, %v1826
    %1828 = vmatmul.bf16.gmra.mxu0 %v988
    %v1829 = vpop.f32.mrf.mxu0
    %v1830 = vadd.f32 %v1661, %v1829
    %v1831 = vpop.f32.mrf.mxu0
    %v1832 = vadd.f32 %v1663, %v1831
    %1833 = vmatmul.bf16.gmra.mxu0 %v994
    %v1834 = vpop.f32.mrf.mxu0
    %v1835 = vadd.f32 %v1666, %v1834
    %v1836 = vpop.f32.mrf.mxu0
    %v1837 = vadd.f32 %v1668, %v1836
    %1838 = vmatmul.bf16.gmra.mxu0 %v1000
    %v1839 = vpop.f32.mrf.mxu0
    %v1840 = vadd.f32 %v1671, %v1839
    %v1841 = vpop.f32.mrf.mxu0
    %v1842 = vadd.f32 %v1673, %v1841
    %1843 = vmatmul.bf16.gmra.mxu0 %v1006
    %v1844 = vpop.f32.mrf.mxu0
    %v1845 = vadd.f32 %v1676, %v1844
    %v1846 = vpop.f32.mrf.mxu0
    %v1847 = vadd.f32 %v1678, %v1846
    %1848 = vmatmul.bf16.gmra.mxu0 %v1012
    %v1849 = vpop.f32.mrf.mxu0
    %v1850 = vadd.f32 %v1681, %v1849
    %v1851 = vpop.f32.mrf.mxu0
    %v1852 = vadd.f32 %v1683, %v1851
    %1853 = vmatmul.bf16.gmra.mxu0 %v1018
    %v1854 = vpop.f32.mrf.mxu0
    %v1855 = vadd.f32 %v1686, %v1854
    %v1856 = vpop.f32.mrf.mxu0
    %v1857 = vadd.f32 %v1688, %v1856
    %1858 = vmatmul.bf16.gmra.mxu0 %v1024
    %v1859 = vpop.f32.mrf.mxu0
    %v1860 = vadd.f32 %v1691, %v1859
    %v1861 = vpop.f32.mrf.mxu0
    %v1862 = vadd.f32 %v1693, %v1861
    %1863 = vmatmul.bf16.gmra.mxu0 %v1030
    %v1864 = vpop.f32.mrf.mxu0
    %v1865 = vadd.f32 %v1696, %v1864
    %v1866 = vpop.f32.mrf.mxu0
    %v1867 = vadd.f32 %v1698, %v1866
    %1868 = vmatmul.bf16.gmra.mxu0 %v1036
    %v1869 = vpop.f32.mrf.mxu0
    %v1870 = vadd.f32 %v1701, %v1869
    %v1871 = vpop.f32.mrf.mxu0
    %v1872 = vadd.f32 %v1703, %v1871
    %1873 = vmatmul.bf16.gmra.mxu0 %v1042
    %v1874 = vpop.f32.mrf.mxu0
    %v1875 = vadd.f32 %v1706, %v1874
    %v1876 = vpop.f32.mrf.mxu0
    %v1877 = vadd.f32 %v1708, %v1876
    %1878 = vmatmul.bf16.gmra.mxu0 %v1048
    %v1879 = vpop.f32.mrf.mxu0
    %v1880 = vadd.f32 %v1711, %v1879
    %v1881 = vpop.f32.mrf.mxu0
    %v1882 = vadd.f32 %v1713, %v1881
    %1883 = vmatmul.bf16.gmra.mxu0 %v1054
    %v1884 = vpop.f32.mrf.mxu0
    %v1885 = vadd.f32 %v1716, %v1884
    %v1886 = vpop.f32.mrf.mxu0
    %v1887 = vadd.f32 %v1718, %v1886
    %1888 = vmatmul.bf16.gmra.mxu0 %v1060
    %v1889 = vpop.f32.mrf.mxu0
    %v1890 = vadd.f32 %v1721, %v1889
    %v1891 = vpop.f32.mrf.mxu0
    %v1892 = vadd.f32 %v1723, %v1891
    %1893 = vmatmul.bf16.gmra.mxu0 %v1066
    %v1894 = vpop.f32.mrf.mxu0
    %v1895 = vadd.f32 %v1726, %v1894
    %v1896 = vpop.f32.mrf.mxu0
    %v1897 = vadd.f32 %v1728, %v1896
    %1898 = vmatmul.bf16.gmra.mxu0 %v1072
    %v1899 = vpop.f32.mrf.mxu0
    %v1900 = vadd.f32 %v1731, %v1899
    %v1901 = vpop.f32.mrf.mxu0
    %v1902 = vadd.f32 %v1733, %v1901
    %1903 = vmatmul.bf16.gmra.mxu0 %v1078
    %v1904 = vpop.f32.mrf.mxu0
    %v1905 = vadd.f32 %v1736, %v1904
    %v1906 = vpop.f32.mrf.mxu0
    %v1907 = vadd.f32 %v1738, %v1906
    %1908 = vmatmul.bf16.gmra.mxu0 %v1084
    %v1909 = vpop.f32.mrf.mxu0
    %v1910 = vadd.f32 %v1741, %v1909
    %v1911 = vpop.f32.mrf.mxu0
    %v1912 = vadd.f32 %v1743, %v1911
    %1913 = vmatmul.bf16.gmra.mxu0 %v1090
    %v1914 = vpop.f32.mrf.mxu0
    %v1915 = vadd.f32 %v1746, %v1914
    %v1916 = vpop.f32.mrf.mxu0
    %v1917 = vadd.f32 %v1748, %v1916
    %1918 = vmatmul.bf16.gmra.mxu0 %v1096
    %v1919 = vpop.f32.mrf.mxu0
    %v1920 = vadd.f32 %v1751, %v1919
    %v1921 = vpop.f32.mrf.mxu0
    %v1922 = vadd.f32 %v1753, %v1921
    %1923 = vmatmul.bf16.gmra.mxu0 %v1102
    %v1924 = vpop.f32.mrf.mxu0
    %v1925 = vadd.f32 %v1756, %v1924
    %v1926 = vpop.f32.mrf.mxu0
    %v1927 = vadd.f32 %v1758, %v1926
    %1928 = vmatmul.bf16.gmra.mxu0 %v1108
    %v1929 = vpop.f32.mrf.mxu0
    %v1930 = vadd.f32 %v1761, %v1929
    %v1931 = vpop.f32.mrf.mxu0
    %v1932 = vadd.f32 %v1763, %v1931
    %1933 = vmatmul.bf16.gmra.mxu0 %v1114
    %v1934 = vpop.f32.mrf.mxu0
    %v1935 = vadd.f32 %v1766, %v1934
    %v1936 = vpop.f32.mrf.mxu0
    %v1937 = vadd.f32 %v1768, %v1936
    %1938 = vmatmul.bf16.gmra.mxu0 %v1120
    %v1939 = vpop.f32.mrf.mxu0
    %v1940 = vadd.f32 %v1771, %v1939
    %v1941 = vpop.f32.mrf.mxu0
    %v1942 = vadd.f32 %v1773, %v1941
    %1943 = vmatmul.bf16.gmra.mxu0 %v1126
    %v1944 = vpop.f32.mrf.mxu0
    %v1945 = vadd.f32 %v1776, %v1944
    %v1946 = vpop.f32.mrf.mxu0
    %v1947 = vadd.f32 %v1778, %v1946
    %1948 = vdwg.mxu0
    %1949 = vmatpush.bf16.msra.mxu0 %v1538
    %1950 = vmatpush.bf16.msra.mxu0 %v1537
    %1951 = vmatpush.bf16.msra.mxu0 %v1536
    %1952 = vmatpush.bf16.msra.mxu0 %v1535
    %1953 = vmatpush.bf16.msra.mxu0 %v1534
    %1954 = vmatpush.bf16.msra.mxu0 %v1533
    %1955 = vmatpush.bf16.msra.mxu0 %v1532
    %1956 = vmatpush.bf16.msra.mxu0 %v1531
    %1957 = vmatmul.bf16.gmra.mxu0 %v941
    %v1958 = vpop.f32.mrf.mxu0
    %v1959 = vadd.f32 %v1790, %v1958
    %v1960 = vpop.f32.mrf.mxu0
    %v1961 = vadd.f32 %v1792, %v1960
    %1962 = vmatmul.bf16.gmra.mxu0 %v947
    %v1963 = vpop.f32.mrf.mxu0
    %v1964 = vadd.f32 %v1795, %v1963
    %v1965 = vpop.f32.mrf.mxu0
    %v1966 = vadd.f32 %v1797, %v1965
    %1967 = vmatmul.bf16.gmra.mxu0 %v953
    %v1968 = vpop.f32.mrf.mxu0
    %v1969 = vadd.f32 %v1800, %v1968
    %v1970 = vpop.f32.mrf.mxu0
    %v1971 = vadd.f32 %v1802, %v1970
    %1972 = vmatmul.bf16.gmra.mxu0 %v959
    %v1973 = vpop.f32.mrf.mxu0
    %v1974 = vadd.f32 %v1805, %v1973
    %v1975 = vpop.f32.mrf.mxu0
    %v1976 = vadd.f32 %v1807, %v1975
    %1977 = vmatmul.bf16.gmra.mxu0 %v965
    %v1978 = vpop.f32.mrf.mxu0
    %v1979 = vadd.f32 %v1810, %v1978
    %v1980 = vpop.f32.mrf.mxu0
    %v1981 = vadd.f32 %v1812, %v1980
    %1982 = vmatmul.bf16.gmra.mxu0 %v971
    %v1983 = vpop.f32.mrf.mxu0
    %v1984 = vadd.f32 %v1815, %v1983
    %v1985 = vpop.f32.mrf.mxu0
    %v1986 = vadd.f32 %v1817, %v1985
    %1987 = vmatmul.bf16.gmra.mxu0 %v977
    %v1988 = vpop.f32.mrf.mxu0
    %v1989 = vadd.f32 %v1820, %v1988
    %v1990 = vpop.f32.mrf.mxu0
    %v1991 = vadd.f32 %v1822, %v1990
    %1992 = vmatmul.bf16.gmra.mxu0 %v983
    %v1993 = vpop.f32.mrf.mxu0
    %v1994 = vadd.f32 %v1825, %v1993
    %v1995 = vpop.f32.mrf.mxu0
    %v1996 = vadd.f32 %v1827, %v1995
    %1997 = vmatmul.bf16.gmra.mxu0 %v989
    %v1998 = vpop.f32.mrf.mxu0
    %v1999 = vadd.f32 %v1830, %v1998
    %v2000 = vpop.f32.mrf.mxu0
    %v2001 = vadd.f32 %v1832, %v2000
    %2002 = vmatmul.bf16.gmra.mxu0 %v995
    %v2003 = vpop.f32.mrf.mxu0
    %v2004 = vadd.f32 %v1835, %v2003
    %v2005 = vpop.f32.mrf.mxu0
    %v2006 = vadd.f32 %v1837, %v2005
    %2007 = vmatmul.bf16.gmra.mxu0 %v1001
    %v2008 = vpop.f32.mrf.mxu0
    %v2009 = vadd.f32 %v1840, %v2008
    %v2010 = vpop.f32.mrf.mxu0
    %v2011 = vadd.f32 %v1842, %v2010
    %2012 = vmatmul.bf16.gmra.mxu0 %v1007
    %v2013 = vpop.f32.mrf.mxu0
    %v2014 = vadd.f32 %v1845, %v2013
    %v2015 = vpop.f32.mrf.mxu0
    %v2016 = vadd.f32 %v1847, %v2015
    %2017 = vmatmul.bf16.gmra.mxu0 %v1013
    %v2018 = vpop.f32.mrf.mxu0
    %v2019 = vadd.f32 %v1850, %v2018
    %v2020 = vpop.f32.mrf.mxu0
    %v2021 = vadd.f32 %v1852, %v2020
    %2022 = vmatmul.bf16.gmra.mxu0 %v1019
    %v2023 = vpop.f32.mrf.mxu0
    %v2024 = vadd.f32 %v1855, %v2023
    %v2025 = vpop.f32.mrf.mxu0
    %v2026 = vadd.f32 %v1857, %v2025
    %2027 = vmatmul.bf16.gmra.mxu0 %v1025
    %v2028 = vpop.f32.mrf.mxu0
    %v2029 = vadd.f32 %v1860, %v2028
    %v2030 = vpop.f32.mrf.mxu0
    %v2031 = vadd.f32 %v1862, %v2030
    %2032 = vmatmul.bf16.gmra.mxu0 %v1031
    %v2033 = vpop.f32.mrf.mxu0
    %v2034 = vadd.f32 %v1865, %v2033
    %v2035 = vpop.f32.mrf.mxu0
    %v2036 = vadd.f32 %v1867, %v2035
    %2037 = vmatmul.bf16.gmra.mxu0 %v1037
    %v2038 = vpop.f32.mrf.mxu0
    %v2039 = vadd.f32 %v1870, %v2038
    %v2040 = vpop.f32.mrf.mxu0
    %v2041 = vadd.f32 %v1872, %v2040
    %2042 = vmatmul.bf16.gmra.mxu0 %v1043
    %v2043 = vpop.f32.mrf.mxu0
    %v2044 = vadd.f32 %v1875, %v2043
    %v2045 = vpop.f32.mrf.mxu0
    %v2046 = vadd.f32 %v1877, %v2045
    %2047 = vmatmul.bf16.gmra.mxu0 %v1049
    %v2048 = vpop.f32.mrf.mxu0
    %v2049 = vadd.f32 %v1880, %v2048
    %v2050 = vpop.f32.mrf.mxu0
    %v2051 = vadd.f32 %v1882, %v2050
    %2052 = vmatmul.bf16.gmra.mxu0 %v1055
    %v2053 = vpop.f32.mrf.mxu0
    %v2054 = vadd.f32 %v1885, %v2053
    %v2055 = vpop.f32.mrf.mxu0
    %v2056 = vadd.f32 %v1887, %v2055
    %2057 = vmatmul.bf16.gmra.mxu0 %v1061
    %v2058 = vpop.f32.mrf.mxu0
    %v2059 = vadd.f32 %v1890, %v2058
    %v2060 = vpop.f32.mrf.mxu0
    %v2061 = vadd.f32 %v1892, %v2060
    %2062 = vmatmul.bf16.gmra.mxu0 %v1067
    %v2063 = vpop.f32.mrf.mxu0
    %v2064 = vadd.f32 %v1895, %v2063
    %v2065 = vpop.f32.mrf.mxu0
    %v2066 = vadd.f32 %v1897, %v2065
    %2067 = vmatmul.bf16.gmra.mxu0 %v1073
    %v2068 = vpop.f32.mrf.mxu0
    %v2069 = vadd.f32 %v1900, %v2068
    %v2070 = vpop.f32.mrf.mxu0
    %v2071 = vadd.f32 %v1902, %v2070
    %2072 = vmatmul.bf16.gmra.mxu0 %v1079
    %v2073 = vpop.f32.mrf.mxu0
    %v2074 = vadd.f32 %v1905, %v2073
    %v2075 = vpop.f32.mrf.mxu0
    %v2076 = vadd.f32 %v1907, %v2075
    %2077 = vmatmul.bf16.gmra.mxu0 %v1085
    %v2078 = vpop.f32.mrf.mxu0
    %v2079 = vadd.f32 %v1910, %v2078
    %v2080 = vpop.f32.mrf.mxu0
    %v2081 = vadd.f32 %v1912, %v2080
    %2082 = vmatmul.bf16.gmra.mxu0 %v1091
    %v2083 = vpop.f32.mrf.mxu0
    %v2084 = vadd.f32 %v1915, %v2083
    %v2085 = vpop.f32.mrf.mxu0
    %v2086 = vadd.f32 %v1917, %v2085
    %2087 = vmatmul.bf16.gmra.mxu0 %v1097
    %v2088 = vpop.f32.mrf.mxu0
    %v2089 = vadd.f32 %v1920, %v2088
    %v2090 = vpop.f32.mrf.mxu0
    %v2091 = vadd.f32 %v1922, %v2090
    %2092 = vmatmul.bf16.gmra.mxu0 %v1103
    %v2093 = vpop.f32.mrf.mxu0
    %v2094 = vadd.f32 %v1925, %v2093
    %v2095 = vpop.f32.mrf.mxu0
    %v2096 = vadd.f32 %v1927, %v2095
    %2097 = vmatmul.bf16.gmra.mxu0 %v1109
    %v2098 = vpop.f32.mrf.mxu0
    %v2099 = vadd.f32 %v1930, %v2098
    %v2100 = vpop.f32.mrf.mxu0
    %v2101 = vadd.f32 %v1932, %v2100
    %2102 = vmatmul.bf16.gmra.mxu0 %v1115
    %v2103 = vpop.f32.mrf.mxu0
    %v2104 = vadd.f32 %v1935, %v2103
    %v2105 = vpop.f32.mrf.mxu0
    %v2106 = vadd.f32 %v1937, %v2105
    %2107 = vmatmul.bf16.gmra.mxu0 %v1121
    %v2108 = vpop.f32.mrf.mxu0
    %v2109 = vadd.f32 %v1940, %v2108
    %v2110 = vpop.f32.mrf.mxu0
    %v2111 = vadd.f32 %v1942, %v2110
    %2112 = vmatmul.bf16.gmra.mxu0 %v1127
    %v2113 = vpop.f32.mrf.mxu0
    %v2114 = vadd.f32 %v1945, %v2113
    %v2115 = vpop.f32.mrf.mxu0
    %v2116 = vadd.f32 %v1947, %v2115
    %2117 = vdwg.mxu0
    %2118 = vmatpush.bf16.msra.mxu0 %v1546
    %2119 = vmatpush.bf16.msra.mxu0 %v1545
    %2120 = vmatpush.bf16.msra.mxu0 %v1544
    %2121 = vmatpush.bf16.msra.mxu0 %v1543
    %2122 = vmatpush.bf16.msra.mxu0 %v1542
    %2123 = vmatpush.bf16.msra.mxu0 %v1541
    %2124 = vmatpush.bf16.msra.mxu0 %v1540
    %2125 = vmatpush.bf16.msra.mxu0 %v1539
    %2126 = vmatmul.bf16.gmra.mxu0 %v942
    %v2127 = vpop.f32.mrf.mxu0
    %v2128 = vadd.f32 %v1959, %v2127
    %v2129 = vpop.f32.mrf.mxu0
    %v2130 = vadd.f32 %v1961, %v2129
    %2131 = vmatmul.bf16.gmra.mxu0 %v948
    %v2132 = vpop.f32.mrf.mxu0
    %v2133 = vadd.f32 %v1964, %v2132
    %v2134 = vpop.f32.mrf.mxu0
    %v2135 = vadd.f32 %v1966, %v2134
    %2136 = vmatmul.bf16.gmra.mxu0 %v954
    %v2137 = vpop.f32.mrf.mxu0
    %v2138 = vadd.f32 %v1969, %v2137
    %v2139 = vpop.f32.mrf.mxu0
    %v2140 = vadd.f32 %v1971, %v2139
    %2141 = vmatmul.bf16.gmra.mxu0 %v960
    %v2142 = vpop.f32.mrf.mxu0
    %v2143 = vadd.f32 %v1974, %v2142
    %v2144 = vpop.f32.mrf.mxu0
    %v2145 = vadd.f32 %v1976, %v2144
    %2146 = vmatmul.bf16.gmra.mxu0 %v966
    %v2147 = vpop.f32.mrf.mxu0
    %v2148 = vadd.f32 %v1979, %v2147
    %v2149 = vpop.f32.mrf.mxu0
    %v2150 = vadd.f32 %v1981, %v2149
    %2151 = vmatmul.bf16.gmra.mxu0 %v972
    %v2152 = vpop.f32.mrf.mxu0
    %v2153 = vadd.f32 %v1984, %v2152
    %v2154 = vpop.f32.mrf.mxu0
    %v2155 = vadd.f32 %v1986, %v2154
    %2156 = vmatmul.bf16.gmra.mxu0 %v978
    %v2157 = vpop.f32.mrf.mxu0
    %v2158 = vadd.f32 %v1989, %v2157
    %v2159 = vpop.f32.mrf.mxu0
    %v2160 = vadd.f32 %v1991, %v2159
    %2161 = vmatmul.bf16.gmra.mxu0 %v984
    %v2162 = vpop.f32.mrf.mxu0
    %v2163 = vadd.f32 %v1994, %v2162
    %v2164 = vpop.f32.mrf.mxu0
    %v2165 = vadd.f32 %v1996, %v2164
    %2166 = vmatmul.bf16.gmra.mxu0 %v990
    %v2167 = vpop.f32.mrf.mxu0
    %v2168 = vadd.f32 %v1999, %v2167
    %v2169 = vpop.f32.mrf.mxu0
    %v2170 = vadd.f32 %v2001, %v2169
    %2171 = vmatmul.bf16.gmra.mxu0 %v996
    %v2172 = vpop.f32.mrf.mxu0
    %v2173 = vadd.f32 %v2004, %v2172
    %v2174 = vpop.f32.mrf.mxu0
    %v2175 = vadd.f32 %v2006, %v2174
    %2176 = vmatmul.bf16.gmra.mxu0 %v1002
    %v2177 = vpop.f32.mrf.mxu0
    %v2178 = vadd.f32 %v2009, %v2177
    %v2179 = vpop.f32.mrf.mxu0
    %v2180 = vadd.f32 %v2011, %v2179
    %2181 = vmatmul.bf16.gmra.mxu0 %v1008
    %v2182 = vpop.f32.mrf.mxu0
    %v2183 = vadd.f32 %v2014, %v2182
    %v2184 = vpop.f32.mrf.mxu0
    %v2185 = vadd.f32 %v2016, %v2184
    %2186 = vmatmul.bf16.gmra.mxu0 %v1014
    %v2187 = vpop.f32.mrf.mxu0
    %v2188 = vadd.f32 %v2019, %v2187
    %v2189 = vpop.f32.mrf.mxu0
    %v2190 = vadd.f32 %v2021, %v2189
    %2191 = vmatmul.bf16.gmra.mxu0 %v1020
    %v2192 = vpop.f32.mrf.mxu0
    %v2193 = vadd.f32 %v2024, %v2192
    %v2194 = vpop.f32.mrf.mxu0
    %v2195 = vadd.f32 %v2026, %v2194
    %2196 = vmatmul.bf16.gmra.mxu0 %v1026
    %v2197 = vpop.f32.mrf.mxu0
    %v2198 = vadd.f32 %v2029, %v2197
    %v2199 = vpop.f32.mrf.mxu0
    %v2200 = vadd.f32 %v2031, %v2199
    %2201 = vmatmul.bf16.gmra.mxu0 %v1032
    %v2202 = vpop.f32.mrf.mxu0
    %v2203 = vadd.f32 %v2034, %v2202
    %v2204 = vpop.f32.mrf.mxu0
    %v2205 = vadd.f32 %v2036, %v2204
    %2206 = vmatmul.bf16.gmra.mxu0 %v1038
    %v2207 = vpop.f32.mrf.mxu0
    %v2208 = vadd.f32 %v2039, %v2207
    %v2209 = vpop.f32.mrf.mxu0
    %v2210 = vadd.f32 %v2041, %v2209
    %2211 = vmatmul.bf16.gmra.mxu0 %v1044
    %v2212 = vpop.f32.mrf.mxu0
    %v2213 = vadd.f32 %v2044, %v2212
    %v2214 = vpop.f32.mrf.mxu0
    %v2215 = vadd.f32 %v2046, %v2214
    %2216 = vmatmul.bf16.gmra.mxu0 %v1050
    %v2217 = vpop.f32.mrf.mxu0
    %v2218 = vadd.f32 %v2049, %v2217
    %v2219 = vpop.f32.mrf.mxu0
    %v2220 = vadd.f32 %v2051, %v2219
    %2221 = vmatmul.bf16.gmra.mxu0 %v1056
    %v2222 = vpop.f32.mrf.mxu0
    %v2223 = vadd.f32 %v2054, %v2222
    %v2224 = vpop.f32.mrf.mxu0
    %v2225 = vadd.f32 %v2056, %v2224
    %2226 = vmatmul.bf16.gmra.mxu0 %v1062
    %v2227 = vpop.f32.mrf.mxu0
    %v2228 = vadd.f32 %v2059, %v2227
    %v2229 = vpop.f32.mrf.mxu0
    %v2230 = vadd.f32 %v2061, %v2229
    %2231 = vmatmul.bf16.gmra.mxu0 %v1068
    %v2232 = vpop.f32.mrf.mxu0
    %v2233 = vadd.f32 %v2064, %v2232
    %v2234 = vpop.f32.mrf.mxu0
    %v2235 = vadd.f32 %v2066, %v2234
    %2236 = vmatmul.bf16.gmra.mxu0 %v1074
    %v2237 = vpop.f32.mrf.mxu0
    %v2238 = vadd.f32 %v2069, %v2237
    %v2239 = vpop.f32.mrf.mxu0
    %v2240 = vadd.f32 %v2071, %v2239
    %2241 = vmatmul.bf16.gmra.mxu0 %v1080
    %v2242 = vpop.f32.mrf.mxu0
    %v2243 = vadd.f32 %v2074, %v2242
    %v2244 = vpop.f32.mrf.mxu0
    %v2245 = vadd.f32 %v2076, %v2244
    %2246 = vmatmul.bf16.gmra.mxu0 %v1086
    %v2247 = vpop.f32.mrf.mxu0
    %v2248 = vadd.f32 %v2079, %v2247
    %v2249 = vpop.f32.mrf.mxu0
    %v2250 = vadd.f32 %v2081, %v2249
    %2251 = vmatmul.bf16.gmra.mxu0 %v1092
    %v2252 = vpop.f32.mrf.mxu0
    %v2253 = vadd.f32 %v2084, %v2252
    %v2254 = vpop.f32.mrf.mxu0
    %v2255 = vadd.f32 %v2086, %v2254
    %2256 = vmatmul.bf16.gmra.mxu0 %v1098
    %v2257 = vpop.f32.mrf.mxu0
    %v2258 = vadd.f32 %v2089, %v2257
    %v2259 = vpop.f32.mrf.mxu0
    %v2260 = vadd.f32 %v2091, %v2259
    %2261 = vmatmul.bf16.gmra.mxu0 %v1104
    %v2262 = vpop.f32.mrf.mxu0
    %v2263 = vadd.f32 %v2094, %v2262
    %v2264 = vpop.f32.mrf.mxu0
    %v2265 = vadd.f32 %v2096, %v2264
    %2266 = vmatmul.bf16.gmra.mxu0 %v1110
    %v2267 = vpop.f32.mrf.mxu0
    %v2268 = vadd.f32 %v2099, %v2267
    %v2269 = vpop.f32.mrf.mxu0
    %v2270 = vadd.f32 %v2101, %v2269
    %2271 = vmatmul.bf16.gmra.mxu0 %v1116
    %v2272 = vpop.f32.mrf.mxu0
    %v2273 = vadd.f32 %v2104, %v2272
    %v2274 = vpop.f32.mrf.mxu0
    %v2275 = vadd.f32 %v2106, %v2274
    %2276 = vmatmul.bf16.gmra.mxu0 %v1122
    %v2277 = vpop.f32.mrf.mxu0
    %v2278 = vadd.f32 %v2109, %v2277
    %v2279 = vpop.f32.mrf.mxu0
    %v2280 = vadd.f32 %v2111, %v2279
    %2281 = vmatmul.bf16.gmra.mxu0 %v1128
    %v2282 = vpop.f32.mrf.mxu0
    %v2283 = vadd.f32 %v2114, %v2282
    %v2284 = vpop.f32.mrf.mxu0
    %v2285 = vadd.f32 %v2116, %v2284
    %2286 = vdwg.mxu0
    %2287 = vmatpush.bf16.msra.mxu0 %v1554
    %2288 = vmatpush.bf16.msra.mxu0 %v1553
    %2289 = vmatpush.bf16.msra.mxu0 %v1552
    %2290 = vmatpush.bf16.msra.mxu0 %v1551
    %2291 = vmatpush.bf16.msra.mxu0 %v1550
    %2292 = vmatpush.bf16.msra.mxu0 %v1549
    %2293 = vmatpush.bf16.msra.mxu0 %v1548
    %2294 = vmatpush.bf16.msra.mxu0 %v1547
    %2295 = vmatmul.bf16.gmra.mxu0 %v943
    %v2296 = vpop.f32.mrf.mxu0
    %v2297 = vadd.f32 %v2128, %v2296
    %v2298 = vpop.f32.mrf.mxu0
    %v2299 = vadd.f32 %v2130, %v2298
    %2300 = vmatmul.bf16.gmra.mxu0 %v949
    %v2301 = vpop.f32.mrf.mxu0
    %v2302 = vadd.f32 %v2133, %v2301
    %v2303 = vpop.f32.mrf.mxu0
    %v2304 = vadd.f32 %v2135, %v2303
    %2305 = vmatmul.bf16.gmra.mxu0 %v955
    %v2306 = vpop.f32.mrf.mxu0
    %v2307 = vadd.f32 %v2138, %v2306
    %v2308 = vpop.f32.mrf.mxu0
    %v2309 = vadd.f32 %v2140, %v2308
    %2310 = vmatmul.bf16.gmra.mxu0 %v961
    %v2311 = vpop.f32.mrf.mxu0
    %v2312 = vadd.f32 %v2143, %v2311
    %v2313 = vpop.f32.mrf.mxu0
    %v2314 = vadd.f32 %v2145, %v2313
    %2315 = vmatmul.bf16.gmra.mxu0 %v967
    %v2316 = vpop.f32.mrf.mxu0
    %v2317 = vadd.f32 %v2148, %v2316
    %v2318 = vpop.f32.mrf.mxu0
    %v2319 = vadd.f32 %v2150, %v2318
    %2320 = vmatmul.bf16.gmra.mxu0 %v973
    %v2321 = vpop.f32.mrf.mxu0
    %v2322 = vadd.f32 %v2153, %v2321
    %v2323 = vpop.f32.mrf.mxu0
    %v2324 = vadd.f32 %v2155, %v2323
    %2325 = vmatmul.bf16.gmra.mxu0 %v979
    %v2326 = vpop.f32.mrf.mxu0
    %v2327 = vadd.f32 %v2158, %v2326
    %v2328 = vpop.f32.mrf.mxu0
    %v2329 = vadd.f32 %v2160, %v2328
    %2330 = vmatmul.bf16.gmra.mxu0 %v985
    %v2331 = vpop.f32.mrf.mxu0
    %v2332 = vadd.f32 %v2163, %v2331
    %v2333 = vpop.f32.mrf.mxu0
    %v2334 = vadd.f32 %v2165, %v2333
    %2335 = vmatmul.bf16.gmra.mxu0 %v991
    %v2336 = vpop.f32.mrf.mxu0
    %v2337 = vadd.f32 %v2168, %v2336
    %v2338 = vpop.f32.mrf.mxu0
    %v2339 = vadd.f32 %v2170, %v2338
    %2340 = vmatmul.bf16.gmra.mxu0 %v997
    %v2341 = vpop.f32.mrf.mxu0
    %v2342 = vadd.f32 %v2173, %v2341
    %v2343 = vpop.f32.mrf.mxu0
    %v2344 = vadd.f32 %v2175, %v2343
    %2345 = vmatmul.bf16.gmra.mxu0 %v1003
    %v2346 = vpop.f32.mrf.mxu0
    %v2347 = vadd.f32 %v2178, %v2346
    %v2348 = vpop.f32.mrf.mxu0
    %v2349 = vadd.f32 %v2180, %v2348
    %2350 = vmatmul.bf16.gmra.mxu0 %v1009
    %v2351 = vpop.f32.mrf.mxu0
    %v2352 = vadd.f32 %v2183, %v2351
    %v2353 = vpop.f32.mrf.mxu0
    %v2354 = vadd.f32 %v2185, %v2353
    %2355 = vmatmul.bf16.gmra.mxu0 %v1015
    %v2356 = vpop.f32.mrf.mxu0
    %v2357 = vadd.f32 %v2188, %v2356
    %v2358 = vpop.f32.mrf.mxu0
    %v2359 = vadd.f32 %v2190, %v2358
    %2360 = vmatmul.bf16.gmra.mxu0 %v1021
    %v2361 = vpop.f32.mrf.mxu0
    %v2362 = vadd.f32 %v2193, %v2361
    %v2363 = vpop.f32.mrf.mxu0
    %v2364 = vadd.f32 %v2195, %v2363
    %2365 = vmatmul.bf16.gmra.mxu0 %v1027
    %v2366 = vpop.f32.mrf.mxu0
    %v2367 = vadd.f32 %v2198, %v2366
    %v2368 = vpop.f32.mrf.mxu0
    %v2369 = vadd.f32 %v2200, %v2368
    %2370 = vmatmul.bf16.gmra.mxu0 %v1033
    %v2371 = vpop.f32.mrf.mxu0
    %v2372 = vadd.f32 %v2203, %v2371
    %v2373 = vpop.f32.mrf.mxu0
    %v2374 = vadd.f32 %v2205, %v2373
    %2375 = vmatmul.bf16.gmra.mxu0 %v1039
    %v2376 = vpop.f32.mrf.mxu0
    %v2377 = vadd.f32 %v2208, %v2376
    %v2378 = vpop.f32.mrf.mxu0
    %v2379 = vadd.f32 %v2210, %v2378
    %2380 = vmatmul.bf16.gmra.mxu0 %v1045
    %v2381 = vpop.f32.mrf.mxu0
    %v2382 = vadd.f32 %v2213, %v2381
    %v2383 = vpop.f32.mrf.mxu0
    %v2384 = vadd.f32 %v2215, %v2383
    %2385 = vmatmul.bf16.gmra.mxu0 %v1051
    %v2386 = vpop.f32.mrf.mxu0
    %v2387 = vadd.f32 %v2218, %v2386
    %v2388 = vpop.f32.mrf.mxu0
    %v2389 = vadd.f32 %v2220, %v2388
    %2390 = vmatmul.bf16.gmra.mxu0 %v1057
    %v2391 = vpop.f32.mrf.mxu0
    %v2392 = vadd.f32 %v2223, %v2391
    %v2393 = vpop.f32.mrf.mxu0
    %v2394 = vadd.f32 %v2225, %v2393
    %2395 = vmatmul.bf16.gmra.mxu0 %v1063
    %v2396 = vpop.f32.mrf.mxu0
    %v2397 = vadd.f32 %v2228, %v2396
    %v2398 = vpop.f32.mrf.mxu0
    %v2399 = vadd.f32 %v2230, %v2398
    %2400 = vmatmul.bf16.gmra.mxu0 %v1069
    %v2401 = vpop.f32.mrf.mxu0
    %v2402 = vadd.f32 %v2233, %v2401
    %v2403 = vpop.f32.mrf.mxu0
    %v2404 = vadd.f32 %v2235, %v2403
    %2405 = vmatmul.bf16.gmra.mxu0 %v1075
    %v2406 = vpop.f32.mrf.mxu0
    %v2407 = vadd.f32 %v2238, %v2406
    %v2408 = vpop.f32.mrf.mxu0
    %v2409 = vadd.f32 %v2240, %v2408
    %2410 = vmatmul.bf16.gmra.mxu0 %v1081
    %v2411 = vpop.f32.mrf.mxu0
    %v2412 = vadd.f32 %v2243, %v2411
    %v2413 = vpop.f32.mrf.mxu0
    %v2414 = vadd.f32 %v2245, %v2413
    %2415 = vmatmul.bf16.gmra.mxu0 %v1087
    %v2416 = vpop.f32.mrf.mxu0
    %v2417 = vadd.f32 %v2248, %v2416
    %v2418 = vpop.f32.mrf.mxu0
    %v2419 = vadd.f32 %v2250, %v2418
    %2420 = vmatmul.bf16.gmra.mxu0 %v1093
    %v2421 = vpop.f32.mrf.mxu0
    %v2422 = vadd.f32 %v2253, %v2421
    %v2423 = vpop.f32.mrf.mxu0
    %v2424 = vadd.f32 %v2255, %v2423
    %2425 = vmatmul.bf16.gmra.mxu0 %v1099
    %v2426 = vpop.f32.mrf.mxu0
    %v2427 = vadd.f32 %v2258, %v2426
    %v2428 = vpop.f32.mrf.mxu0
    %v2429 = vadd.f32 %v2260, %v2428
    %2430 = vmatmul.bf16.gmra.mxu0 %v1105
    %v2431 = vpop.f32.mrf.mxu0
    %v2432 = vadd.f32 %v2263, %v2431
    %v2433 = vpop.f32.mrf.mxu0
    %v2434 = vadd.f32 %v2265, %v2433
    %2435 = vmatmul.bf16.gmra.mxu0 %v1111
    %v2436 = vpop.f32.mrf.mxu0
    %v2437 = vadd.f32 %v2268, %v2436
    %v2438 = vpop.f32.mrf.mxu0
    %v2439 = vadd.f32 %v2270, %v2438
    %2440 = vmatmul.bf16.gmra.mxu0 %v1117
    %v2441 = vpop.f32.mrf.mxu0
    %v2442 = vadd.f32 %v2273, %v2441
    %v2443 = vpop.f32.mrf.mxu0
    %v2444 = vadd.f32 %v2275, %v2443
    %2445 = vmatmul.bf16.gmra.mxu0 %v1123
    %v2446 = vpop.f32.mrf.mxu0
    %v2447 = vadd.f32 %v2278, %v2446
    %v2448 = vpop.f32.mrf.mxu0
    %v2449 = vadd.f32 %v2280, %v2448
    %2450 = vmatmul.bf16.gmra.mxu0 %v1129
    %v2451 = vpop.f32.mrf.mxu0
    %v2452 = vadd.f32 %v2283, %v2451
    %v2453 = vpop.f32.mrf.mxu0
    %v2454 = vadd.f32 %v2285, %v2453
    %2455 = vdwg.mxu0
    %2456 = vmatpush.bf16.msra.mxu0 %v1562
    %2457 = vmatpush.bf16.msra.mxu0 %v1561
    %2458 = vmatpush.bf16.msra.mxu0 %v1560
    %2459 = vmatpush.bf16.msra.mxu0 %v1559
    %2460 = vmatpush.bf16.msra.mxu0 %v1558
    %2461 = vmatpush.bf16.msra.mxu0 %v1557
    %2462 = vmatpush.bf16.msra.mxu0 %v1556
    %2463 = vmatpush.bf16.msra.mxu0 %v1555
    %2464 = vmatmul.bf16.gmra.mxu0 %v944
    %v2465 = vpop.f32.mrf.mxu0
    %v2466 = vadd.f32 %v2297, %v2465
    %v2467 = vpop.f32.mrf.mxu0
    %v2468 = vadd.f32 %v2299, %v2467
    %2469 = vmatmul.bf16.gmra.mxu0 %v950
    %v2470 = vpop.f32.mrf.mxu0
    %v2471 = vadd.f32 %v2302, %v2470
    %v2472 = vpop.f32.mrf.mxu0
    %v2473 = vadd.f32 %v2304, %v2472
    %2474 = vmatmul.bf16.gmra.mxu0 %v956
    %v2475 = vpop.f32.mrf.mxu0
    %v2476 = vadd.f32 %v2307, %v2475
    %v2477 = vpop.f32.mrf.mxu0
    %v2478 = vadd.f32 %v2309, %v2477
    %2479 = vmatmul.bf16.gmra.mxu0 %v962
    %v2480 = vpop.f32.mrf.mxu0
    %v2481 = vadd.f32 %v2312, %v2480
    %v2482 = vpop.f32.mrf.mxu0
    %v2483 = vadd.f32 %v2314, %v2482
    %2484 = vmatmul.bf16.gmra.mxu0 %v968
    %v2485 = vpop.f32.mrf.mxu0
    %v2486 = vadd.f32 %v2317, %v2485
    %v2487 = vpop.f32.mrf.mxu0
    %v2488 = vadd.f32 %v2319, %v2487
    %2489 = vmatmul.bf16.gmra.mxu0 %v974
    %v2490 = vpop.f32.mrf.mxu0
    %v2491 = vadd.f32 %v2322, %v2490
    %v2492 = vpop.f32.mrf.mxu0
    %v2493 = vadd.f32 %v2324, %v2492
    %2494 = vmatmul.bf16.gmra.mxu0 %v980
    %v2495 = vpop.f32.mrf.mxu0
    %v2496 = vadd.f32 %v2327, %v2495
    %v2497 = vpop.f32.mrf.mxu0
    %v2498 = vadd.f32 %v2329, %v2497
    %2499 = vmatmul.bf16.gmra.mxu0 %v986
    %v2500 = vpop.f32.mrf.mxu0
    %v2501 = vadd.f32 %v2332, %v2500
    %v2502 = vpop.f32.mrf.mxu0
    %v2503 = vadd.f32 %v2334, %v2502
    %2504 = vmatmul.bf16.gmra.mxu0 %v992
    %v2505 = vpop.f32.mrf.mxu0
    %v2506 = vadd.f32 %v2337, %v2505
    %v2507 = vpop.f32.mrf.mxu0
    %v2508 = vadd.f32 %v2339, %v2507
    %2509 = vmatmul.bf16.gmra.mxu0 %v998
    %v2510 = vpop.f32.mrf.mxu0
    %v2511 = vadd.f32 %v2342, %v2510
    %v2512 = vpop.f32.mrf.mxu0
    %v2513 = vadd.f32 %v2344, %v2512
    %2514 = vmatmul.bf16.gmra.mxu0 %v1004
    %v2515 = vpop.f32.mrf.mxu0
    %v2516 = vadd.f32 %v2347, %v2515
    %v2517 = vpop.f32.mrf.mxu0
    %v2518 = vadd.f32 %v2349, %v2517
    %2519 = vmatmul.bf16.gmra.mxu0 %v1010
    %v2520 = vpop.f32.mrf.mxu0
    %v2521 = vadd.f32 %v2352, %v2520
    %v2522 = vpop.f32.mrf.mxu0
    %v2523 = vadd.f32 %v2354, %v2522
    %2524 = vmatmul.bf16.gmra.mxu0 %v1016
    %v2525 = vpop.f32.mrf.mxu0
    %v2526 = vadd.f32 %v2357, %v2525
    %v2527 = vpop.f32.mrf.mxu0
    %v2528 = vadd.f32 %v2359, %v2527
    %2529 = vmatmul.bf16.gmra.mxu0 %v1022
    %v2530 = vpop.f32.mrf.mxu0
    %v2531 = vadd.f32 %v2362, %v2530
    %v2532 = vpop.f32.mrf.mxu0
    %v2533 = vadd.f32 %v2364, %v2532
    %2534 = vmatmul.bf16.gmra.mxu0 %v1028
    %v2535 = vpop.f32.mrf.mxu0
    %v2536 = vadd.f32 %v2367, %v2535
    %v2537 = vpop.f32.mrf.mxu0
    %v2538 = vadd.f32 %v2369, %v2537
    %2539 = vmatmul.bf16.gmra.mxu0 %v1034
    %v2540 = vpop.f32.mrf.mxu0
    %v2541 = vadd.f32 %v2372, %v2540
    %v2542 = vpop.f32.mrf.mxu0
    %v2543 = vadd.f32 %v2374, %v2542
    %2544 = vmatmul.bf16.gmra.mxu0 %v1040
    %v2545 = vpop.f32.mrf.mxu0
    %v2546 = vadd.f32 %v2377, %v2545
    %v2547 = vpop.f32.mrf.mxu0
    %v2548 = vadd.f32 %v2379, %v2547
    %2549 = vmatmul.bf16.gmra.mxu0 %v1046
    %v2550 = vpop.f32.mrf.mxu0
    %v2551 = vadd.f32 %v2382, %v2550
    %v2552 = vpop.f32.mrf.mxu0
    %v2553 = vadd.f32 %v2384, %v2552
    %2554 = vmatmul.bf16.gmra.mxu0 %v1052
    %v2555 = vpop.f32.mrf.mxu0
    %v2556 = vadd.f32 %v2387, %v2555
    %v2557 = vpop.f32.mrf.mxu0
    %v2558 = vadd.f32 %v2389, %v2557
    %2559 = vmatmul.bf16.gmra.mxu0 %v1058
    %v2560 = vpop.f32.mrf.mxu0
    %v2561 = vadd.f32 %v2392, %v2560
    %v2562 = vpop.f32.mrf.mxu0
    %v2563 = vadd.f32 %v2394, %v2562
    %2564 = vmatmul.bf16.gmra.mxu0 %v1064
    %v2565 = vpop.f32.mrf.mxu0
    %v2566 = vadd.f32 %v2397, %v2565
    %v2567 = vpop.f32.mrf.mxu0
    %v2568 = vadd.f32 %v2399, %v2567
    %2569 = vmatmul.bf16.gmra.mxu0 %v1070
    %v2570 = vpop.f32.mrf.mxu0
    %v2571 = vadd.f32 %v2402, %v2570
    %v2572 = vpop.f32.mrf.mxu0
    %v2573 = vadd.f32 %v2404, %v2572
    %2574 = vmatmul.bf16.gmra.mxu0 %v1076
    %v2575 = vpop.f32.mrf.mxu0
    %v2576 = vadd.f32 %v2407, %v2575
    %v2577 = vpop.f32.mrf.mxu0
    %v2578 = vadd.f32 %v2409, %v2577
    %2579 = vmatmul.bf16.gmra.mxu0 %v1082
    %v2580 = vpop.f32.mrf.mxu0
    %v2581 = vadd.f32 %v2412, %v2580
    %v2582 = vpop.f32.mrf.mxu0
    %v2583 = vadd.f32 %v2414, %v2582
    %2584 = vmatmul.bf16.gmra.mxu0 %v1088
    %v2585 = vpop.f32.mrf.mxu0
    %v2586 = vadd.f32 %v2417, %v2585
    %v2587 = vpop.f32.mrf.mxu0
    %v2588 = vadd.f32 %v2419, %v2587
    %2589 = vmatmul.bf16.gmra.mxu0 %v1094
    %v2590 = vpop.f32.mrf.mxu0
    %v2591 = vadd.f32 %v2422, %v2590
    %v2592 = vpop.f32.mrf.mxu0
    %v2593 = vadd.f32 %v2424, %v2592
    %2594 = vmatmul.bf16.gmra.mxu0 %v1100
    %v2595 = vpop.f32.mrf.mxu0
    %v2596 = vadd.f32 %v2427, %v2595
    %v2597 = vpop.f32.mrf.mxu0
    %v2598 = vadd.f32 %v2429, %v2597
    %2599 = vmatmul.bf16.gmra.mxu0 %v1106
    %v2600 = vpop.f32.mrf.mxu0
    %v2601 = vadd.f32 %v2432, %v2600
    %v2602 = vpop.f32.mrf.mxu0
    %v2603 = vadd.f32 %v2434, %v2602
    %2604 = vmatmul.bf16.gmra.mxu0 %v1112
    %v2605 = vpop.f32.mrf.mxu0
    %v2606 = vadd.f32 %v2437, %v2605
    %v2607 = vpop.f32.mrf.mxu0
    %v2608 = vadd.f32 %v2439, %v2607
    %2609 = vmatmul.bf16.gmra.mxu0 %v1118
    %v2610 = vpop.f32.mrf.mxu0
    %v2611 = vadd.f32 %v2442, %v2610
    %v2612 = vpop.f32.mrf.mxu0
    %v2613 = vadd.f32 %v2444, %v2612
    %2614 = vmatmul.bf16.gmra.mxu0 %v1124
    %v2615 = vpop.f32.mrf.mxu0
    %v2616 = vadd.f32 %v2447, %v2615
    %v2617 = vpop.f32.mrf.mxu0
    %v2618 = vadd.f32 %v2449, %v2617
    %2619 = vmatmul.bf16.gmra.mxu0 %v1130
    %v2620 = vpop.f32.mrf.mxu0
    %v2621 = vadd.f32 %v2452, %v2620
    %v2622 = vpop.f32.mrf.mxu0
    %v2623 = vadd.f32 %v2454, %v2622
    %2624 = vdwg.mxu0
    %vm2625 = vcmp.ge.f32.partialorder %v2466, 0.0
    %vm2626 = vcmp.ge.f32.partialorder %v2468, 0.0
    %vm2627 = vcmp.ge.f32.partialorder %v2471, 0.0
    %vm2628 = vcmp.ge.f32.partialorder %v2473, 0.0
    %vm2629 = vcmp.ge.f32.partialorder %v2476, 0.0
    %vm2630 = vcmp.ge.f32.partialorder %v2478, 0.0
    %vm2631 = vcmp.ge.f32.partialorder %v2481, 0.0
    %vm2632 = vcmp.ge.f32.partialorder %v2483, 0.0
    %vm2633 = vcmp.ge.f32.partialorder %v2486, 0.0
    %vm2634 = vcmp.ge.f32.partialorder %v2488, 0.0
    %vm2635 = vcmp.ge.f32.partialorder %v2491, 0.0
    %vm2636 = vcmp.ge.f32.partialorder %v2493, 0.0
    %vm2637 = vcmp.ge.f32.partialorder %v2496, 0.0
    %vm2638 = vcmp.ge.f32.partialorder %v2498, 0.0
    %vm2639 = vcmp.ge.f32.partialorder %v2501, 0.0
    %vm2640 = vcmp.ge.f32.partialorder %v2503, 0.0
    %vm2641 = vcmp.ge.f32.partialorder %v2506, 0.0
    %vm2642 = vcmp.ge.f32.partialorder %v2508, 0.0
    %vm2643 = vcmp.ge.f32.partialorder %v2511, 0.0
    %vm2644 = vcmp.ge.f32.partialorder %v2513, 0.0
    %vm2645 = vcmp.ge.f32.partialorder %v2516, 0.0
    %vm2646 = vcmp.ge.f32.partialorder %v2518, 0.0
    %vm2647 = vcmp.ge.f32.partialorder %v2521, 0.0
    %vm2648 = vcmp.ge.f32.partialorder %v2523, 0.0
    %vm2649 = vcmp.ge.f32.partialorder %v2526, 0.0
    %vm2650 = vcmp.ge.f32.partialorder %v2528, 0.0
    %vm2651 = vcmp.ge.f32.partialorder %v2531, 0.0
    %vm2652 = vcmp.ge.f32.partialorder %v2533, 0.0
    %vm2653 = vcmp.ge.f32.partialorder %v2536, 0.0
    %vm2654 = vcmp.ge.f32.partialorder %v2538, 0.0
    %vm2655 = vcmp.ge.f32.partialorder %v2541, 0.0
    %vm2656 = vcmp.ge.f32.partialorder %v2543, 0.0
    %vm2657 = vcmp.ge.f32.partialorder %v2546, 0.0
    %vm2658 = vcmp.ge.f32.partialorder %v2548, 0.0
    %vm2659 = vcmp.ge.f32.partialorder %v2551, 0.0
    %vm2660 = vcmp.ge.f32.partialorder %v2553, 0.0
    %vm2661 = vcmp.ge.f32.partialorder %v2556, 0.0
    %vm2662 = vcmp.ge.f32.partialorder %v2558, 0.0
    %vm2663 = vcmp.ge.f32.partialorder %v2561, 0.0
    %vm2664 = vcmp.ge.f32.partialorder %v2563, 0.0
    %vm2665 = vcmp.ge.f32.partialorder %v2566, 0.0
    %vm2666 = vcmp.ge.f32.partialorder %v2568, 0.0
    %vm2667 = vcmp.ge.f32.partialorder %v2571, 0.0
    %vm2668 = vcmp.ge.f32.partialorder %v2573, 0.0
    %vm2669 = vcmp.ge.f32.partialorder %v2576, 0.0
    %vm2670 = vcmp.ge.f32.partialorder %v2578, 0.0
    %vm2671 = vcmp.ge.f32.partialorder %v2581, 0.0
    %vm2672 = vcmp.ge.f32.partialorder %v2583, 0.0
    %vm2673 = vcmp.ge.f32.partialorder %v2586, 0.0
    %vm2674 = vcmp.ge.f32.partialorder %v2588, 0.0
    %vm2675 = vcmp.ge.f32.partialorder %v2591, 0.0
    %vm2676 = vcmp.ge.f32.partialorder %v2593, 0.0
    %vm2677 = vcmp.ge.f32.partialorder %v2596, 0.0
    %vm2678 = vcmp.ge.f32.partialorder %v2598, 0.0
    %vm2679 = vcmp.ge.f32.partialorder %v2601, 0.0
    %vm2680 = vcmp.ge.f32.partialorder %v2603, 0.0
    %vm2681 = vcmp.ge.f32.partialorder %v2606, 0.0
    %vm2682 = vcmp.ge.f32.partialorder %v2608, 0.0
    %vm2683 = vcmp.ge.f32.partialorder %v2611, 0.0
    %vm2684 = vcmp.ge.f32.partialorder %v2613, 0.0
    %vm2685 = vcmp.ge.f32.partialorder %v2616, 0.0
    %vm2686 = vcmp.ge.f32.partialorder %v2618, 0.0
    %vm2687 = vcmp.ge.f32.partialorder %v2621, 0.0
    %vm2688 = vcmp.ge.f32.partialorder %v2623, 0.0
    %v2689 = vmul.f32 %v2466, 0.01
    %v2690 = vmul.f32 %v2468, 0.01
    %v2691 = vmul.f32 %v2471, 0.01
    %v2692 = vmul.f32 %v2473, 0.01
    %v2693 = vmul.f32 %v2476, 0.01
    %v2694 = vmul.f32 %v2478, 0.01
    %v2695 = vmul.f32 %v2481, 0.01
    %v2696 = vmul.f32 %v2483, 0.01
    %v2697 = vmul.f32 %v2486, 0.01
    %v2698 = vmul.f32 %v2488, 0.01
    %v2699 = vmul.f32 %v2491, 0.01
    %v2700 = vmul.f32 %v2493, 0.01
    %v2701 = vmul.f32 %v2496, 0.01
    %v2702 = vmul.f32 %v2498, 0.01
    %v2703 = vmul.f32 %v2501, 0.01
    %v2704 = vmul.f32 %v2503, 0.01
    %v2705 = vmul.f32 %v2506, 0.01
    %v2706 = vmul.f32 %v2508, 0.01
    %v2707 = vmul.f32 %v2511, 0.01
    %v2708 = vmul.f32 %v2513, 0.01
    %v2709 = vmul.f32 %v2516, 0.01
    %v2710 = vmul.f32 %v2518, 0.01
    %v2711 = vmul.f32 %v2521, 0.01
    %v2712 = vmul.f32 %v2523, 0.01
    %v2713 = vmul.f32 %v2526, 0.01
    %v2714 = vmul.f32 %v2528, 0.01
    %v2715 = vmul.f32 %v2531, 0.01
    %v2716 = vmul.f32 %v2533, 0.01
    %v2717 = vmul.f32 %v2536, 0.01
    %v2718 = vmul.f32 %v2538, 0.01
    %v2719 = vmul.f32 %v2541, 0.01
    %v2720 = vmul.f32 %v2543, 0.01
    %v2721 = vmul.f32 %v2546, 0.01
    %v2722 = vmul.f32 %v2548, 0.01
    %v2723 = vmul.f32 %v2551, 0.01
    %v2724 = vmul.f32 %v2553, 0.01
    %v2725 = vmul.f32 %v2556, 0.01
    %v2726 = vmul.f32 %v2558, 0.01
    %v2727 = vmul.f32 %v2561, 0.01
    %v2728 = vmul.f32 %v2563, 0.01
    %v2729 = vmul.f32 %v2566, 0.01
    %v2730 = vmul.f32 %v2568, 0.01
    %v2731 = vmul.f32 %v2571, 0.01
    %v2732 = vmul.f32 %v2573, 0.01
    %v2733 = vmul.f32 %v2576, 0.01
    %v2734 = vmul.f32 %v2578, 0.01
    %v2735 = vmul.f32 %v2581, 0.01
    %v2736 = vmul.f32 %v2583, 0.01
    %v2737 = vmul.f32 %v2586, 0.01
    %v2738 = vmul.f32 %v2588, 0.01
    %v2739 = vmul.f32 %v2591, 0.01
    %v2740 = vmul.f32 %v2593, 0.01
    %v2741 = vmul.f32 %v2596, 0.01
    %v2742 = vmul.f32 %v2598, 0.01
    %v2743 = vmul.f32 %v2601, 0.01
    %v2744 = vmul.f32 %v2603, 0.01
    %v2745 = vmul.f32 %v2606, 0.01
    %v2746 = vmul.f32 %v2608, 0.01
    %v2747 = vmul.f32 %v2611, 0.01
    %v2748 = vmul.f32 %v2613, 0.01
    %v2749 = vmul.f32 %v2616, 0.01
    %v2750 = vmul.f32 %v2618, 0.01
    %v2751 = vmul.f32 %v2621, 0.01
    %v2752 = vmul.f32 %v2623, 0.01
    %v2753 = vsel %vm2625, %v2466, %v2689
    %v2754 = vsel %vm2626, %v2468, %v2690
    %v2755 = vsel %vm2627, %v2471, %v2691
    %v2756 = vsel %vm2628, %v2473, %v2692
    %v2757 = vsel %vm2629, %v2476, %v2693
    %v2758 = vsel %vm2630, %v2478, %v2694
    %v2759 = vsel %vm2631, %v2481, %v2695
    %v2760 = vsel %vm2632, %v2483, %v2696
    %v2761 = vsel %vm2633, %v2486, %v2697
    %v2762 = vsel %vm2634, %v2488, %v2698
    %v2763 = vsel %vm2635, %v2491, %v2699
    %v2764 = vsel %vm2636, %v2493, %v2700
    %v2765 = vsel %vm2637, %v2496, %v2701
    %v2766 = vsel %vm2638, %v2498, %v2702
    %v2767 = vsel %vm2639, %v2501, %v2703
    %v2768 = vsel %vm2640, %v2503, %v2704
    %v2769 = vsel %vm2641, %v2506, %v2705
    %v2770 = vsel %vm2642, %v2508, %v2706
    %v2771 = vsel %vm2643, %v2511, %v2707
    %v2772 = vsel %vm2644, %v2513, %v2708
    %v2773 = vsel %vm2645, %v2516, %v2709
    %v2774 = vsel %vm2646, %v2518, %v2710
    %v2775 = vsel %vm2647, %v2521, %v2711
    %v2776 = vsel %vm2648, %v2523, %v2712
    %v2777 = vsel %vm2649, %v2526, %v2713
    %v2778 = vsel %vm2650, %v2528, %v2714
    %v2779 = vsel %vm2651, %v2531, %v2715
    %v2780 = vsel %vm2652, %v2533, %v2716
    %v2781 = vsel %vm2653, %v2536, %v2717
    %v2782 = vsel %vm2654, %v2538, %v2718
    %v2783 = vsel %vm2655, %v2541, %v2719
    %v2784 = vsel %vm2656, %v2543, %v2720
    %v2785 = vsel %vm2657, %v2546, %v2721
    %v2786 = vsel %vm2658, %v2548, %v2722
    %v2787 = vsel %vm2659, %v2551, %v2723
    %v2788 = vsel %vm2660, %v2553, %v2724
    %v2789 = vsel %vm2661, %v2556, %v2725
    %v2790 = vsel %vm2662, %v2558, %v2726
    %v2791 = vsel %vm2663, %v2561, %v2727
    %v2792 = vsel %vm2664, %v2563, %v2728
    %v2793 = vsel %vm2665, %v2566, %v2729
    %v2794 = vsel %vm2666, %v2568, %v2730
    %v2795 = vsel %vm2667, %v2571, %v2731
    %v2796 = vsel %vm2668, %v2573, %v2732
    %v2797 = vsel %vm2669, %v2576, %v2733
    %v2798 = vsel %vm2670, %v2578, %v2734
    %v2799 = vsel %vm2671, %v2581, %v2735
    %v2800 = vsel %vm2672, %v2583, %v2736
    %v2801 = vsel %vm2673, %v2586, %v2737
    %v2802 = vsel %vm2674, %v2588, %v2738
    %v2803 = vsel %vm2675, %v2591, %v2739
    %v2804 = vsel %vm2676, %v2593, %v2740
    %v2805 = vsel %vm2677, %v2596, %v2741
    %v2806 = vsel %vm2678, %v2598, %v2742
    %v2807 = vsel %vm2679, %v2601, %v2743
    %v2808 = vsel %vm2680, %v2603, %v2744
    %v2809 = vsel %vm2681, %v2606, %v2745
    %v2810 = vsel %vm2682, %v2608, %v2746
    %v2811 = vsel %vm2683, %v2611, %v2747
    %v2812 = vsel %vm2684, %v2613, %v2748
    %v2813 = vsel %vm2685, %v2616, %v2749
    %v2814 = vsel %vm2686, %v2618, %v2750
    %v2815 = vsel %vm2687, %v2621, %v2751
    %v2816 = vsel %vm2688, %v2623, %v2752
    %v2817 = vld [vmem:[#allocation5] sm:$0xff]
    %v2818 = vld [vmem:[#allocation5 + $0x8] sm:$0xff]
    %v2819 = vld [vmem:[#allocation5 + $0x10] sm:$0xff]
    %v2820 = vld [vmem:[#allocation5 + $0x18] sm:$0xff]
    %v2821 = vld [vmem:[#allocation5 + $0x20] sm:$0xff]
    %v2822 = vld [vmem:[#allocation5 + $0x28] sm:$0xff]
    %v2823 = vld [vmem:[#allocation5 + $0x30] sm:$0xff]
    %v2824 = vld [vmem:[#allocation5 + $0x38] sm:$0xff]
    %v2825 = vld [vmem:[#allocation5 + $0x40] sm:$0xff]
    %v2826 = vld [vmem:[#allocation5 + $0x48] sm:$0xff]
    %v2827 = vld [vmem:[#allocation5 + $0x50] sm:$0xff]
    %v2828 = vld [vmem:[#allocation5 + $0x58] sm:$0xff]
    %v2829 = vld [vmem:[#allocation5 + $0x60] sm:$0xff]
    %v2830 = vld [vmem:[#allocation5 + $0x68] sm:$0xff]
    %v2831 = vld [vmem:[#allocation5 + $0x70] sm:$0xff]
    %v2832 = vld [vmem:[#allocation5 + $0x78] sm:$0xff]
    %v2833 = vld [vmem:[#allocation5 + $0x80] sm:$0xff]
    %v2834 = vld [vmem:[#allocation5 + $0x88] sm:$0xff]
    %v2835 = vld [vmem:[#allocation5 + $0x90] sm:$0xff]
    %v2836 = vld [vmem:[#allocation5 + $0x98] sm:$0xff]
    %v2837 = vld [vmem:[#allocation5 + $0xa0] sm:$0xff]
    %v2838 = vld [vmem:[#allocation5 + $0xa8] sm:$0xff]
    %v2839 = vld [vmem:[#allocation5 + $0xb0] sm:$0xff]
    %v2840 = vld [vmem:[#allocation5 + $0xb8] sm:$0xff]
    %v2841 = vld [vmem:[#allocation5 + $0xc0] sm:$0xff]
    %v2842 = vld [vmem:[#allocation5 + $0xc8] sm:$0xff]
    %v2843 = vld [vmem:[#allocation5 + $0xd0] sm:$0xff]
    %v2844 = vld [vmem:[#allocation5 + $0xd8] sm:$0xff]
    %v2845 = vld [vmem:[#allocation5 + $0xe0] sm:$0xff]
    %v2846 = vld [vmem:[#allocation5 + $0xe8] sm:$0xff]
    %v2847 = vld [vmem:[#allocation5 + $0xf0] sm:$0xff]
    %v2848 = vld [vmem:[#allocation5 + $0xf8] sm:$0xff]
    %v2849 = vld [vmem:[#allocation5 + $0x100] sm:$0xff]
    %v2850 = vld [vmem:[#allocation5 + $0x108] sm:$0xff]
    %v2851 = vld [vmem:[#allocation5 + $0x110] sm:$0xff]
    %v2852 = vld [vmem:[#allocation5 + $0x118] sm:$0xff]
    %v2853 = vld [vmem:[#allocation5 + $0x120] sm:$0xff]
    %v2854 = vld [vmem:[#allocation5 + $0x128] sm:$0xff]
    %v2855 = vld [vmem:[#allocation5 + $0x130] sm:$0xff]
    %v2856 = vld [vmem:[#allocation5 + $0x138] sm:$0xff]
    %v2857 = vld [vmem:[#allocation5 + $0x140] sm:$0xff]
    %v2858 = vld [vmem:[#allocation5 + $0x148] sm:$0xff]
    %v2859 = vld [vmem:[#allocation5 + $0x150] sm:$0xff]
    %v2860 = vld [vmem:[#allocation5 + $0x158] sm:$0xff]
    %v2861 = vld [vmem:[#allocation5 + $0x160] sm:$0xff]
    %v2862 = vld [vmem:[#allocation5 + $0x168] sm:$0xff]
    %v2863 = vld [vmem:[#allocation5 + $0x170] sm:$0xff]
    %v2864 = vld [vmem:[#allocation5 + $0x178] sm:$0xff]
    %v2865 = vld [vmem:[#allocation5 + $0x180] sm:$0xff]
    %v2866 = vld [vmem:[#allocation5 + $0x188] sm:$0xff]
    %v2867 = vld [vmem:[#allocation5 + $0x190] sm:$0xff]
    %v2868 = vld [vmem:[#allocation5 + $0x198] sm:$0xff]
    %v2869 = vld [vmem:[#allocation5 + $0x1a0] sm:$0xff]
    %v2870 = vld [vmem:[#allocation5 + $0x1a8] sm:$0xff]
    %v2871 = vld [vmem:[#allocation5 + $0x1b0] sm:$0xff]
    %v2872 = vld [vmem:[#allocation5 + $0x1b8] sm:$0xff]
    %v2873 = vld [vmem:[#allocation5 + $0x1c0] sm:$0xff]
    %v2874 = vld [vmem:[#allocation5 + $0x1c8] sm:$0xff]
    %v2875 = vld [vmem:[#allocation5 + $0x1d0] sm:$0xff]
    %v2876 = vld [vmem:[#allocation5 + $0x1d8] sm:$0xff]
    %v2877 = vld [vmem:[#allocation5 + $0x1e0] sm:$0xff]
    %v2878 = vld [vmem:[#allocation5 + $0x1e8] sm:$0xff]
    %v2879 = vld [vmem:[#allocation5 + $0x1f0] sm:$0xff]
    %v2880 = vld [vmem:[#allocation5 + $0x1f8] sm:$0xff]
    %v2881 = vld [vmem:[#allocation5 + $0x200] sm:$0xff]
    %v2882 = vld [vmem:[#allocation5 + $0x208] sm:$0xff]
    %v2883 = vld [vmem:[#allocation5 + $0x210] sm:$0xff]
    %v2884 = vld [vmem:[#allocation5 + $0x218] sm:$0xff]
    %v2885 = vld [vmem:[#allocation5 + $0x220] sm:$0xff]
    %v2886 = vld [vmem:[#allocation5 + $0x228] sm:$0xff]
    %v2887 = vld [vmem:[#allocation5 + $0x230] sm:$0xff]
    %v2888 = vld [vmem:[#allocation5 + $0x238] sm:$0xff]
    %v2889 = vld [vmem:[#allocation5 + $0x240] sm:$0xff]
    %v2890 = vld [vmem:[#allocation5 + $0x248] sm:$0xff]
    %v2891 = vld [vmem:[#allocation5 + $0x250] sm:$0xff]
    %v2892 = vld [vmem:[#allocation5 + $0x258] sm:$0xff]
    %v2893 = vld [vmem:[#allocation5 + $0x260] sm:$0xff]
    %v2894 = vld [vmem:[#allocation5 + $0x268] sm:$0xff]
    %v2895 = vld [vmem:[#allocation5 + $0x270] sm:$0xff]
    %v2896 = vld [vmem:[#allocation5 + $0x278] sm:$0xff]
    %v2897 = vld [vmem:[#allocation5 + $0x280] sm:$0xff]
    %v2898 = vld [vmem:[#allocation5 + $0x288] sm:$0xff]
    %v2899 = vld [vmem:[#allocation5 + $0x290] sm:$0xff]
    %v2900 = vld [vmem:[#allocation5 + $0x298] sm:$0xff]
    %v2901 = vld [vmem:[#allocation5 + $0x2a0] sm:$0xff]
    %v2902 = vld [vmem:[#allocation5 + $0x2a8] sm:$0xff]
    %v2903 = vld [vmem:[#allocation5 + $0x2b0] sm:$0xff]
    %v2904 = vld [vmem:[#allocation5 + $0x2b8] sm:$0xff]
    %v2905 = vld [vmem:[#allocation5 + $0x2c0] sm:$0xff]
    %v2906 = vld [vmem:[#allocation5 + $0x2c8] sm:$0xff]
    %v2907 = vld [vmem:[#allocation5 + $0x2d0] sm:$0xff]
    %v2908 = vld [vmem:[#allocation5 + $0x2d8] sm:$0xff]
    %v2909 = vld [vmem:[#allocation5 + $0x2e0] sm:$0xff]
    %v2910 = vld [vmem:[#allocation5 + $0x2e8] sm:$0xff]
    %v2911 = vld [vmem:[#allocation5 + $0x2f0] sm:$0xff]
    %v2912 = vld [vmem:[#allocation5 + $0x2f8] sm:$0xff]
    %v2913 = vld [vmem:[#allocation5 + $0x300] sm:$0xff]
    %v2914 = vld [vmem:[#allocation5 + $0x308] sm:$0xff]
    %v2915 = vld [vmem:[#allocation5 + $0x310] sm:$0xff]
    %v2916 = vld [vmem:[#allocation5 + $0x318] sm:$0xff]
    %v2917 = vld [vmem:[#allocation5 + $0x320] sm:$0xff]
    %v2918 = vld [vmem:[#allocation5 + $0x328] sm:$0xff]
    %v2919 = vld [vmem:[#allocation5 + $0x330] sm:$0xff]
    %v2920 = vld [vmem:[#allocation5 + $0x338] sm:$0xff]
    %v2921 = vld [vmem:[#allocation5 + $0x340] sm:$0xff]
    %v2922 = vld [vmem:[#allocation5 + $0x348] sm:$0xff]
    %v2923 = vld [vmem:[#allocation5 + $0x350] sm:$0xff]
    %v2924 = vld [vmem:[#allocation5 + $0x358] sm:$0xff]
    %v2925 = vld [vmem:[#allocation5 + $0x360] sm:$0xff]
    %v2926 = vld [vmem:[#allocation5 + $0x368] sm:$0xff]
    %v2927 = vld [vmem:[#allocation5 + $0x370] sm:$0xff]
    %v2928 = vld [vmem:[#allocation5 + $0x378] sm:$0xff]
    %v2929 = vld [vmem:[#allocation5 + $0x380] sm:$0xff]
    %v2930 = vld [vmem:[#allocation5 + $0x388] sm:$0xff]
    %v2931 = vld [vmem:[#allocation5 + $0x390] sm:$0xff]
    %v2932 = vld [vmem:[#allocation5 + $0x398] sm:$0xff]
    %v2933 = vld [vmem:[#allocation5 + $0x3a0] sm:$0xff]
    %v2934 = vld [vmem:[#allocation5 + $0x3a8] sm:$0xff]
    %v2935 = vld [vmem:[#allocation5 + $0x3b0] sm:$0xff]
    %v2936 = vld [vmem:[#allocation5 + $0x3b8] sm:$0xff]
    %v2937 = vld [vmem:[#allocation5 + $0x3c0] sm:$0xff]
    %v2938 = vld [vmem:[#allocation5 + $0x3c8] sm:$0xff]
    %v2939 = vld [vmem:[#allocation5 + $0x3d0] sm:$0xff]
    %v2940 = vld [vmem:[#allocation5 + $0x3d8] sm:$0xff]
    %v2941 = vld [vmem:[#allocation5 + $0x3e0] sm:$0xff]
    %v2942 = vld [vmem:[#allocation5 + $0x3e8] sm:$0xff]
    %v2943 = vld [vmem:[#allocation5 + $0x3f0] sm:$0xff]
    %v2944 = vld [vmem:[#allocation5 + $0x3f8] sm:$0xff]
    %v2945 = vld [vmem:[#allocation5 + $0x400] sm:$0xff]
    %v2946 = vld [vmem:[#allocation5 + $0x408] sm:$0xff]
    %v2947 = vld [vmem:[#allocation5 + $0x410] sm:$0xff]
    %v2948 = vld [vmem:[#allocation5 + $0x418] sm:$0xff]
    %v2949 = vld [vmem:[#allocation5 + $0x420] sm:$0xff]
    %v2950 = vld [vmem:[#allocation5 + $0x428] sm:$0xff]
    %v2951 = vld [vmem:[#allocation5 + $0x430] sm:$0xff]
    %v2952 = vld [vmem:[#allocation5 + $0x438] sm:$0xff]
    %v2953 = vld [vmem:[#allocation5 + $0x440] sm:$0xff]
    %v2954 = vld [vmem:[#allocation5 + $0x448] sm:$0xff]
    %v2955 = vld [vmem:[#allocation5 + $0x450] sm:$0xff]
    %v2956 = vld [vmem:[#allocation5 + $0x458] sm:$0xff]
    %v2957 = vld [vmem:[#allocation5 + $0x460] sm:$0xff]
    %v2958 = vld [vmem:[#allocation5 + $0x468] sm:$0xff]
    %v2959 = vld [vmem:[#allocation5 + $0x470] sm:$0xff]
    %v2960 = vld [vmem:[#allocation5 + $0x478] sm:$0xff]
    %v2961 = vld [vmem:[#allocation5 + $0x480] sm:$0xff]
    %v2962 = vld [vmem:[#allocation5 + $0x488] sm:$0xff]
    %v2963 = vld [vmem:[#allocation5 + $0x490] sm:$0xff]
    %v2964 = vld [vmem:[#allocation5 + $0x498] sm:$0xff]
    %v2965 = vld [vmem:[#allocation5 + $0x4a0] sm:$0xff]
    %v2966 = vld [vmem:[#allocation5 + $0x4a8] sm:$0xff]
    %v2967 = vld [vmem:[#allocation5 + $0x4b0] sm:$0xff]
    %v2968 = vld [vmem:[#allocation5 + $0x4b8] sm:$0xff]
    %v2969 = vld [vmem:[#allocation5 + $0x4c0] sm:$0xff]
    %v2970 = vld [vmem:[#allocation5 + $0x4c8] sm:$0xff]
    %v2971 = vld [vmem:[#allocation5 + $0x4d0] sm:$0xff]
    %v2972 = vld [vmem:[#allocation5 + $0x4d8] sm:$0xff]
    %v2973 = vld [vmem:[#allocation5 + $0x4e0] sm:$0xff]
    %v2974 = vld [vmem:[#allocation5 + $0x4e8] sm:$0xff]
    %v2975 = vld [vmem:[#allocation5 + $0x4f0] sm:$0xff]
    %v2976 = vld [vmem:[#allocation5 + $0x4f8] sm:$0xff]
    %v2977 = vld [vmem:[#allocation5 + $0x500] sm:$0xff]
    %v2978 = vld [vmem:[#allocation5 + $0x508] sm:$0xff]
    %v2979 = vld [vmem:[#allocation5 + $0x510] sm:$0xff]
    %v2980 = vld [vmem:[#allocation5 + $0x518] sm:$0xff]
    %v2981 = vld [vmem:[#allocation5 + $0x520] sm:$0xff]
    %v2982 = vld [vmem:[#allocation5 + $0x528] sm:$0xff]
    %v2983 = vld [vmem:[#allocation5 + $0x530] sm:$0xff]
    %v2984 = vld [vmem:[#allocation5 + $0x538] sm:$0xff]
    %v2985 = vld [vmem:[#allocation5 + $0x540] sm:$0xff]
    %v2986 = vld [vmem:[#allocation5 + $0x548] sm:$0xff]
    %v2987 = vld [vmem:[#allocation5 + $0x550] sm:$0xff]
    %v2988 = vld [vmem:[#allocation5 + $0x558] sm:$0xff]
    %v2989 = vld [vmem:[#allocation5 + $0x560] sm:$0xff]
    %v2990 = vld [vmem:[#allocation5 + $0x568] sm:$0xff]
    %v2991 = vld [vmem:[#allocation5 + $0x570] sm:$0xff]
    %v2992 = vld [vmem:[#allocation5 + $0x578] sm:$0xff]
    %v2993 = vld [vmem:[#allocation5 + $0x580] sm:$0xff]
    %v2994 = vld [vmem:[#allocation5 + $0x588] sm:$0xff]
    %v2995 = vld [vmem:[#allocation5 + $0x590] sm:$0xff]
    %v2996 = vld [vmem:[#allocation5 + $0x598] sm:$0xff]
    %v2997 = vld [vmem:[#allocation5 + $0x5a0] sm:$0xff]
    %v2998 = vld [vmem:[#allocation5 + $0x5a8] sm:$0xff]
    %v2999 = vld [vmem:[#allocation5 + $0x5b0] sm:$0xff]
    %v3000 = vld [vmem:[#allocation5 + $0x5b8] sm:$0xff]
    %v3001 = vld [vmem:[#allocation5 + $0x5c0] sm:$0xff]
    %v3002 = vld [vmem:[#allocation5 + $0x5c8] sm:$0xff]
    %v3003 = vld [vmem:[#allocation5 + $0x5d0] sm:$0xff]
    %v3004 = vld [vmem:[#allocation5 + $0x5d8] sm:$0xff]
    %v3005 = vld [vmem:[#allocation5 + $0x5e0] sm:$0xff]
    %v3006 = vld [vmem:[#allocation5 + $0x5e8] sm:$0xff]
    %v3007 = vld [vmem:[#allocation5 + $0x5f0] sm:$0xff]
    %v3008 = vld [vmem:[#allocation5 + $0x5f8] sm:$0xff]
    %v3009 = vld [vmem:[%s5] sm:$0xf]
    %v3010 = vld [vmem:[%s5 + $0x4] sm:$0xf]
    %v3011 = vld [vmem:[%s5 + $0x8] sm:$0xf]
    %v3012 = vld [vmem:[%s5 + $0xc] sm:$0xf]
    %v3013 = vld [vmem:[%s5 + $0x10] sm:$0xf]
    %v3014 = vld [vmem:[%s5 + $0x14] sm:$0xf]
    %v3015 = vld [vmem:[%s5 + $0x18] sm:$0xf]
    %v3016 = vld [vmem:[%s5 + $0x1c] sm:$0xf]
    %v3017 = vld [vmem:[%s5 + $0x20] sm:$0xf]
    %v3018 = vld [vmem:[%s5 + $0x24] sm:$0xf]
    %v3019 = vld [vmem:[%s5 + $0x28] sm:$0xf]
    %v3020 = vld [vmem:[%s5 + $0x2c] sm:$0xf]
    %v3021 = vld [vmem:[%s5 + $0x30] sm:$0xf]
    %v3022 = vld [vmem:[%s5 + $0x34] sm:$0xf]
    %v3023 = vld [vmem:[%s5 + $0x38] sm:$0xf]
    %v3024 = vld [vmem:[%s5 + $0x3c] sm:$0xf]
    %v3025 = vld [vmem:[%s5 + $0x40] sm:$0xf]
    %v3026 = vld [vmem:[%s5 + $0x44] sm:$0xf]
    %v3027 = vld [vmem:[%s5 + $0x48] sm:$0xf]
    %v3028 = vld [vmem:[%s5 + $0x4c] sm:$0xf]
    %v3029 = vld [vmem:[%s5 + $0x50] sm:$0xf]
    %v3030 = vld [vmem:[%s5 + $0x54] sm:$0xf]
    %v3031 = vld [vmem:[%s5 + $0x58] sm:$0xf]
    %v3032 = vld [vmem:[%s5 + $0x5c] sm:$0xf]
    %v3033 = vld [vmem:[%s5 + $0x60] sm:$0xf]
    %v3034 = vld [vmem:[%s5 + $0x64] sm:$0xf]
    %v3035 = vld [vmem:[%s5 + $0x68] sm:$0xf]
    %v3036 = vld [vmem:[%s5 + $0x6c] sm:$0xf]
    %v3037 = vld [vmem:[%s5 + $0x70] sm:$0xf]
    %v3038 = vld [vmem:[%s5 + $0x74] sm:$0xf]
    %v3039 = vld [vmem:[%s5 + $0x78] sm:$0xf]
    %v3040 = vld [vmem:[%s5 + $0x7c] sm:$0xf]
    %v3041 = vld [vmem:[%s5 + $0x80] sm:$0xf]
    %v3042 = vld [vmem:[%s5 + $0x84] sm:$0xf]
    %v3043 = vld [vmem:[%s5 + $0x88] sm:$0xf]
    %v3044 = vld [vmem:[%s5 + $0x8c] sm:$0xf]
    %v3045 = vld [vmem:[%s5 + $0x90] sm:$0xf]
    %v3046 = vld [vmem:[%s5 + $0x94] sm:$0xf]
    %v3047 = vld [vmem:[%s5 + $0x98] sm:$0xf]
    %v3048 = vld [vmem:[%s5 + $0x9c] sm:$0xf]
    %v3049 = vld [vmem:[%s5 + $0xa0] sm:$0xf]
    %v3050 = vld [vmem:[%s5 + $0xa4] sm:$0xf]
    %v3051 = vld [vmem:[%s5 + $0xa8] sm:$0xf]
    %v3052 = vld [vmem:[%s5 + $0xac] sm:$0xf]
    %v3053 = vld [vmem:[%s5 + $0xb0] sm:$0xf]
    %v3054 = vld [vmem:[%s5 + $0xb4] sm:$0xf]
    %v3055 = vld [vmem:[%s5 + $0xb8] sm:$0xf]
    %v3056 = vld [vmem:[%s5 + $0xbc] sm:$0xf]
    %v3057 = vld [vmem:[%s5 + $0xc0] sm:$0xf]
    %v3058 = vld [vmem:[%s5 + $0xc4] sm:$0xf]
    %v3059 = vld [vmem:[%s5 + $0xc8] sm:$0xf]
    %v3060 = vld [vmem:[%s5 + $0xcc] sm:$0xf]
    %v3061 = vld [vmem:[%s5 + $0xd0] sm:$0xf]
    %v3062 = vld [vmem:[%s5 + $0xd4] sm:$0xf]
    %v3063 = vld [vmem:[%s5 + $0xd8] sm:$0xf]
    %v3064 = vld [vmem:[%s5 + $0xdc] sm:$0xf]
    %v3065 = vld [vmem:[%s5 + $0xe0] sm:$0xf]
    %v3066 = vld [vmem:[%s5 + $0xe4] sm:$0xf]
    %v3067 = vld [vmem:[%s5 + $0xe8] sm:$0xf]
    %v3068 = vld [vmem:[%s5 + $0xec] sm:$0xf]
    %v3069 = vld [vmem:[%s5 + $0xf0] sm:$0xf]
    %v3070 = vld [vmem:[%s5 + $0xf4] sm:$0xf]
    %v3071 = vld [vmem:[%s5 + $0xf8] sm:$0xf]
    %v3072 = vld [vmem:[%s5 + $0xfc] sm:$0xf]
    %v3073 = vld [vmem:[%s5 + $0x100] sm:$0xf]
    %v3074 = vld [vmem:[%s5 + $0x104] sm:$0xf]
    %v3075 = vld [vmem:[%s5 + $0x108] sm:$0xf]
    %v3076 = vld [vmem:[%s5 + $0x10c] sm:$0xf]
    %v3077 = vld [vmem:[%s5 + $0x110] sm:$0xf]
    %v3078 = vld [vmem:[%s5 + $0x114] sm:$0xf]
    %v3079 = vld [vmem:[%s5 + $0x118] sm:$0xf]
    %v3080 = vld [vmem:[%s5 + $0x11c] sm:$0xf]
    %v3081 = vld [vmem:[%s5 + $0x120] sm:$0xf]
    %v3082 = vld [vmem:[%s5 + $0x124] sm:$0xf]
    %v3083 = vld [vmem:[%s5 + $0x128] sm:$0xf]
    %v3084 = vld [vmem:[%s5 + $0x12c] sm:$0xf]
    %v3085 = vld [vmem:[%s5 + $0x130] sm:$0xf]
    %v3086 = vld [vmem:[%s5 + $0x134] sm:$0xf]
    %v3087 = vld [vmem:[%s5 + $0x138] sm:$0xf]
    %v3088 = vld [vmem:[%s5 + $0x13c] sm:$0xf]
    %v3089 = vld [vmem:[%s5 + $0x140] sm:$0xf]
    %v3090 = vld [vmem:[%s5 + $0x144] sm:$0xf]
    %v3091 = vld [vmem:[%s5 + $0x148] sm:$0xf]
    %v3092 = vld [vmem:[%s5 + $0x14c] sm:$0xf]
    %v3093 = vld [vmem:[%s5 + $0x150] sm:$0xf]
    %v3094 = vld [vmem:[%s5 + $0x154] sm:$0xf]
    %v3095 = vld [vmem:[%s5 + $0x158] sm:$0xf]
    %v3096 = vld [vmem:[%s5 + $0x15c] sm:$0xf]
    %v3097 = vld [vmem:[%s5 + $0x160] sm:$0xf]
    %v3098 = vld [vmem:[%s5 + $0x164] sm:$0xf]
    %v3099 = vld [vmem:[%s5 + $0x168] sm:$0xf]
    %v3100 = vld [vmem:[%s5 + $0x16c] sm:$0xf]
    %v3101 = vld [vmem:[%s5 + $0x170] sm:$0xf]
    %v3102 = vld [vmem:[%s5 + $0x174] sm:$0xf]
    %v3103 = vld [vmem:[%s5 + $0x178] sm:$0xf]
    %v3104 = vld [vmem:[%s5 + $0x17c] sm:$0xf]
    %v3105 = vld [vmem:[%s6] sm:$0x1]
    %v3107 = vperm.slane %v3105, 0
    %v3301 = vunpack.c.l.b16 %v2817
    %v3302 = vunpack.c.h.b16 %v2817
    %v3303 = vunpack.c.l.b16 %v2818
    %v3304 = vunpack.c.h.b16 %v2818
    %v3305 = vunpack.c.l.b16 %v2819
    %v3306 = vunpack.c.h.b16 %v2819
    %v3307 = vunpack.c.l.b16 %v2820
    %v3308 = vunpack.c.h.b16 %v2820
    %v3309 = vunpack.c.l.b16 %v2821
    %v3310 = vunpack.c.h.b16 %v2821
    %v3311 = vunpack.c.l.b16 %v2822
    %v3312 = vunpack.c.h.b16 %v2822
    %v3313 = vunpack.c.l.b16 %v2823
    %v3314 = vunpack.c.h.b16 %v2823
    %v3315 = vunpack.c.l.b16 %v2824
    %v3316 = vunpack.c.h.b16 %v2824
    %v3317 = vunpack.c.l.b16 %v2825
    %v3318 = vunpack.c.h.b16 %v2825
    %v3319 = vunpack.c.l.b16 %v2826
    %v3320 = vunpack.c.h.b16 %v2826
    %v3321 = vunpack.c.l.b16 %v2827
    %v3322 = vunpack.c.h.b16 %v2827
    %v3323 = vunpack.c.l.b16 %v2828
    %v3324 = vunpack.c.h.b16 %v2828
    %v3325 = vunpack.c.l.b16 %v2829
    %v3326 = vunpack.c.h.b16 %v2829
    %v3327 = vunpack.c.l.b16 %v2830
    %v3328 = vunpack.c.h.b16 %v2830
    %v3329 = vunpack.c.l.b16 %v2831
    %v3330 = vunpack.c.h.b16 %v2831
    %v3331 = vunpack.c.l.b16 %v2832
    %v3332 = vunpack.c.h.b16 %v2832
    %v3333 = vunpack.c.l.b16 %v2833
    %v3334 = vunpack.c.h.b16 %v2833
    %v3335 = vunpack.c.l.b16 %v2834
    %v3336 = vunpack.c.h.b16 %v2834
    %v3337 = vunpack.c.l.b16 %v2835
    %v3338 = vunpack.c.h.b16 %v2835
    %v3339 = vunpack.c.l.b16 %v2836
    %v3340 = vunpack.c.h.b16 %v2836
    %v3341 = vunpack.c.l.b16 %v2837
    %v3342 = vunpack.c.h.b16 %v2837
    %v3343 = vunpack.c.l.b16 %v2838
    %v3344 = vunpack.c.h.b16 %v2838
    %v3345 = vunpack.c.l.b16 %v2839
    %v3346 = vunpack.c.h.b16 %v2839
    %v3347 = vunpack.c.l.b16 %v2840
    %v3348 = vunpack.c.h.b16 %v2840
    %v3349 = vunpack.c.l.b16 %v2841
    %v3350 = vunpack.c.h.b16 %v2841
    %v3351 = vunpack.c.l.b16 %v2842
    %v3352 = vunpack.c.h.b16 %v2842
    %v3353 = vunpack.c.l.b16 %v2843
    %v3354 = vunpack.c.h.b16 %v2843
    %v3355 = vunpack.c.l.b16 %v2844
    %v3356 = vunpack.c.h.b16 %v2844
    %v3357 = vunpack.c.l.b16 %v2845
    %v3358 = vunpack.c.h.b16 %v2845
    %v3359 = vunpack.c.l.b16 %v2846
    %v3360 = vunpack.c.h.b16 %v2846
    %v3361 = vunpack.c.l.b16 %v2847
    %v3362 = vunpack.c.h.b16 %v2847
    %v3363 = vunpack.c.l.b16 %v2848
    %v3364 = vunpack.c.h.b16 %v2848
    %v3365 = vunpack.c.l.b16 %v2849
    %v3366 = vunpack.c.h.b16 %v2849
    %v3367 = vunpack.c.l.b16 %v2850
    %v3368 = vunpack.c.h.b16 %v2850
    %v3369 = vunpack.c.l.b16 %v2851
    %v3370 = vunpack.c.h.b16 %v2851
    %v3371 = vunpack.c.l.b16 %v2852
    %v3372 = vunpack.c.h.b16 %v2852
    %v3373 = vunpack.c.l.b16 %v2853
    %v3374 = vunpack.c.h.b16 %v2853
    %v3375 = vunpack.c.l.b16 %v2854
    %v3376 = vunpack.c.h.b16 %v2854
    %v3377 = vunpack.c.l.b16 %v2855
    %v3378 = vunpack.c.h.b16 %v2855
    %v3379 = vunpack.c.l.b16 %v2856
    %v3380 = vunpack.c.h.b16 %v2856
    %v3381 = vunpack.c.l.b16 %v2857
    %v3382 = vunpack.c.h.b16 %v2857
    %v3383 = vunpack.c.l.b16 %v2858
    %v3384 = vunpack.c.h.b16 %v2858
    %v3385 = vunpack.c.l.b16 %v2859
    %v3386 = vunpack.c.h.b16 %v2859
    %v3387 = vunpack.c.l.b16 %v2860
    %v3388 = vunpack.c.h.b16 %v2860
    %v3389 = vunpack.c.l.b16 %v2861
    %v3390 = vunpack.c.h.b16 %v2861
    %v3391 = vunpack.c.l.b16 %v2862
    %v3392 = vunpack.c.h.b16 %v2862
    %v3393 = vunpack.c.l.b16 %v2863
    %v3394 = vunpack.c.h.b16 %v2863
    %v3395 = vunpack.c.l.b16 %v2864
    %v3396 = vunpack.c.h.b16 %v2864
    %v3397 = vunpack.c.l.b16 %v2865
    %v3398 = vunpack.c.h.b16 %v2865
    %v3399 = vunpack.c.l.b16 %v2866
    %v3400 = vunpack.c.h.b16 %v2866
    %v3401 = vunpack.c.l.b16 %v2867
    %v3402 = vunpack.c.h.b16 %v2867
    %v3403 = vunpack.c.l.b16 %v2868
    %v3404 = vunpack.c.h.b16 %v2868
    %v3405 = vunpack.c.l.b16 %v2869
    %v3406 = vunpack.c.h.b16 %v2869
    %v3407 = vunpack.c.l.b16 %v2870
    %v3408 = vunpack.c.h.b16 %v2870
    %v3409 = vunpack.c.l.b16 %v2871
    %v3410 = vunpack.c.h.b16 %v2871
    %v3411 = vunpack.c.l.b16 %v2872
    %v3412 = vunpack.c.h.b16 %v2872
    %v3413 = vunpack.c.l.b16 %v2873
    %v3414 = vunpack.c.h.b16 %v2873
    %v3415 = vunpack.c.l.b16 %v2874
    %v3416 = vunpack.c.h.b16 %v2874
    %v3417 = vunpack.c.l.b16 %v2875
    %v3418 = vunpack.c.h.b16 %v2875
    %v3419 = vunpack.c.l.b16 %v2876
    %v3420 = vunpack.c.h.b16 %v2876
    %v3421 = vunpack.c.l.b16 %v2877
    %v3422 = vunpack.c.h.b16 %v2877
    %v3423 = vunpack.c.l.b16 %v2878
    %v3424 = vunpack.c.h.b16 %v2878
    %v3425 = vunpack.c.l.b16 %v2879
    %v3426 = vunpack.c.h.b16 %v2879
    %v3427 = vunpack.c.l.b16 %v2880
    %v3428 = vunpack.c.h.b16 %v2880
    %v3429 = vunpack.c.l.b16 %v2881
    %v3430 = vunpack.c.h.b16 %v2881
    %v3431 = vunpack.c.l.b16 %v2882
    %v3432 = vunpack.c.h.b16 %v2882
    %v3433 = vunpack.c.l.b16 %v2883
    %v3434 = vunpack.c.h.b16 %v2883
    %v3435 = vunpack.c.l.b16 %v2884
    %v3436 = vunpack.c.h.b16 %v2884
    %v3437 = vunpack.c.l.b16 %v2885
    %v3438 = vunpack.c.h.b16 %v2885
    %v3439 = vunpack.c.l.b16 %v2886
    %v3440 = vunpack.c.h.b16 %v2886
    %v3441 = vunpack.c.l.b16 %v2887
    %v3442 = vunpack.c.h.b16 %v2887
    %v3443 = vunpack.c.l.b16 %v2888
    %v3444 = vunpack.c.h.b16 %v2888
    %v3445 = vunpack.c.l.b16 %v2889
    %v3446 = vunpack.c.h.b16 %v2889
    %v3447 = vunpack.c.l.b16 %v2890
    %v3448 = vunpack.c.h.b16 %v2890
    %v3449 = vunpack.c.l.b16 %v2891
    %v3450 = vunpack.c.h.b16 %v2891
    %v3451 = vunpack.c.l.b16 %v2892
    %v3452 = vunpack.c.h.b16 %v2892
    %v3453 = vunpack.c.l.b16 %v2893
    %v3454 = vunpack.c.h.b16 %v2893
    %v3455 = vunpack.c.l.b16 %v2894
    %v3456 = vunpack.c.h.b16 %v2894
    %v3457 = vunpack.c.l.b16 %v2895
    %v3458 = vunpack.c.h.b16 %v2895
    %v3459 = vunpack.c.l.b16 %v2896
    %v3460 = vunpack.c.h.b16 %v2896
    %v3461 = vunpack.c.l.b16 %v2897
    %v3462 = vunpack.c.h.b16 %v2897
    %v3463 = vunpack.c.l.b16 %v2898
    %v3464 = vunpack.c.h.b16 %v2898
    %v3465 = vunpack.c.l.b16 %v2899
    %v3466 = vunpack.c.h.b16 %v2899
    %v3467 = vunpack.c.l.b16 %v2900
    %v3468 = vunpack.c.h.b16 %v2900
    %v3469 = vunpack.c.l.b16 %v2901
    %v3470 = vunpack.c.h.b16 %v2901
    %v3471 = vunpack.c.l.b16 %v2902
    %v3472 = vunpack.c.h.b16 %v2902
    %v3473 = vunpack.c.l.b16 %v2903
    %v3474 = vunpack.c.h.b16 %v2903
    %v3475 = vunpack.c.l.b16 %v2904
    %v3476 = vunpack.c.h.b16 %v2904
    %v3477 = vunpack.c.l.b16 %v2905
    %v3478 = vunpack.c.h.b16 %v2905
    %v3479 = vunpack.c.l.b16 %v2906
    %v3480 = vunpack.c.h.b16 %v2906
    %v3481 = vunpack.c.l.b16 %v2907
    %v3482 = vunpack.c.h.b16 %v2907
    %v3483 = vunpack.c.l.b16 %v2908
    %v3484 = vunpack.c.h.b16 %v2908
    %v3485 = vunpack.c.l.b16 %v2909
    %v3486 = vunpack.c.h.b16 %v2909
    %v3487 = vunpack.c.l.b16 %v2910
    %v3488 = vunpack.c.h.b16 %v2910
    %v3489 = vunpack.c.l.b16 %v2911
    %v3490 = vunpack.c.h.b16 %v2911
    %v3491 = vunpack.c.l.b16 %v2912
    %v3492 = vunpack.c.h.b16 %v2912
    %v3493 = vunpack.c.l.b16 %v2913
    %v3494 = vunpack.c.h.b16 %v2913
    %v3495 = vunpack.c.l.b16 %v2914
    %v3496 = vunpack.c.h.b16 %v2914
    %v3497 = vunpack.c.l.b16 %v2915
    %v3498 = vunpack.c.h.b16 %v2915
    %v3499 = vunpack.c.l.b16 %v2916
    %v3500 = vunpack.c.h.b16 %v2916
    %v3501 = vunpack.c.l.b16 %v2917
    %v3502 = vunpack.c.h.b16 %v2917
    %v3503 = vunpack.c.l.b16 %v2918
    %v3504 = vunpack.c.h.b16 %v2918
    %v3505 = vunpack.c.l.b16 %v2919
    %v3506 = vunpack.c.h.b16 %v2919
    %v3507 = vunpack.c.l.b16 %v2920
    %v3508 = vunpack.c.h.b16 %v2920
    %v3509 = vunpack.c.l.b16 %v2921
    %v3510 = vunpack.c.h.b16 %v2921
    %v3511 = vunpack.c.l.b16 %v2922
    %v3512 = vunpack.c.h.b16 %v2922
    %v3513 = vunpack.c.l.b16 %v2923
    %v3514 = vunpack.c.h.b16 %v2923
    %v3515 = vunpack.c.l.b16 %v2924
    %v3516 = vunpack.c.h.b16 %v2924
    %v3517 = vunpack.c.l.b16 %v2925
    %v3518 = vunpack.c.h.b16 %v2925
    %v3519 = vunpack.c.l.b16 %v2926
    %v3520 = vunpack.c.h.b16 %v2926
    %v3521 = vunpack.c.l.b16 %v2927
    %v3522 = vunpack.c.h.b16 %v2927
    %v3523 = vunpack.c.l.b16 %v2928
    %v3524 = vunpack.c.h.b16 %v2928
    %v3525 = vunpack.c.l.b16 %v2929
    %v3526 = vunpack.c.h.b16 %v2929
    %v3527 = vunpack.c.l.b16 %v2930
    %v3528 = vunpack.c.h.b16 %v2930
    %v3529 = vunpack.c.l.b16 %v2931
    %v3530 = vunpack.c.h.b16 %v2931
    %v3531 = vunpack.c.l.b16 %v2932
    %v3532 = vunpack.c.h.b16 %v2932
    %v3533 = vunpack.c.l.b16 %v2933
    %v3534 = vunpack.c.h.b16 %v2933
    %v3535 = vunpack.c.l.b16 %v2934
    %v3536 = vunpack.c.h.b16 %v2934
    %v3537 = vunpack.c.l.b16 %v2935
    %v3538 = vunpack.c.h.b16 %v2935
    %v3539 = vunpack.c.l.b16 %v2936
    %v3540 = vunpack.c.h.b16 %v2936
    %v3541 = vunpack.c.l.b16 %v2937
    %v3542 = vunpack.c.h.b16 %v2937
    %v3543 = vunpack.c.l.b16 %v2938
    %v3544 = vunpack.c.h.b16 %v2938
    %v3545 = vunpack.c.l.b16 %v2939
    %v3546 = vunpack.c.h.b16 %v2939
    %v3547 = vunpack.c.l.b16 %v2940
    %v3548 = vunpack.c.h.b16 %v2940
    %v3549 = vunpack.c.l.b16 %v2941
    %v3550 = vunpack.c.h.b16 %v2941
    %v3551 = vunpack.c.l.b16 %v2942
    %v3552 = vunpack.c.h.b16 %v2942
    %v3553 = vunpack.c.l.b16 %v2943
    %v3554 = vunpack.c.h.b16 %v2943
    %v3555 = vunpack.c.l.b16 %v2944
    %v3556 = vunpack.c.h.b16 %v2944
    %v3557 = vunpack.c.l.b16 %v2945
    %v3558 = vunpack.c.h.b16 %v2945
    %v3559 = vunpack.c.l.b16 %v2946
    %v3560 = vunpack.c.h.b16 %v2946
    %v3561 = vunpack.c.l.b16 %v2947
    %v3562 = vunpack.c.h.b16 %v2947
    %v3563 = vunpack.c.l.b16 %v2948
    %v3564 = vunpack.c.h.b16 %v2948
    %v3565 = vunpack.c.l.b16 %v2949
    %v3566 = vunpack.c.h.b16 %v2949
    %v3567 = vunpack.c.l.b16 %v2950
    %v3568 = vunpack.c.h.b16 %v2950
    %v3569 = vunpack.c.l.b16 %v2951
    %v3570 = vunpack.c.h.b16 %v2951
    %v3571 = vunpack.c.l.b16 %v2952
    %v3572 = vunpack.c.h.b16 %v2952
    %v3573 = vunpack.c.l.b16 %v2953
    %v3574 = vunpack.c.h.b16 %v2953
    %v3575 = vunpack.c.l.b16 %v2954
    %v3576 = vunpack.c.h.b16 %v2954
    %v3577 = vunpack.c.l.b16 %v2955
    %v3578 = vunpack.c.h.b16 %v2955
    %v3579 = vunpack.c.l.b16 %v2956
    %v3580 = vunpack.c.h.b16 %v2956
    %v3581 = vunpack.c.l.b16 %v2957
    %v3582 = vunpack.c.h.b16 %v2957
    %v3583 = vunpack.c.l.b16 %v2958
    %v3584 = vunpack.c.h.b16 %v2958
    %v3585 = vunpack.c.l.b16 %v2959
    %v3586 = vunpack.c.h.b16 %v2959
    %v3587 = vunpack.c.l.b16 %v2960
    %v3588 = vunpack.c.h.b16 %v2960
    %v3589 = vunpack.c.l.b16 %v2961
    %v3590 = vunpack.c.h.b16 %v2961
    %v3591 = vunpack.c.l.b16 %v2962
    %v3592 = vunpack.c.h.b16 %v2962
    %v3593 = vunpack.c.l.b16 %v2963
    %v3594 = vunpack.c.h.b16 %v2963
    %v3595 = vunpack.c.l.b16 %v2964
    %v3596 = vunpack.c.h.b16 %v2964
    %v3597 = vunpack.c.l.b16 %v2965
    %v3598 = vunpack.c.h.b16 %v2965
    %v3599 = vunpack.c.l.b16 %v2966
    %v3600 = vunpack.c.h.b16 %v2966
    %v3601 = vunpack.c.l.b16 %v2967
    %v3602 = vunpack.c.h.b16 %v2967
    %v3603 = vunpack.c.l.b16 %v2968
    %v3604 = vunpack.c.h.b16 %v2968
    %v3605 = vunpack.c.l.b16 %v2969
    %v3606 = vunpack.c.h.b16 %v2969
    %v3607 = vunpack.c.l.b16 %v2970
    %v3608 = vunpack.c.h.b16 %v2970
    %v3609 = vunpack.c.l.b16 %v2971
    %v3610 = vunpack.c.h.b16 %v2971
    %v3611 = vunpack.c.l.b16 %v2972
    %v3612 = vunpack.c.h.b16 %v2972
    %v3613 = vunpack.c.l.b16 %v2973
    %v3614 = vunpack.c.h.b16 %v2973
    %v3615 = vunpack.c.l.b16 %v2974
    %v3616 = vunpack.c.h.b16 %v2974
    %v3617 = vunpack.c.l.b16 %v2975
    %v3618 = vunpack.c.h.b16 %v2975
    %v3619 = vunpack.c.l.b16 %v2976
    %v3620 = vunpack.c.h.b16 %v2976
    %v3621 = vunpack.c.l.b16 %v2977
    %v3622 = vunpack.c.h.b16 %v2977
    %v3623 = vunpack.c.l.b16 %v2978
    %v3624 = vunpack.c.h.b16 %v2978
    %v3625 = vunpack.c.l.b16 %v2979
    %v3626 = vunpack.c.h.b16 %v2979
    %v3627 = vunpack.c.l.b16 %v2980
    %v3628 = vunpack.c.h.b16 %v2980
    %v3629 = vunpack.c.l.b16 %v2981
    %v3630 = vunpack.c.h.b16 %v2981
    %v3631 = vunpack.c.l.b16 %v2982
    %v3632 = vunpack.c.h.b16 %v2982
    %v3633 = vunpack.c.l.b16 %v2983
    %v3634 = vunpack.c.h.b16 %v2983
    %v3635 = vunpack.c.l.b16 %v2984
    %v3636 = vunpack.c.h.b16 %v2984
    %v3637 = vunpack.c.l.b16 %v2985
    %v3638 = vunpack.c.h.b16 %v2985
    %v3639 = vunpack.c.l.b16 %v2986
    %v3640 = vunpack.c.h.b16 %v2986
    %v3641 = vunpack.c.l.b16 %v2987
    %v3642 = vunpack.c.h.b16 %v2987
    %v3643 = vunpack.c.l.b16 %v2988
    %v3644 = vunpack.c.h.b16 %v2988
    %v3645 = vunpack.c.l.b16 %v2989
    %v3646 = vunpack.c.h.b16 %v2989
    %v3647 = vunpack.c.l.b16 %v2990
    %v3648 = vunpack.c.h.b16 %v2990
    %v3649 = vunpack.c.l.b16 %v2991
    %v3650 = vunpack.c.h.b16 %v2991
    %v3651 = vunpack.c.l.b16 %v2992
    %v3652 = vunpack.c.h.b16 %v2992
    %v3653 = vunpack.c.l.b16 %v2993
    %v3654 = vunpack.c.h.b16 %v2993
    %v3655 = vunpack.c.l.b16 %v2994
    %v3656 = vunpack.c.h.b16 %v2994
    %v3657 = vunpack.c.l.b16 %v2995
    %v3658 = vunpack.c.h.b16 %v2995
    %v3659 = vunpack.c.l.b16 %v2996
    %v3660 = vunpack.c.h.b16 %v2996
    %v3661 = vunpack.c.l.b16 %v2997
    %v3662 = vunpack.c.h.b16 %v2997
    %v3663 = vunpack.c.l.b16 %v2998
    %v3664 = vunpack.c.h.b16 %v2998
    %v3665 = vunpack.c.l.b16 %v2999
    %v3666 = vunpack.c.h.b16 %v2999
    %v3667 = vunpack.c.l.b16 %v3000
    %v3668 = vunpack.c.h.b16 %v3000
    %v3669 = vunpack.c.l.b16 %v3001
    %v3670 = vunpack.c.h.b16 %v3001
    %v3671 = vunpack.c.l.b16 %v3002
    %v3672 = vunpack.c.h.b16 %v3002
    %v3673 = vunpack.c.l.b16 %v3003
    %v3674 = vunpack.c.h.b16 %v3003
    %v3675 = vunpack.c.l.b16 %v3004
    %v3676 = vunpack.c.h.b16 %v3004
    %v3677 = vunpack.c.l.b16 %v3005
    %v3678 = vunpack.c.h.b16 %v3005
    %v3679 = vunpack.c.l.b16 %v3006
    %v3680 = vunpack.c.h.b16 %v3006
    %v3681 = vunpack.c.l.b16 %v3007
    %v3682 = vunpack.c.h.b16 %v3007
    %v3683 = vunpack.c.l.b16 %v3008
    %v3684 = vunpack.c.h.b16 %v3008
    %v3685 = vpack.c.b16 %v3307, %v3301
    %v3686 = vpack.c.b16 %v3308, %v3302
    %v3687 = vpack.c.b16 %v3309, %v3303
    %v3688 = vpack.c.b16 %v3310, %v3304
    %v3689 = vpack.c.b16 %v3311, %v3305
    %v3690 = vpack.c.b16 %v3312, %v3306
    %v3691 = vpack.c.b16 %v3319, %v3313
    %v3692 = vpack.c.b16 %v3320, %v3314
    %v3693 = vpack.c.b16 %v3321, %v3315
    %v3694 = vpack.c.b16 %v3322, %v3316
    %v3695 = vpack.c.b16 %v3323, %v3317
    %v3696 = vpack.c.b16 %v3324, %v3318
    %v3697 = vpack.c.b16 %v3331, %v3325
    %v3698 = vpack.c.b16 %v3332, %v3326
    %v3699 = vpack.c.b16 %v3333, %v3327
    %v3700 = vpack.c.b16 %v3334, %v3328
    %v3701 = vpack.c.b16 %v3335, %v3329
    %v3702 = vpack.c.b16 %v3336, %v3330
    %v3703 = vpack.c.b16 %v3343, %v3337
    %v3704 = vpack.c.b16 %v3344, %v3338
    %v3705 = vpack.c.b16 %v3345, %v3339
    %v3706 = vpack.c.b16 %v3346, %v3340
    %v3707 = vpack.c.b16 %v3347, %v3341
    %v3708 = vpack.c.b16 %v3348, %v3342
    %v3709 = vpack.c.b16 %v3355, %v3349
    %v3710 = vpack.c.b16 %v3356, %v3350
    %v3711 = vpack.c.b16 %v3357, %v3351
    %v3712 = vpack.c.b16 %v3358, %v3352
    %v3713 = vpack.c.b16 %v3359, %v3353
    %v3714 = vpack.c.b16 %v3360, %v3354
    %v3715 = vpack.c.b16 %v3367, %v3361
    %v3716 = vpack.c.b16 %v3368, %v3362
    %v3717 = vpack.c.b16 %v3369, %v3363
    %v3718 = vpack.c.b16 %v3370, %v3364
    %v3719 = vpack.c.b16 %v3371, %v3365
    %v3720 = vpack.c.b16 %v3372, %v3366
    %v3721 = vpack.c.b16 %v3379, %v3373
    %v3722 = vpack.c.b16 %v3380, %v3374
    %v3723 = vpack.c.b16 %v3381, %v3375
    %v3724 = vpack.c.b16 %v3382, %v3376
    %v3725 = vpack.c.b16 %v3383, %v3377
    %v3726 = vpack.c.b16 %v3384, %v3378
    %v3727 = vpack.c.b16 %v3391, %v3385
    %v3728 = vpack.c.b16 %v3392, %v3386
    %v3729 = vpack.c.b16 %v3393, %v3387
    %v3730 = vpack.c.b16 %v3394, %v3388
    %v3731 = vpack.c.b16 %v3395, %v3389
    %v3732 = vpack.c.b16 %v3396, %v3390
    %v3733 = vpack.c.b16 %v3403, %v3397
    %v3734 = vpack.c.b16 %v3404, %v3398
    %v3735 = vpack.c.b16 %v3405, %v3399
    %v3736 = vpack.c.b16 %v3406, %v3400
    %v3737 = vpack.c.b16 %v3407, %v3401
    %v3738 = vpack.c.b16 %v3408, %v3402
    %v3739 = vpack.c.b16 %v3415, %v3409
    %v3740 = vpack.c.b16 %v3416, %v3410
    %v3741 = vpack.c.b16 %v3417, %v3411
    %v3742 = vpack.c.b16 %v3418, %v3412
    %v3743 = vpack.c.b16 %v3419, %v3413
    %v3744 = vpack.c.b16 %v3420, %v3414
    %v3745 = vpack.c.b16 %v3427, %v3421
    %v3746 = vpack.c.b16 %v3428, %v3422
    %v3747 = vpack.c.b16 %v3429, %v3423
    %v3748 = vpack.c.b16 %v3430, %v3424
    %v3749 = vpack.c.b16 %v3431, %v3425
    %v3750 = vpack.c.b16 %v3432, %v3426
    %v3751 = vpack.c.b16 %v3439, %v3433
    %v3752 = vpack.c.b16 %v3440, %v3434
    %v3753 = vpack.c.b16 %v3441, %v3435
    %v3754 = vpack.c.b16 %v3442, %v3436
    %v3755 = vpack.c.b16 %v3443, %v3437
    %v3756 = vpack.c.b16 %v3444, %v3438
    %v3757 = vpack.c.b16 %v3451, %v3445
    %v3758 = vpack.c.b16 %v3452, %v3446
    %v3759 = vpack.c.b16 %v3453, %v3447
    %v3760 = vpack.c.b16 %v3454, %v3448
    %v3761 = vpack.c.b16 %v3455, %v3449
    %v3762 = vpack.c.b16 %v3456, %v3450
    %v3763 = vpack.c.b16 %v3463, %v3457
    %v3764 = vpack.c.b16 %v3464, %v3458
    %v3765 = vpack.c.b16 %v3465, %v3459
    %v3766 = vpack.c.b16 %v3466, %v3460
    %v3767 = vpack.c.b16 %v3467, %v3461
    %v3768 = vpack.c.b16 %v3468, %v3462
    %v3769 = vpack.c.b16 %v3475, %v3469
    %v3770 = vpack.c.b16 %v3476, %v3470
    %v3771 = vpack.c.b16 %v3477, %v3471
    %v3772 = vpack.c.b16 %v3478, %v3472
    %v3773 = vpack.c.b16 %v3479, %v3473
    %v3774 = vpack.c.b16 %v3480, %v3474
    %v3775 = vpack.c.b16 %v3487, %v3481
    %v3776 = vpack.c.b16 %v3488, %v3482
    %v3777 = vpack.c.b16 %v3489, %v3483
    %v3778 = vpack.c.b16 %v3490, %v3484
    %v3779 = vpack.c.b16 %v3491, %v3485
    %v3780 = vpack.c.b16 %v3492, %v3486
    %v3781 = vpack.c.b16 %v3499, %v3493
    %v3782 = vpack.c.b16 %v3500, %v3494
    %v3783 = vpack.c.b16 %v3501, %v3495
    %v3784 = vpack.c.b16 %v3502, %v3496
    %v3785 = vpack.c.b16 %v3503, %v3497
    %v3786 = vpack.c.b16 %v3504, %v3498
    %v3787 = vpack.c.b16 %v3511, %v3505
    %v3788 = vpack.c.b16 %v3512, %v3506
    %v3789 = vpack.c.b16 %v3513, %v3507
    %v3790 = vpack.c.b16 %v3514, %v3508
    %v3791 = vpack.c.b16 %v3515, %v3509
    %v3792 = vpack.c.b16 %v3516, %v3510
    %v3793 = vpack.c.b16 %v3523, %v3517
    %v3794 = vpack.c.b16 %v3524, %v3518
    %v3795 = vpack.c.b16 %v3525, %v3519
    %v3796 = vpack.c.b16 %v3526, %v3520
    %v3797 = vpack.c.b16 %v3527, %v3521
    %v3798 = vpack.c.b16 %v3528, %v3522
    %v3799 = vpack.c.b16 %v3535, %v3529
    %v3800 = vpack.c.b16 %v3536, %v3530
    %v3801 = vpack.c.b16 %v3537, %v3531
    %v3802 = vpack.c.b16 %v3538, %v3532
    %v3803 = vpack.c.b16 %v3539, %v3533
    %v3804 = vpack.c.b16 %v3540, %v3534
    %v3805 = vpack.c.b16 %v3547, %v3541
    %v3806 = vpack.c.b16 %v3548, %v3542
    %v3807 = vpack.c.b16 %v3549, %v3543
    %v3808 = vpack.c.b16 %v3550, %v3544
    %v3809 = vpack.c.b16 %v3551, %v3545
    %v3810 = vpack.c.b16 %v3552, %v3546
    %v3811 = vpack.c.b16 %v3559, %v3553
    %v3812 = vpack.c.b16 %v3560, %v3554
    %v3813 = vpack.c.b16 %v3561, %v3555
    %v3814 = vpack.c.b16 %v3562, %v3556
    %v3815 = vpack.c.b16 %v3563, %v3557
    %v3816 = vpack.c.b16 %v3564, %v3558
    %v3817 = vpack.c.b16 %v3571, %v3565
    %v3818 = vpack.c.b16 %v3572, %v3566
    %v3819 = vpack.c.b16 %v3573, %v3567
    %v3820 = vpack.c.b16 %v3574, %v3568
    %v3821 = vpack.c.b16 %v3575, %v3569
    %v3822 = vpack.c.b16 %v3576, %v3570
    %v3823 = vpack.c.b16 %v3583, %v3577
    %v3824 = vpack.c.b16 %v3584, %v3578
    %v3825 = vpack.c.b16 %v3585, %v3579
    %v3826 = vpack.c.b16 %v3586, %v3580
    %v3827 = vpack.c.b16 %v3587, %v3581
    %v3828 = vpack.c.b16 %v3588, %v3582
    %v3829 = vpack.c.b16 %v3595, %v3589
    %v3830 = vpack.c.b16 %v3596, %v3590
    %v3831 = vpack.c.b16 %v3597, %v3591
    %v3832 = vpack.c.b16 %v3598, %v3592
    %v3833 = vpack.c.b16 %v3599, %v3593
    %v3834 = vpack.c.b16 %v3600, %v3594
    %v3835 = vpack.c.b16 %v3607, %v3601
    %v3836 = vpack.c.b16 %v3608, %v3602
    %v3837 = vpack.c.b16 %v3609, %v3603
    %v3838 = vpack.c.b16 %v3610, %v3604
    %v3839 = vpack.c.b16 %v3611, %v3605
    %v3840 = vpack.c.b16 %v3612, %v3606
    %v3841 = vpack.c.b16 %v3619, %v3613
    %v3842 = vpack.c.b16 %v3620, %v3614
    %v3843 = vpack.c.b16 %v3621, %v3615
    %v3844 = vpack.c.b16 %v3622, %v3616
    %v3845 = vpack.c.b16 %v3623, %v3617
    %v3846 = vpack.c.b16 %v3624, %v3618
    %v3847 = vpack.c.b16 %v3631, %v3625
    %v3848 = vpack.c.b16 %v3632, %v3626
    %v3849 = vpack.c.b16 %v3633, %v3627
    %v3850 = vpack.c.b16 %v3634, %v3628
    %v3851 = vpack.c.b16 %v3635, %v3629
    %v3852 = vpack.c.b16 %v3636, %v3630
    %v3853 = vpack.c.b16 %v3643, %v3637
    %v3854 = vpack.c.b16 %v3644, %v3638
    %v3855 = vpack.c.b16 %v3645, %v3639
    %v3856 = vpack.c.b16 %v3646, %v3640
    %v3857 = vpack.c.b16 %v3647, %v3641
    %v3858 = vpack.c.b16 %v3648, %v3642
    %v3859 = vpack.c.b16 %v3655, %v3649
    %v3860 = vpack.c.b16 %v3656, %v3650
    %v3861 = vpack.c.b16 %v3657, %v3651
    %v3862 = vpack.c.b16 %v3658, %v3652
    %v3863 = vpack.c.b16 %v3659, %v3653
    %v3864 = vpack.c.b16 %v3660, %v3654
    %v3865 = vpack.c.b16 %v3667, %v3661
    %v3866 = vpack.c.b16 %v3668, %v3662
    %v3867 = vpack.c.b16 %v3669, %v3663
    %v3868 = vpack.c.b16 %v3670, %v3664
    %v3869 = vpack.c.b16 %v3671, %v3665
    %v3870 = vpack.c.b16 %v3672, %v3666
    %v3871 = vpack.c.b16 %v3679, %v3673
    %v3872 = vpack.c.b16 %v3680, %v3674
    %v3873 = vpack.c.b16 %v3681, %v3675
    %v3874 = vpack.c.b16 %v3682, %v3676
    %v3875 = vpack.c.b16 %v3683, %v3677
    %v3876 = vpack.c.b16 %v3684, %v3678
    %v4165 = vunpack.c.l.b16 %v3009
    %v4166 = vunpack.c.l.b16 %v3010
    %v4167 = vunpack.c.l.b16 %v3011
    %v4168 = vunpack.c.l.b16 %v3012
    %v4169 = vunpack.c.l.b16 %v3013
    %v4170 = vunpack.c.l.b16 %v3014
    %v4171 = vunpack.c.l.b16 %v3015
    %v4172 = vunpack.c.l.b16 %v3016
    %v4173 = vunpack.c.l.b16 %v3017
    %v4174 = vunpack.c.l.b16 %v3018
    %v4175 = vunpack.c.l.b16 %v3019
    %v4176 = vunpack.c.l.b16 %v3020
    %v4177 = vunpack.c.l.b16 %v3021
    %v4178 = vunpack.c.l.b16 %v3022
    %v4179 = vunpack.c.l.b16 %v3023
    %v4180 = vunpack.c.l.b16 %v3024
    %v4181 = vunpack.c.l.b16 %v3025
    %v4182 = vunpack.c.l.b16 %v3026
    %v4183 = vunpack.c.l.b16 %v3027
    %v4184 = vunpack.c.l.b16 %v3028
    %v4185 = vunpack.c.l.b16 %v3029
    %v4186 = vunpack.c.l.b16 %v3030
    %v4187 = vunpack.c.l.b16 %v3031
    %v4188 = vunpack.c.l.b16 %v3032
    %v4189 = vunpack.c.l.b16 %v3033
    %v4190 = vunpack.c.l.b16 %v3034
    %v4191 = vunpack.c.l.b16 %v3035
    %v4192 = vunpack.c.l.b16 %v3036
    %v4193 = vunpack.c.l.b16 %v3037
    %v4194 = vunpack.c.l.b16 %v3038
    %v4195 = vunpack.c.l.b16 %v3039
    %v4196 = vunpack.c.l.b16 %v3040
    %v4197 = vunpack.c.l.b16 %v3041
    %v4198 = vunpack.c.l.b16 %v3042
    %v4199 = vunpack.c.l.b16 %v3043
    %v4200 = vunpack.c.l.b16 %v3044
    %v4201 = vunpack.c.l.b16 %v3045
    %v4202 = vunpack.c.l.b16 %v3046
    %v4203 = vunpack.c.l.b16 %v3047
    %v4204 = vunpack.c.l.b16 %v3048
    %v4205 = vunpack.c.l.b16 %v3049
    %v4206 = vunpack.c.l.b16 %v3050
    %v4207 = vunpack.c.l.b16 %v3051
    %v4208 = vunpack.c.l.b16 %v3052
    %v4209 = vunpack.c.l.b16 %v3053
    %v4210 = vunpack.c.l.b16 %v3054
    %v4211 = vunpack.c.l.b16 %v3055
    %v4212 = vunpack.c.l.b16 %v3056
    %v4213 = vunpack.c.l.b16 %v3057
    %v4214 = vunpack.c.l.b16 %v3058
    %v4215 = vunpack.c.l.b16 %v3059
    %v4216 = vunpack.c.l.b16 %v3060
    %v4217 = vunpack.c.l.b16 %v3061
    %v4218 = vunpack.c.l.b16 %v3062
    %v4219 = vunpack.c.l.b16 %v3063
    %v4220 = vunpack.c.l.b16 %v3064
    %v4221 = vunpack.c.l.b16 %v3065
    %v4222 = vunpack.c.l.b16 %v3066
    %v4223 = vunpack.c.l.b16 %v3067
    %v4224 = vunpack.c.l.b16 %v3068
    %v4225 = vunpack.c.l.b16 %v3069
    %v4226 = vunpack.c.l.b16 %v3070
    %v4227 = vunpack.c.l.b16 %v3071
    %v4228 = vunpack.c.l.b16 %v3072
    %v4229 = vunpack.c.l.b16 %v3073
    %v4230 = vunpack.c.l.b16 %v3074
    %v4231 = vunpack.c.l.b16 %v3075
    %v4232 = vunpack.c.l.b16 %v3076
    %v4233 = vunpack.c.l.b16 %v3077
    %v4234 = vunpack.c.l.b16 %v3078
    %v4235 = vunpack.c.l.b16 %v3079
    %v4236 = vunpack.c.l.b16 %v3080
    %v4237 = vunpack.c.l.b16 %v3081
    %v4238 = vunpack.c.l.b16 %v3082
    %v4239 = vunpack.c.l.b16 %v3083
    %v4240 = vunpack.c.l.b16 %v3084
    %v4241 = vunpack.c.l.b16 %v3085
    %v4242 = vunpack.c.l.b16 %v3086
    %v4243 = vunpack.c.l.b16 %v3087
    %v4244 = vunpack.c.l.b16 %v3088
    %v4245 = vunpack.c.l.b16 %v3089
    %v4246 = vunpack.c.l.b16 %v3090
    %v4247 = vunpack.c.l.b16 %v3091
    %v4248 = vunpack.c.l.b16 %v3092
    %v4249 = vunpack.c.l.b16 %v3093
    %v4250 = vunpack.c.l.b16 %v3094
    %v4251 = vunpack.c.l.b16 %v3095
    %v4252 = vunpack.c.l.b16 %v3096
    %v4253 = vunpack.c.l.b16 %v3097
    %v4254 = vunpack.c.l.b16 %v3098
    %v4255 = vunpack.c.l.b16 %v3099
    %v4256 = vunpack.c.l.b16 %v3100
    %v4257 = vunpack.c.l.b16 %v3101
    %v4258 = vunpack.c.l.b16 %v3102
    %v4259 = vunpack.c.l.b16 %v3103
    %v4260 = vunpack.c.l.b16 %v3104
    %v4261 = vpack.c.b16 %v4166, %v4165
    %v4262 = vpack.c.b16 %v4168, %v4167
    %v4263 = vpack.c.b16 %v4170, %v4169
    %v4264 = vpack.c.b16 %v4172, %v4171
    %v4265 = vpack.c.b16 %v4174, %v4173
    %v4266 = vpack.c.b16 %v4176, %v4175
    %v4267 = vpack.c.b16 %v4178, %v4177
    %v4268 = vpack.c.b16 %v4180, %v4179
    %v4269 = vpack.c.b16 %v4182, %v4181
    %v4270 = vpack.c.b16 %v4184, %v4183
    %v4271 = vpack.c.b16 %v4186, %v4185
    %v4272 = vpack.c.b16 %v4188, %v4187
    %v4273 = vpack.c.b16 %v4190, %v4189
    %v4274 = vpack.c.b16 %v4192, %v4191
    %v4275 = vpack.c.b16 %v4194, %v4193
    %v4276 = vpack.c.b16 %v4196, %v4195
    %v4277 = vpack.c.b16 %v4198, %v4197
    %v4278 = vpack.c.b16 %v4200, %v4199
    %v4279 = vpack.c.b16 %v4202, %v4201
    %v4280 = vpack.c.b16 %v4204, %v4203
    %v4281 = vpack.c.b16 %v4206, %v4205
    %v4282 = vpack.c.b16 %v4208, %v4207
    %v4283 = vpack.c.b16 %v4210, %v4209
    %v4284 = vpack.c.b16 %v4212, %v4211
    %v4285 = vpack.c.b16 %v4214, %v4213
    %v4286 = vpack.c.b16 %v4216, %v4215
    %v4287 = vpack.c.b16 %v4218, %v4217
    %v4288 = vpack.c.b16 %v4220, %v4219
    %v4289 = vpack.c.b16 %v4222, %v4221
    %v4290 = vpack.c.b16 %v4224, %v4223
    %v4291 = vpack.c.b16 %v4226, %v4225
    %v4292 = vpack.c.b16 %v4228, %v4227
    %v4293 = vpack.c.b16 %v4230, %v4229
    %v4294 = vpack.c.b16 %v4232, %v4231
    %v4295 = vpack.c.b16 %v4234, %v4233
    %v4296 = vpack.c.b16 %v4236, %v4235
    %v4297 = vpack.c.b16 %v4238, %v4237
    %v4298 = vpack.c.b16 %v4240, %v4239
    %v4299 = vpack.c.b16 %v4242, %v4241
    %v4300 = vpack.c.b16 %v4244, %v4243
    %v4301 = vpack.c.b16 %v4246, %v4245
    %v4302 = vpack.c.b16 %v4248, %v4247
    %v4303 = vpack.c.b16 %v4250, %v4249
    %v4304 = vpack.c.b16 %v4252, %v4251
    %v4305 = vpack.c.b16 %v4254, %v4253
    %v4306 = vpack.c.b16 %v4256, %v4255
    %v4307 = vpack.c.b16 %v4258, %v4257
    %v4308 = vpack.c.b16 %v4260, %v4259
    %4357 = vmatpush.bf16.msra.mxu0 %v4268
    %4358 = vmatpush.bf16.msra.mxu0 %v4267
    %4359 = vmatpush.bf16.msra.mxu0 %v4266
    %4360 = vmatpush.bf16.msra.mxu0 %v4265
    %4361 = vmatpush.bf16.msra.mxu0 %v4264
    %4362 = vmatpush.bf16.msra.mxu0 %v4263
    %4363 = vmatpush.bf16.msra.mxu0 %v4262
    %4364 = vmatpush.bf16.msra.mxu0 %v4261
    %4365 = vmatmul.bf16.gmra.mxu0 %v3685
    %v4366 = vpop.f32.mrf.mxu0
    %v4367 = vadd.f32 %v3107, %v4366
    %v4368 = vpop.f32.mrf.mxu0
    %v4369 = vadd.f32 %v3107, %v4368
    %4370 = vmatmul.bf16.gmra.mxu0 %v3691
    %v4371 = vpop.f32.mrf.mxu0
    %v4372 = vadd.f32 %v3107, %v4371
    %v4373 = vpop.f32.mrf.mxu0
    %v4374 = vadd.f32 %v3107, %v4373
    %4375 = vmatmul.bf16.gmra.mxu0 %v3697
    %v4376 = vpop.f32.mrf.mxu0
    %v4377 = vadd.f32 %v3107, %v4376
    %v4378 = vpop.f32.mrf.mxu0
    %v4379 = vadd.f32 %v3107, %v4378
    %4380 = vmatmul.bf16.gmra.mxu0 %v3703
    %v4381 = vpop.f32.mrf.mxu0
    %v4382 = vadd.f32 %v3107, %v4381
    %v4383 = vpop.f32.mrf.mxu0
    %v4384 = vadd.f32 %v3107, %v4383
    %4385 = vmatmul.bf16.gmra.mxu0 %v3709
    %v4386 = vpop.f32.mrf.mxu0
    %v4387 = vadd.f32 %v3107, %v4386
    %v4388 = vpop.f32.mrf.mxu0
    %v4389 = vadd.f32 %v3107, %v4388
    %4390 = vmatmul.bf16.gmra.mxu0 %v3715
    %v4391 = vpop.f32.mrf.mxu0
    %v4392 = vadd.f32 %v3107, %v4391
    %v4393 = vpop.f32.mrf.mxu0
    %v4394 = vadd.f32 %v3107, %v4393
    %4395 = vmatmul.bf16.gmra.mxu0 %v3721
    %v4396 = vpop.f32.mrf.mxu0
    %v4397 = vadd.f32 %v3107, %v4396
    %v4398 = vpop.f32.mrf.mxu0
    %v4399 = vadd.f32 %v3107, %v4398
    %4400 = vmatmul.bf16.gmra.mxu0 %v3727
    %v4401 = vpop.f32.mrf.mxu0
    %v4402 = vadd.f32 %v3107, %v4401
    %v4403 = vpop.f32.mrf.mxu0
    %v4404 = vadd.f32 %v3107, %v4403
    %4405 = vmatmul.bf16.gmra.mxu0 %v3733
    %v4406 = vpop.f32.mrf.mxu0
    %v4407 = vadd.f32 %v3107, %v4406
    %v4408 = vpop.f32.mrf.mxu0
    %v4409 = vadd.f32 %v3107, %v4408
    %4410 = vmatmul.bf16.gmra.mxu0 %v3739
    %v4411 = vpop.f32.mrf.mxu0
    %v4412 = vadd.f32 %v3107, %v4411
    %v4413 = vpop.f32.mrf.mxu0
    %v4414 = vadd.f32 %v3107, %v4413
    %4415 = vmatmul.bf16.gmra.mxu0 %v3745
    %v4416 = vpop.f32.mrf.mxu0
    %v4417 = vadd.f32 %v3107, %v4416
    %v4418 = vpop.f32.mrf.mxu0
    %v4419 = vadd.f32 %v3107, %v4418
    %4420 = vmatmul.bf16.gmra.mxu0 %v3751
    %v4421 = vpop.f32.mrf.mxu0
    %v4422 = vadd.f32 %v3107, %v4421
    %v4423 = vpop.f32.mrf.mxu0
    %v4424 = vadd.f32 %v3107, %v4423
    %4425 = vmatmul.bf16.gmra.mxu0 %v3757
    %v4426 = vpop.f32.mrf.mxu0
    %v4427 = vadd.f32 %v3107, %v4426
    %v4428 = vpop.f32.mrf.mxu0
    %v4429 = vadd.f32 %v3107, %v4428
    %4430 = vmatmul.bf16.gmra.mxu0 %v3763
    %v4431 = vpop.f32.mrf.mxu0
    %v4432 = vadd.f32 %v3107, %v4431
    %v4433 = vpop.f32.mrf.mxu0
    %v4434 = vadd.f32 %v3107, %v4433
    %4435 = vmatmul.bf16.gmra.mxu0 %v3769
    %v4436 = vpop.f32.mrf.mxu0
    %v4437 = vadd.f32 %v3107, %v4436
    %v4438 = vpop.f32.mrf.mxu0
    %v4439 = vadd.f32 %v3107, %v4438
    %4440 = vmatmul.bf16.gmra.mxu0 %v3775
    %v4441 = vpop.f32.mrf.mxu0
    %v4442 = vadd.f32 %v3107, %v4441
    %v4443 = vpop.f32.mrf.mxu0
    %v4444 = vadd.f32 %v3107, %v4443
    %4445 = vmatmul.bf16.gmra.mxu0 %v3781
    %v4446 = vpop.f32.mrf.mxu0
    %v4447 = vadd.f32 %v3107, %v4446
    %v4448 = vpop.f32.mrf.mxu0
    %v4449 = vadd.f32 %v3107, %v4448
    %4450 = vmatmul.bf16.gmra.mxu0 %v3787
    %v4451 = vpop.f32.mrf.mxu0
    %v4452 = vadd.f32 %v3107, %v4451
    %v4453 = vpop.f32.mrf.mxu0
    %v4454 = vadd.f32 %v3107, %v4453
    %4455 = vmatmul.bf16.gmra.mxu0 %v3793
    %v4456 = vpop.f32.mrf.mxu0
    %v4457 = vadd.f32 %v3107, %v4456
    %v4458 = vpop.f32.mrf.mxu0
    %v4459 = vadd.f32 %v3107, %v4458
    %4460 = vmatmul.bf16.gmra.mxu0 %v3799
    %v4461 = vpop.f32.mrf.mxu0
    %v4462 = vadd.f32 %v3107, %v4461
    %v4463 = vpop.f32.mrf.mxu0
    %v4464 = vadd.f32 %v3107, %v4463
    %4465 = vmatmul.bf16.gmra.mxu0 %v3805
    %v4466 = vpop.f32.mrf.mxu0
    %v4467 = vadd.f32 %v3107, %v4466
    %v4468 = vpop.f32.mrf.mxu0
    %v4469 = vadd.f32 %v3107, %v4468
    %4470 = vmatmul.bf16.gmra.mxu0 %v3811
    %v4471 = vpop.f32.mrf.mxu0
    %v4472 = vadd.f32 %v3107, %v4471
    %v4473 = vpop.f32.mrf.mxu0
    %v4474 = vadd.f32 %v3107, %v4473
    %4475 = vmatmul.bf16.gmra.mxu0 %v3817
    %v4476 = vpop.f32.mrf.mxu0
    %v4477 = vadd.f32 %v3107, %v4476
    %v4478 = vpop.f32.mrf.mxu0
    %v4479 = vadd.f32 %v3107, %v4478
    %4480 = vmatmul.bf16.gmra.mxu0 %v3823
    %v4481 = vpop.f32.mrf.mxu0
    %v4482 = vadd.f32 %v3107, %v4481
    %v4483 = vpop.f32.mrf.mxu0
    %v4484 = vadd.f32 %v3107, %v4483
    %4485 = vmatmul.bf16.gmra.mxu0 %v3829
    %v4486 = vpop.f32.mrf.mxu0
    %v4487 = vadd.f32 %v3107, %v4486
    %v4488 = vpop.f32.mrf.mxu0
    %v4489 = vadd.f32 %v3107, %v4488
    %4490 = vmatmul.bf16.gmra.mxu0 %v3835
    %v4491 = vpop.f32.mrf.mxu0
    %v4492 = vadd.f32 %v3107, %v4491
    %v4493 = vpop.f32.mrf.mxu0
    %v4494 = vadd.f32 %v3107, %v4493
    %4495 = vmatmul.bf16.gmra.mxu0 %v3841
    %v4496 = vpop.f32.mrf.mxu0
    %v4497 = vadd.f32 %v3107, %v4496
    %v4498 = vpop.f32.mrf.mxu0
    %v4499 = vadd.f32 %v3107, %v4498
    %4500 = vmatmul.bf16.gmra.mxu0 %v3847
    %v4501 = vpop.f32.mrf.mxu0
    %v4502 = vadd.f32 %v3107, %v4501
    %v4503 = vpop.f32.mrf.mxu0
    %v4504 = vadd.f32 %v3107, %v4503
    %4505 = vmatmul.bf16.gmra.mxu0 %v3853
    %v4506 = vpop.f32.mrf.mxu0
    %v4507 = vadd.f32 %v3107, %v4506
    %v4508 = vpop.f32.mrf.mxu0
    %v4509 = vadd.f32 %v3107, %v4508
    %4510 = vmatmul.bf16.gmra.mxu0 %v3859
    %v4511 = vpop.f32.mrf.mxu0
    %v4512 = vadd.f32 %v3107, %v4511
    %v4513 = vpop.f32.mrf.mxu0
    %v4514 = vadd.f32 %v3107, %v4513
    %4515 = vmatmul.bf16.gmra.mxu0 %v3865
    %v4516 = vpop.f32.mrf.mxu0
    %v4517 = vadd.f32 %v3107, %v4516
    %v4518 = vpop.f32.mrf.mxu0
    %v4519 = vadd.f32 %v3107, %v4518
    %4520 = vmatmul.bf16.gmra.mxu0 %v3871
    %v4521 = vpop.f32.mrf.mxu0
    %v4522 = vadd.f32 %v3107, %v4521
    %v4523 = vpop.f32.mrf.mxu0
    %v4524 = vadd.f32 %v3107, %v4523
    %4525 = vdwg.mxu0
    %4526 = vmatpush.bf16.msra.mxu0 %v4276
    %4527 = vmatpush.bf16.msra.mxu0 %v4275
    %4528 = vmatpush.bf16.msra.mxu0 %v4274
    %4529 = vmatpush.bf16.msra.mxu0 %v4273
    %4530 = vmatpush.bf16.msra.mxu0 %v4272
    %4531 = vmatpush.bf16.msra.mxu0 %v4271
    %4532 = vmatpush.bf16.msra.mxu0 %v4270
    %4533 = vmatpush.bf16.msra.mxu0 %v4269
    %4534 = vmatmul.bf16.gmra.mxu0 %v3686
    %v4535 = vpop.f32.mrf.mxu0
    %v4536 = vadd.f32 %v4367, %v4535
    %v4537 = vpop.f32.mrf.mxu0
    %v4538 = vadd.f32 %v4369, %v4537
    %4539 = vmatmul.bf16.gmra.mxu0 %v3692
    %v4540 = vpop.f32.mrf.mxu0
    %v4541 = vadd.f32 %v4372, %v4540
    %v4542 = vpop.f32.mrf.mxu0
    %v4543 = vadd.f32 %v4374, %v4542
    %4544 = vmatmul.bf16.gmra.mxu0 %v3698
    %v4545 = vpop.f32.mrf.mxu0
    %v4546 = vadd.f32 %v4377, %v4545
    %v4547 = vpop.f32.mrf.mxu0
    %v4548 = vadd.f32 %v4379, %v4547
    %4549 = vmatmul.bf16.gmra.mxu0 %v3704
    %v4550 = vpop.f32.mrf.mxu0
    %v4551 = vadd.f32 %v4382, %v4550
    %v4552 = vpop.f32.mrf.mxu0
    %v4553 = vadd.f32 %v4384, %v4552
    %4554 = vmatmul.bf16.gmra.mxu0 %v3710
    %v4555 = vpop.f32.mrf.mxu0
    %v4556 = vadd.f32 %v4387, %v4555
    %v4557 = vpop.f32.mrf.mxu0
    %v4558 = vadd.f32 %v4389, %v4557
    %4559 = vmatmul.bf16.gmra.mxu0 %v3716
    %v4560 = vpop.f32.mrf.mxu0
    %v4561 = vadd.f32 %v4392, %v4560
    %v4562 = vpop.f32.mrf.mxu0
    %v4563 = vadd.f32 %v4394, %v4562
    %4564 = vmatmul.bf16.gmra.mxu0 %v3722
    %v4565 = vpop.f32.mrf.mxu0
    %v4566 = vadd.f32 %v4397, %v4565
    %v4567 = vpop.f32.mrf.mxu0
    %v4568 = vadd.f32 %v4399, %v4567
    %4569 = vmatmul.bf16.gmra.mxu0 %v3728
    %v4570 = vpop.f32.mrf.mxu0
    %v4571 = vadd.f32 %v4402, %v4570
    %v4572 = vpop.f32.mrf.mxu0
    %v4573 = vadd.f32 %v4404, %v4572
    %4574 = vmatmul.bf16.gmra.mxu0 %v3734
    %v4575 = vpop.f32.mrf.mxu0
    %v4576 = vadd.f32 %v4407, %v4575
    %v4577 = vpop.f32.mrf.mxu0
    %v4578 = vadd.f32 %v4409, %v4577
    %4579 = vmatmul.bf16.gmra.mxu0 %v3740
    %v4580 = vpop.f32.mrf.mxu0
    %v4581 = vadd.f32 %v4412, %v4580
    %v4582 = vpop.f32.mrf.mxu0
    %v4583 = vadd.f32 %v4414, %v4582
    %4584 = vmatmul.bf16.gmra.mxu0 %v3746
    %v4585 = vpop.f32.mrf.mxu0
    %v4586 = vadd.f32 %v4417, %v4585
    %v4587 = vpop.f32.mrf.mxu0
    %v4588 = vadd.f32 %v4419, %v4587
    %4589 = vmatmul.bf16.gmra.mxu0 %v3752
    %v4590 = vpop.f32.mrf.mxu0
    %v4591 = vadd.f32 %v4422, %v4590
    %v4592 = vpop.f32.mrf.mxu0
    %v4593 = vadd.f32 %v4424, %v4592
    %4594 = vmatmul.bf16.gmra.mxu0 %v3758
    %v4595 = vpop.f32.mrf.mxu0
    %v4596 = vadd.f32 %v4427, %v4595
    %v4597 = vpop.f32.mrf.mxu0
    %v4598 = vadd.f32 %v4429, %v4597
    %4599 = vmatmul.bf16.gmra.mxu0 %v3764
    %v4600 = vpop.f32.mrf.mxu0
    %v4601 = vadd.f32 %v4432, %v4600
    %v4602 = vpop.f32.mrf.mxu0
    %v4603 = vadd.f32 %v4434, %v4602
    %4604 = vmatmul.bf16.gmra.mxu0 %v3770
    %v4605 = vpop.f32.mrf.mxu0
    %v4606 = vadd.f32 %v4437, %v4605
    %v4607 = vpop.f32.mrf.mxu0
    %v4608 = vadd.f32 %v4439, %v4607
    %4609 = vmatmul.bf16.gmra.mxu0 %v3776
    %v4610 = vpop.f32.mrf.mxu0
    %v4611 = vadd.f32 %v4442, %v4610
    %v4612 = vpop.f32.mrf.mxu0
    %v4613 = vadd.f32 %v4444, %v4612
    %4614 = vmatmul.bf16.gmra.mxu0 %v3782
    %v4615 = vpop.f32.mrf.mxu0
    %v4616 = vadd.f32 %v4447, %v4615
    %v4617 = vpop.f32.mrf.mxu0
    %v4618 = vadd.f32 %v4449, %v4617
    %4619 = vmatmul.bf16.gmra.mxu0 %v3788
    %v4620 = vpop.f32.mrf.mxu0
    %v4621 = vadd.f32 %v4452, %v4620
    %v4622 = vpop.f32.mrf.mxu0
    %v4623 = vadd.f32 %v4454, %v4622
    %4624 = vmatmul.bf16.gmra.mxu0 %v3794
    %v4625 = vpop.f32.mrf.mxu0
    %v4626 = vadd.f32 %v4457, %v4625
    %v4627 = vpop.f32.mrf.mxu0
    %v4628 = vadd.f32 %v4459, %v4627
    %4629 = vmatmul.bf16.gmra.mxu0 %v3800
    %v4630 = vpop.f32.mrf.mxu0
    %v4631 = vadd.f32 %v4462, %v4630
    %v4632 = vpop.f32.mrf.mxu0
    %v4633 = vadd.f32 %v4464, %v4632
    %4634 = vmatmul.bf16.gmra.mxu0 %v3806
    %v4635 = vpop.f32.mrf.mxu0
    %v4636 = vadd.f32 %v4467, %v4635
    %v4637 = vpop.f32.mrf.mxu0
    %v4638 = vadd.f32 %v4469, %v4637
    %4639 = vmatmul.bf16.gmra.mxu0 %v3812
    %v4640 = vpop.f32.mrf.mxu0
    %v4641 = vadd.f32 %v4472, %v4640
    %v4642 = vpop.f32.mrf.mxu0
    %v4643 = vadd.f32 %v4474, %v4642
    %4644 = vmatmul.bf16.gmra.mxu0 %v3818
    %v4645 = vpop.f32.mrf.mxu0
    %v4646 = vadd.f32 %v4477, %v4645
    %v4647 = vpop.f32.mrf.mxu0
    %v4648 = vadd.f32 %v4479, %v4647
    %4649 = vmatmul.bf16.gmra.mxu0 %v3824
    %v4650 = vpop.f32.mrf.mxu0
    %v4651 = vadd.f32 %v4482, %v4650
    %v4652 = vpop.f32.mrf.mxu0
    %v4653 = vadd.f32 %v4484, %v4652
    %4654 = vmatmul.bf16.gmra.mxu0 %v3830
    %v4655 = vpop.f32.mrf.mxu0
    %v4656 = vadd.f32 %v4487, %v4655
    %v4657 = vpop.f32.mrf.mxu0
    %v4658 = vadd.f32 %v4489, %v4657
    %4659 = vmatmul.bf16.gmra.mxu0 %v3836
    %v4660 = vpop.f32.mrf.mxu0
    %v4661 = vadd.f32 %v4492, %v4660
    %v4662 = vpop.f32.mrf.mxu0
    %v4663 = vadd.f32 %v4494, %v4662
    %4664 = vmatmul.bf16.gmra.mxu0 %v3842
    %v4665 = vpop.f32.mrf.mxu0
    %v4666 = vadd.f32 %v4497, %v4665
    %v4667 = vpop.f32.mrf.mxu0
    %v4668 = vadd.f32 %v4499, %v4667
    %4669 = vmatmul.bf16.gmra.mxu0 %v3848
    %v4670 = vpop.f32.mrf.mxu0
    %v4671 = vadd.f32 %v4502, %v4670
    %v4672 = vpop.f32.mrf.mxu0
    %v4673 = vadd.f32 %v4504, %v4672
    %4674 = vmatmul.bf16.gmra.mxu0 %v3854
    %v4675 = vpop.f32.mrf.mxu0
    %v4676 = vadd.f32 %v4507, %v4675
    %v4677 = vpop.f32.mrf.mxu0
    %v4678 = vadd.f32 %v4509, %v4677
    %4679 = vmatmul.bf16.gmra.mxu0 %v3860
    %v4680 = vpop.f32.mrf.mxu0
    %v4681 = vadd.f32 %v4512, %v4680
    %v4682 = vpop.f32.mrf.mxu0
    %v4683 = vadd.f32 %v4514, %v4682
    %4684 = vmatmul.bf16.gmra.mxu0 %v3866
    %v4685 = vpop.f32.mrf.mxu0
    %v4686 = vadd.f32 %v4517, %v4685
    %v4687 = vpop.f32.mrf.mxu0
    %v4688 = vadd.f32 %v4519, %v4687
    %4689 = vmatmul.bf16.gmra.mxu0 %v3872
    %v4690 = vpop.f32.mrf.mxu0
    %v4691 = vadd.f32 %v4522, %v4690
    %v4692 = vpop.f32.mrf.mxu0
    %v4693 = vadd.f32 %v4524, %v4692
    %4694 = vdwg.mxu0
    %4695 = vmatpush.bf16.msra.mxu0 %v4284
    %4696 = vmatpush.bf16.msra.mxu0 %v4283
    %4697 = vmatpush.bf16.msra.mxu0 %v4282
    %4698 = vmatpush.bf16.msra.mxu0 %v4281
    %4699 = vmatpush.bf16.msra.mxu0 %v4280
    %4700 = vmatpush.bf16.msra.mxu0 %v4279
    %4701 = vmatpush.bf16.msra.mxu0 %v4278
    %4702 = vmatpush.bf16.msra.mxu0 %v4277
    %4703 = vmatmul.bf16.gmra.mxu0 %v3687
    %v4704 = vpop.f32.mrf.mxu0
    %v4705 = vadd.f32 %v4536, %v4704
    %v4706 = vpop.f32.mrf.mxu0
    %v4707 = vadd.f32 %v4538, %v4706
    %4708 = vmatmul.bf16.gmra.mxu0 %v3693
    %v4709 = vpop.f32.mrf.mxu0
    %v4710 = vadd.f32 %v4541, %v4709
    %v4711 = vpop.f32.mrf.mxu0
    %v4712 = vadd.f32 %v4543, %v4711
    %4713 = vmatmul.bf16.gmra.mxu0 %v3699
    %v4714 = vpop.f32.mrf.mxu0
    %v4715 = vadd.f32 %v4546, %v4714
    %v4716 = vpop.f32.mrf.mxu0
    %v4717 = vadd.f32 %v4548, %v4716
    %4718 = vmatmul.bf16.gmra.mxu0 %v3705
    %v4719 = vpop.f32.mrf.mxu0
    %v4720 = vadd.f32 %v4551, %v4719
    %v4721 = vpop.f32.mrf.mxu0
    %v4722 = vadd.f32 %v4553, %v4721
    %4723 = vmatmul.bf16.gmra.mxu0 %v3711
    %v4724 = vpop.f32.mrf.mxu0
    %v4725 = vadd.f32 %v4556, %v4724
    %v4726 = vpop.f32.mrf.mxu0
    %v4727 = vadd.f32 %v4558, %v4726
    %4728 = vmatmul.bf16.gmra.mxu0 %v3717
    %v4729 = vpop.f32.mrf.mxu0
    %v4730 = vadd.f32 %v4561, %v4729
    %v4731 = vpop.f32.mrf.mxu0
    %v4732 = vadd.f32 %v4563, %v4731
    %4733 = vmatmul.bf16.gmra.mxu0 %v3723
    %v4734 = vpop.f32.mrf.mxu0
    %v4735 = vadd.f32 %v4566, %v4734
    %v4736 = vpop.f32.mrf.mxu0
    %v4737 = vadd.f32 %v4568, %v4736
    %4738 = vmatmul.bf16.gmra.mxu0 %v3729
    %v4739 = vpop.f32.mrf.mxu0
    %v4740 = vadd.f32 %v4571, %v4739
    %v4741 = vpop.f32.mrf.mxu0
    %v4742 = vadd.f32 %v4573, %v4741
    %4743 = vmatmul.bf16.gmra.mxu0 %v3735
    %v4744 = vpop.f32.mrf.mxu0
    %v4745 = vadd.f32 %v4576, %v4744
    %v4746 = vpop.f32.mrf.mxu0
    %v4747 = vadd.f32 %v4578, %v4746
    %4748 = vmatmul.bf16.gmra.mxu0 %v3741
    %v4749 = vpop.f32.mrf.mxu0
    %v4750 = vadd.f32 %v4581, %v4749
    %v4751 = vpop.f32.mrf.mxu0
    %v4752 = vadd.f32 %v4583, %v4751
    %4753 = vmatmul.bf16.gmra.mxu0 %v3747
    %v4754 = vpop.f32.mrf.mxu0
    %v4755 = vadd.f32 %v4586, %v4754
    %v4756 = vpop.f32.mrf.mxu0
    %v4757 = vadd.f32 %v4588, %v4756
    %4758 = vmatmul.bf16.gmra.mxu0 %v3753
    %v4759 = vpop.f32.mrf.mxu0
    %v4760 = vadd.f32 %v4591, %v4759
    %v4761 = vpop.f32.mrf.mxu0
    %v4762 = vadd.f32 %v4593, %v4761
    %4763 = vmatmul.bf16.gmra.mxu0 %v3759
    %v4764 = vpop.f32.mrf.mxu0
    %v4765 = vadd.f32 %v4596, %v4764
    %v4766 = vpop.f32.mrf.mxu0
    %v4767 = vadd.f32 %v4598, %v4766
    %4768 = vmatmul.bf16.gmra.mxu0 %v3765
    %v4769 = vpop.f32.mrf.mxu0
    %v4770 = vadd.f32 %v4601, %v4769
    %v4771 = vpop.f32.mrf.mxu0
    %v4772 = vadd.f32 %v4603, %v4771
    %4773 = vmatmul.bf16.gmra.mxu0 %v3771
    %v4774 = vpop.f32.mrf.mxu0
    %v4775 = vadd.f32 %v4606, %v4774
    %v4776 = vpop.f32.mrf.mxu0
    %v4777 = vadd.f32 %v4608, %v4776
    %4778 = vmatmul.bf16.gmra.mxu0 %v3777
    %v4779 = vpop.f32.mrf.mxu0
    %v4780 = vadd.f32 %v4611, %v4779
    %v4781 = vpop.f32.mrf.mxu0
    %v4782 = vadd.f32 %v4613, %v4781
    %4783 = vmatmul.bf16.gmra.mxu0 %v3783
    %v4784 = vpop.f32.mrf.mxu0
    %v4785 = vadd.f32 %v4616, %v4784
    %v4786 = vpop.f32.mrf.mxu0
    %v4787 = vadd.f32 %v4618, %v4786
    %4788 = vmatmul.bf16.gmra.mxu0 %v3789
    %v4789 = vpop.f32.mrf.mxu0
    %v4790 = vadd.f32 %v4621, %v4789
    %v4791 = vpop.f32.mrf.mxu0
    %v4792 = vadd.f32 %v4623, %v4791
    %4793 = vmatmul.bf16.gmra.mxu0 %v3795
    %v4794 = vpop.f32.mrf.mxu0
    %v4795 = vadd.f32 %v4626, %v4794
    %v4796 = vpop.f32.mrf.mxu0
    %v4797 = vadd.f32 %v4628, %v4796
    %4798 = vmatmul.bf16.gmra.mxu0 %v3801
    %v4799 = vpop.f32.mrf.mxu0
    %v4800 = vadd.f32 %v4631, %v4799
    %v4801 = vpop.f32.mrf.mxu0
    %v4802 = vadd.f32 %v4633, %v4801
    %4803 = vmatmul.bf16.gmra.mxu0 %v3807
    %v4804 = vpop.f32.mrf.mxu0
    %v4805 = vadd.f32 %v4636, %v4804
    %v4806 = vpop.f32.mrf.mxu0
    %v4807 = vadd.f32 %v4638, %v4806
    %4808 = vmatmul.bf16.gmra.mxu0 %v3813
    %v4809 = vpop.f32.mrf.mxu0
    %v4810 = vadd.f32 %v4641, %v4809
    %v4811 = vpop.f32.mrf.mxu0
    %v4812 = vadd.f32 %v4643, %v4811
    %4813 = vmatmul.bf16.gmra.mxu0 %v3819
    %v4814 = vpop.f32.mrf.mxu0
    %v4815 = vadd.f32 %v4646, %v4814
    %v4816 = vpop.f32.mrf.mxu0
    %v4817 = vadd.f32 %v4648, %v4816
    %4818 = vmatmul.bf16.gmra.mxu0 %v3825
    %v4819 = vpop.f32.mrf.mxu0
    %v4820 = vadd.f32 %v4651, %v4819
    %v4821 = vpop.f32.mrf.mxu0
    %v4822 = vadd.f32 %v4653, %v4821
    %4823 = vmatmul.bf16.gmra.mxu0 %v3831
    %v4824 = vpop.f32.mrf.mxu0
    %v4825 = vadd.f32 %v4656, %v4824
    %v4826 = vpop.f32.mrf.mxu0
    %v4827 = vadd.f32 %v4658, %v4826
    %4828 = vmatmul.bf16.gmra.mxu0 %v3837
    %v4829 = vpop.f32.mrf.mxu0
    %v4830 = vadd.f32 %v4661, %v4829
    %v4831 = vpop.f32.mrf.mxu0
    %v4832 = vadd.f32 %v4663, %v4831
    %4833 = vmatmul.bf16.gmra.mxu0 %v3843
    %v4834 = vpop.f32.mrf.mxu0
    %v4835 = vadd.f32 %v4666, %v4834
    %v4836 = vpop.f32.mrf.mxu0
    %v4837 = vadd.f32 %v4668, %v4836
    %4838 = vmatmul.bf16.gmra.mxu0 %v3849
    %v4839 = vpop.f32.mrf.mxu0
    %v4840 = vadd.f32 %v4671, %v4839
    %v4841 = vpop.f32.mrf.mxu0
    %v4842 = vadd.f32 %v4673, %v4841
    %4843 = vmatmul.bf16.gmra.mxu0 %v3855
    %v4844 = vpop.f32.mrf.mxu0
    %v4845 = vadd.f32 %v4676, %v4844
    %v4846 = vpop.f32.mrf.mxu0
    %v4847 = vadd.f32 %v4678, %v4846
    %4848 = vmatmul.bf16.gmra.mxu0 %v3861
    %v4849 = vpop.f32.mrf.mxu0
    %v4850 = vadd.f32 %v4681, %v4849
    %v4851 = vpop.f32.mrf.mxu0
    %v4852 = vadd.f32 %v4683, %v4851
    %4853 = vmatmul.bf16.gmra.mxu0 %v3867
    %v4854 = vpop.f32.mrf.mxu0
    %v4855 = vadd.f32 %v4686, %v4854
    %v4856 = vpop.f32.mrf.mxu0
    %v4857 = vadd.f32 %v4688, %v4856
    %4858 = vmatmul.bf16.gmra.mxu0 %v3873
    %v4859 = vpop.f32.mrf.mxu0
    %v4860 = vadd.f32 %v4691, %v4859
    %v4861 = vpop.f32.mrf.mxu0
    %v4862 = vadd.f32 %v4693, %v4861
    %4863 = vdwg.mxu0
    %4864 = vmatpush.bf16.msra.mxu0 %v4292
    %4865 = vmatpush.bf16.msra.mxu0 %v4291
    %4866 = vmatpush.bf16.msra.mxu0 %v4290
    %4867 = vmatpush.bf16.msra.mxu0 %v4289
    %4868 = vmatpush.bf16.msra.mxu0 %v4288
    %4869 = vmatpush.bf16.msra.mxu0 %v4287
    %4870 = vmatpush.bf16.msra.mxu0 %v4286
    %4871 = vmatpush.bf16.msra.mxu0 %v4285
    %4872 = vmatmul.bf16.gmra.mxu0 %v3688
    %v4873 = vpop.f32.mrf.mxu0
    %v4874 = vadd.f32 %v4705, %v4873
    %v4875 = vpop.f32.mrf.mxu0
    %v4876 = vadd.f32 %v4707, %v4875
    %4877 = vmatmul.bf16.gmra.mxu0 %v3694
    %v4878 = vpop.f32.mrf.mxu0
    %v4879 = vadd.f32 %v4710, %v4878
    %v4880 = vpop.f32.mrf.mxu0
    %v4881 = vadd.f32 %v4712, %v4880
    %4882 = vmatmul.bf16.gmra.mxu0 %v3700
    %v4883 = vpop.f32.mrf.mxu0
    %v4884 = vadd.f32 %v4715, %v4883
    %v4885 = vpop.f32.mrf.mxu0
    %v4886 = vadd.f32 %v4717, %v4885
    %4887 = vmatmul.bf16.gmra.mxu0 %v3706
    %v4888 = vpop.f32.mrf.mxu0
    %v4889 = vadd.f32 %v4720, %v4888
    %v4890 = vpop.f32.mrf.mxu0
    %v4891 = vadd.f32 %v4722, %v4890
    %4892 = vmatmul.bf16.gmra.mxu0 %v3712
    %v4893 = vpop.f32.mrf.mxu0
    %v4894 = vadd.f32 %v4725, %v4893
    %v4895 = vpop.f32.mrf.mxu0
    %v4896 = vadd.f32 %v4727, %v4895
    %4897 = vmatmul.bf16.gmra.mxu0 %v3718
    %v4898 = vpop.f32.mrf.mxu0
    %v4899 = vadd.f32 %v4730, %v4898
    %v4900 = vpop.f32.mrf.mxu0
    %v4901 = vadd.f32 %v4732, %v4900
    %4902 = vmatmul.bf16.gmra.mxu0 %v3724
    %v4903 = vpop.f32.mrf.mxu0
    %v4904 = vadd.f32 %v4735, %v4903
    %v4905 = vpop.f32.mrf.mxu0
    %v4906 = vadd.f32 %v4737, %v4905
    %4907 = vmatmul.bf16.gmra.mxu0 %v3730
    %v4908 = vpop.f32.mrf.mxu0
    %v4909 = vadd.f32 %v4740, %v4908
    %v4910 = vpop.f32.mrf.mxu0
    %v4911 = vadd.f32 %v4742, %v4910
    %4912 = vmatmul.bf16.gmra.mxu0 %v3736
    %v4913 = vpop.f32.mrf.mxu0
    %v4914 = vadd.f32 %v4745, %v4913
    %v4915 = vpop.f32.mrf.mxu0
    %v4916 = vadd.f32 %v4747, %v4915
    %4917 = vmatmul.bf16.gmra.mxu0 %v3742
    %v4918 = vpop.f32.mrf.mxu0
    %v4919 = vadd.f32 %v4750, %v4918
    %v4920 = vpop.f32.mrf.mxu0
    %v4921 = vadd.f32 %v4752, %v4920
    %4922 = vmatmul.bf16.gmra.mxu0 %v3748
    %v4923 = vpop.f32.mrf.mxu0
    %v4924 = vadd.f32 %v4755, %v4923
    %v4925 = vpop.f32.mrf.mxu0
    %v4926 = vadd.f32 %v4757, %v4925
    %4927 = vmatmul.bf16.gmra.mxu0 %v3754
    %v4928 = vpop.f32.mrf.mxu0
    %v4929 = vadd.f32 %v4760, %v4928
    %v4930 = vpop.f32.mrf.mxu0
    %v4931 = vadd.f32 %v4762, %v4930
    %4932 = vmatmul.bf16.gmra.mxu0 %v3760
    %v4933 = vpop.f32.mrf.mxu0
    %v4934 = vadd.f32 %v4765, %v4933
    %v4935 = vpop.f32.mrf.mxu0
    %v4936 = vadd.f32 %v4767, %v4935
    %4937 = vmatmul.bf16.gmra.mxu0 %v3766
    %v4938 = vpop.f32.mrf.mxu0
    %v4939 = vadd.f32 %v4770, %v4938
    %v4940 = vpop.f32.mrf.mxu0
    %v4941 = vadd.f32 %v4772, %v4940
    %4942 = vmatmul.bf16.gmra.mxu0 %v3772
    %v4943 = vpop.f32.mrf.mxu0
    %v4944 = vadd.f32 %v4775, %v4943
    %v4945 = vpop.f32.mrf.mxu0
    %v4946 = vadd.f32 %v4777, %v4945
    %4947 = vmatmul.bf16.gmra.mxu0 %v3778
    %v4948 = vpop.f32.mrf.mxu0
    %v4949 = vadd.f32 %v4780, %v4948
    %v4950 = vpop.f32.mrf.mxu0
    %v4951 = vadd.f32 %v4782, %v4950
    %4952 = vmatmul.bf16.gmra.mxu0 %v3784
    %v4953 = vpop.f32.mrf.mxu0
    %v4954 = vadd.f32 %v4785, %v4953
    %v4955 = vpop.f32.mrf.mxu0
    %v4956 = vadd.f32 %v4787, %v4955
    %4957 = vmatmul.bf16.gmra.mxu0 %v3790
    %v4958 = vpop.f32.mrf.mxu0
    %v4959 = vadd.f32 %v4790, %v4958
    %v4960 = vpop.f32.mrf.mxu0
    %v4961 = vadd.f32 %v4792, %v4960
    %4962 = vmatmul.bf16.gmra.mxu0 %v3796
    %v4963 = vpop.f32.mrf.mxu0
    %v4964 = vadd.f32 %v4795, %v4963
    %v4965 = vpop.f32.mrf.mxu0
    %v4966 = vadd.f32 %v4797, %v4965
    %4967 = vmatmul.bf16.gmra.mxu0 %v3802
    %v4968 = vpop.f32.mrf.mxu0
    %v4969 = vadd.f32 %v4800, %v4968
    %v4970 = vpop.f32.mrf.mxu0
    %v4971 = vadd.f32 %v4802, %v4970
    %4972 = vmatmul.bf16.gmra.mxu0 %v3808
    %v4973 = vpop.f32.mrf.mxu0
    %v4974 = vadd.f32 %v4805, %v4973
    %v4975 = vpop.f32.mrf.mxu0
    %v4976 = vadd.f32 %v4807, %v4975
    %4977 = vmatmul.bf16.gmra.mxu0 %v3814
    %v4978 = vpop.f32.mrf.mxu0
    %v4979 = vadd.f32 %v4810, %v4978
    %v4980 = vpop.f32.mrf.mxu0
    %v4981 = vadd.f32 %v4812, %v4980
    %4982 = vmatmul.bf16.gmra.mxu0 %v3820
    %v4983 = vpop.f32.mrf.mxu0
    %v4984 = vadd.f32 %v4815, %v4983
    %v4985 = vpop.f32.mrf.mxu0
    %v4986 = vadd.f32 %v4817, %v4985
    %4987 = vmatmul.bf16.gmra.mxu0 %v3826
    %v4988 = vpop.f32.mrf.mxu0
    %v4989 = vadd.f32 %v4820, %v4988
    %v4990 = vpop.f32.mrf.mxu0
    %v4991 = vadd.f32 %v4822, %v4990
    %4992 = vmatmul.bf16.gmra.mxu0 %v3832
    %v4993 = vpop.f32.mrf.mxu0
    %v4994 = vadd.f32 %v4825, %v4993
    %v4995 = vpop.f32.mrf.mxu0
    %v4996 = vadd.f32 %v4827, %v4995
    %4997 = vmatmul.bf16.gmra.mxu0 %v3838
    %v4998 = vpop.f32.mrf.mxu0
    %v4999 = vadd.f32 %v4830, %v4998
    %v5000 = vpop.f32.mrf.mxu0
    %v5001 = vadd.f32 %v4832, %v5000
    %5002 = vmatmul.bf16.gmra.mxu0 %v3844
    %v5003 = vpop.f32.mrf.mxu0
    %v5004 = vadd.f32 %v4835, %v5003
    %v5005 = vpop.f32.mrf.mxu0
    %v5006 = vadd.f32 %v4837, %v5005
    %5007 = vmatmul.bf16.gmra.mxu0 %v3850
    %v5008 = vpop.f32.mrf.mxu0
    %v5009 = vadd.f32 %v4840, %v5008
    %v5010 = vpop.f32.mrf.mxu0
    %v5011 = vadd.f32 %v4842, %v5010
    %5012 = vmatmul.bf16.gmra.mxu0 %v3856
    %v5013 = vpop.f32.mrf.mxu0
    %v5014 = vadd.f32 %v4845, %v5013
    %v5015 = vpop.f32.mrf.mxu0
    %v5016 = vadd.f32 %v4847, %v5015
    %5017 = vmatmul.bf16.gmra.mxu0 %v3862
    %v5018 = vpop.f32.mrf.mxu0
    %v5019 = vadd.f32 %v4850, %v5018
    %v5020 = vpop.f32.mrf.mxu0
    %v5021 = vadd.f32 %v4852, %v5020
    %5022 = vmatmul.bf16.gmra.mxu0 %v3868
    %v5023 = vpop.f32.mrf.mxu0
    %v5024 = vadd.f32 %v4855, %v5023
    %v5025 = vpop.f32.mrf.mxu0
    %v5026 = vadd.f32 %v4857, %v5025
    %5027 = vmatmul.bf16.gmra.mxu0 %v3874
    %v5028 = vpop.f32.mrf.mxu0
    %v5029 = vadd.f32 %v4860, %v5028
    %v5030 = vpop.f32.mrf.mxu0
    %v5031 = vadd.f32 %v4862, %v5030
    %5032 = vdwg.mxu0
    %5033 = vmatpush.bf16.msra.mxu0 %v4300
    %5034 = vmatpush.bf16.msra.mxu0 %v4299
    %5035 = vmatpush.bf16.msra.mxu0 %v4298
    %5036 = vmatpush.bf16.msra.mxu0 %v4297
    %5037 = vmatpush.bf16.msra.mxu0 %v4296
    %5038 = vmatpush.bf16.msra.mxu0 %v4295
    %5039 = vmatpush.bf16.msra.mxu0 %v4294
    %5040 = vmatpush.bf16.msra.mxu0 %v4293
    %5041 = vmatmul.bf16.gmra.mxu0 %v3689
    %v5042 = vpop.f32.mrf.mxu0
    %v5043 = vadd.f32 %v4874, %v5042
    %v5044 = vpop.f32.mrf.mxu0
    %v5045 = vadd.f32 %v4876, %v5044
    %5046 = vmatmul.bf16.gmra.mxu0 %v3695
    %v5047 = vpop.f32.mrf.mxu0
    %v5048 = vadd.f32 %v4879, %v5047
    %v5049 = vpop.f32.mrf.mxu0
    %v5050 = vadd.f32 %v4881, %v5049
    %5051 = vmatmul.bf16.gmra.mxu0 %v3701
    %v5052 = vpop.f32.mrf.mxu0
    %v5053 = vadd.f32 %v4884, %v5052
    %v5054 = vpop.f32.mrf.mxu0
    %v5055 = vadd.f32 %v4886, %v5054
    %5056 = vmatmul.bf16.gmra.mxu0 %v3707
    %v5057 = vpop.f32.mrf.mxu0
    %v5058 = vadd.f32 %v4889, %v5057
    %v5059 = vpop.f32.mrf.mxu0
    %v5060 = vadd.f32 %v4891, %v5059
    %5061 = vmatmul.bf16.gmra.mxu0 %v3713
    %v5062 = vpop.f32.mrf.mxu0
    %v5063 = vadd.f32 %v4894, %v5062
    %v5064 = vpop.f32.mrf.mxu0
    %v5065 = vadd.f32 %v4896, %v5064
    %5066 = vmatmul.bf16.gmra.mxu0 %v3719
    %v5067 = vpop.f32.mrf.mxu0
    %v5068 = vadd.f32 %v4899, %v5067
    %v5069 = vpop.f32.mrf.mxu0
    %v5070 = vadd.f32 %v4901, %v5069
    %5071 = vmatmul.bf16.gmra.mxu0 %v3725
    %v5072 = vpop.f32.mrf.mxu0
    %v5073 = vadd.f32 %v4904, %v5072
    %v5074 = vpop.f32.mrf.mxu0
    %v5075 = vadd.f32 %v4906, %v5074
    %5076 = vmatmul.bf16.gmra.mxu0 %v3731
    %v5077 = vpop.f32.mrf.mxu0
    %v5078 = vadd.f32 %v4909, %v5077
    %v5079 = vpop.f32.mrf.mxu0
    %v5080 = vadd.f32 %v4911, %v5079
    %5081 = vmatmul.bf16.gmra.mxu0 %v3737
    %v5082 = vpop.f32.mrf.mxu0
    %v5083 = vadd.f32 %v4914, %v5082
    %v5084 = vpop.f32.mrf.mxu0
    %v5085 = vadd.f32 %v4916, %v5084
    %5086 = vmatmul.bf16.gmra.mxu0 %v3743
    %v5087 = vpop.f32.mrf.mxu0
    %v5088 = vadd.f32 %v4919, %v5087
    %v5089 = vpop.f32.mrf.mxu0
    %v5090 = vadd.f32 %v4921, %v5089
    %5091 = vmatmul.bf16.gmra.mxu0 %v3749
    %v5092 = vpop.f32.mrf.mxu0
    %v5093 = vadd.f32 %v4924, %v5092
    %v5094 = vpop.f32.mrf.mxu0
    %v5095 = vadd.f32 %v4926, %v5094
    %5096 = vmatmul.bf16.gmra.mxu0 %v3755
    %v5097 = vpop.f32.mrf.mxu0
    %v5098 = vadd.f32 %v4929, %v5097
    %v5099 = vpop.f32.mrf.mxu0
    %v5100 = vadd.f32 %v4931, %v5099
    %5101 = vmatmul.bf16.gmra.mxu0 %v3761
    %v5102 = vpop.f32.mrf.mxu0
    %v5103 = vadd.f32 %v4934, %v5102
    %v5104 = vpop.f32.mrf.mxu0
    %v5105 = vadd.f32 %v4936, %v5104
    %5106 = vmatmul.bf16.gmra.mxu0 %v3767
    %v5107 = vpop.f32.mrf.mxu0
    %v5108 = vadd.f32 %v4939, %v5107
    %v5109 = vpop.f32.mrf.mxu0
    %v5110 = vadd.f32 %v4941, %v5109
    %5111 = vmatmul.bf16.gmra.mxu0 %v3773
    %v5112 = vpop.f32.mrf.mxu0
    %v5113 = vadd.f32 %v4944, %v5112
    %v5114 = vpop.f32.mrf.mxu0
    %v5115 = vadd.f32 %v4946, %v5114
    %5116 = vmatmul.bf16.gmra.mxu0 %v3779
    %v5117 = vpop.f32.mrf.mxu0
    %v5118 = vadd.f32 %v4949, %v5117
    %v5119 = vpop.f32.mrf.mxu0
    %v5120 = vadd.f32 %v4951, %v5119
    %5121 = vmatmul.bf16.gmra.mxu0 %v3785
    %v5122 = vpop.f32.mrf.mxu0
    %v5123 = vadd.f32 %v4954, %v5122
    %v5124 = vpop.f32.mrf.mxu0
    %v5125 = vadd.f32 %v4956, %v5124
    %5126 = vmatmul.bf16.gmra.mxu0 %v3791
    %v5127 = vpop.f32.mrf.mxu0
    %v5128 = vadd.f32 %v4959, %v5127
    %v5129 = vpop.f32.mrf.mxu0
    %v5130 = vadd.f32 %v4961, %v5129
    %5131 = vmatmul.bf16.gmra.mxu0 %v3797
    %v5132 = vpop.f32.mrf.mxu0
    %v5133 = vadd.f32 %v4964, %v5132
    %v5134 = vpop.f32.mrf.mxu0
    %v5135 = vadd.f32 %v4966, %v5134
    %5136 = vmatmul.bf16.gmra.mxu0 %v3803
    %v5137 = vpop.f32.mrf.mxu0
    %v5138 = vadd.f32 %v4969, %v5137
    %v5139 = vpop.f32.mrf.mxu0
    %v5140 = vadd.f32 %v4971, %v5139
    %5141 = vmatmul.bf16.gmra.mxu0 %v3809
    %v5142 = vpop.f32.mrf.mxu0
    %v5143 = vadd.f32 %v4974, %v5142
    %v5144 = vpop.f32.mrf.mxu0
    %v5145 = vadd.f32 %v4976, %v5144
    %5146 = vmatmul.bf16.gmra.mxu0 %v3815
    %v5147 = vpop.f32.mrf.mxu0
    %v5148 = vadd.f32 %v4979, %v5147
    %v5149 = vpop.f32.mrf.mxu0
    %v5150 = vadd.f32 %v4981, %v5149
    %5151 = vmatmul.bf16.gmra.mxu0 %v3821
    %v5152 = vpop.f32.mrf.mxu0
    %v5153 = vadd.f32 %v4984, %v5152
    %v5154 = vpop.f32.mrf.mxu0
    %v5155 = vadd.f32 %v4986, %v5154
    %5156 = vmatmul.bf16.gmra.mxu0 %v3827
    %v5157 = vpop.f32.mrf.mxu0
    %v5158 = vadd.f32 %v4989, %v5157
    %v5159 = vpop.f32.mrf.mxu0
    %v5160 = vadd.f32 %v4991, %v5159
    %5161 = vmatmul.bf16.gmra.mxu0 %v3833
    %v5162 = vpop.f32.mrf.mxu0
    %v5163 = vadd.f32 %v4994, %v5162
    %v5164 = vpop.f32.mrf.mxu0
    %v5165 = vadd.f32 %v4996, %v5164
    %5166 = vmatmul.bf16.gmra.mxu0 %v3839
    %v5167 = vpop.f32.mrf.mxu0
    %v5168 = vadd.f32 %v4999, %v5167
    %v5169 = vpop.f32.mrf.mxu0
    %v5170 = vadd.f32 %v5001, %v5169
    %5171 = vmatmul.bf16.gmra.mxu0 %v3845
    %v5172 = vpop.f32.mrf.mxu0
    %v5173 = vadd.f32 %v5004, %v5172
    %v5174 = vpop.f32.mrf.mxu0
    %v5175 = vadd.f32 %v5006, %v5174
    %5176 = vmatmul.bf16.gmra.mxu0 %v3851
    %v5177 = vpop.f32.mrf.mxu0
    %v5178 = vadd.f32 %v5009, %v5177
    %v5179 = vpop.f32.mrf.mxu0
    %v5180 = vadd.f32 %v5011, %v5179
    %5181 = vmatmul.bf16.gmra.mxu0 %v3857
    %v5182 = vpop.f32.mrf.mxu0
    %v5183 = vadd.f32 %v5014, %v5182
    %v5184 = vpop.f32.mrf.mxu0
    %v5185 = vadd.f32 %v5016, %v5184
    %5186 = vmatmul.bf16.gmra.mxu0 %v3863
    %v5187 = vpop.f32.mrf.mxu0
    %v5188 = vadd.f32 %v5019, %v5187
    %v5189 = vpop.f32.mrf.mxu0
    %v5190 = vadd.f32 %v5021, %v5189
    %5191 = vmatmul.bf16.gmra.mxu0 %v3869
    %v5192 = vpop.f32.mrf.mxu0
    %v5193 = vadd.f32 %v5024, %v5192
    %v5194 = vpop.f32.mrf.mxu0
    %v5195 = vadd.f32 %v5026, %v5194
    %5196 = vmatmul.bf16.gmra.mxu0 %v3875
    %v5197 = vpop.f32.mrf.mxu0
    %v5198 = vadd.f32 %v5029, %v5197
    %v5199 = vpop.f32.mrf.mxu0
    %v5200 = vadd.f32 %v5031, %v5199
    %5201 = vdwg.mxu0
    %5202 = vmatpush.bf16.msra.mxu0 %v4308
    %5203 = vmatpush.bf16.msra.mxu0 %v4307
    %5204 = vmatpush.bf16.msra.mxu0 %v4306
    %5205 = vmatpush.bf16.msra.mxu0 %v4305
    %5206 = vmatpush.bf16.msra.mxu0 %v4304
    %5207 = vmatpush.bf16.msra.mxu0 %v4303
    %5208 = vmatpush.bf16.msra.mxu0 %v4302
    %5209 = vmatpush.bf16.msra.mxu0 %v4301
    %5210 = vmatmul.bf16.gmra.mxu0 %v3690
    %v5211 = vpop.f32.mrf.mxu0
    %v5212 = vadd.f32 %v5043, %v5211
    %v5213 = vpop.f32.mrf.mxu0
    %v5214 = vadd.f32 %v5045, %v5213
    %5215 = vmatmul.bf16.gmra.mxu0 %v3696
    %v5216 = vpop.f32.mrf.mxu0
    %v5217 = vadd.f32 %v5048, %v5216
    %v5218 = vpop.f32.mrf.mxu0
    %v5219 = vadd.f32 %v5050, %v5218
    %5220 = vmatmul.bf16.gmra.mxu0 %v3702
    %v5221 = vpop.f32.mrf.mxu0
    %v5222 = vadd.f32 %v5053, %v5221
    %v5223 = vpop.f32.mrf.mxu0
    %v5224 = vadd.f32 %v5055, %v5223
    %5225 = vmatmul.bf16.gmra.mxu0 %v3708
    %v5226 = vpop.f32.mrf.mxu0
    %v5227 = vadd.f32 %v5058, %v5226
    %v5228 = vpop.f32.mrf.mxu0
    %v5229 = vadd.f32 %v5060, %v5228
    %5230 = vmatmul.bf16.gmra.mxu0 %v3714
    %v5231 = vpop.f32.mrf.mxu0
    %v5232 = vadd.f32 %v5063, %v5231
    %v5233 = vpop.f32.mrf.mxu0
    %v5234 = vadd.f32 %v5065, %v5233
    %5235 = vmatmul.bf16.gmra.mxu0 %v3720
    %v5236 = vpop.f32.mrf.mxu0
    %v5237 = vadd.f32 %v5068, %v5236
    %v5238 = vpop.f32.mrf.mxu0
    %v5239 = vadd.f32 %v5070, %v5238
    %5240 = vmatmul.bf16.gmra.mxu0 %v3726
    %v5241 = vpop.f32.mrf.mxu0
    %v5242 = vadd.f32 %v5073, %v5241
    %v5243 = vpop.f32.mrf.mxu0
    %v5244 = vadd.f32 %v5075, %v5243
    %5245 = vmatmul.bf16.gmra.mxu0 %v3732
    %v5246 = vpop.f32.mrf.mxu0
    %v5247 = vadd.f32 %v5078, %v5246
    %v5248 = vpop.f32.mrf.mxu0
    %v5249 = vadd.f32 %v5080, %v5248
    %5250 = vmatmul.bf16.gmra.mxu0 %v3738
    %v5251 = vpop.f32.mrf.mxu0
    %v5252 = vadd.f32 %v5083, %v5251
    %v5253 = vpop.f32.mrf.mxu0
    %v5254 = vadd.f32 %v5085, %v5253
    %5255 = vmatmul.bf16.gmra.mxu0 %v3744
    %v5256 = vpop.f32.mrf.mxu0
    %v5257 = vadd.f32 %v5088, %v5256
    %v5258 = vpop.f32.mrf.mxu0
    %v5259 = vadd.f32 %v5090, %v5258
    %5260 = vmatmul.bf16.gmra.mxu0 %v3750
    %v5261 = vpop.f32.mrf.mxu0
    %v5262 = vadd.f32 %v5093, %v5261
    %v5263 = vpop.f32.mrf.mxu0
    %v5264 = vadd.f32 %v5095, %v5263
    %5265 = vmatmul.bf16.gmra.mxu0 %v3756
    %v5266 = vpop.f32.mrf.mxu0
    %v5267 = vadd.f32 %v5098, %v5266
    %v5268 = vpop.f32.mrf.mxu0
    %v5269 = vadd.f32 %v5100, %v5268
    %5270 = vmatmul.bf16.gmra.mxu0 %v3762
    %v5271 = vpop.f32.mrf.mxu0
    %v5272 = vadd.f32 %v5103, %v5271
    %v5273 = vpop.f32.mrf.mxu0
    %v5274 = vadd.f32 %v5105, %v5273
    %5275 = vmatmul.bf16.gmra.mxu0 %v3768
    %v5276 = vpop.f32.mrf.mxu0
    %v5277 = vadd.f32 %v5108, %v5276
    %v5278 = vpop.f32.mrf.mxu0
    %v5279 = vadd.f32 %v5110, %v5278
    %5280 = vmatmul.bf16.gmra.mxu0 %v3774
    %v5281 = vpop.f32.mrf.mxu0
    %v5282 = vadd.f32 %v5113, %v5281
    %v5283 = vpop.f32.mrf.mxu0
    %v5284 = vadd.f32 %v5115, %v5283
    %5285 = vmatmul.bf16.gmra.mxu0 %v3780
    %v5286 = vpop.f32.mrf.mxu0
    %v5287 = vadd.f32 %v5118, %v5286
    %v5288 = vpop.f32.mrf.mxu0
    %v5289 = vadd.f32 %v5120, %v5288
    %5290 = vmatmul.bf16.gmra.mxu0 %v3786
    %v5291 = vpop.f32.mrf.mxu0
    %v5292 = vadd.f32 %v5123, %v5291
    %v5293 = vpop.f32.mrf.mxu0
    %v5294 = vadd.f32 %v5125, %v5293
    %5295 = vmatmul.bf16.gmra.mxu0 %v3792
    %v5296 = vpop.f32.mrf.mxu0
    %v5297 = vadd.f32 %v5128, %v5296
    %v5298 = vpop.f32.mrf.mxu0
    %v5299 = vadd.f32 %v5130, %v5298
    %5300 = vmatmul.bf16.gmra.mxu0 %v3798
    %v5301 = vpop.f32.mrf.mxu0
    %v5302 = vadd.f32 %v5133, %v5301
    %v5303 = vpop.f32.mrf.mxu0
    %v5304 = vadd.f32 %v5135, %v5303
    %5305 = vmatmul.bf16.gmra.mxu0 %v3804
    %v5306 = vpop.f32.mrf.mxu0
    %v5307 = vadd.f32 %v5138, %v5306
    %v5308 = vpop.f32.mrf.mxu0
    %v5309 = vadd.f32 %v5140, %v5308
    %5310 = vmatmul.bf16.gmra.mxu0 %v3810
    %v5311 = vpop.f32.mrf.mxu0
    %v5312 = vadd.f32 %v5143, %v5311
    %v5313 = vpop.f32.mrf.mxu0
    %v5314 = vadd.f32 %v5145, %v5313
    %5315 = vmatmul.bf16.gmra.mxu0 %v3816
    %v5316 = vpop.f32.mrf.mxu0
    %v5317 = vadd.f32 %v5148, %v5316
    %v5318 = vpop.f32.mrf.mxu0
    %v5319 = vadd.f32 %v5150, %v5318
    %5320 = vmatmul.bf16.gmra.mxu0 %v3822
    %v5321 = vpop.f32.mrf.mxu0
    %v5322 = vadd.f32 %v5153, %v5321
    %v5323 = vpop.f32.mrf.mxu0
    %v5324 = vadd.f32 %v5155, %v5323
    %5325 = vmatmul.bf16.gmra.mxu0 %v3828
    %v5326 = vpop.f32.mrf.mxu0
    %v5327 = vadd.f32 %v5158, %v5326
    %v5328 = vpop.f32.mrf.mxu0
    %v5329 = vadd.f32 %v5160, %v5328
    %5330 = vmatmul.bf16.gmra.mxu0 %v3834
    %v5331 = vpop.f32.mrf.mxu0
    %v5332 = vadd.f32 %v5163, %v5331
    %v5333 = vpop.f32.mrf.mxu0
    %v5334 = vadd.f32 %v5165, %v5333
    %5335 = vmatmul.bf16.gmra.mxu0 %v3840
    %v5336 = vpop.f32.mrf.mxu0
    %v5337 = vadd.f32 %v5168, %v5336
    %v5338 = vpop.f32.mrf.mxu0
    %v5339 = vadd.f32 %v5170, %v5338
    %5340 = vmatmul.bf16.gmra.mxu0 %v3846
    %v5341 = vpop.f32.mrf.mxu0
    %v5342 = vadd.f32 %v5173, %v5341
    %v5343 = vpop.f32.mrf.mxu0
    %v5344 = vadd.f32 %v5175, %v5343
    %5345 = vmatmul.bf16.gmra.mxu0 %v3852
    %v5346 = vpop.f32.mrf.mxu0
    %v5347 = vadd.f32 %v5178, %v5346
    %v5348 = vpop.f32.mrf.mxu0
    %v5349 = vadd.f32 %v5180, %v5348
    %5350 = vmatmul.bf16.gmra.mxu0 %v3858
    %v5351 = vpop.f32.mrf.mxu0
    %v5352 = vadd.f32 %v5183, %v5351
    %v5353 = vpop.f32.mrf.mxu0
    %v5354 = vadd.f32 %v5185, %v5353
    %5355 = vmatmul.bf16.gmra.mxu0 %v3864
    %v5356 = vpop.f32.mrf.mxu0
    %v5357 = vadd.f32 %v5188, %v5356
    %v5358 = vpop.f32.mrf.mxu0
    %v5359 = vadd.f32 %v5190, %v5358
    %5360 = vmatmul.bf16.gmra.mxu0 %v3870
    %v5361 = vpop.f32.mrf.mxu0
    %v5362 = vadd.f32 %v5193, %v5361
    %v5363 = vpop.f32.mrf.mxu0
    %v5364 = vadd.f32 %v5195, %v5363
    %5365 = vmatmul.bf16.gmra.mxu0 %v3876
    %v5366 = vpop.f32.mrf.mxu0
    %v5367 = vadd.f32 %v5198, %v5366
    %v5368 = vpop.f32.mrf.mxu0
    %v5369 = vadd.f32 %v5200, %v5368
    %5370 = vdwg.mxu0
    %vm5371 = vcmp.ge.f32.partialorder %v5212, 0.0
    %vm5372 = vcmp.ge.f32.partialorder %v5214, 0.0
    %vm5373 = vcmp.ge.f32.partialorder %v5217, 0.0
    %vm5374 = vcmp.ge.f32.partialorder %v5219, 0.0
    %vm5375 = vcmp.ge.f32.partialorder %v5222, 0.0
    %vm5376 = vcmp.ge.f32.partialorder %v5224, 0.0
    %vm5377 = vcmp.ge.f32.partialorder %v5227, 0.0
    %vm5378 = vcmp.ge.f32.partialorder %v5229, 0.0
    %vm5379 = vcmp.ge.f32.partialorder %v5232, 0.0
    %vm5380 = vcmp.ge.f32.partialorder %v5234, 0.0
    %vm5381 = vcmp.ge.f32.partialorder %v5237, 0.0
    %vm5382 = vcmp.ge.f32.partialorder %v5239, 0.0
    %vm5383 = vcmp.ge.f32.partialorder %v5242, 0.0
    %vm5384 = vcmp.ge.f32.partialorder %v5244, 0.0
    %vm5385 = vcmp.ge.f32.partialorder %v5247, 0.0
    %vm5386 = vcmp.ge.f32.partialorder %v5249, 0.0
    %vm5387 = vcmp.ge.f32.partialorder %v5252, 0.0
    %vm5388 = vcmp.ge.f32.partialorder %v5254, 0.0
    %vm5389 = vcmp.ge.f32.partialorder %v5257, 0.0
    %vm5390 = vcmp.ge.f32.partialorder %v5259, 0.0
    %vm5391 = vcmp.ge.f32.partialorder %v5262, 0.0
    %vm5392 = vcmp.ge.f32.partialorder %v5264, 0.0
    %vm5393 = vcmp.ge.f32.partialorder %v5267, 0.0
    %vm5394 = vcmp.ge.f32.partialorder %v5269, 0.0
    %vm5395 = vcmp.ge.f32.partialorder %v5272, 0.0
    %vm5396 = vcmp.ge.f32.partialorder %v5274, 0.0
    %vm5397 = vcmp.ge.f32.partialorder %v5277, 0.0
    %vm5398 = vcmp.ge.f32.partialorder %v5279, 0.0
    %vm5399 = vcmp.ge.f32.partialorder %v5282, 0.0
    %vm5400 = vcmp.ge.f32.partialorder %v5284, 0.0
    %vm5401 = vcmp.ge.f32.partialorder %v5287, 0.0
    %vm5402 = vcmp.ge.f32.partialorder %v5289, 0.0
    %vm5403 = vcmp.ge.f32.partialorder %v5292, 0.0
    %vm5404 = vcmp.ge.f32.partialorder %v5294, 0.0
    %vm5405 = vcmp.ge.f32.partialorder %v5297, 0.0
    %vm5406 = vcmp.ge.f32.partialorder %v5299, 0.0
    %vm5407 = vcmp.ge.f32.partialorder %v5302, 0.0
    %vm5408 = vcmp.ge.f32.partialorder %v5304, 0.0
    %vm5409 = vcmp.ge.f32.partialorder %v5307, 0.0
    %vm5410 = vcmp.ge.f32.partialorder %v5309, 0.0
    %vm5411 = vcmp.ge.f32.partialorder %v5312, 0.0
    %vm5412 = vcmp.ge.f32.partialorder %v5314, 0.0
    %vm5413 = vcmp.ge.f32.partialorder %v5317, 0.0
    %vm5414 = vcmp.ge.f32.partialorder %v5319, 0.0
    %vm5415 = vcmp.ge.f32.partialorder %v5322, 0.0
    %vm5416 = vcmp.ge.f32.partialorder %v5324, 0.0
    %vm5417 = vcmp.ge.f32.partialorder %v5327, 0.0
    %vm5418 = vcmp.ge.f32.partialorder %v5329, 0.0
    %vm5419 = vcmp.ge.f32.partialorder %v5332, 0.0
    %vm5420 = vcmp.ge.f32.partialorder %v5334, 0.0
    %vm5421 = vcmp.ge.f32.partialorder %v5337, 0.0
    %vm5422 = vcmp.ge.f32.partialorder %v5339, 0.0
    %vm5423 = vcmp.ge.f32.partialorder %v5342, 0.0
    %vm5424 = vcmp.ge.f32.partialorder %v5344, 0.0
    %vm5425 = vcmp.ge.f32.partialorder %v5347, 0.0
    %vm5426 = vcmp.ge.f32.partialorder %v5349, 0.0
    %vm5427 = vcmp.ge.f32.partialorder %v5352, 0.0
    %vm5428 = vcmp.ge.f32.partialorder %v5354, 0.0
    %vm5429 = vcmp.ge.f32.partialorder %v5357, 0.0
    %vm5430 = vcmp.ge.f32.partialorder %v5359, 0.0
    %vm5431 = vcmp.ge.f32.partialorder %v5362, 0.0
    %vm5432 = vcmp.ge.f32.partialorder %v5364, 0.0
    %vm5433 = vcmp.ge.f32.partialorder %v5367, 0.0
    %vm5434 = vcmp.ge.f32.partialorder %v5369, 0.0
    %v5435 = vmul.f32 %v5212, 0.01
    %v5436 = vmul.f32 %v5214, 0.01
    %v5437 = vmul.f32 %v5217, 0.01
    %v5438 = vmul.f32 %v5219, 0.01
    %v5439 = vmul.f32 %v5222, 0.01
    %v5440 = vmul.f32 %v5224, 0.01
    %v5441 = vmul.f32 %v5227, 0.01
    %v5442 = vmul.f32 %v5229, 0.01
    %v5443 = vmul.f32 %v5232, 0.01
    %v5444 = vmul.f32 %v5234, 0.01
    %v5445 = vmul.f32 %v5237, 0.01
    %v5446 = vmul.f32 %v5239, 0.01
    %v5447 = vmul.f32 %v5242, 0.01
    %v5448 = vmul.f32 %v5244, 0.01
    %v5449 = vmul.f32 %v5247, 0.01
    %v5450 = vmul.f32 %v5249, 0.01
    %v5451 = vmul.f32 %v5252, 0.01
    %v5452 = vmul.f32 %v5254, 0.01
    %v5453 = vmul.f32 %v5257, 0.01
    %v5454 = vmul.f32 %v5259, 0.01
    %v5455 = vmul.f32 %v5262, 0.01
    %v5456 = vmul.f32 %v5264, 0.01
    %v5457 = vmul.f32 %v5267, 0.01
    %v5458 = vmul.f32 %v5269, 0.01
    %v5459 = vmul.f32 %v5272, 0.01
    %v5460 = vmul.f32 %v5274, 0.01
    %v5461 = vmul.f32 %v5277, 0.01
    %v5462 = vmul.f32 %v5279, 0.01
    %v5463 = vmul.f32 %v5282, 0.01
    %v5464 = vmul.f32 %v5284, 0.01
    %v5465 = vmul.f32 %v5287, 0.01
    %v5466 = vmul.f32 %v5289, 0.01
    %v5467 = vmul.f32 %v5292, 0.01
    %v5468 = vmul.f32 %v5294, 0.01
    %v5469 = vmul.f32 %v5297, 0.01
    %v5470 = vmul.f32 %v5299, 0.01
    %v5471 = vmul.f32 %v5302, 0.01
    %v5472 = vmul.f32 %v5304, 0.01
    %v5473 = vmul.f32 %v5307, 0.01
    %v5474 = vmul.f32 %v5309, 0.01
    %v5475 = vmul.f32 %v5312, 0.01
    %v5476 = vmul.f32 %v5314, 0.01
    %v5477 = vmul.f32 %v5317, 0.01
    %v5478 = vmul.f32 %v5319, 0.01
    %v5479 = vmul.f32 %v5322, 0.01
    %v5480 = vmul.f32 %v5324, 0.01
    %v5481 = vmul.f32 %v5327, 0.01
    %v5482 = vmul.f32 %v5329, 0.01
    %v5483 = vmul.f32 %v5332, 0.01
    %v5484 = vmul.f32 %v5334, 0.01
    %v5485 = vmul.f32 %v5337, 0.01
    %v5486 = vmul.f32 %v5339, 0.01
    %v5487 = vmul.f32 %v5342, 0.01
    %v5488 = vmul.f32 %v5344, 0.01
    %v5489 = vmul.f32 %v5347, 0.01
    %v5490 = vmul.f32 %v5349, 0.01
    %v5491 = vmul.f32 %v5352, 0.01
    %v5492 = vmul.f32 %v5354, 0.01
    %v5493 = vmul.f32 %v5357, 0.01
    %v5494 = vmul.f32 %v5359, 0.01
    %v5495 = vmul.f32 %v5362, 0.01
    %v5496 = vmul.f32 %v5364, 0.01
    %v5497 = vmul.f32 %v5367, 0.01
    %v5498 = vmul.f32 %v5369, 0.01
    %v5499 = vsel %vm5371, %v5212, %v5435
    %v5500 = vsel %vm5372, %v5214, %v5436
    %v5501 = vsel %vm5373, %v5217, %v5437
    %v5502 = vsel %vm5374, %v5219, %v5438
    %v5503 = vsel %vm5375, %v5222, %v5439
    %v5504 = vsel %vm5376, %v5224, %v5440
    %v5505 = vsel %vm5377, %v5227, %v5441
    %v5506 = vsel %vm5378, %v5229, %v5442
    %v5507 = vsel %vm5379, %v5232, %v5443
    %v5508 = vsel %vm5380, %v5234, %v5444
    %v5509 = vsel %vm5381, %v5237, %v5445
    %v5510 = vsel %vm5382, %v5239, %v5446
    %v5511 = vsel %vm5383, %v5242, %v5447
    %v5512 = vsel %vm5384, %v5244, %v5448
    %v5513 = vsel %vm5385, %v5247, %v5449
    %v5514 = vsel %vm5386, %v5249, %v5450
    %v5515 = vsel %vm5387, %v5252, %v5451
    %v5516 = vsel %vm5388, %v5254, %v5452
    %v5517 = vsel %vm5389, %v5257, %v5453
    %v5518 = vsel %vm5390, %v5259, %v5454
    %v5519 = vsel %vm5391, %v5262, %v5455
    %v5520 = vsel %vm5392, %v5264, %v5456
    %v5521 = vsel %vm5393, %v5267, %v5457
    %v5522 = vsel %vm5394, %v5269, %v5458
    %v5523 = vsel %vm5395, %v5272, %v5459
    %v5524 = vsel %vm5396, %v5274, %v5460
    %v5525 = vsel %vm5397, %v5277, %v5461
    %v5526 = vsel %vm5398, %v5279, %v5462
    %v5527 = vsel %vm5399, %v5282, %v5463
    %v5528 = vsel %vm5400, %v5284, %v5464
    %v5529 = vsel %vm5401, %v5287, %v5465
    %v5530 = vsel %vm5402, %v5289, %v5466
    %v5531 = vsel %vm5403, %v5292, %v5467
    %v5532 = vsel %vm5404, %v5294, %v5468
    %v5533 = vsel %vm5405, %v5297, %v5469
    %v5534 = vsel %vm5406, %v5299, %v5470
    %v5535 = vsel %vm5407, %v5302, %v5471
    %v5536 = vsel %vm5408, %v5304, %v5472
    %v5537 = vsel %vm5409, %v5307, %v5473
    %v5538 = vsel %vm5410, %v5309, %v5474
    %v5539 = vsel %vm5411, %v5312, %v5475
    %v5540 = vsel %vm5412, %v5314, %v5476
    %v5541 = vsel %vm5413, %v5317, %v5477
    %v5542 = vsel %vm5414, %v5319, %v5478
    %v5543 = vsel %vm5415, %v5322, %v5479
    %v5544 = vsel %vm5416, %v5324, %v5480
    %v5545 = vsel %vm5417, %v5327, %v5481
    %v5546 = vsel %vm5418, %v5329, %v5482
    %v5547 = vsel %vm5419, %v5332, %v5483
    %v5548 = vsel %vm5420, %v5334, %v5484
    %v5549 = vsel %vm5421, %v5337, %v5485
    %v5550 = vsel %vm5422, %v5339, %v5486
    %v5551 = vsel %vm5423, %v5342, %v5487
    %v5552 = vsel %vm5424, %v5344, %v5488
    %v5553 = vsel %vm5425, %v5347, %v5489
    %v5554 = vsel %vm5426, %v5349, %v5490
    %v5555 = vsel %vm5427, %v5352, %v5491
    %v5556 = vsel %vm5428, %v5354, %v5492
    %v5557 = vsel %vm5429, %v5357, %v5493
    %v5558 = vsel %vm5430, %v5359, %v5494
    %v5559 = vsel %vm5431, %v5362, %v5495
    %v5560 = vsel %vm5432, %v5364, %v5496
    %v5561 = vsel %vm5433, %v5367, %v5497
    %v5562 = vsel %vm5434, %v5369, %v5498
    %v5563 = vld [vmem:[%s2] sm:$0xf]
    %v5564 = vld [vmem:[%s2 + $0x4] sm:$0xf]
    %v5565 = vld [vmem:[%s2 + $0x8] sm:$0xf]
    %v5566 = vld [vmem:[%s2 + $0xc] sm:$0xf]
    %v5567 = vld [vmem:[%s2 + $0x10] sm:$0xf]
    %v5568 = vld [vmem:[%s2 + $0x14] sm:$0xf]
    %v5569 = vld [vmem:[%s2 + $0x18] sm:$0xf]
    %v5570 = vld [vmem:[%s2 + $0x1c] sm:$0xf]
    %v5571 = vld [vmem:[%s2 + $0x20] sm:$0xf]
    %v5572 = vld [vmem:[%s2 + $0x24] sm:$0xf]
    %v5573 = vld [vmem:[%s2 + $0x28] sm:$0xf]
    %v5574 = vld [vmem:[%s2 + $0x2c] sm:$0xf]
    %v5575 = vld [vmem:[%s2 + $0x30] sm:$0xf]
    %v5576 = vld [vmem:[%s2 + $0x34] sm:$0xf]
    %v5577 = vld [vmem:[%s2 + $0x38] sm:$0xf]
    %v5578 = vld [vmem:[%s2 + $0x3c] sm:$0xf]
    %v5579 = vld [vmem:[%s2 + $0x40] sm:$0xf]
    %v5580 = vld [vmem:[%s2 + $0x44] sm:$0xf]
    %v5581 = vld [vmem:[%s2 + $0x48] sm:$0xf]
    %v5582 = vld [vmem:[%s2 + $0x4c] sm:$0xf]
    %v5583 = vld [vmem:[%s2 + $0x50] sm:$0xf]
    %v5584 = vld [vmem:[%s2 + $0x54] sm:$0xf]
    %v5585 = vld [vmem:[%s2 + $0x58] sm:$0xf]
    %v5586 = vld [vmem:[%s2 + $0x5c] sm:$0xf]
    %v5587 = vld [vmem:[%s2 + $0x60] sm:$0xf]
    %v5588 = vld [vmem:[%s2 + $0x64] sm:$0xf]
    %v5589 = vld [vmem:[%s2 + $0x68] sm:$0xf]
    %v5590 = vld [vmem:[%s2 + $0x6c] sm:$0xf]
    %v5591 = vld [vmem:[%s2 + $0x70] sm:$0xf]
    %v5592 = vld [vmem:[%s2 + $0x74] sm:$0xf]
    %v5593 = vld [vmem:[%s2 + $0x78] sm:$0xf]
    %v5594 = vld [vmem:[%s2 + $0x7c] sm:$0xf]
    %v5595 = vld [vmem:[%s2 + $0x80] sm:$0xf]
    %v5596 = vld [vmem:[%s2 + $0x84] sm:$0xf]
    %v5597 = vld [vmem:[%s2 + $0x88] sm:$0xf]
    %v5598 = vld [vmem:[%s2 + $0x8c] sm:$0xf]
    %v5599 = vld [vmem:[%s2 + $0x90] sm:$0xf]
    %v5600 = vld [vmem:[%s2 + $0x94] sm:$0xf]
    %v5601 = vld [vmem:[%s2 + $0x98] sm:$0xf]
    %v5602 = vld [vmem:[%s2 + $0x9c] sm:$0xf]
    %v5603 = vld [vmem:[%s2 + $0xa0] sm:$0xf]
    %v5604 = vld [vmem:[%s2 + $0xa4] sm:$0xf]
    %v5605 = vld [vmem:[%s2 + $0xa8] sm:$0xf]
    %v5606 = vld [vmem:[%s2 + $0xac] sm:$0xf]
    %v5607 = vld [vmem:[%s2 + $0xb0] sm:$0xf]
    %v5608 = vld [vmem:[%s2 + $0xb4] sm:$0xf]
    %v5609 = vld [vmem:[%s2 + $0xb8] sm:$0xf]
    %v5610 = vld [vmem:[%s2 + $0xbc] sm:$0xf]
    %v5611 = vld [vmem:[%s2 + $0xc0] sm:$0xf]
    %v5612 = vld [vmem:[%s2 + $0xc4] sm:$0xf]
    %v5613 = vld [vmem:[%s2 + $0xc8] sm:$0xf]
    %v5614 = vld [vmem:[%s2 + $0xcc] sm:$0xf]
    %v5615 = vld [vmem:[%s2 + $0xd0] sm:$0xf]
    %v5616 = vld [vmem:[%s2 + $0xd4] sm:$0xf]
    %v5617 = vld [vmem:[%s2 + $0xd8] sm:$0xf]
    %v5618 = vld [vmem:[%s2 + $0xdc] sm:$0xf]
    %v5619 = vld [vmem:[%s2 + $0xe0] sm:$0xf]
    %v5620 = vld [vmem:[%s2 + $0xe4] sm:$0xf]
    %v5621 = vld [vmem:[%s2 + $0xe8] sm:$0xf]
    %v5622 = vld [vmem:[%s2 + $0xec] sm:$0xf]
    %v5623 = vld [vmem:[%s2 + $0xf0] sm:$0xf]
    %v5624 = vld [vmem:[%s2 + $0xf4] sm:$0xf]
    %v5625 = vld [vmem:[%s2 + $0xf8] sm:$0xf]
    %v5626 = vld [vmem:[%s2 + $0xfc] sm:$0xf]
    %v5627 = vld [vmem:[%s7] sm:$0xf]
    %v5628 = vld [vmem:[%s7 + $0x4] sm:$0xf]
    %v5629 = vld [vmem:[%s7 + $0x8] sm:$0xf]
    %v5630 = vld [vmem:[%s7 + $0xc] sm:$0xf]
    %v5631 = vld [vmem:[%s7 + $0x10] sm:$0xf]
    %v5632 = vld [vmem:[%s7 + $0x14] sm:$0xf]
    %v5633 = vld [vmem:[%s7 + $0x18] sm:$0xf]
    %v5634 = vld [vmem:[%s7 + $0x1c] sm:$0xf]
    %v5635 = vld [vmem:[%s7 + $0x20] sm:$0xf]
    %v5636 = vld [vmem:[%s7 + $0x24] sm:$0xf]
    %v5637 = vld [vmem:[%s7 + $0x28] sm:$0xf]
    %v5638 = vld [vmem:[%s7 + $0x2c] sm:$0xf]
    %v5639 = vld [vmem:[%s7 + $0x30] sm:$0xf]
    %v5640 = vld [vmem:[%s7 + $0x34] sm:$0xf]
    %v5641 = vld [vmem:[%s7 + $0x38] sm:$0xf]
    %v5642 = vld [vmem:[%s7 + $0x3c] sm:$0xf]
    %v5643 = vld [vmem:[%s8] sm:$0x1]
    %v5645 = vperm.slane %v5643, 0
    %v5711 = vunpack.c.l.b16 %v5563
    %v5712 = vunpack.c.l.b16 %v5564
    %v5713 = vunpack.c.l.b16 %v5565
    %v5714 = vunpack.c.l.b16 %v5566
    %v5715 = vunpack.c.l.b16 %v5567
    %v5716 = vunpack.c.l.b16 %v5568
    %v5717 = vunpack.c.l.b16 %v5569
    %v5718 = vunpack.c.l.b16 %v5570
    %v5719 = vunpack.c.l.b16 %v5571
    %v5720 = vunpack.c.l.b16 %v5572
    %v5721 = vunpack.c.l.b16 %v5573
    %v5722 = vunpack.c.l.b16 %v5574
    %v5723 = vunpack.c.l.b16 %v5575
    %v5724 = vunpack.c.l.b16 %v5576
    %v5725 = vunpack.c.l.b16 %v5577
    %v5726 = vunpack.c.l.b16 %v5578
    %v5727 = vunpack.c.l.b16 %v5579
    %v5728 = vunpack.c.l.b16 %v5580
    %v5729 = vunpack.c.l.b16 %v5581
    %v5730 = vunpack.c.l.b16 %v5582
    %v5731 = vunpack.c.l.b16 %v5583
    %v5732 = vunpack.c.l.b16 %v5584
    %v5733 = vunpack.c.l.b16 %v5585
    %v5734 = vunpack.c.l.b16 %v5586
    %v5735 = vunpack.c.l.b16 %v5587
    %v5736 = vunpack.c.l.b16 %v5588
    %v5737 = vunpack.c.l.b16 %v5589
    %v5738 = vunpack.c.l.b16 %v5590
    %v5739 = vunpack.c.l.b16 %v5591
    %v5740 = vunpack.c.l.b16 %v5592
    %v5741 = vunpack.c.l.b16 %v5593
    %v5742 = vunpack.c.l.b16 %v5594
    %v5743 = vunpack.c.l.b16 %v5595
    %v5744 = vunpack.c.l.b16 %v5596
    %v5745 = vunpack.c.l.b16 %v5597
    %v5746 = vunpack.c.l.b16 %v5598
    %v5747 = vunpack.c.l.b16 %v5599
    %v5748 = vunpack.c.l.b16 %v5600
    %v5749 = vunpack.c.l.b16 %v5601
    %v5750 = vunpack.c.l.b16 %v5602
    %v5751 = vunpack.c.l.b16 %v5603
    %v5752 = vunpack.c.l.b16 %v5604
    %v5753 = vunpack.c.l.b16 %v5605
    %v5754 = vunpack.c.l.b16 %v5606
    %v5755 = vunpack.c.l.b16 %v5607
    %v5756 = vunpack.c.l.b16 %v5608
    %v5757 = vunpack.c.l.b16 %v5609
    %v5758 = vunpack.c.l.b16 %v5610
    %v5759 = vunpack.c.l.b16 %v5611
    %v5760 = vunpack.c.l.b16 %v5612
    %v5761 = vunpack.c.l.b16 %v5613
    %v5762 = vunpack.c.l.b16 %v5614
    %v5763 = vunpack.c.l.b16 %v5615
    %v5764 = vunpack.c.l.b16 %v5616
    %v5765 = vunpack.c.l.b16 %v5617
    %v5766 = vunpack.c.l.b16 %v5618
    %v5767 = vunpack.c.l.b16 %v5619
    %v5768 = vunpack.c.l.b16 %v5620
    %v5769 = vunpack.c.l.b16 %v5621
    %v5770 = vunpack.c.l.b16 %v5622
    %v5771 = vunpack.c.l.b16 %v5623
    %v5772 = vunpack.c.l.b16 %v5624
    %v5773 = vunpack.c.l.b16 %v5625
    %v5774 = vunpack.c.l.b16 %v5626
    %v5775 = vpack.c.b16 %v5712, %v5711
    %v5776 = vpack.c.b16 %v5714, %v5713
    %v5777 = vpack.c.b16 %v5716, %v5715
    %v5778 = vpack.c.b16 %v5718, %v5717
    %v5779 = vpack.c.b16 %v5720, %v5719
    %v5780 = vpack.c.b16 %v5722, %v5721
    %v5781 = vpack.c.b16 %v5724, %v5723
    %v5782 = vpack.c.b16 %v5726, %v5725
    %v5783 = vpack.c.b16 %v5728, %v5727
    %v5784 = vpack.c.b16 %v5730, %v5729
    %v5785 = vpack.c.b16 %v5732, %v5731
    %v5786 = vpack.c.b16 %v5734, %v5733
    %v5787 = vpack.c.b16 %v5736, %v5735
    %v5788 = vpack.c.b16 %v5738, %v5737
    %v5789 = vpack.c.b16 %v5740, %v5739
    %v5790 = vpack.c.b16 %v5742, %v5741
    %v5791 = vpack.c.b16 %v5744, %v5743
    %v5792 = vpack.c.b16 %v5746, %v5745
    %v5793 = vpack.c.b16 %v5748, %v5747
    %v5794 = vpack.c.b16 %v5750, %v5749
    %v5795 = vpack.c.b16 %v5752, %v5751
    %v5796 = vpack.c.b16 %v5754, %v5753
    %v5797 = vpack.c.b16 %v5756, %v5755
    %v5798 = vpack.c.b16 %v5758, %v5757
    %v5799 = vpack.c.b16 %v5760, %v5759
    %v5800 = vpack.c.b16 %v5762, %v5761
    %v5801 = vpack.c.b16 %v5764, %v5763
    %v5802 = vpack.c.b16 %v5766, %v5765
    %v5803 = vpack.c.b16 %v5768, %v5767
    %v5804 = vpack.c.b16 %v5770, %v5769
    %v5805 = vpack.c.b16 %v5772, %v5771
    %v5806 = vpack.c.b16 %v5774, %v5773
    %v5855 = vunpack.c.l.b16 %v5627
    %v5856 = vunpack.c.l.b16 %v5628
    %v5857 = vunpack.c.l.b16 %v5629
    %v5858 = vunpack.c.l.b16 %v5630
    %v5859 = vunpack.c.l.b16 %v5631
    %v5860 = vunpack.c.l.b16 %v5632
    %v5861 = vunpack.c.l.b16 %v5633
    %v5862 = vunpack.c.l.b16 %v5634
    %v5863 = vunpack.c.l.b16 %v5635
    %v5864 = vunpack.c.l.b16 %v5636
    %v5865 = vunpack.c.l.b16 %v5637
    %v5866 = vunpack.c.l.b16 %v5638
    %v5867 = vunpack.c.l.b16 %v5639
    %v5868 = vunpack.c.l.b16 %v5640
    %v5869 = vunpack.c.l.b16 %v5641
    %v5870 = vunpack.c.l.b16 %v5642
    %v5871 = vpack.c.b16 %v5856, %v5855
    %v5872 = vpack.c.b16 %v5858, %v5857
    %v5873 = vpack.c.b16 %v5860, %v5859
    %v5874 = vpack.c.b16 %v5862, %v5861
    %v5875 = vpack.c.b16 %v5864, %v5863
    %v5876 = vpack.c.b16 %v5866, %v5865
    %v5877 = vpack.c.b16 %v5868, %v5867
    %v5878 = vpack.c.b16 %v5870, %v5869
    %5887 = vmatpush.bf16.msra.mxu0 %v5878
    %5888 = vmatpush.bf16.msra.mxu0 %v5877
    %5889 = vmatpush.bf16.msra.mxu0 %v5876
    %5890 = vmatpush.bf16.msra.mxu0 %v5875
    %5891 = vmatpush.bf16.msra.mxu0 %v5874
    %5892 = vmatpush.bf16.msra.mxu0 %v5873
    %5893 = vmatpush.bf16.msra.mxu0 %v5872
    %5894 = vmatpush.bf16.msra.mxu0 %v5871
    %5895 = vmatmul.bf16.gmra.mxu0 %v5775
    %v5896 = vpop.f32.mrf.mxu0
    %v5897 = vadd.f32 %v5645, %v5896
    %v5898 = vpop.f32.mrf.mxu0
    %v5899 = vadd.f32 %v5645, %v5898
    %5900 = vmatmul.bf16.gmra.mxu0 %v5776
    %v5901 = vpop.f32.mrf.mxu0
    %v5902 = vadd.f32 %v5645, %v5901
    %v5903 = vpop.f32.mrf.mxu0
    %v5904 = vadd.f32 %v5645, %v5903
    %5905 = vmatmul.bf16.gmra.mxu0 %v5777
    %v5906 = vpop.f32.mrf.mxu0
    %v5907 = vadd.f32 %v5645, %v5906
    %v5908 = vpop.f32.mrf.mxu0
    %v5909 = vadd.f32 %v5645, %v5908
    %5910 = vmatmul.bf16.gmra.mxu0 %v5778
    %v5911 = vpop.f32.mrf.mxu0
    %v5912 = vadd.f32 %v5645, %v5911
    %v5913 = vpop.f32.mrf.mxu0
    %v5914 = vadd.f32 %v5645, %v5913
    %5915 = vmatmul.bf16.gmra.mxu0 %v5779
    %v5916 = vpop.f32.mrf.mxu0
    %v5917 = vadd.f32 %v5645, %v5916
    %v5918 = vpop.f32.mrf.mxu0
    %v5919 = vadd.f32 %v5645, %v5918
    %5920 = vmatmul.bf16.gmra.mxu0 %v5780
    %v5921 = vpop.f32.mrf.mxu0
    %v5922 = vadd.f32 %v5645, %v5921
    %v5923 = vpop.f32.mrf.mxu0
    %v5924 = vadd.f32 %v5645, %v5923
    %5925 = vmatmul.bf16.gmra.mxu0 %v5781
    %v5926 = vpop.f32.mrf.mxu0
    %v5927 = vadd.f32 %v5645, %v5926
    %v5928 = vpop.f32.mrf.mxu0
    %v5929 = vadd.f32 %v5645, %v5928
    %5930 = vmatmul.bf16.gmra.mxu0 %v5782
    %v5931 = vpop.f32.mrf.mxu0
    %v5932 = vadd.f32 %v5645, %v5931
    %v5933 = vpop.f32.mrf.mxu0
    %v5934 = vadd.f32 %v5645, %v5933
    %5935 = vmatmul.bf16.gmra.mxu0 %v5783
    %v5936 = vpop.f32.mrf.mxu0
    %v5937 = vadd.f32 %v5645, %v5936
    %v5938 = vpop.f32.mrf.mxu0
    %v5939 = vadd.f32 %v5645, %v5938
    %5940 = vmatmul.bf16.gmra.mxu0 %v5784
    %v5941 = vpop.f32.mrf.mxu0
    %v5942 = vadd.f32 %v5645, %v5941
    %v5943 = vpop.f32.mrf.mxu0
    %v5944 = vadd.f32 %v5645, %v5943
    %5945 = vmatmul.bf16.gmra.mxu0 %v5785
    %v5946 = vpop.f32.mrf.mxu0
    %v5947 = vadd.f32 %v5645, %v5946
    %v5948 = vpop.f32.mrf.mxu0
    %v5949 = vadd.f32 %v5645, %v5948
    %5950 = vmatmul.bf16.gmra.mxu0 %v5786
    %v5951 = vpop.f32.mrf.mxu0
    %v5952 = vadd.f32 %v5645, %v5951
    %v5953 = vpop.f32.mrf.mxu0
    %v5954 = vadd.f32 %v5645, %v5953
    %5955 = vmatmul.bf16.gmra.mxu0 %v5787
    %v5956 = vpop.f32.mrf.mxu0
    %v5957 = vadd.f32 %v5645, %v5956
    %v5958 = vpop.f32.mrf.mxu0
    %v5959 = vadd.f32 %v5645, %v5958
    %5960 = vmatmul.bf16.gmra.mxu0 %v5788
    %v5961 = vpop.f32.mrf.mxu0
    %v5962 = vadd.f32 %v5645, %v5961
    %v5963 = vpop.f32.mrf.mxu0
    %v5964 = vadd.f32 %v5645, %v5963
    %5965 = vmatmul.bf16.gmra.mxu0 %v5789
    %v5966 = vpop.f32.mrf.mxu0
    %v5967 = vadd.f32 %v5645, %v5966
    %v5968 = vpop.f32.mrf.mxu0
    %v5969 = vadd.f32 %v5645, %v5968
    %5970 = vmatmul.bf16.gmra.mxu0 %v5790
    %v5971 = vpop.f32.mrf.mxu0
    %v5972 = vadd.f32 %v5645, %v5971
    %v5973 = vpop.f32.mrf.mxu0
    %v5974 = vadd.f32 %v5645, %v5973
    %5975 = vmatmul.bf16.gmra.mxu0 %v5791
    %v5976 = vpop.f32.mrf.mxu0
    %v5977 = vadd.f32 %v5645, %v5976
    %v5978 = vpop.f32.mrf.mxu0
    %v5979 = vadd.f32 %v5645, %v5978
    %5980 = vmatmul.bf16.gmra.mxu0 %v5792
    %v5981 = vpop.f32.mrf.mxu0
    %v5982 = vadd.f32 %v5645, %v5981
    %v5983 = vpop.f32.mrf.mxu0
    %v5984 = vadd.f32 %v5645, %v5983
    %5985 = vmatmul.bf16.gmra.mxu0 %v5793
    %v5986 = vpop.f32.mrf.mxu0
    %v5987 = vadd.f32 %v5645, %v5986
    %v5988 = vpop.f32.mrf.mxu0
    %v5989 = vadd.f32 %v5645, %v5988
    %5990 = vmatmul.bf16.gmra.mxu0 %v5794
    %v5991 = vpop.f32.mrf.mxu0
    %v5992 = vadd.f32 %v5645, %v5991
    %v5993 = vpop.f32.mrf.mxu0
    %v5994 = vadd.f32 %v5645, %v5993
    %5995 = vmatmul.bf16.gmra.mxu0 %v5795
    %v5996 = vpop.f32.mrf.mxu0
    %v5997 = vadd.f32 %v5645, %v5996
    %v5998 = vpop.f32.mrf.mxu0
    %v5999 = vadd.f32 %v5645, %v5998
    %6000 = vmatmul.bf16.gmra.mxu0 %v5796
    %v6001 = vpop.f32.mrf.mxu0
    %v6002 = vadd.f32 %v5645, %v6001
    %v6003 = vpop.f32.mrf.mxu0
    %v6004 = vadd.f32 %v5645, %v6003
    %6005 = vmatmul.bf16.gmra.mxu0 %v5797
    %v6006 = vpop.f32.mrf.mxu0
    %v6007 = vadd.f32 %v5645, %v6006
    %v6008 = vpop.f32.mrf.mxu0
    %v6009 = vadd.f32 %v5645, %v6008
    %6010 = vmatmul.bf16.gmra.mxu0 %v5798
    %v6011 = vpop.f32.mrf.mxu0
    %v6012 = vadd.f32 %v5645, %v6011
    %v6013 = vpop.f32.mrf.mxu0
    %v6014 = vadd.f32 %v5645, %v6013
    %6015 = vmatmul.bf16.gmra.mxu0 %v5799
    %v6016 = vpop.f32.mrf.mxu0
    %v6017 = vadd.f32 %v5645, %v6016
    %v6018 = vpop.f32.mrf.mxu0
    %v6019 = vadd.f32 %v5645, %v6018
    %6020 = vmatmul.bf16.gmra.mxu0 %v5800
    %v6021 = vpop.f32.mrf.mxu0
    %v6022 = vadd.f32 %v5645, %v6021
    %v6023 = vpop.f32.mrf.mxu0
    %v6024 = vadd.f32 %v5645, %v6023
    %6025 = vmatmul.bf16.gmra.mxu0 %v5801
    %v6026 = vpop.f32.mrf.mxu0
    %v6027 = vadd.f32 %v5645, %v6026
    %v6028 = vpop.f32.mrf.mxu0
    %v6029 = vadd.f32 %v5645, %v6028
    %6030 = vmatmul.bf16.gmra.mxu0 %v5802
    %v6031 = vpop.f32.mrf.mxu0
    %v6032 = vadd.f32 %v5645, %v6031
    %v6033 = vpop.f32.mrf.mxu0
    %v6034 = vadd.f32 %v5645, %v6033
    %6035 = vmatmul.bf16.gmra.mxu0 %v5803
    %v6036 = vpop.f32.mrf.mxu0
    %v6037 = vadd.f32 %v5645, %v6036
    %v6038 = vpop.f32.mrf.mxu0
    %v6039 = vadd.f32 %v5645, %v6038
    %6040 = vmatmul.bf16.gmra.mxu0 %v5804
    %v6041 = vpop.f32.mrf.mxu0
    %v6042 = vadd.f32 %v5645, %v6041
    %v6043 = vpop.f32.mrf.mxu0
    %v6044 = vadd.f32 %v5645, %v6043
    %6045 = vmatmul.bf16.gmra.mxu0 %v5805
    %v6046 = vpop.f32.mrf.mxu0
    %v6047 = vadd.f32 %v5645, %v6046
    %v6048 = vpop.f32.mrf.mxu0
    %v6049 = vadd.f32 %v5645, %v6048
    %6050 = vmatmul.bf16.gmra.mxu0 %v5806
    %v6051 = vpop.f32.mrf.mxu0
    %v6052 = vadd.f32 %v5645, %v6051
    %v6053 = vpop.f32.mrf.mxu0
    %v6054 = vadd.f32 %v5645, %v6053
    %6055 = vdwg.mxu0
    %vm6056 = vcmp.ge.f32.partialorder %v5897, 0.0
    %vm6057 = vcmp.ge.f32.partialorder %v5899, 0.0
    %vm6058 = vcmp.ge.f32.partialorder %v5902, 0.0
    %vm6059 = vcmp.ge.f32.partialorder %v5904, 0.0
    %vm6060 = vcmp.ge.f32.partialorder %v5907, 0.0
    %vm6061 = vcmp.ge.f32.partialorder %v5909, 0.0
    %vm6062 = vcmp.ge.f32.partialorder %v5912, 0.0
    %vm6063 = vcmp.ge.f32.partialorder %v5914, 0.0
    %vm6064 = vcmp.ge.f32.partialorder %v5917, 0.0
    %vm6065 = vcmp.ge.f32.partialorder %v5919, 0.0
    %vm6066 = vcmp.ge.f32.partialorder %v5922, 0.0
    %vm6067 = vcmp.ge.f32.partialorder %v5924, 0.0
    %vm6068 = vcmp.ge.f32.partialorder %v5927, 0.0
    %vm6069 = vcmp.ge.f32.partialorder %v5929, 0.0
    %vm6070 = vcmp.ge.f32.partialorder %v5932, 0.0
    %vm6071 = vcmp.ge.f32.partialorder %v5934, 0.0
    %vm6072 = vcmp.ge.f32.partialorder %v5937, 0.0
    %vm6073 = vcmp.ge.f32.partialorder %v5939, 0.0
    %vm6074 = vcmp.ge.f32.partialorder %v5942, 0.0
    %vm6075 = vcmp.ge.f32.partialorder %v5944, 0.0
    %vm6076 = vcmp.ge.f32.partialorder %v5947, 0.0
    %vm6077 = vcmp.ge.f32.partialorder %v5949, 0.0
    %vm6078 = vcmp.ge.f32.partialorder %v5952, 0.0
    %vm6079 = vcmp.ge.f32.partialorder %v5954, 0.0
    %vm6080 = vcmp.ge.f32.partialorder %v5957, 0.0
    %vm6081 = vcmp.ge.f32.partialorder %v5959, 0.0
    %vm6082 = vcmp.ge.f32.partialorder %v5962, 0.0
    %vm6083 = vcmp.ge.f32.partialorder %v5964, 0.0
    %vm6084 = vcmp.ge.f32.partialorder %v5967, 0.0
    %vm6085 = vcmp.ge.f32.partialorder %v5969, 0.0
    %vm6086 = vcmp.ge.f32.partialorder %v5972, 0.0
    %vm6087 = vcmp.ge.f32.partialorder %v5974, 0.0
    %vm6088 = vcmp.ge.f32.partialorder %v5977, 0.0
    %vm6089 = vcmp.ge.f32.partialorder %v5979, 0.0
    %vm6090 = vcmp.ge.f32.partialorder %v5982, 0.0
    %vm6091 = vcmp.ge.f32.partialorder %v5984, 0.0
    %vm6092 = vcmp.ge.f32.partialorder %v5987, 0.0
    %vm6093 = vcmp.ge.f32.partialorder %v5989, 0.0
    %vm6094 = vcmp.ge.f32.partialorder %v5992, 0.0
    %vm6095 = vcmp.ge.f32.partialorder %v5994, 0.0
    %vm6096 = vcmp.ge.f32.partialorder %v5997, 0.0
    %vm6097 = vcmp.ge.f32.partialorder %v5999, 0.0
    %vm6098 = vcmp.ge.f32.partialorder %v6002, 0.0
    %vm6099 = vcmp.ge.f32.partialorder %v6004, 0.0
    %vm6100 = vcmp.ge.f32.partialorder %v6007, 0.0
    %vm6101 = vcmp.ge.f32.partialorder %v6009, 0.0
    %vm6102 = vcmp.ge.f32.partialorder %v6012, 0.0
    %vm6103 = vcmp.ge.f32.partialorder %v6014, 0.0
    %vm6104 = vcmp.ge.f32.partialorder %v6017, 0.0
    %vm6105 = vcmp.ge.f32.partialorder %v6019, 0.0
    %vm6106 = vcmp.ge.f32.partialorder %v6022, 0.0
    %vm6107 = vcmp.ge.f32.partialorder %v6024, 0.0
    %vm6108 = vcmp.ge.f32.partialorder %v6027, 0.0
    %vm6109 = vcmp.ge.f32.partialorder %v6029, 0.0
    %vm6110 = vcmp.ge.f32.partialorder %v6032, 0.0
    %vm6111 = vcmp.ge.f32.partialorder %v6034, 0.0
    %vm6112 = vcmp.ge.f32.partialorder %v6037, 0.0
    %vm6113 = vcmp.ge.f32.partialorder %v6039, 0.0
    %vm6114 = vcmp.ge.f32.partialorder %v6042, 0.0
    %vm6115 = vcmp.ge.f32.partialorder %v6044, 0.0
    %vm6116 = vcmp.ge.f32.partialorder %v6047, 0.0
    %vm6117 = vcmp.ge.f32.partialorder %v6049, 0.0
    %vm6118 = vcmp.ge.f32.partialorder %v6052, 0.0
    %vm6119 = vcmp.ge.f32.partialorder %v6054, 0.0
    %v6120 = vmul.f32 %v5897, 0.01
    %v6121 = vmul.f32 %v5899, 0.01
    %v6122 = vmul.f32 %v5902, 0.01
    %v6123 = vmul.f32 %v5904, 0.01
    %v6124 = vmul.f32 %v5907, 0.01
    %v6125 = vmul.f32 %v5909, 0.01
    %v6126 = vmul.f32 %v5912, 0.01
    %v6127 = vmul.f32 %v5914, 0.01
    %v6128 = vmul.f32 %v5917, 0.01
    %v6129 = vmul.f32 %v5919, 0.01
    %v6130 = vmul.f32 %v5922, 0.01
    %v6131 = vmul.f32 %v5924, 0.01
    %v6132 = vmul.f32 %v5927, 0.01
    %v6133 = vmul.f32 %v5929, 0.01
    %v6134 = vmul.f32 %v5932, 0.01
    %v6135 = vmul.f32 %v5934, 0.01
    %v6136 = vmul.f32 %v5937, 0.01
    %v6137 = vmul.f32 %v5939, 0.01
    %v6138 = vmul.f32 %v5942, 0.01
    %v6139 = vmul.f32 %v5944, 0.01
    %v6140 = vmul.f32 %v5947, 0.01
    %v6141 = vmul.f32 %v5949, 0.01
    %v6142 = vmul.f32 %v5952, 0.01
    %v6143 = vmul.f32 %v5954, 0.01
    %v6144 = vmul.f32 %v5957, 0.01
    %v6145 = vmul.f32 %v5959, 0.01
    %v6146 = vmul.f32 %v5962, 0.01
    %v6147 = vmul.f32 %v5964, 0.01
    %v6148 = vmul.f32 %v5967, 0.01
    %v6149 = vmul.f32 %v5969, 0.01
    %v6150 = vmul.f32 %v5972, 0.01
    %v6151 = vmul.f32 %v5974, 0.01
    %v6152 = vmul.f32 %v5977, 0.01
    %v6153 = vmul.f32 %v5979, 0.01
    %v6154 = vmul.f32 %v5982, 0.01
    %v6155 = vmul.f32 %v5984, 0.01
    %v6156 = vmul.f32 %v5987, 0.01
    %v6157 = vmul.f32 %v5989, 0.01
    %v6158 = vmul.f32 %v5992, 0.01
    %v6159 = vmul.f32 %v5994, 0.01
    %v6160 = vmul.f32 %v5997, 0.01
    %v6161 = vmul.f32 %v5999, 0.01
    %v6162 = vmul.f32 %v6002, 0.01
    %v6163 = vmul.f32 %v6004, 0.01
    %v6164 = vmul.f32 %v6007, 0.01
    %v6165 = vmul.f32 %v6009, 0.01
    %v6166 = vmul.f32 %v6012, 0.01
    %v6167 = vmul.f32 %v6014, 0.01
    %v6168 = vmul.f32 %v6017, 0.01
    %v6169 = vmul.f32 %v6019, 0.01
    %v6170 = vmul.f32 %v6022, 0.01
    %v6171 = vmul.f32 %v6024, 0.01
    %v6172 = vmul.f32 %v6027, 0.01
    %v6173 = vmul.f32 %v6029, 0.01
    %v6174 = vmul.f32 %v6032, 0.01
    %v6175 = vmul.f32 %v6034, 0.01
    %v6176 = vmul.f32 %v6037, 0.01
    %v6177 = vmul.f32 %v6039, 0.01
    %v6178 = vmul.f32 %v6042, 0.01
    %v6179 = vmul.f32 %v6044, 0.01
    %v6180 = vmul.f32 %v6047, 0.01
    %v6181 = vmul.f32 %v6049, 0.01
    %v6182 = vmul.f32 %v6052, 0.01
    %v6183 = vmul.f32 %v6054, 0.01
    %v6184 = vsel %vm6056, %v5897, %v6120
    %v6185 = vsel %vm6057, %v5899, %v6121
    %v6186 = vsel %vm6058, %v5902, %v6122
    %v6187 = vsel %vm6059, %v5904, %v6123
    %v6188 = vsel %vm6060, %v5907, %v6124
    %v6189 = vsel %vm6061, %v5909, %v6125
    %v6190 = vsel %vm6062, %v5912, %v6126
    %v6191 = vsel %vm6063, %v5914, %v6127
    %v6192 = vsel %vm6064, %v5917, %v6128
    %v6193 = vsel %vm6065, %v5919, %v6129
    %v6194 = vsel %vm6066, %v5922, %v6130
    %v6195 = vsel %vm6067, %v5924, %v6131
    %v6196 = vsel %vm6068, %v5927, %v6132
    %v6197 = vsel %vm6069, %v5929, %v6133
    %v6198 = vsel %vm6070, %v5932, %v6134
    %v6199 = vsel %vm6071, %v5934, %v6135
    %v6200 = vsel %vm6072, %v5937, %v6136
    %v6201 = vsel %vm6073, %v5939, %v6137
    %v6202 = vsel %vm6074, %v5942, %v6138
    %v6203 = vsel %vm6075, %v5944, %v6139
    %v6204 = vsel %vm6076, %v5947, %v6140
    %v6205 = vsel %vm6077, %v5949, %v6141
    %v6206 = vsel %vm6078, %v5952, %v6142
    %v6207 = vsel %vm6079, %v5954, %v6143
    %v6208 = vsel %vm6080, %v5957, %v6144
    %v6209 = vsel %vm6081, %v5959, %v6145
    %v6210 = vsel %vm6082, %v5962, %v6146
    %v6211 = vsel %vm6083, %v5964, %v6147
    %v6212 = vsel %vm6084, %v5967, %v6148
    %v6213 = vsel %vm6085, %v5969, %v6149
    %v6214 = vsel %vm6086, %v5972, %v6150
    %v6215 = vsel %vm6087, %v5974, %v6151
    %v6216 = vsel %vm6088, %v5977, %v6152
    %v6217 = vsel %vm6089, %v5979, %v6153
    %v6218 = vsel %vm6090, %v5982, %v6154
    %v6219 = vsel %vm6091, %v5984, %v6155
    %v6220 = vsel %vm6092, %v5987, %v6156
    %v6221 = vsel %vm6093, %v5989, %v6157
    %v6222 = vsel %vm6094, %v5992, %v6158
    %v6223 = vsel %vm6095, %v5994, %v6159
    %v6224 = vsel %vm6096, %v5997, %v6160
    %v6225 = vsel %vm6097, %v5999, %v6161
    %v6226 = vsel %vm6098, %v6002, %v6162
    %v6227 = vsel %vm6099, %v6004, %v6163
    %v6228 = vsel %vm6100, %v6007, %v6164
    %v6229 = vsel %vm6101, %v6009, %v6165
    %v6230 = vsel %vm6102, %v6012, %v6166
    %v6231 = vsel %vm6103, %v6014, %v6167
    %v6232 = vsel %vm6104, %v6017, %v6168
    %v6233 = vsel %vm6105, %v6019, %v6169
    %v6234 = vsel %vm6106, %v6022, %v6170
    %v6235 = vsel %vm6107, %v6024, %v6171
    %v6236 = vsel %vm6108, %v6027, %v6172
    %v6237 = vsel %vm6109, %v6029, %v6173
    %v6238 = vsel %vm6110, %v6032, %v6174
    %v6239 = vsel %vm6111, %v6034, %v6175
    %v6240 = vsel %vm6112, %v6037, %v6176
    %v6241 = vsel %vm6113, %v6039, %v6177
    %v6242 = vsel %vm6114, %v6042, %v6178
    %v6243 = vsel %vm6115, %v6044, %v6179
    %v6244 = vsel %vm6116, %v6047, %v6180
    %v6245 = vsel %vm6117, %v6049, %v6181
    %v6246 = vsel %vm6118, %v6052, %v6182
    %v6247 = vsel %vm6119, %v6054, %v6183
    %6312 = vrot.lane.b32.xlu0 %v5499, 32
    %v6313 = vpop.permute.xlu0 %6312
    %6314 = vrot.lane.b32.xlu0 %v5500, 32
    %v6315 = vpop.permute.xlu0 %6314
    %6316 = vrot.lane.b32.xlu0 %v5501, 32
    %v6317 = vpop.permute.xlu0 %6316
    %6318 = vrot.lane.b32.xlu0 %v5502, 32
    %v6319 = vpop.permute.xlu0 %6318
    %6320 = vrot.lane.b32.xlu0 %v5503, 32
    %v6321 = vpop.permute.xlu0 %6320
    %6322 = vrot.lane.b32.xlu0 %v5504, 32
    %v6323 = vpop.permute.xlu0 %6322
    %6324 = vrot.lane.b32.xlu0 %v5505, 32
    %v6325 = vpop.permute.xlu0 %6324
    %6326 = vrot.lane.b32.xlu0 %v5506, 32
    %v6327 = vpop.permute.xlu0 %6326
    %6328 = vrot.lane.b32.xlu0 %v5507, 32
    %v6329 = vpop.permute.xlu0 %6328
    %6330 = vrot.lane.b32.xlu0 %v5508, 32
    %v6331 = vpop.permute.xlu0 %6330
    %6332 = vrot.lane.b32.xlu0 %v5509, 32
    %v6333 = vpop.permute.xlu0 %6332
    %6334 = vrot.lane.b32.xlu0 %v5510, 32
    %v6335 = vpop.permute.xlu0 %6334
    %6336 = vrot.lane.b32.xlu0 %v5511, 32
    %v6337 = vpop.permute.xlu0 %6336
    %6338 = vrot.lane.b32.xlu0 %v5512, 32
    %v6339 = vpop.permute.xlu0 %6338
    %6340 = vrot.lane.b32.xlu0 %v5513, 32
    %v6341 = vpop.permute.xlu0 %6340
    %6342 = vrot.lane.b32.xlu0 %v5514, 32
    %v6343 = vpop.permute.xlu0 %6342
    %6344 = vrot.lane.b32.xlu0 %v5515, 32
    %v6345 = vpop.permute.xlu0 %6344
    %6346 = vrot.lane.b32.xlu0 %v5516, 32
    %v6347 = vpop.permute.xlu0 %6346
    %6348 = vrot.lane.b32.xlu0 %v5517, 32
    %v6349 = vpop.permute.xlu0 %6348
    %6350 = vrot.lane.b32.xlu0 %v5518, 32
    %v6351 = vpop.permute.xlu0 %6350
    %6352 = vrot.lane.b32.xlu0 %v5519, 32
    %v6353 = vpop.permute.xlu0 %6352
    %6354 = vrot.lane.b32.xlu0 %v5520, 32
    %v6355 = vpop.permute.xlu0 %6354
    %6356 = vrot.lane.b32.xlu0 %v5521, 32
    %v6357 = vpop.permute.xlu0 %6356
    %6358 = vrot.lane.b32.xlu0 %v5522, 32
    %v6359 = vpop.permute.xlu0 %6358
    %6360 = vrot.lane.b32.xlu0 %v5523, 32
    %v6361 = vpop.permute.xlu0 %6360
    %6362 = vrot.lane.b32.xlu0 %v5524, 32
    %v6363 = vpop.permute.xlu0 %6362
    %6364 = vrot.lane.b32.xlu0 %v5525, 32
    %v6365 = vpop.permute.xlu0 %6364
    %6366 = vrot.lane.b32.xlu0 %v5526, 32
    %v6367 = vpop.permute.xlu0 %6366
    %6368 = vrot.lane.b32.xlu0 %v5527, 32
    %v6369 = vpop.permute.xlu0 %6368
    %6370 = vrot.lane.b32.xlu0 %v5528, 32
    %v6371 = vpop.permute.xlu0 %6370
    %6372 = vrot.lane.b32.xlu0 %v5529, 32
    %v6373 = vpop.permute.xlu0 %6372
    %6374 = vrot.lane.b32.xlu0 %v5530, 32
    %v6375 = vpop.permute.xlu0 %6374
    %6376 = vrot.lane.b32.xlu0 %v5531, 32
    %v6377 = vpop.permute.xlu0 %6376
    %6378 = vrot.lane.b32.xlu0 %v5532, 32
    %v6379 = vpop.permute.xlu0 %6378
    %6380 = vrot.lane.b32.xlu0 %v5533, 32
    %v6381 = vpop.permute.xlu0 %6380
    %6382 = vrot.lane.b32.xlu0 %v5534, 32
    %v6383 = vpop.permute.xlu0 %6382
    %6384 = vrot.lane.b32.xlu0 %v5535, 32
    %v6385 = vpop.permute.xlu0 %6384
    %6386 = vrot.lane.b32.xlu0 %v5536, 32
    %v6387 = vpop.permute.xlu0 %6386
    %6388 = vrot.lane.b32.xlu0 %v5537, 32
    %v6389 = vpop.permute.xlu0 %6388
    %6390 = vrot.lane.b32.xlu0 %v5538, 32
    %v6391 = vpop.permute.xlu0 %6390
    %6392 = vrot.lane.b32.xlu0 %v5539, 32
    %v6393 = vpop.permute.xlu0 %6392
    %6394 = vrot.lane.b32.xlu0 %v5540, 32
    %v6395 = vpop.permute.xlu0 %6394
    %6396 = vrot.lane.b32.xlu0 %v5541, 32
    %v6397 = vpop.permute.xlu0 %6396
    %6398 = vrot.lane.b32.xlu0 %v5542, 32
    %v6399 = vpop.permute.xlu0 %6398
    %6400 = vrot.lane.b32.xlu0 %v5543, 32
    %v6401 = vpop.permute.xlu0 %6400
    %6402 = vrot.lane.b32.xlu0 %v5544, 32
    %v6403 = vpop.permute.xlu0 %6402
    %6404 = vrot.lane.b32.xlu0 %v5545, 32
    %v6405 = vpop.permute.xlu0 %6404
    %6406 = vrot.lane.b32.xlu0 %v5546, 32
    %v6407 = vpop.permute.xlu0 %6406
    %6408 = vrot.lane.b32.xlu0 %v5547, 32
    %v6409 = vpop.permute.xlu0 %6408
    %6410 = vrot.lane.b32.xlu0 %v5548, 32
    %v6411 = vpop.permute.xlu0 %6410
    %6412 = vrot.lane.b32.xlu0 %v5549, 32
    %v6413 = vpop.permute.xlu0 %6412
    %6414 = vrot.lane.b32.xlu0 %v5550, 32
    %v6415 = vpop.permute.xlu0 %6414
    %6416 = vrot.lane.b32.xlu0 %v5551, 32
    %v6417 = vpop.permute.xlu0 %6416
    %6418 = vrot.lane.b32.xlu0 %v5552, 32
    %v6419 = vpop.permute.xlu0 %6418
    %6420 = vrot.lane.b32.xlu0 %v5553, 32
    %v6421 = vpop.permute.xlu0 %6420
    %6422 = vrot.lane.b32.xlu0 %v5554, 32
    %v6423 = vpop.permute.xlu0 %6422
    %6424 = vrot.lane.b32.xlu0 %v5555, 32
    %v6425 = vpop.permute.xlu0 %6424
    %6426 = vrot.lane.b32.xlu0 %v5556, 32
    %v6427 = vpop.permute.xlu0 %6426
    %6428 = vrot.lane.b32.xlu0 %v5557, 32
    %v6429 = vpop.permute.xlu0 %6428
    %6430 = vrot.lane.b32.xlu0 %v5558, 32
    %v6431 = vpop.permute.xlu0 %6430
    %6432 = vrot.lane.b32.xlu0 %v5559, 32
    %v6433 = vpop.permute.xlu0 %6432
    %6434 = vrot.lane.b32.xlu0 %v5560, 32
    %v6435 = vpop.permute.xlu0 %6434
    %6436 = vrot.lane.b32.xlu0 %v5561, 32
    %v6437 = vpop.permute.xlu0 %6436
    %6438 = vrot.lane.b32.xlu0 %v5562, 32
    %v6439 = vpop.permute.xlu0 %6438
    %6568 = vrot.lane.b32.xlu0 %v6184, 64
    %v6569 = vpop.permute.xlu0 %6568
    %6570 = vrot.lane.b32.xlu0 %v6185, 64
    %v6571 = vpop.permute.xlu0 %6570
    %6572 = vrot.lane.b32.xlu0 %v6186, 64
    %v6573 = vpop.permute.xlu0 %6572
    %6574 = vrot.lane.b32.xlu0 %v6187, 64
    %v6575 = vpop.permute.xlu0 %6574
    %6576 = vrot.lane.b32.xlu0 %v6188, 64
    %v6577 = vpop.permute.xlu0 %6576
    %6578 = vrot.lane.b32.xlu0 %v6189, 64
    %v6579 = vpop.permute.xlu0 %6578
    %6580 = vrot.lane.b32.xlu0 %v6190, 64
    %v6581 = vpop.permute.xlu0 %6580
    %6582 = vrot.lane.b32.xlu0 %v6191, 64
    %v6583 = vpop.permute.xlu0 %6582
    %6584 = vrot.lane.b32.xlu0 %v6192, 64
    %v6585 = vpop.permute.xlu0 %6584
    %6586 = vrot.lane.b32.xlu0 %v6193, 64
    %v6587 = vpop.permute.xlu0 %6586
    %6588 = vrot.lane.b32.xlu0 %v6194, 64
    %v6589 = vpop.permute.xlu0 %6588
    %6590 = vrot.lane.b32.xlu0 %v6195, 64
    %v6591 = vpop.permute.xlu0 %6590
    %6592 = vrot.lane.b32.xlu0 %v6196, 64
    %v6593 = vpop.permute.xlu0 %6592
    %6594 = vrot.lane.b32.xlu0 %v6197, 64
    %v6595 = vpop.permute.xlu0 %6594
    %6596 = vrot.lane.b32.xlu0 %v6198, 64
    %v6597 = vpop.permute.xlu0 %6596
    %6598 = vrot.lane.b32.xlu0 %v6199, 64
    %v6599 = vpop.permute.xlu0 %6598
    %6600 = vrot.lane.b32.xlu0 %v6200, 64
    %v6601 = vpop.permute.xlu0 %6600
    %6602 = vrot.lane.b32.xlu0 %v6201, 64
    %v6603 = vpop.permute.xlu0 %6602
    %6604 = vrot.lane.b32.xlu0 %v6202, 64
    %v6605 = vpop.permute.xlu0 %6604
    %6606 = vrot.lane.b32.xlu0 %v6203, 64
    %v6607 = vpop.permute.xlu0 %6606
    %6608 = vrot.lane.b32.xlu0 %v6204, 64
    %v6609 = vpop.permute.xlu0 %6608
    %6610 = vrot.lane.b32.xlu0 %v6205, 64
    %v6611 = vpop.permute.xlu0 %6610
    %6612 = vrot.lane.b32.xlu0 %v6206, 64
    %v6613 = vpop.permute.xlu0 %6612
    %6614 = vrot.lane.b32.xlu0 %v6207, 64
    %v6615 = vpop.permute.xlu0 %6614
    %6616 = vrot.lane.b32.xlu0 %v6208, 64
    %v6617 = vpop.permute.xlu0 %6616
    %6618 = vrot.lane.b32.xlu0 %v6209, 64
    %v6619 = vpop.permute.xlu0 %6618
    %6620 = vrot.lane.b32.xlu0 %v6210, 64
    %v6621 = vpop.permute.xlu0 %6620
    %6622 = vrot.lane.b32.xlu0 %v6211, 64
    %v6623 = vpop.permute.xlu0 %6622
    %6624 = vrot.lane.b32.xlu0 %v6212, 64
    %v6625 = vpop.permute.xlu0 %6624
    %6626 = vrot.lane.b32.xlu0 %v6213, 64
    %v6627 = vpop.permute.xlu0 %6626
    %6628 = vrot.lane.b32.xlu0 %v6214, 64
    %v6629 = vpop.permute.xlu0 %6628
    %6630 = vrot.lane.b32.xlu0 %v6215, 64
    %v6631 = vpop.permute.xlu0 %6630
    %6632 = vrot.lane.b32.xlu0 %v6216, 64
    %v6633 = vpop.permute.xlu0 %6632
    %6634 = vrot.lane.b32.xlu0 %v6217, 64
    %v6635 = vpop.permute.xlu0 %6634
    %6636 = vrot.lane.b32.xlu0 %v6218, 64
    %v6637 = vpop.permute.xlu0 %6636
    %6638 = vrot.lane.b32.xlu0 %v6219, 64
    %v6639 = vpop.permute.xlu0 %6638
    %6640 = vrot.lane.b32.xlu0 %v6220, 64
    %v6641 = vpop.permute.xlu0 %6640
    %6642 = vrot.lane.b32.xlu0 %v6221, 64
    %v6643 = vpop.permute.xlu0 %6642
    %6644 = vrot.lane.b32.xlu0 %v6222, 64
    %v6645 = vpop.permute.xlu0 %6644
    %6646 = vrot.lane.b32.xlu0 %v6223, 64
    %v6647 = vpop.permute.xlu0 %6646
    %6648 = vrot.lane.b32.xlu0 %v6224, 64
    %v6649 = vpop.permute.xlu0 %6648
    %6650 = vrot.lane.b32.xlu0 %v6225, 64
    %v6651 = vpop.permute.xlu0 %6650
    %6652 = vrot.lane.b32.xlu0 %v6226, 64
    %v6653 = vpop.permute.xlu0 %6652
    %6654 = vrot.lane.b32.xlu0 %v6227, 64
    %v6655 = vpop.permute.xlu0 %6654
    %6656 = vrot.lane.b32.xlu0 %v6228, 64
    %v6657 = vpop.permute.xlu0 %6656
    %6658 = vrot.lane.b32.xlu0 %v6229, 64
    %v6659 = vpop.permute.xlu0 %6658
    %6660 = vrot.lane.b32.xlu0 %v6230, 64
    %v6661 = vpop.permute.xlu0 %6660
    %6662 = vrot.lane.b32.xlu0 %v6231, 64
    %v6663 = vpop.permute.xlu0 %6662
    %6664 = vrot.lane.b32.xlu0 %v6232, 64
    %v6665 = vpop.permute.xlu0 %6664
    %6666 = vrot.lane.b32.xlu0 %v6233, 64
    %v6667 = vpop.permute.xlu0 %6666
    %6668 = vrot.lane.b32.xlu0 %v6234, 64
    %v6669 = vpop.permute.xlu0 %6668
    %6670 = vrot.lane.b32.xlu0 %v6235, 64
    %v6671 = vpop.permute.xlu0 %6670
    %6672 = vrot.lane.b32.xlu0 %v6236, 64
    %v6673 = vpop.permute.xlu0 %6672
    %6674 = vrot.lane.b32.xlu0 %v6237, 64
    %v6675 = vpop.permute.xlu0 %6674
    %6676 = vrot.lane.b32.xlu0 %v6238, 64
    %v6677 = vpop.permute.xlu0 %6676
    %6678 = vrot.lane.b32.xlu0 %v6239, 64
    %v6679 = vpop.permute.xlu0 %6678
    %6680 = vrot.lane.b32.xlu0 %v6240, 64
    %v6681 = vpop.permute.xlu0 %6680
    %6682 = vrot.lane.b32.xlu0 %v6241, 64
    %v6683 = vpop.permute.xlu0 %6682
    %6684 = vrot.lane.b32.xlu0 %v6242, 64
    %v6685 = vpop.permute.xlu0 %6684
    %6686 = vrot.lane.b32.xlu0 %v6243, 64
    %v6687 = vpop.permute.xlu0 %6686
    %6688 = vrot.lane.b32.xlu0 %v6244, 64
    %v6689 = vpop.permute.xlu0 %6688
    %6690 = vrot.lane.b32.xlu0 %v6245, 64
    %v6691 = vpop.permute.xlu0 %6690
    %6692 = vrot.lane.b32.xlu0 %v6246, 64
    %v6693 = vpop.permute.xlu0 %6692
    %6694 = vrot.lane.b32.xlu0 %v6247, 64
    %v6695 = vpop.permute.xlu0 %6694
    %vm6760 = vcmask 261120
    %v6761 = vsel %vm6760, %v2753, %v6313
    %v6762 = vsel %vm6760, %v2754, %v6315
    %v6763 = vsel %vm6760, %v2755, %v6317
    %v6764 = vsel %vm6760, %v2756, %v6319
    %v6765 = vsel %vm6760, %v2757, %v6321
    %v6766 = vsel %vm6760, %v2758, %v6323
    %v6767 = vsel %vm6760, %v2759, %v6325
    %v6768 = vsel %vm6760, %v2760, %v6327
    %v6769 = vsel %vm6760, %v2761, %v6329
    %v6770 = vsel %vm6760, %v2762, %v6331
    %v6771 = vsel %vm6760, %v2763, %v6333
    %v6772 = vsel %vm6760, %v2764, %v6335
    %v6773 = vsel %vm6760, %v2765, %v6337
    %v6774 = vsel %vm6760, %v2766, %v6339
    %v6775 = vsel %vm6760, %v2767, %v6341
    %v6776 = vsel %vm6760, %v2768, %v6343
    %v6777 = vsel %vm6760, %v2769, %v6345
    %v6778 = vsel %vm6760, %v2770, %v6347
    %v6779 = vsel %vm6760, %v2771, %v6349
    %v6780 = vsel %vm6760, %v2772, %v6351
    %v6781 = vsel %vm6760, %v2773, %v6353
    %v6782 = vsel %vm6760, %v2774, %v6355
    %v6783 = vsel %vm6760, %v2775, %v6357
    %v6784 = vsel %vm6760, %v2776, %v6359
    %v6785 = vsel %vm6760, %v2777, %v6361
    %v6786 = vsel %vm6760, %v2778, %v6363
    %v6787 = vsel %vm6760, %v2779, %v6365
    %v6788 = vsel %vm6760, %v2780, %v6367
    %v6789 = vsel %vm6760, %v2781, %v6369
    %v6790 = vsel %vm6760, %v2782, %v6371
    %v6791 = vsel %vm6760, %v2783, %v6373
    %v6792 = vsel %vm6760, %v2784, %v6375
    %v6793 = vsel %vm6760, %v2785, %v6377
    %v6794 = vsel %vm6760, %v2786, %v6379
    %v6795 = vsel %vm6760, %v2787, %v6381
    %v6796 = vsel %vm6760, %v2788, %v6383
    %v6797 = vsel %vm6760, %v2789, %v6385
    %v6798 = vsel %vm6760, %v2790, %v6387
    %v6799 = vsel %vm6760, %v2791, %v6389
    %v6800 = vsel %vm6760, %v2792, %v6391
    %v6801 = vsel %vm6760, %v2793, %v6393
    %v6802 = vsel %vm6760, %v2794, %v6395
    %v6803 = vsel %vm6760, %v2795, %v6397
    %v6804 = vsel %vm6760, %v2796, %v6399
    %v6805 = vsel %vm6760, %v2797, %v6401
    %v6806 = vsel %vm6760, %v2798, %v6403
    %v6807 = vsel %vm6760, %v2799, %v6405
    %v6808 = vsel %vm6760, %v2800, %v6407
    %v6809 = vsel %vm6760, %v2801, %v6409
    %v6810 = vsel %vm6760, %v2802, %v6411
    %v6811 = vsel %vm6760, %v2803, %v6413
    %v6812 = vsel %vm6760, %v2804, %v6415
    %v6813 = vsel %vm6760, %v2805, %v6417
    %v6814 = vsel %vm6760, %v2806, %v6419
    %v6815 = vsel %vm6760, %v2807, %v6421
    %v6816 = vsel %vm6760, %v2808, %v6423
    %v6817 = vsel %vm6760, %v2809, %v6425
    %v6818 = vsel %vm6760, %v2810, %v6427
    %v6819 = vsel %vm6760, %v2811, %v6429
    %v6820 = vsel %vm6760, %v2812, %v6431
    %v6821 = vsel %vm6760, %v2813, %v6433
    %v6822 = vsel %vm6760, %v2814, %v6435
    %v6823 = vsel %vm6760, %v2815, %v6437
    %v6824 = vsel %vm6760, %v2816, %v6439
    %vm6825 = vcmask 523264
    %v6826 = vsel %vm6825, %v6761, %v6569
    %v6827 = vsel %vm6825, %v6762, %v6571
    %v6828 = vsel %vm6825, %v6763, %v6573
    %v6829 = vsel %vm6825, %v6764, %v6575
    %v6830 = vsel %vm6825, %v6765, %v6577
    %v6831 = vsel %vm6825, %v6766, %v6579
    %v6832 = vsel %vm6825, %v6767, %v6581
    %v6833 = vsel %vm6825, %v6768, %v6583
    %v6834 = vsel %vm6825, %v6769, %v6585
    %v6835 = vsel %vm6825, %v6770, %v6587
    %v6836 = vsel %vm6825, %v6771, %v6589
    %v6837 = vsel %vm6825, %v6772, %v6591
    %v6838 = vsel %vm6825, %v6773, %v6593
    %v6839 = vsel %vm6825, %v6774, %v6595
    %v6840 = vsel %vm6825, %v6775, %v6597
    %v6841 = vsel %vm6825, %v6776, %v6599
    %v6842 = vsel %vm6825, %v6777, %v6601
    %v6843 = vsel %vm6825, %v6778, %v6603
    %v6844 = vsel %vm6825, %v6779, %v6605
    %v6845 = vsel %vm6825, %v6780, %v6607
    %v6846 = vsel %vm6825, %v6781, %v6609
    %v6847 = vsel %vm6825, %v6782, %v6611
    %v6848 = vsel %vm6825, %v6783, %v6613
    %v6849 = vsel %vm6825, %v6784, %v6615
    %v6850 = vsel %vm6825, %v6785, %v6617
    %v6851 = vsel %vm6825, %v6786, %v6619
    %v6852 = vsel %vm6825, %v6787, %v6621
    %v6853 = vsel %vm6825, %v6788, %v6623
    %v6854 = vsel %vm6825, %v6789, %v6625
    %v6855 = vsel %vm6825, %v6790, %v6627
    %v6856 = vsel %vm6825, %v6791, %v6629
    %v6857 = vsel %vm6825, %v6792, %v6631
    %v6858 = vsel %vm6825, %v6793, %v6633
    %v6859 = vsel %vm6825, %v6794, %v6635
    %v6860 = vsel %vm6825, %v6795, %v6637
    %v6861 = vsel %vm6825, %v6796, %v6639
    %v6862 = vsel %vm6825, %v6797, %v6641
    %v6863 = vsel %vm6825, %v6798, %v6643
    %v6864 = vsel %vm6825, %v6799, %v6645
    %v6865 = vsel %vm6825, %v6800, %v6647
    %v6866 = vsel %vm6825, %v6801, %v6649
    %v6867 = vsel %vm6825, %v6802, %v6651
    %v6868 = vsel %vm6825, %v6803, %v6653
    %v6869 = vsel %vm6825, %v6804, %v6655
    %v6870 = vsel %vm6825, %v6805, %v6657
    %v6871 = vsel %vm6825, %v6806, %v6659
    %v6872 = vsel %vm6825, %v6807, %v6661
    %v6873 = vsel %vm6825, %v6808, %v6663
    %v6874 = vsel %vm6825, %v6809, %v6665
    %v6875 = vsel %vm6825, %v6810, %v6667
    %v6876 = vsel %vm6825, %v6811, %v6669
    %v6877 = vsel %vm6825, %v6812, %v6671
    %v6878 = vsel %vm6825, %v6813, %v6673
    %v6879 = vsel %vm6825, %v6814, %v6675
    %v6880 = vsel %vm6825, %v6815, %v6677
    %v6881 = vsel %vm6825, %v6816, %v6679
    %v6882 = vsel %vm6825, %v6817, %v6681
    %v6883 = vsel %vm6825, %v6818, %v6683
    %v6884 = vsel %vm6825, %v6819, %v6685
    %v6885 = vsel %vm6825, %v6820, %v6687
    %v6886 = vsel %vm6825, %v6821, %v6689
    %v6887 = vsel %vm6825, %v6822, %v6691
    %v6888 = vsel %vm6825, %v6823, %v6693
    %v6889 = vsel %vm6825, %v6824, %v6695
    %v6890 = vpack.c.bf16 %v6827, %v6826
    %v6891 = vpack.c.bf16 %v6829, %v6828
    %v6892 = vpack.c.bf16 %v6831, %v6830
    %v6893 = vpack.c.bf16 %v6833, %v6832
    %v6894 = vpack.c.bf16 %v6835, %v6834
    %v6895 = vpack.c.bf16 %v6837, %v6836
    %v6896 = vpack.c.bf16 %v6839, %v6838
    %v6897 = vpack.c.bf16 %v6841, %v6840
    %v6898 = vpack.c.bf16 %v6843, %v6842
    %v6899 = vpack.c.bf16 %v6845, %v6844
    %v6900 = vpack.c.bf16 %v6847, %v6846
    %v6901 = vpack.c.bf16 %v6849, %v6848
    %v6902 = vpack.c.bf16 %v6851, %v6850
    %v6903 = vpack.c.bf16 %v6853, %v6852
    %v6904 = vpack.c.bf16 %v6855, %v6854
    %v6905 = vpack.c.bf16 %v6857, %v6856
    %v6906 = vpack.c.bf16 %v6859, %v6858
    %v6907 = vpack.c.bf16 %v6861, %v6860
    %v6908 = vpack.c.bf16 %v6863, %v6862
    %v6909 = vpack.c.bf16 %v6865, %v6864
    %v6910 = vpack.c.bf16 %v6867, %v6866
    %v6911 = vpack.c.bf16 %v6869, %v6868
    %v6912 = vpack.c.bf16 %v6871, %v6870
    %v6913 = vpack.c.bf16 %v6873, %v6872
    %v6914 = vpack.c.bf16 %v6875, %v6874
    %v6915 = vpack.c.bf16 %v6877, %v6876
    %v6916 = vpack.c.bf16 %v6879, %v6878
    %v6917 = vpack.c.bf16 %v6881, %v6880
    %v6918 = vpack.c.bf16 %v6883, %v6882
    %v6919 = vpack.c.bf16 %v6885, %v6884
    %v6920 = vpack.c.bf16 %v6887, %v6886
    %v6921 = vpack.c.bf16 %v6889, %v6888
    %v6922 = vld [vmem:[%s9] sm:$0xf]
    %v6923 = vld [vmem:[%s9 + $0x4] sm:$0xf]
    %v6924 = vld [vmem:[%s9 + $0x8] sm:$0xf]
    %v6925 = vld [vmem:[%s9 + $0xc] sm:$0xf]
    %v6926 = vld [vmem:[%s9 + $0x10] sm:$0xf]
    %v6927 = vld [vmem:[%s9 + $0x14] sm:$0xf]
    %v6928 = vld [vmem:[%s9 + $0x18] sm:$0xf]
    %v6929 = vld [vmem:[%s9 + $0x1c] sm:$0xf]
    %v6930 = vld [vmem:[%s9 + $0x20] sm:$0xf]
    %v6931 = vld [vmem:[%s9 + $0x24] sm:$0xf]
    %v6932 = vld [vmem:[%s9 + $0x28] sm:$0xf]
    %v6933 = vld [vmem:[%s9 + $0x2c] sm:$0xf]
    %v6934 = vld [vmem:[%s9 + $0x30] sm:$0xf]
    %v6935 = vld [vmem:[%s9 + $0x34] sm:$0xf]
    %v6936 = vld [vmem:[%s9 + $0x38] sm:$0xf]
    %v6937 = vld [vmem:[%s9 + $0x3c] sm:$0xf]
    %v6938 = vld [vmem:[%s10] sm:$0x1]
    %v6940 = vperm.slane %v6938, 0
    %v6958 = vunpack.c.l.b16 %v6922
    %v6959 = vunpack.c.l.b16 %v6923
    %v6960 = vunpack.c.l.b16 %v6924
    %v6961 = vunpack.c.l.b16 %v6925
    %v6962 = vunpack.c.l.b16 %v6926
    %v6963 = vunpack.c.l.b16 %v6927
    %v6964 = vunpack.c.l.b16 %v6928
    %v6965 = vunpack.c.l.b16 %v6929
    %v6966 = vunpack.c.l.b16 %v6930
    %v6967 = vunpack.c.l.b16 %v6931
    %v6968 = vunpack.c.l.b16 %v6932
    %v6969 = vunpack.c.l.b16 %v6933
    %v6970 = vunpack.c.l.b16 %v6934
    %v6971 = vunpack.c.l.b16 %v6935
    %v6972 = vunpack.c.l.b16 %v6936
    %v6973 = vunpack.c.l.b16 %v6937
    %v6974 = vpack.c.b16 %v6959, %v6958
    %v6975 = vpack.c.b16 %v6961, %v6960
    %v6976 = vpack.c.b16 %v6963, %v6962
    %v6977 = vpack.c.b16 %v6965, %v6964
    %v6978 = vpack.c.b16 %v6967, %v6966
    %v6979 = vpack.c.b16 %v6969, %v6968
    %v6980 = vpack.c.b16 %v6971, %v6970
    %v6981 = vpack.c.b16 %v6973, %v6972
    %6990 = vmatpush.bf16.msra.mxu0 %v6981
    %6991 = vmatpush.bf16.msra.mxu0 %v6980
    %6992 = vmatpush.bf16.msra.mxu0 %v6979
    %6993 = vmatpush.bf16.msra.mxu0 %v6978
    %6994 = vmatpush.bf16.msra.mxu0 %v6977
    %6995 = vmatpush.bf16.msra.mxu0 %v6976
    %6996 = vmatpush.bf16.msra.mxu0 %v6975
    %6997 = vmatpush.bf16.msra.mxu0 %v6974
    %6998 = vmatmul.bf16.gmra.mxu0 %v6890
    %v6999 = vpop.f32.mrf.mxu0
    %v7000 = vadd.f32 %v6940, %v6999
    %v7001 = vpop.f32.mrf.mxu0
    %v7002 = vadd.f32 %v6940, %v7001
    %7003 = vmatmul.bf16.gmra.mxu0 %v6891
    %v7004 = vpop.f32.mrf.mxu0
    %v7005 = vadd.f32 %v6940, %v7004
    %v7006 = vpop.f32.mrf.mxu0
    %v7007 = vadd.f32 %v6940, %v7006
    %7008 = vmatmul.bf16.gmra.mxu0 %v6892
    %v7009 = vpop.f32.mrf.mxu0
    %v7010 = vadd.f32 %v6940, %v7009
    %v7011 = vpop.f32.mrf.mxu0
    %v7012 = vadd.f32 %v6940, %v7011
    %7013 = vmatmul.bf16.gmra.mxu0 %v6893
    %v7014 = vpop.f32.mrf.mxu0
    %v7015 = vadd.f32 %v6940, %v7014
    %v7016 = vpop.f32.mrf.mxu0
    %v7017 = vadd.f32 %v6940, %v7016
    %7018 = vmatmul.bf16.gmra.mxu0 %v6894
    %v7019 = vpop.f32.mrf.mxu0
    %v7020 = vadd.f32 %v6940, %v7019
    %v7021 = vpop.f32.mrf.mxu0
    %v7022 = vadd.f32 %v6940, %v7021
    %7023 = vmatmul.bf16.gmra.mxu0 %v6895
    %v7024 = vpop.f32.mrf.mxu0
    %v7025 = vadd.f32 %v6940, %v7024
    %v7026 = vpop.f32.mrf.mxu0
    %v7027 = vadd.f32 %v6940, %v7026
    %7028 = vmatmul.bf16.gmra.mxu0 %v6896
    %v7029 = vpop.f32.mrf.mxu0
    %v7030 = vadd.f32 %v6940, %v7029
    %v7031 = vpop.f32.mrf.mxu0
    %v7032 = vadd.f32 %v6940, %v7031
    %7033 = vmatmul.bf16.gmra.mxu0 %v6897
    %v7034 = vpop.f32.mrf.mxu0
    %v7035 = vadd.f32 %v6940, %v7034
    %v7036 = vpop.f32.mrf.mxu0
    %v7037 = vadd.f32 %v6940, %v7036
    %7038 = vmatmul.bf16.gmra.mxu0 %v6898
    %v7039 = vpop.f32.mrf.mxu0
    %v7040 = vadd.f32 %v6940, %v7039
    %v7041 = vpop.f32.mrf.mxu0
    %v7042 = vadd.f32 %v6940, %v7041
    %7043 = vmatmul.bf16.gmra.mxu0 %v6899
    %v7044 = vpop.f32.mrf.mxu0
    %v7045 = vadd.f32 %v6940, %v7044
    %v7046 = vpop.f32.mrf.mxu0
    %v7047 = vadd.f32 %v6940, %v7046
    %7048 = vmatmul.bf16.gmra.mxu0 %v6900
    %v7049 = vpop.f32.mrf.mxu0
    %v7050 = vadd.f32 %v6940, %v7049
    %v7051 = vpop.f32.mrf.mxu0
    %v7052 = vadd.f32 %v6940, %v7051
    %7053 = vmatmul.bf16.gmra.mxu0 %v6901
    %v7054 = vpop.f32.mrf.mxu0
    %v7055 = vadd.f32 %v6940, %v7054
    %v7056 = vpop.f32.mrf.mxu0
    %v7057 = vadd.f32 %v6940, %v7056
    %7058 = vmatmul.bf16.gmra.mxu0 %v6902
    %v7059 = vpop.f32.mrf.mxu0
    %v7060 = vadd.f32 %v6940, %v7059
    %v7061 = vpop.f32.mrf.mxu0
    %v7062 = vadd.f32 %v6940, %v7061
    %7063 = vmatmul.bf16.gmra.mxu0 %v6903
    %v7064 = vpop.f32.mrf.mxu0
    %v7065 = vadd.f32 %v6940, %v7064
    %v7066 = vpop.f32.mrf.mxu0
    %v7067 = vadd.f32 %v6940, %v7066
    %7068 = vmatmul.bf16.gmra.mxu0 %v6904
    %v7069 = vpop.f32.mrf.mxu0
    %v7070 = vadd.f32 %v6940, %v7069
    %v7071 = vpop.f32.mrf.mxu0
    %v7072 = vadd.f32 %v6940, %v7071
    %7073 = vmatmul.bf16.gmra.mxu0 %v6905
    %v7074 = vpop.f32.mrf.mxu0
    %v7075 = vadd.f32 %v6940, %v7074
    %v7076 = vpop.f32.mrf.mxu0
    %v7077 = vadd.f32 %v6940, %v7076
    %7078 = vmatmul.bf16.gmra.mxu0 %v6906
    %v7079 = vpop.f32.mrf.mxu0
    %v7080 = vadd.f32 %v6940, %v7079
    %v7081 = vpop.f32.mrf.mxu0
    %v7082 = vadd.f32 %v6940, %v7081
    %7083 = vmatmul.bf16.gmra.mxu0 %v6907
    %v7084 = vpop.f32.mrf.mxu0
    %v7085 = vadd.f32 %v6940, %v7084
    %v7086 = vpop.f32.mrf.mxu0
    %v7087 = vadd.f32 %v6940, %v7086
    %7088 = vmatmul.bf16.gmra.mxu0 %v6908
    %v7089 = vpop.f32.mrf.mxu0
    %v7090 = vadd.f32 %v6940, %v7089
    %v7091 = vpop.f32.mrf.mxu0
    %v7092 = vadd.f32 %v6940, %v7091
    %7093 = vmatmul.bf16.gmra.mxu0 %v6909
    %v7094 = vpop.f32.mrf.mxu0
    %v7095 = vadd.f32 %v6940, %v7094
    %v7096 = vpop.f32.mrf.mxu0
    %v7097 = vadd.f32 %v6940, %v7096
    %7098 = vmatmul.bf16.gmra.mxu0 %v6910
    %v7099 = vpop.f32.mrf.mxu0
    %v7100 = vadd.f32 %v6940, %v7099
    %v7101 = vpop.f32.mrf.mxu0
    %v7102 = vadd.f32 %v6940, %v7101
    %7103 = vmatmul.bf16.gmra.mxu0 %v6911
    %v7104 = vpop.f32.mrf.mxu0
    %v7105 = vadd.f32 %v6940, %v7104
    %v7106 = vpop.f32.mrf.mxu0
    %v7107 = vadd.f32 %v6940, %v7106
    %7108 = vmatmul.bf16.gmra.mxu0 %v6912
    %v7109 = vpop.f32.mrf.mxu0
    %v7110 = vadd.f32 %v6940, %v7109
    %v7111 = vpop.f32.mrf.mxu0
    %v7112 = vadd.f32 %v6940, %v7111
    %7113 = vmatmul.bf16.gmra.mxu0 %v6913
    %v7114 = vpop.f32.mrf.mxu0
    %v7115 = vadd.f32 %v6940, %v7114
    %v7116 = vpop.f32.mrf.mxu0
    %v7117 = vadd.f32 %v6940, %v7116
    %7118 = vmatmul.bf16.gmra.mxu0 %v6914
    %v7119 = vpop.f32.mrf.mxu0
    %v7120 = vadd.f32 %v6940, %v7119
    %v7121 = vpop.f32.mrf.mxu0
    %v7122 = vadd.f32 %v6940, %v7121
    %7123 = vmatmul.bf16.gmra.mxu0 %v6915
    %v7124 = vpop.f32.mrf.mxu0
    %v7125 = vadd.f32 %v6940, %v7124
    %v7126 = vpop.f32.mrf.mxu0
    %v7127 = vadd.f32 %v6940, %v7126
    %7128 = vmatmul.bf16.gmra.mxu0 %v6916
    %v7129 = vpop.f32.mrf.mxu0
    %v7130 = vadd.f32 %v6940, %v7129
    %v7131 = vpop.f32.mrf.mxu0
    %v7132 = vadd.f32 %v6940, %v7131
    %7133 = vmatmul.bf16.gmra.mxu0 %v6917
    %v7134 = vpop.f32.mrf.mxu0
    %v7135 = vadd.f32 %v6940, %v7134
    %v7136 = vpop.f32.mrf.mxu0
    %v7137 = vadd.f32 %v6940, %v7136
    %7138 = vmatmul.bf16.gmra.mxu0 %v6918
    %v7139 = vpop.f32.mrf.mxu0
    %v7140 = vadd.f32 %v6940, %v7139
    %v7141 = vpop.f32.mrf.mxu0
    %v7142 = vadd.f32 %v6940, %v7141
    %7143 = vmatmul.bf16.gmra.mxu0 %v6919
    %v7144 = vpop.f32.mrf.mxu0
    %v7145 = vadd.f32 %v6940, %v7144
    %v7146 = vpop.f32.mrf.mxu0
    %v7147 = vadd.f32 %v6940, %v7146
    %7148 = vmatmul.bf16.gmra.mxu0 %v6920
    %v7149 = vpop.f32.mrf.mxu0
    %v7150 = vadd.f32 %v6940, %v7149
    %v7151 = vpop.f32.mrf.mxu0
    %v7152 = vadd.f32 %v6940, %v7151
    %7153 = vmatmul.bf16.gmra.mxu0 %v6921
    %v7154 = vpop.f32.mrf.mxu0
    %v7155 = vadd.f32 %v6940, %v7154
    %v7156 = vpop.f32.mrf.mxu0
    %v7157 = vadd.f32 %v6940, %v7156
    %7158 = vdwg.mxu0
    %vm7159 = vcmp.ge.f32.partialorder %v7000, 0.0
    %vm7160 = vcmp.ge.f32.partialorder %v7002, 0.0
    %vm7161 = vcmp.ge.f32.partialorder %v7005, 0.0
    %vm7162 = vcmp.ge.f32.partialorder %v7007, 0.0
    %vm7163 = vcmp.ge.f32.partialorder %v7010, 0.0
    %vm7164 = vcmp.ge.f32.partialorder %v7012, 0.0
    %vm7165 = vcmp.ge.f32.partialorder %v7015, 0.0
    %vm7166 = vcmp.ge.f32.partialorder %v7017, 0.0
    %vm7167 = vcmp.ge.f32.partialorder %v7020, 0.0
    %vm7168 = vcmp.ge.f32.partialorder %v7022, 0.0
    %vm7169 = vcmp.ge.f32.partialorder %v7025, 0.0
    %vm7170 = vcmp.ge.f32.partialorder %v7027, 0.0
    %vm7171 = vcmp.ge.f32.partialorder %v7030, 0.0
    %vm7172 = vcmp.ge.f32.partialorder %v7032, 0.0
    %vm7173 = vcmp.ge.f32.partialorder %v7035, 0.0
    %vm7174 = vcmp.ge.f32.partialorder %v7037, 0.0
    %vm7175 = vcmp.ge.f32.partialorder %v7040, 0.0
    %vm7176 = vcmp.ge.f32.partialorder %v7042, 0.0
    %vm7177 = vcmp.ge.f32.partialorder %v7045, 0.0
    %vm7178 = vcmp.ge.f32.partialorder %v7047, 0.0
    %vm7179 = vcmp.ge.f32.partialorder %v7050, 0.0
    %vm7180 = vcmp.ge.f32.partialorder %v7052, 0.0
    %vm7181 = vcmp.ge.f32.partialorder %v7055, 0.0
    %vm7182 = vcmp.ge.f32.partialorder %v7057, 0.0
    %vm7183 = vcmp.ge.f32.partialorder %v7060, 0.0
    %vm7184 = vcmp.ge.f32.partialorder %v7062, 0.0
    %vm7185 = vcmp.ge.f32.partialorder %v7065, 0.0
    %vm7186 = vcmp.ge.f32.partialorder %v7067, 0.0
    %vm7187 = vcmp.ge.f32.partialorder %v7070, 0.0
    %vm7188 = vcmp.ge.f32.partialorder %v7072, 0.0
    %vm7189 = vcmp.ge.f32.partialorder %v7075, 0.0
    %vm7190 = vcmp.ge.f32.partialorder %v7077, 0.0
    %vm7191 = vcmp.ge.f32.partialorder %v7080, 0.0
    %vm7192 = vcmp.ge.f32.partialorder %v7082, 0.0
    %vm7193 = vcmp.ge.f32.partialorder %v7085, 0.0
    %vm7194 = vcmp.ge.f32.partialorder %v7087, 0.0
    %vm7195 = vcmp.ge.f32.partialorder %v7090, 0.0
    %vm7196 = vcmp.ge.f32.partialorder %v7092, 0.0
    %vm7197 = vcmp.ge.f32.partialorder %v7095, 0.0
    %vm7198 = vcmp.ge.f32.partialorder %v7097, 0.0
    %vm7199 = vcmp.ge.f32.partialorder %v7100, 0.0
    %vm7200 = vcmp.ge.f32.partialorder %v7102, 0.0
    %vm7201 = vcmp.ge.f32.partialorder %v7105, 0.0
    %vm7202 = vcmp.ge.f32.partialorder %v7107, 0.0
    %vm7203 = vcmp.ge.f32.partialorder %v7110, 0.0
    %vm7204 = vcmp.ge.f32.partialorder %v7112, 0.0
    %vm7205 = vcmp.ge.f32.partialorder %v7115, 0.0
    %vm7206 = vcmp.ge.f32.partialorder %v7117, 0.0
    %vm7207 = vcmp.ge.f32.partialorder %v7120, 0.0
    %vm7208 = vcmp.ge.f32.partialorder %v7122, 0.0
    %vm7209 = vcmp.ge.f32.partialorder %v7125, 0.0
    %vm7210 = vcmp.ge.f32.partialorder %v7127, 0.0
    %vm7211 = vcmp.ge.f32.partialorder %v7130, 0.0
    %vm7212 = vcmp.ge.f32.partialorder %v7132, 0.0
    %vm7213 = vcmp.ge.f32.partialorder %v7135, 0.0
    %vm7214 = vcmp.ge.f32.partialorder %v7137, 0.0
    %vm7215 = vcmp.ge.f32.partialorder %v7140, 0.0
    %vm7216 = vcmp.ge.f32.partialorder %v7142, 0.0
    %vm7217 = vcmp.ge.f32.partialorder %v7145, 0.0
    %vm7218 = vcmp.ge.f32.partialorder %v7147, 0.0
    %vm7219 = vcmp.ge.f32.partialorder %v7150, 0.0
    %vm7220 = vcmp.ge.f32.partialorder %v7152, 0.0
    %vm7221 = vcmp.ge.f32.partialorder %v7155, 0.0
    %vm7222 = vcmp.ge.f32.partialorder %v7157, 0.0
    %v7223 = vmul.f32 %v7000, 0.01
    %v7224 = vmul.f32 %v7002, 0.01
    %v7225 = vmul.f32 %v7005, 0.01
    %v7226 = vmul.f32 %v7007, 0.01
    %v7227 = vmul.f32 %v7010, 0.01
    %v7228 = vmul.f32 %v7012, 0.01
    %v7229 = vmul.f32 %v7015, 0.01
    %v7230 = vmul.f32 %v7017, 0.01
    %v7231 = vmul.f32 %v7020, 0.01
    %v7232 = vmul.f32 %v7022, 0.01
    %v7233 = vmul.f32 %v7025, 0.01
    %v7234 = vmul.f32 %v7027, 0.01
    %v7235 = vmul.f32 %v7030, 0.01
    %v7236 = vmul.f32 %v7032, 0.01
    %v7237 = vmul.f32 %v7035, 0.01
    %v7238 = vmul.f32 %v7037, 0.01
    %v7239 = vmul.f32 %v7040, 0.01
    %v7240 = vmul.f32 %v7042, 0.01
    %v7241 = vmul.f32 %v7045, 0.01
    %v7242 = vmul.f32 %v7047, 0.01
    %v7243 = vmul.f32 %v7050, 0.01
    %v7244 = vmul.f32 %v7052, 0.01
    %v7245 = vmul.f32 %v7055, 0.01
    %v7246 = vmul.f32 %v7057, 0.01
    %v7247 = vmul.f32 %v7060, 0.01
    %v7248 = vmul.f32 %v7062, 0.01
    %v7249 = vmul.f32 %v7065, 0.01
    %v7250 = vmul.f32 %v7067, 0.01
    %v7251 = vmul.f32 %v7070, 0.01
    %v7252 = vmul.f32 %v7072, 0.01
    %v7253 = vmul.f32 %v7075, 0.01
    %v7254 = vmul.f32 %v7077, 0.01
    %v7255 = vmul.f32 %v7080, 0.01
    %v7256 = vmul.f32 %v7082, 0.01
    %v7257 = vmul.f32 %v7085, 0.01
    %v7258 = vmul.f32 %v7087, 0.01
    %v7259 = vmul.f32 %v7090, 0.01
    %v7260 = vmul.f32 %v7092, 0.01
    %v7261 = vmul.f32 %v7095, 0.01
    %v7262 = vmul.f32 %v7097, 0.01
    %v7263 = vmul.f32 %v7100, 0.01
    %v7264 = vmul.f32 %v7102, 0.01
    %v7265 = vmul.f32 %v7105, 0.01
    %v7266 = vmul.f32 %v7107, 0.01
    %v7267 = vmul.f32 %v7110, 0.01
    %v7268 = vmul.f32 %v7112, 0.01
    %v7269 = vmul.f32 %v7115, 0.01
    %v7270 = vmul.f32 %v7117, 0.01
    %v7271 = vmul.f32 %v7120, 0.01
    %v7272 = vmul.f32 %v7122, 0.01
    %v7273 = vmul.f32 %v7125, 0.01
    %v7274 = vmul.f32 %v7127, 0.01
    %v7275 = vmul.f32 %v7130, 0.01
    %v7276 = vmul.f32 %v7132, 0.01
    %v7277 = vmul.f32 %v7135, 0.01
    %v7278 = vmul.f32 %v7137, 0.01
    %v7279 = vmul.f32 %v7140, 0.01
    %v7280 = vmul.f32 %v7142, 0.01
    %v7281 = vmul.f32 %v7145, 0.01
    %v7282 = vmul.f32 %v7147, 0.01
    %v7283 = vmul.f32 %v7150, 0.01
    %v7284 = vmul.f32 %v7152, 0.01
    %v7285 = vmul.f32 %v7155, 0.01
    %v7286 = vmul.f32 %v7157, 0.01
    %v7287 = vsel %vm7159, %v7000, %v7223
    %v7288 = vsel %vm7160, %v7002, %v7224
    %v7289 = vsel %vm7161, %v7005, %v7225
    %v7290 = vsel %vm7162, %v7007, %v7226
    %v7291 = vsel %vm7163, %v7010, %v7227
    %v7292 = vsel %vm7164, %v7012, %v7228
    %v7293 = vsel %vm7165, %v7015, %v7229
    %v7294 = vsel %vm7166, %v7017, %v7230
    %v7295 = vsel %vm7167, %v7020, %v7231
    %v7296 = vsel %vm7168, %v7022, %v7232
    %v7297 = vsel %vm7169, %v7025, %v7233
    %v7298 = vsel %vm7170, %v7027, %v7234
    %v7299 = vsel %vm7171, %v7030, %v7235
    %v7300 = vsel %vm7172, %v7032, %v7236
    %v7301 = vsel %vm7173, %v7035, %v7237
    %v7302 = vsel %vm7174, %v7037, %v7238
    %v7303 = vsel %vm7175, %v7040, %v7239
    %v7304 = vsel %vm7176, %v7042, %v7240
    %v7305 = vsel %vm7177, %v7045, %v7241
    %v7306 = vsel %vm7178, %v7047, %v7242
    %v7307 = vsel %vm7179, %v7050, %v7243
    %v7308 = vsel %vm7180, %v7052, %v7244
    %v7309 = vsel %vm7181, %v7055, %v7245
    %v7310 = vsel %vm7182, %v7057, %v7246
    %v7311 = vsel %vm7183, %v7060, %v7247
    %v7312 = vsel %vm7184, %v7062, %v7248
    %v7313 = vsel %vm7185, %v7065, %v7249
    %v7314 = vsel %vm7186, %v7067, %v7250
    %v7315 = vsel %vm7187, %v7070, %v7251
    %v7316 = vsel %vm7188, %v7072, %v7252
    %v7317 = vsel %vm7189, %v7075, %v7253
    %v7318 = vsel %vm7190, %v7077, %v7254
    %v7319 = vsel %vm7191, %v7080, %v7255
    %v7320 = vsel %vm7192, %v7082, %v7256
    %v7321 = vsel %vm7193, %v7085, %v7257
    %v7322 = vsel %vm7194, %v7087, %v7258
    %v7323 = vsel %vm7195, %v7090, %v7259
    %v7324 = vsel %vm7196, %v7092, %v7260
    %v7325 = vsel %vm7197, %v7095, %v7261
    %v7326 = vsel %vm7198, %v7097, %v7262
    %v7327 = vsel %vm7199, %v7100, %v7263
    %v7328 = vsel %vm7200, %v7102, %v7264
    %v7329 = vsel %vm7201, %v7105, %v7265
    %v7330 = vsel %vm7202, %v7107, %v7266
    %v7331 = vsel %vm7203, %v7110, %v7267
    %v7332 = vsel %vm7204, %v7112, %v7268
    %v7333 = vsel %vm7205, %v7115, %v7269
    %v7334 = vsel %vm7206, %v7117, %v7270
    %v7335 = vsel %vm7207, %v7120, %v7271
    %v7336 = vsel %vm7208, %v7122, %v7272
    %v7337 = vsel %vm7209, %v7125, %v7273
    %v7338 = vsel %vm7210, %v7127, %v7274
    %v7339 = vsel %vm7211, %v7130, %v7275
    %v7340 = vsel %vm7212, %v7132, %v7276
    %v7341 = vsel %vm7213, %v7135, %v7277
    %v7342 = vsel %vm7214, %v7137, %v7278
    %v7343 = vsel %vm7215, %v7140, %v7279
    %v7344 = vsel %vm7216, %v7142, %v7280
    %v7345 = vsel %vm7217, %v7145, %v7281
    %v7346 = vsel %vm7218, %v7147, %v7282
    %v7347 = vsel %vm7219, %v7150, %v7283
    %v7348 = vsel %vm7220, %v7152, %v7284
    %v7349 = vsel %vm7221, %v7155, %v7285
    %v7350 = vsel %vm7222, %v7157, %v7286
    %v7351 = vpack.c.bf16 %v7287, %v7287
    %v7352 = vpack.c.bf16 %v7288, %v7288
    %v7353 = vpack.c.bf16 %v7289, %v7289
    %v7354 = vpack.c.bf16 %v7290, %v7290
    %v7355 = vpack.c.bf16 %v7291, %v7291
    %v7356 = vpack.c.bf16 %v7292, %v7292
    %v7357 = vpack.c.bf16 %v7293, %v7293
    %v7358 = vpack.c.bf16 %v7294, %v7294
    %v7359 = vpack.c.bf16 %v7295, %v7295
    %v7360 = vpack.c.bf16 %v7296, %v7296
    %v7361 = vpack.c.bf16 %v7297, %v7297
    %v7362 = vpack.c.bf16 %v7298, %v7298
    %v7363 = vpack.c.bf16 %v7299, %v7299
    %v7364 = vpack.c.bf16 %v7300, %v7300
    %v7365 = vpack.c.bf16 %v7301, %v7301
    %v7366 = vpack.c.bf16 %v7302, %v7302
    %v7367 = vpack.c.bf16 %v7303, %v7303
    %v7368 = vpack.c.bf16 %v7304, %v7304
    %v7369 = vpack.c.bf16 %v7305, %v7305
    %v7370 = vpack.c.bf16 %v7306, %v7306
    %v7371 = vpack.c.bf16 %v7307, %v7307
    %v7372 = vpack.c.bf16 %v7308, %v7308
    %v7373 = vpack.c.bf16 %v7309, %v7309
    %v7374 = vpack.c.bf16 %v7310, %v7310
    %v7375 = vpack.c.bf16 %v7311, %v7311
    %v7376 = vpack.c.bf16 %v7312, %v7312
    %v7377 = vpack.c.bf16 %v7313, %v7313
    %v7378 = vpack.c.bf16 %v7314, %v7314
    %v7379 = vpack.c.bf16 %v7315, %v7315
    %v7380 = vpack.c.bf16 %v7316, %v7316
    %v7381 = vpack.c.bf16 %v7317, %v7317
    %v7382 = vpack.c.bf16 %v7318, %v7318
    %v7383 = vpack.c.bf16 %v7319, %v7319
    %v7384 = vpack.c.bf16 %v7320, %v7320
    %v7385 = vpack.c.bf16 %v7321, %v7321
    %v7386 = vpack.c.bf16 %v7322, %v7322
    %v7387 = vpack.c.bf16 %v7323, %v7323
    %v7388 = vpack.c.bf16 %v7324, %v7324
    %v7389 = vpack.c.bf16 %v7325, %v7325
    %v7390 = vpack.c.bf16 %v7326, %v7326
    %v7391 = vpack.c.bf16 %v7327, %v7327
    %v7392 = vpack.c.bf16 %v7328, %v7328
    %v7393 = vpack.c.bf16 %v7329, %v7329
    %v7394 = vpack.c.bf16 %v7330, %v7330
    %v7395 = vpack.c.bf16 %v7331, %v7331
    %v7396 = vpack.c.bf16 %v7332, %v7332
    %v7397 = vpack.c.bf16 %v7333, %v7333
    %v7398 = vpack.c.bf16 %v7334, %v7334
    %v7399 = vpack.c.bf16 %v7335, %v7335
    %v7400 = vpack.c.bf16 %v7336, %v7336
    %v7401 = vpack.c.bf16 %v7337, %v7337
    %v7402 = vpack.c.bf16 %v7338, %v7338
    %v7403 = vpack.c.bf16 %v7339, %v7339
    %v7404 = vpack.c.bf16 %v7340, %v7340
    %v7405 = vpack.c.bf16 %v7341, %v7341
    %v7406 = vpack.c.bf16 %v7342, %v7342
    %v7407 = vpack.c.bf16 %v7343, %v7343
    %v7408 = vpack.c.bf16 %v7344, %v7344
    %v7409 = vpack.c.bf16 %v7345, %v7345
    %v7410 = vpack.c.bf16 %v7346, %v7346
    %v7411 = vpack.c.bf16 %v7347, %v7347
    %v7412 = vpack.c.bf16 %v7348, %v7348
    %v7413 = vpack.c.bf16 %v7349, %v7349
    %v7414 = vpack.c.bf16 %v7350, %v7350
    %7415 = vst [vmem:[#allocation7] sm:$0xf] %v7351
    %7416 = vst [vmem:[#allocation7 + $0x4] sm:$0xf] %v7352
    %7417 = vst [vmem:[#allocation7 + $0x8] sm:$0xf] %v7353
    %7418 = vst [vmem:[#allocation7 + $0xc] sm:$0xf] %v7354
    %7419 = vst [vmem:[#allocation7 + $0x10] sm:$0xf] %v7355
    %7420 = vst [vmem:[#allocation7 + $0x14] sm:$0xf] %v7356
    %7421 = vst [vmem:[#allocation7 + $0x18] sm:$0xf] %v7357
    %7422 = vst [vmem:[#allocation7 + $0x1c] sm:$0xf] %v7358
    %7423 = vst [vmem:[#allocation7 + $0x20] sm:$0xf] %v7359
    %7424 = vst [vmem:[#allocation7 + $0x24] sm:$0xf] %v7360
    %7425 = vst [vmem:[#allocation7 + $0x28] sm:$0xf] %v7361
    %7426 = vst [vmem:[#allocation7 + $0x2c] sm:$0xf] %v7362
    %7427 = vst [vmem:[#allocation7 + $0x30] sm:$0xf] %v7363
    %7428 = vst [vmem:[#allocation7 + $0x34] sm:$0xf] %v7364
    %7429 = vst [vmem:[#allocation7 + $0x38] sm:$0xf] %v7365
    %7430 = vst [vmem:[#allocation7 + $0x3c] sm:$0xf] %v7366
    %7431 = vst [vmem:[#allocation7 + $0x40] sm:$0xf] %v7367
    %7432 = vst [vmem:[#allocation7 + $0x44] sm:$0xf] %v7368
    %7433 = vst [vmem:[#allocation7 + $0x48] sm:$0xf] %v7369
    %7434 = vst [vmem:[#allocation7 + $0x4c] sm:$0xf] %v7370
    %7435 = vst [vmem:[#allocation7 + $0x50] sm:$0xf] %v7371
    %7436 = vst [vmem:[#allocation7 + $0x54] sm:$0xf] %v7372
    %7437 = vst [vmem:[#allocation7 + $0x58] sm:$0xf] %v7373
    %7438 = vst [vmem:[#allocation7 + $0x5c] sm:$0xf] %v7374
    %7439 = vst [vmem:[#allocation7 + $0x60] sm:$0xf] %v7375
    %7440 = vst [vmem:[#allocation7 + $0x64] sm:$0xf] %v7376
    %7441 = vst [vmem:[#allocation7 + $0x68] sm:$0xf] %v7377
    %7442 = vst [vmem:[#allocation7 + $0x6c] sm:$0xf] %v7378
    %7443 = vst [vmem:[#allocation7 + $0x70] sm:$0xf] %v7379
    %7444 = vst [vmem:[#allocation7 + $0x74] sm:$0xf] %v7380
    %7445 = vst [vmem:[#allocation7 + $0x78] sm:$0xf] %v7381
    %7446 = vst [vmem:[#allocation7 + $0x7c] sm:$0xf] %v7382
    %7447 = vst [vmem:[#allocation7 + $0x80] sm:$0xf] %v7383
    %7448 = vst [vmem:[#allocation7 + $0x84] sm:$0xf] %v7384
    %7449 = vst [vmem:[#allocation7 + $0x88] sm:$0xf] %v7385
    %7450 = vst [vmem:[#allocation7 + $0x8c] sm:$0xf] %v7386
    %7451 = vst [vmem:[#allocation7 + $0x90] sm:$0xf] %v7387
    %7452 = vst [vmem:[#allocation7 + $0x94] sm:$0xf] %v7388
    %7453 = vst [vmem:[#allocation7 + $0x98] sm:$0xf] %v7389
    %7454 = vst [vmem:[#allocation7 + $0x9c] sm:$0xf] %v7390
    %7455 = vst [vmem:[#allocation7 + $0xa0] sm:$0xf] %v7391
    %7456 = vst [vmem:[#allocation7 + $0xa4] sm:$0xf] %v7392
    %7457 = vst [vmem:[#allocation7 + $0xa8] sm:$0xf] %v7393
    %7458 = vst [vmem:[#allocation7 + $0xac] sm:$0xf] %v7394
    %7459 = vst [vmem:[#allocation7 + $0xb0] sm:$0xf] %v7395
    %7460 = vst [vmem:[#allocation7 + $0xb4] sm:$0xf] %v7396
    %7461 = vst [vmem:[#allocation7 + $0xb8] sm:$0xf] %v7397
    %7462 = vst [vmem:[#allocation7 + $0xbc] sm:$0xf] %v7398
    %7463 = vst [vmem:[#allocation7 + $0xc0] sm:$0xf] %v7399
    %7464 = vst [vmem:[#allocation7 + $0xc4] sm:$0xf] %v7400
    %7465 = vst [vmem:[#allocation7 + $0xc8] sm:$0xf] %v7401
    %7466 = vst [vmem:[#allocation7 + $0xcc] sm:$0xf] %v7402
    %7467 = vst [vmem:[#allocation7 + $0xd0] sm:$0xf] %v7403
    %7468 = vst [vmem:[#allocation7 + $0xd4] sm:$0xf] %v7404
    %7469 = vst [vmem:[#allocation7 + $0xd8] sm:$0xf] %v7405
    %7470 = vst [vmem:[#allocation7 + $0xdc] sm:$0xf] %v7406
    %7471 = vst [vmem:[#allocation7 + $0xe0] sm:$0xf] %v7407
    %7472 = vst [vmem:[#allocation7 + $0xe4] sm:$0xf] %v7408
    %7473 = vst [vmem:[#allocation7 + $0xe8] sm:$0xf] %v7409
    %7474 = vst [vmem:[#allocation7 + $0xec] sm:$0xf] %v7410
    %7475 = vst [vmem:[#allocation7 + $0xf0] sm:$0xf] %v7411
    %7476 = vst [vmem:[#allocation7 + $0xf4] sm:$0xf] %v7412
    %7477 = vst [vmem:[#allocation7 + $0xf8] sm:$0xf] %v7413
    %7478 = vst [vmem:[#allocation7 + $0xfc] sm:$0xf] %v7414
    // Predicated region
    $region54: #{tpu_custom_call.1} parent=1 // pred_check
      _
    $region55: #{tpu_custom_call.1} parent=1 // pred_check_branch
      %7480 = sbr.rel (0) target = $region57
    $region56: #{tpu_custom_call.1} parent=1 // pred_region
      %7482 = vsyncadd [#allocation4], 0
      %s7483 = sshll.u32 [#allocation7], 4
      %s7484 = int_to_ptr.vmem [resolvable:$true] %s7483
      %s7485 = sshll.u32 %s11, 4
      %s7486 = int_to_ptr.hbm [resolvable:$true] %s7485
      %7491 = dma.vmem_to_hbm [thread:$0]  %s7484, 4096, %s7486, [#allocation4], 64, 64, 4
    $region57: #{tpu_custom_call.1} parent=1 // pred_fallthru
      _
    // Predicated region
    $region58: #{tpu_custom_call.1} parent=1 // pred_check
      _
    $region59: #{tpu_custom_call.1} parent=1 // pred_check_branch
      %7493 = sbr.rel (0) target = $region61
    $region60: #{tpu_custom_call.1} parent=1 // pred_region
      %7495 = dma.done [#allocation4], 4096
    $region61: #{tpu_custom_call.1} parent=1 // pred_fallthru
      _
    %7496 = vsyncpa [#allocation3], 1
    %7497 = vsyncpa [#allocation6], 1
    %7498 = vsyncpa [#allocation4], 1

</llo_original>
